<compile_context>
chip_gen: v6e
topology: v6e:2x2x1
jax: 0.10.0
libtpu: 0.0.40
codegen_flags: <defaults>
</compile_context>

<pallas_src>
import functools

import jax
import jax.numpy as jnp
from jax.experimental import pallas as pl
from jax.experimental.pallas import tpu as pltpu

GEMM_TM = 256    # row tile for conv-as-GEMM
POOL_TM = 512    # row tile for maxpool (mem-bound)
DIST_TM = 512    # row tile for the LPIPS distance reduction
ELEM_TL = 2048   # lane tile for elementwise / pixel-loss kernels


def _round_up(x, m):
    return (x + m - 1) // m * m


def _tile_and_pad(n, target, align):
    """Pick a tile <= target (multiple of `align`) and the padded extent it divides."""
    tile = target if n >= target else _round_up(n, align)
    return tile, _round_up(n, tile)


# ----------------------------------------------------------------------------
# Kernel 1: per-row affine (input preprocessing + LPIPS ScalingLayer fused)
#   lane-dense layout: rows = (image, channel), lanes = H*W pixels.
# ----------------------------------------------------------------------------
def _affine_kernel(x_ref, m_ref, a_ref, o_ref):
    o_ref[...] = (x_ref[...] * m_ref[...] + a_ref[...]).astype(o_ref.dtype)


def channel_affine_rows(x_rows, mult_rows, add_rows):
    # x_rows: (R, L) f32; mult_rows/add_rows: (R,) f32.  Returns (R, L) bf16.
    R, L = x_rows.shape
    Rp = _round_up(R, 16)
    tile_l, Lp = _tile_and_pad(L, ELEM_TL, 128)
    xp = jnp.pad(x_rows, ((0, Rp - R), (0, Lp - L)))
    mp = jnp.pad(mult_rows, (0, Rp - R)).reshape(Rp, 1)
    ap = jnp.pad(add_rows, (0, Rp - R)).reshape(Rp, 1)
    out = pl.pallas_call(
        _affine_kernel,
        out_shape=jax.ShapeDtypeStruct((Rp, Lp), jnp.bfloat16),
        grid=(Lp // tile_l,),
        in_specs=[
            pl.BlockSpec((Rp, tile_l), lambda j: (0, j)),
            pl.BlockSpec((Rp, 1), lambda j: (0, 0)),
            pl.BlockSpec((Rp, 1), lambda j: (0, 0)),
        ],
        out_specs=pl.BlockSpec((Rp, tile_l), lambda j: (0, j)),
        compiler_params=pltpu.CompilerParams(dimension_semantics=("parallel",)),
    )(xp, mp, ap)
    return out[:R, :L]


# ----------------------------------------------------------------------------
# Kernel 2: bf16 GEMM + f32 bias + ReLU  (every AlexNet conv via im2col)
# ----------------------------------------------------------------------------
def _matmul_bias_relu_kernel(x_ref, w_ref, b_ref, o_ref):
    acc = jnp.dot(x_ref[...], w_ref[...], preferred_element_type=jnp.float32)
    o_ref[...] = jnp.maximum(acc + b_ref[...], 0.0).astype(o_ref.dtype)


def conv2d_relu(x, conv):
    # x: (B, H, W, Cin) NHWC bf16; conv: prepared dict (GEMM-layout bf16 weight).
    kh, kw = conv["k"]
    s, p = conv["stride"], conv["pad"]
    cin, cout, Kp = conv["cin"], conv["cout"], conv["Kp"]
    xp = jnp.pad(x, ((0, 0), (p, p), (p, p), (0, 0)))
    B, H, W, _ = xp.shape
    Ho = (H - kh) // s + 1
    Wo = (W - kw) // s + 1
    M = B * Ho * Wo
    K = kh * kw * cin

    # im2col built directly at padded K width, in bf16 (single concatenate).
    cols = []
    for i in range(kh):
        for j in range(kw):
            cols.append(xp[:, i:i + s * Ho:s, j:j + s * Wo:s, :].reshape(M, cin))
    if Kp > K:
        cols.append(jnp.zeros((M, Kp - K), x.dtype))
    patches = jnp.concatenate(cols, axis=1)

    tile_m, Mp = _tile_and_pad(M, GEMM_TM, 16)
    if Mp > M:
        patches = jnp.pad(patches, ((0, Mp - M), (0, 0)))

    out = pl.pallas_call(
        _matmul_bias_relu_kernel,
        out_shape=jax.ShapeDtypeStruct((Mp, cout), jnp.bfloat16),
        grid=(Mp // tile_m,),
        in_specs=[
            pl.BlockSpec((tile_m, Kp), lambda i: (i, 0)),
            pl.BlockSpec((Kp, cout), lambda i: (0, 0)),
            pl.BlockSpec((1, cout), lambda i: (0, 0)),
        ],
        out_specs=pl.BlockSpec((tile_m, cout), lambda i: (i, 0)),
        compiler_params=pltpu.CompilerParams(dimension_semantics=("parallel",)),
    )(patches, conv["w"], conv["b"])
    return out[:M].reshape(B, Ho, Wo, cout)


# ----------------------------------------------------------------------------
# Kernel 3: maxpool (k=3, s=2) as a window-axis max reduction, gridded over rows
# ----------------------------------------------------------------------------
def _max_reduce_kernel(p_ref, o_ref):
    o_ref[...] = jnp.max(p_ref[...], axis=0)


def maxpool_nhwc(x, k, stride):
    # x: (B, H, W, C) bf16; AlexNet maxpools use padding=0
    B, H, W, C = x.shape
    Ho = (H - k) // stride + 1
    Wo = (W - k) // stride + 1
    M = B * Ho * Wo
    pats = []
    for i in range(k):
        for j in range(k):
            pats.append(x[:, i:i + stride * Ho:stride, j:j + stride * Wo:stride, :].reshape(M, C))
    p = jnp.stack(pats, axis=0)  # (k*k, M, C) bf16
    tile_m, Mp = _tile_and_pad(M, POOL_TM, 16)
    if Mp > M:
        p = jnp.pad(p, ((0, 0), (0, Mp - M), (0, 0)))
    out = pl.pallas_call(
        _max_reduce_kernel,
        out_shape=jax.ShapeDtypeStruct((Mp, C), x.dtype),
        grid=(Mp // tile_m,),
        in_specs=[pl.BlockSpec((k * k, tile_m, C), lambda i: (0, i, 0))],
        out_specs=pl.BlockSpec((tile_m, C), lambda i: (i, 0)),
        compiler_params=pltpu.CompilerParams(dimension_semantics=("parallel",)),
    )(p)
    return out[:M].reshape(B, Ho, Wo, C)


# ----------------------------------------------------------------------------
# Kernel 4: per-level LPIPS distance
#   unit-normalize features over channels, squared diff, 1x1 "lin" channel
#   weighting; per-channel accumulator, one cross-lane reduce at the end.
#   Both feature halves come from the same (2, M, C) array via two index_maps.
# ----------------------------------------------------------------------------
def _lpips_dist_kernel(fa_ref, fb_ref, w_ref, o_ref, acc_ref):
    @pl.when(pl.program_id(0) == 0)
    def _():
        acc_ref[...] = jnp.zeros_like(acc_ref)

    f1 = fa_ref[0].astype(jnp.float32)
    f2 = fb_ref[0].astype(jnp.float32)
    n1 = jnp.sqrt(jnp.sum(f1 * f1, axis=-1, keepdims=True))
    n2 = jnp.sqrt(jnp.sum(f2 * f2, axis=-1, keepdims=True))
    # lpips.normalize_tensor semantics (eps added to the norm)
    f1n = f1 * pl.reciprocal(n1 + 1e-10, approx=True)
    f2n = f2 * pl.reciprocal(n2 + 1e-10, approx=True)
    d = (f1n - f2n) ** 2
    acc_ref[...] += jnp.sum(d, axis=0, keepdims=True)   # rows only (VPU-friendly)

    @pl.when(pl.program_id(0) == pl.num_programs(0) - 1)
    def _():
        o_ref[...] = jnp.sum(acc_ref[...] * w_ref[...], axis=1, keepdims=True)


def lpips_level_sum(feat, lin_w):
    # feat: (2B, H, W, C) bf16 (first B images belong to img1); lin_w: (1, C) f32.
    twoB, H, W, C = feat.shape
    B = twoB // 2
    M = B * H * W
    f = feat.reshape(2, M, C)
    tile_m, Mp = _tile_and_pad(M, DIST_TM, 16)
    if Mp > M:
        f = jnp.pad(f, ((0, 0), (0, Mp - M), (0, 0)))
    out = pl.pallas_call(
        _lpips_dist_kernel,
        out_shape=jax.ShapeDtypeStruct((1, 1), jnp.float32),
        grid=(Mp // tile_m,),
        in_specs=[
            pl.BlockSpec((1, tile_m, C), lambda i: (0, i, 0)),   # img1 half
            pl.BlockSpec((1, tile_m, C), lambda i: (1, i, 0)),   # img2 half
            pl.BlockSpec((1, C), lambda i: (0, 0)),
        ],
        out_specs=pl.BlockSpec((1, 1), lambda i: (0, 0)),
        scratch_shapes=[pltpu.VMEM((1, C), jnp.float32)],
        compiler_params=pltpu.CompilerParams(dimension_semantics=("arbitrary",)),
    )(f, f, lin_w)
    return out[0, 0]


# ----------------------------------------------------------------------------
# Kernel 5: squared-difference sum (optional pixel L2 loss), lane-dense layout
# ----------------------------------------------------------------------------
def _sq_diff_sum_kernel(a_ref, b_ref, o_ref, acc_ref):
    @pl.when(pl.program_id(0) == 0)
    def _():
        acc_ref[...] = jnp.zeros_like(acc_ref)

    d = a_ref[...] - b_ref[...]
    acc_ref[...] += jnp.sum(d * d, axis=(0, 1), keepdims=True)

    @pl.when(pl.program_id(0) == pl.num_programs(0) - 1)
    def _():
        o_ref[...] = acc_ref[...]


def sq_diff_sum(a, b):
    # a, b: (R, L) f32 with L as the (lane-dense) pixel axis.
    R, L = a.shape
    Rp = _round_up(R, 8)
    tile_l, Lp = _tile_and_pad(L, ELEM_TL, 128)
    ap = jnp.pad(a, ((0, Rp - R), (0, Lp - L)))
    bp = jnp.pad(b, ((0, Rp - R), (0, Lp - L)))
    out = pl.pallas_call(
        _sq_diff_sum_kernel,
        out_shape=jax.ShapeDtypeStruct((1, 1), jnp.float32),
        grid=(Lp // tile_l,),
        in_specs=[
            pl.BlockSpec((Rp, tile_l), lambda j: (0, j)),
            pl.BlockSpec((Rp, tile_l), lambda j: (0, j)),
        ],
        out_specs=pl.BlockSpec((1, 1), lambda j: (0, 0)),
        scratch_shapes=[pltpu.VMEM((1, 1), jnp.float32)],
        compiler_params=pltpu.CompilerParams(dimension_semantics=("arbitrary",)),
    )(ap, bp)
    return out[0, 0]


# ----------------------------------------------------------------------------
# LPIPS (AlexNet) model glue
# ----------------------------------------------------------------------------
# LPIPS ScalingLayer constants (fixed, not learned)
_SHIFT = jnp.array([-0.030, -0.088, -0.188], jnp.float32)
_SCALE = jnp.array([0.458, 0.448, 0.450], jnp.float32)

# AlexNet feature config: (Cout, Cin, k, stride, pad)
_ALEX_CFG = [
    (64, 3, 11, 4, 2),
    (192, 64, 5, 1, 2),
    (384, 192, 3, 1, 1),
    (256, 384, 3, 1, 1),
    (256, 256, 3, 1, 1),
]
_ALEX_CHNS = [64, 192, 384, 256, 256]


def init_lpips_alex_params(key):
    # Synthetic deterministic stand-in for pretrained AlexNet + learned lin weights.
    params = {"convs": [], "lins": []}
    for (cout, cin, k, s, p) in _ALEX_CFG:
        key, k1, k2 = jax.random.split(key, 3)
        fan_in = cin * k * k
        w = jax.random.normal(k1, (cout, cin, k, k), jnp.float32) / jnp.sqrt(fan_in)
        b = 0.01 * jax.random.normal(k2, (cout,), jnp.float32)
        params["convs"].append((w, b, s, p))
    for c in _ALEX_CHNS:
        key, k1 = jax.random.split(key)
        # lin layers are 1x1 convs with non-negative weights
        params["lins"].append(jnp.abs(jax.random.normal(k1, (c,), jnp.float32)) / c)
    return params


def prepare_lpips_params(raw):
    """One-time conversion to GEMM layout: transpose, K-pad, cast weights to bf16."""
    prepared = {"convs": [], "lins": []}
    for (w, b, s, p) in raw["convs"]:
        cout, cin, kh, kw = w.shape
        K = kh * kw * cin
        Kp = _round_up(K, 128)
        wm = jnp.transpose(w, (2, 3, 1, 0)).reshape(K, cout)
        wm = jnp.pad(wm, ((0, Kp - K), (0, 0))).astype(jnp.bfloat16)
        prepared["convs"].append({
            "w": wm, "b": b.reshape(1, cout).astype(jnp.float32),
            "k": (kh, kw), "stride": s, "pad": p,
            "cin": cin, "cout": cout, "Kp": Kp,
        })
    for lw in raw["lins"]:
        prepared["lins"].append(lw.reshape(1, -1).astype(jnp.float32))
    return prepared


def preprocess_and_scale(img1, img2):
    """preprocess_images ([0,1] -> [-1,1] if min>=0, per image) fused with the
    LPIPS ScalingLayer; both images concatenated along batch. Returns NHWC bf16."""
    B, C, H, W = img1.shape
    x = jnp.concatenate([img1, img2], axis=0).astype(jnp.float32)  # (2B, C, H, W)

    def mult_add(img):
        in_01 = jnp.min(img) >= 0
        m = jnp.where(in_01, 2.0, 1.0)
        a = jnp.where(in_01, -1.0, 0.0)
        return m / _SCALE, (a - _SHIFT) / _SCALE

    m1, a1 = mult_add(img1)
    m2, a2 = mult_add(img2)
    mult_rows = jnp.concatenate([jnp.tile(m1, B), jnp.tile(m2, B)])
    add_rows = jnp.concatenate([jnp.tile(a1, B), jnp.tile(a2, B)])

    y = channel_affine_rows(x.reshape(2 * B * C, H * W), mult_rows, add_rows)
    y = y.reshape(2 * B, C, H, W)
    return jnp.transpose(y, (0, 2, 3, 1))  # NHWC bf16


def alex_features(x, params):
    convs = params["convs"]
    feats = []
    h = conv2d_relu(x, convs[0]); feats.append(h)      # relu1
    h = maxpool_nhwc(h, 3, 2)
    h = conv2d_relu(h, convs[1]); feats.append(h)      # relu2
    h = maxpool_nhwc(h, 3, 2)
    h = conv2d_relu(h, convs[2]); feats.append(h)      # relu3
    h = conv2d_relu(h, convs[3]); feats.append(h)      # relu4
    h = conv2d_relu(h, convs[4]); feats.append(h)      # relu5
    return feats


def lpips_loss(img1, img2, params, pixel_loss_weight=0.0):
    """Equivalent of LPIPSLoss.forward (spatial_average=True, normalize_input=True)."""
    x = preprocess_and_scale(img1, img2)          # (2B, H, W, 3) bf16
    feats = alex_features(x, params)              # one pass over both images
    B = img1.shape[0]

    total = jnp.float32(0.0)
    for feat, lw in zip(feats, params["lins"]):
        _, H, W, _ = feat.shape
        s = lpips_level_sum(feat, lw)
        # spatial average over (H, W) then mean over batch == mean over all rows
        total = total + s / (B * H * W)

    if pixel_loss_weight > 0:
        Bc, C, H, W = img1.shape
        mse = sq_diff_sum(img1.reshape(Bc * C, H * W).astype(jnp.float32),
                          img2.reshape(Bc * C, H * W).astype(jnp.float32)) / (Bc * C * H * W)
        total = total + pixel_loss_weight * mse
    return total


if __name__ == "__main__":
    key = jax.random.PRNGKey(0)
    kp, k1, k2 = jax.random.split(key, 3)
    params = prepare_lpips_params(init_lpips_alex_params(kp))

    # images in [0, 1], NCHW, 32x32 (smallest spatial that survives AlexNet strides)
    img1 = jax.random.uniform(k1, (2, 3, 32, 32), jnp.float32)
    img2 = jax.random.uniform(k2, (2, 3, 32, 32), jnp.float32)

    loss_fn = jax.jit(functools.partial(lpips_loss, params=params, pixel_loss_weight=0.1))
    loss = loss_fn(img1, img2)
    jax.block_until_ready(loss)
    assert loss.shape == () and bool(jnp.isfinite(loss))
    print("KERNEL_OK")
</pallas_src>

<mosaic_0001>
module attributes {stable_mosaic.version = 11 : i64} {
  func.func @_affine_kernel(%arg0: i32, %arg1: memref<16x1024xf32, #tpu.memory_space<vmem>>, %arg2: memref<16x1xf32, #tpu.memory_space<vmem>>, %arg3: memref<16x1xf32, #tpu.memory_space<vmem>>, %arg4: memref<16x1024xbf16, #tpu.memory_space<vmem>>) attributes {dimension_semantics = [#tpu.dimension_semantics<parallel>], iteration_bounds = array<i64: 1>, scalar_prefetch = 0 : i64, scratch_operands = 0 : i64, tpu.core_type = #tpu.core_type<tc>, window_params = [{transform_indices = @transform_0, window_bounds = array<i64: 16, 1024>}, {pipeline_mode = #tpu.pipeline_mode<synchronous>, transform_indices = @transform_1, window_bounds = array<i64: 16, 1>}, {pipeline_mode = #tpu.pipeline_mode<synchronous>, transform_indices = @transform_2, window_bounds = array<i64: 16, 1>}, {transform_indices = @transform_3, window_bounds = array<i64: 16, 1024>}]} {
    %c0 = arith.constant 0 : index
    %c0_0 = arith.constant 0 : index
    %0 = vector.load %arg1[%c0, %c0_0] : memref<16x1024xf32, #tpu.memory_space<vmem>>, vector<16x1024xf32>
    %c0_1 = arith.constant 0 : index
    %c0_2 = arith.constant 0 : index
    %1 = vector.load %arg2[%c0_1, %c0_2] : memref<16x1xf32, #tpu.memory_space<vmem>>, vector<16x1xf32>
    %2 = vector.broadcast %1 : vector<16x1xf32> to vector<16x1024xf32>
    %3 = arith.mulf %0, %2 : vector<16x1024xf32>
    %c0_3 = arith.constant 0 : index
    %c0_4 = arith.constant 0 : index
    %4 = vector.load %arg3[%c0_3, %c0_4] : memref<16x1xf32, #tpu.memory_space<vmem>>, vector<16x1xf32>
    %5 = vector.broadcast %4 : vector<16x1xf32> to vector<16x1024xf32>
    %6 = arith.addf %3, %5 : vector<16x1024xf32>
    %7 = arith.truncf %6 : vector<16x1024xf32> to vector<16x1024xbf16>
    %c0_5 = arith.constant 0 : index
    %c0_6 = arith.constant 0 : index
    %8 = vector.load %arg4[%c0_5, %c0_6] : memref<16x1024xbf16, #tpu.memory_space<vmem>>, vector<16x1024xbf16>
    tpu.vector_store %arg4[%c0_5, %c0_6], %7 {strides = array<i32>} : memref<16x1024xbf16, #tpu.memory_space<vmem>>, vector<16x1024xbf16>,
    return
  }
  func.func @transform_0(%arg0: i32) -> (i32, i32) {
    %c0_i32 = arith.constant 0 : i32
    %c0_i32_0 = arith.constant 0 : i32
    return %c0_i32, %arg0 : i32, i32
  }
  func.func @transform_1(%arg0: i32) -> (i32, i32) {
    %c0_i32 = arith.constant 0 : i32
    %c0_i32_0 = arith.constant 0 : i32
    %c0_i32_1 = arith.constant 0 : i32
    return %c0_i32, %c0_i32_0 : i32, i32
  }
  func.func @transform_2(%arg0: i32) -> (i32, i32) {
    %c0_i32 = arith.constant 0 : i32
    %c0_i32_0 = arith.constant 0 : i32
    %c0_i32_1 = arith.constant 0 : i32
    return %c0_i32, %c0_i32_0 : i32, i32
  }
  func.func @transform_3(%arg0: i32) -> (i32, i32) {
    %c0_i32 = arith.constant 0 : i32
    %c0_i32_0 = arith.constant 0 : i32
    return %c0_i32, %arg0 : i32, i32
  }
}

module attributes {stable_mosaic.version = 11 : i64} {
  func.func @_matmul_bias_relu_kernel(%arg0: i32, %arg1: memref<208x384xbf16, #tpu.memory_space<vmem>>, %arg2: memref<384x64xbf16, #tpu.memory_space<vmem>>, %arg3: memref<1x64xf32, #tpu.memory_space<vmem>>, %arg4: memref<208x64xbf16, #tpu.memory_space<vmem>>) attributes {dimension_semantics = [#tpu.dimension_semantics<parallel>], iteration_bounds = array<i64: 1>, scalar_prefetch = 0 : i64, scratch_operands = 0 : i64, tpu.core_type = #tpu.core_type<tc>, window_params = [{transform_indices = @transform_0, window_bounds = array<i64: 208, 384>}, {pipeline_mode = #tpu.pipeline_mode<synchronous>, transform_indices = @transform_1, window_bounds = array<i64: 384, 64>}, {pipeline_mode = #tpu.pipeline_mode<synchronous>, transform_indices = @transform_2, window_bounds = array<i64: 1, 64>}, {transform_indices = @transform_3, window_bounds = array<i64: 208, 64>}]} {
    %c0 = arith.constant 0 : index
    %c0_0 = arith.constant 0 : index
    %0 = vector.load %arg1[%c0, %c0_0] : memref<208x384xbf16, #tpu.memory_space<vmem>>, vector<208x384xbf16>
    %c0_1 = arith.constant 0 : index
    %c0_2 = arith.constant 0 : index
    %1 = vector.load %arg2[%c0_1, %c0_2] : memref<384x64xbf16, #tpu.memory_space<vmem>>, vector<384x64xbf16>
    %cst = arith.constant dense<0.000000e+00> : vector<208x64xf32>
    %2 = tpu.matmul %0, %1, %cst {dimension_numbers = #tpu.dot_dimension_numbers<[1], [0], [0], [1], [0, 0, 1, 1], [], []>} : vector<208x384xbf16>, vector<384x64xbf16>, vector<208x64xf32> -> vector<208x64xf32>
    %c0_3 = arith.constant 0 : index
    %c0_4 = arith.constant 0 : index
    %3 = vector.load %arg3[%c0_3, %c0_4] : memref<1x64xf32, #tpu.memory_space<vmem>>, vector<1x64xf32>
    %4 = vector.broadcast %3 : vector<1x64xf32> to vector<208x64xf32>
    %5 = arith.addf %2, %4 : vector<208x64xf32>
    %cst_5 = arith.constant 0.000000e+00 : f32
    %6 = vector.broadcast %cst_5 : f32 to vector<208x64xf32>
    %7 = arith.maximumf %5, %6 : vector<208x64xf32>
    %8 = arith.truncf %7 : vector<208x64xf32> to vector<208x64xbf16>
    %c0_6 = arith.constant 0 : index
    %c0_7 = arith.constant 0 : index
    %9 = vector.load %arg4[%c0_6, %c0_7] : memref<208x64xbf16, #tpu.memory_space<vmem>>, vector<208x64xbf16>
    tpu.vector_store %arg4[%c0_6, %c0_7], %8 {strides = array<i32>} : memref<208x64xbf16, #tpu.memory_space<vmem>>, vector<208x64xbf16>,
    return
  }
  func.func @transform_0(%arg0: i32) -> (i32, i32) {
    %c0_i32 = arith.constant 0 : i32
    %c0_i32_0 = arith.constant 0 : i32
    return %arg0, %c0_i32 : i32, i32
  }
  func.func @transform_1(%arg0: i32) -> (i32, i32) {
    %c0_i32 = arith.constant 0 : i32
    %c0_i32_0 = arith.constant 0 : i32
    %c0_i32_1 = arith.constant 0 : i32
    return %c0_i32, %c0_i32_0 : i32, i32
  }
  func.func @transform_2(%arg0: i32) -> (i32, i32) {
    %c0_i32 = arith.constant 0 : i32
    %c0_i32_0 = arith.constant 0 : i32
    %c0_i32_1 = arith.constant 0 : i32
    return %c0_i32, %c0_i32_0 : i32, i32
  }
  func.func @transform_3(%arg0: i32) -> (i32, i32) {
    %c0_i32 = arith.constant 0 : i32
    %c0_i32_0 = arith.constant 0 : i32
    return %arg0, %c0_i32 : i32, i32
  }
}

module attributes {stable_mosaic.version = 11 : i64} {
  func.func @_max_reduce_kernel(%arg0: i32, %arg1: memref<9x48x64xbf16, #tpu.memory_space<vmem>>, %arg2: memref<48x64xbf16, #tpu.memory_space<vmem>>) attributes {dimension_semantics = [#tpu.dimension_semantics<parallel>], iteration_bounds = array<i64: 1>, scalar_prefetch = 0 : i64, scratch_operands = 0 : i64, tpu.core_type = #tpu.core_type<tc>, window_params = [{transform_indices = @transform_0, window_bounds = array<i64: 9, 48, 64>}, {transform_indices = @transform_1, window_bounds = array<i64: 48, 64>}]} {
    %c0 = arith.constant 0 : index
    %c0_0 = arith.constant 0 : index
    %c0_1 = arith.constant 0 : index
    %0 = vector.load %arg1[%c0, %c0_0, %c0_1] : memref<9x48x64xbf16, #tpu.memory_space<vmem>>, vector<9x48x64xbf16>
    %cst = arith.constant dense<0xFF80> : vector<48x64xbf16>
    %1 = vector.multi_reduction <maximumf>, %0, %cst [0] : vector<9x48x64xbf16> to vector<48x64xbf16>
    %c0_2 = arith.constant 0 : index
    %c0_3 = arith.constant 0 : index
    %2 = vector.load %arg2[%c0_2, %c0_3] : memref<48x64xbf16, #tpu.memory_space<vmem>>, vector<48x64xbf16>
    tpu.vector_store %arg2[%c0_2, %c0_3], %1 {strides = array<i32>} : memref<48x64xbf16, #tpu.memory_space<vmem>>, vector<48x64xbf16>,
    return
  }
  func.func @transform_0(%arg0: i32) -> (i32, i32, i32) {
    %c0_i32 = arith.constant 0 : i32
    %c0_i32_0 = arith.constant 0 : i32
    %c0_i32_1 = arith.constant 0 : i32
    return %c0_i32, %arg0, %c0_i32_0 : i32, i32, i32
  }
  func.func @transform_1(%arg0: i32) -> (i32, i32) {
    %c0_i32 = arith.constant 0 : i32
    %c0_i32_0 = arith.constant 0 : i32
    return %arg0, %c0_i32 : i32, i32
  }
}

module attributes {stable_mosaic.version = 11 : i64} {
  func.func @_matmul_bias_relu_kernel(%arg0: i32, %arg1: memref<48x1664xbf16, #tpu.memory_space<vmem>>, %arg2: memref<1664x192xbf16, #tpu.memory_space<vmem>>, %arg3: memref<1x192xf32, #tpu.memory_space<vmem>>, %arg4: memref<48x192xbf16, #tpu.memory_space<vmem>>) attributes {dimension_semantics = [#tpu.dimension_semantics<parallel>], iteration_bounds = array<i64: 1>, scalar_prefetch = 0 : i64, scratch_operands = 0 : i64, tpu.core_type = #tpu.core_type<tc>, window_params = [{transform_indices = @transform_0, window_bounds = array<i64: 48, 1664>}, {pipeline_mode = #tpu.pipeline_mode<synchronous>, transform_indices = @transform_1, window_bounds = array<i64: 1664, 192>}, {pipeline_mode = #tpu.pipeline_mode<synchronous>, transform_indices = @transform_2, window_bounds = array<i64: 1, 192>}, {transform_indices = @transform_3, window_bounds = array<i64: 48, 192>}]} {
    %c0 = arith.constant 0 : index
    %c0_0 = arith.constant 0 : index
    %0 = vector.load %arg1[%c0, %c0_0] : memref<48x1664xbf16, #tpu.memory_space<vmem>>, vector<48x1664xbf16>
    %c0_1 = arith.constant 0 : index
    %c0_2 = arith.constant 0 : index
    %1 = vector.load %arg2[%c0_1, %c0_2] : memref<1664x192xbf16, #tpu.memory_space<vmem>>, vector<1664x192xbf16>
    %cst = arith.constant dense<0.000000e+00> : vector<48x192xf32>
    %2 = tpu.matmul %0, %1, %cst {dimension_numbers = #tpu.dot_dimension_numbers<[1], [0], [0], [1], [0, 0, 1, 1], [], []>} : vector<48x1664xbf16>, vector<1664x192xbf16>, vector<48x192xf32> -> vector<48x192xf32>
    %c0_3 = arith.constant 0 : index
    %c0_4 = arith.constant 0 : index
    %3 = vector.load %arg3[%c0_3, %c0_4] : memref<1x192xf32, #tpu.memory_space<vmem>>, vector<1x192xf32>
    %4 = vector.broadcast %3 : vector<1x192xf32> to vector<48x192xf32>
    %5 = arith.addf %2, %4 : vector<48x192xf32>
    %cst_5 = arith.constant 0.000000e+00 : f32
    %6 = vector.broadcast %cst_5 : f32 to vector<48x192xf32>
    %7 = arith.maximumf %5, %6 : vector<48x192xf32>
    %8 = arith.truncf %7 : vector<48x192xf32> to vector<48x192xbf16>
    %c0_6 = arith.constant 0 : index
    %c0_7 = arith.constant 0 : index
    %9 = vector.load %arg4[%c0_6, %c0_7] : memref<48x192xbf16, #tpu.memory_space<vmem>>, vector<48x192xbf16>
    tpu.vector_store %arg4[%c0_6, %c0_7], %8 {strides = array<i32>} : memref<48x192xbf16, #tpu.memory_space<vmem>>, vector<48x192xbf16>,
    return
  }
  func.func @transform_0(%arg0: i32) -> (i32, i32) {
    %c0_i32 = arith.constant 0 : i32
    %c0_i32_0 = arith.constant 0 : i32
    return %arg0, %c0_i32 : i32, i32
  }
  func.func @transform_1(%arg0: i32) -> (i32, i32) {
    %c0_i32 = arith.constant 0 : i32
    %c0_i32_0 = arith.constant 0 : i32
    %c0_i32_1 = arith.constant 0 : i32
    return %c0_i32, %c0_i32_0 : i32, i32
  }
  func.func @transform_2(%arg0: i32) -> (i32, i32) {
    %c0_i32 = arith.constant 0 : i32
    %c0_i32_0 = arith.constant 0 : i32
    %c0_i32_1 = arith.constant 0 : i32
    return %c0_i32, %c0_i32_0 : i32, i32
  }
  func.func @transform_3(%arg0: i32) -> (i32, i32) {
    %c0_i32 = arith.constant 0 : i32
    %c0_i32_0 = arith.constant 0 : i32
    return %arg0, %c0_i32 : i32, i32
  }
}

module attributes {stable_mosaic.version = 11 : i64} {
  func.func @_max_reduce_kernel(%arg0: i32, %arg1: memref<9x16x192xbf16, #tpu.memory_space<vmem>>, %arg2: memref<16x192xbf16, #tpu.memory_space<vmem>>) attributes {dimension_semantics = [#tpu.dimension_semantics<parallel>], iteration_bounds = array<i64: 1>, scalar_prefetch = 0 : i64, scratch_operands = 0 : i64, tpu.core_type = #tpu.core_type<tc>, window_params = [{transform_indices = @transform_0, window_bounds = array<i64: 9, 16, 192>}, {transform_indices = @transform_1, window_bounds = array<i64: 16, 192>}]} {
    %c0 = arith.constant 0 : index
    %c0_0 = arith.constant 0 : index
    %c0_1 = arith.constant 0 : index
    %0 = vector.load %arg1[%c0, %c0_0, %c0_1] : memref<9x16x192xbf16, #tpu.memory_space<vmem>>, vector<9x16x192xbf16>
    %cst = arith.constant dense<0xFF80> : vector<16x192xbf16>
    %1 = vector.multi_reduction <maximumf>, %0, %cst [0] : vector<9x16x192xbf16> to vector<16x192xbf16>
    %c0_2 = arith.constant 0 : index
    %c0_3 = arith.constant 0 : index
    %2 = vector.load %arg2[%c0_2, %c0_3] : memref<16x192xbf16, #tpu.memory_space<vmem>>, vector<16x192xbf16>
    tpu.vector_store %arg2[%c0_2, %c0_3], %1 {strides = array<i32>} : memref<16x192xbf16, #tpu.memory_space<vmem>>, vector<16x192xbf16>,
    return
  }
  func.func @transform_0(%arg0: i32) -> (i32, i32, i32) {
    %c0_i32 = arith.constant 0 : i32
    %c0_i32_0 = arith.constant 0 : i32
    %c0_i32_1 = arith.constant 0 : i32
    return %c0_i32, %arg0, %c0_i32_0 : i32, i32, i32
  }
  func.func @transform_1(%arg0: i32) -> (i32, i32) {
    %c0_i32 = arith.constant 0 : i32
    %c0_i32_0 = arith.constant 0 : i32
    return %arg0, %c0_i32 : i32, i32
  }
}

module attributes {stable_mosaic.version = 11 : i64} {
  func.func @_matmul_bias_relu_kernel(%arg0: i32, %arg1: memref<16x1792xbf16, #tpu.memory_space<vmem>>, %arg2: memref<1792x384xbf16, #tpu.memory_space<vmem>>, %arg3: memref<1x384xf32, #tpu.memory_space<vmem>>, %arg4: memref<16x384xbf16, #tpu.memory_space<vmem>>) attributes {dimension_semantics = [#tpu.dimension_semantics<parallel>], iteration_bounds = array<i64: 1>, scalar_prefetch = 0 : i64, scratch_operands = 0 : i64, tpu.core_type = #tpu.core_type<tc>, window_params = [{transform_indices = @transform_0, window_bounds = array<i64: 16, 1792>}, {pipeline_mode = #tpu.pipeline_mode<synchronous>, transform_indices = @transform_1, window_bounds = array<i64: 1792, 384>}, {pipeline_mode = #tpu.pipeline_mode<synchronous>, transform_indices = @transform_2, window_bounds = array<i64: 1, 384>}, {transform_indices = @transform_3, window_bounds = array<i64: 16, 384>}]} {
    %c0 = arith.constant 0 : index
    %c0_0 = arith.constant 0 : index
    %0 = vector.load %arg1[%c0, %c0_0] : memref<16x1792xbf16, #tpu.memory_space<vmem>>, vector<16x1792xbf16>
    %c0_1 = arith.constant 0 : index
    %c0_2 = arith.constant 0 : index
    %1 = vector.load %arg2[%c0_1, %c0_2] : memref<1792x384xbf16, #tpu.memory_space<vmem>>, vector<1792x384xbf16>
    %cst = arith.constant dense<0.000000e+00> : vector<16x384xf32>
    %2 = tpu.matmul %0, %1, %cst {dimension_numbers = #tpu.dot_dimension_numbers<[1], [0], [0], [1], [0, 0, 1, 1], [], []>} : vector<16x1792xbf16>, vector<1792x384xbf16>, vector<16x384xf32> -> vector<16x384xf32>
    %c0_3 = arith.constant 0 : index
    %c0_4 = arith.constant 0 : index
    %3 = vector.load %arg3[%c0_3, %c0_4] : memref<1x384xf32, #tpu.memory_space<vmem>>, vector<1x384xf32>
    %4 = vector.broadcast %3 : vector<1x384xf32> to vector<16x384xf32>
    %5 = arith.addf %2, %4 : vector<16x384xf32>
    %cst_5 = arith.constant 0.000000e+00 : f32
    %6 = vector.broadcast %cst_5 : f32 to vector<16x384xf32>
    %7 = arith.maximumf %5, %6 : vector<16x384xf32>
    %8 = arith.truncf %7 : vector<16x384xf32> to vector<16x384xbf16>
    %c0_6 = arith.constant 0 : index
    %c0_7 = arith.constant 0 : index
    %9 = vector.load %arg4[%c0_6, %c0_7] : memref<16x384xbf16, #tpu.memory_space<vmem>>, vector<16x384xbf16>
    tpu.vector_store %arg4[%c0_6, %c0_7], %8 {strides = array<i32>} : memref<16x384xbf16, #tpu.memory_space<vmem>>, vector<16x384xbf16>,
    return
  }
  func.func @transform_0(%arg0: i32) -> (i32, i32) {
    %c0_i32 = arith.constant 0 : i32
    %c0_i32_0 = arith.constant 0 : i32
    return %arg0, %c0_i32 : i32, i32
  }
  func.func @transform_1(%arg0: i32) -> (i32, i32) {
    %c0_i32 = arith.constant 0 : i32
    %c0_i32_0 = arith.constant 0 : i32
    %c0_i32_1 = arith.constant 0 : i32
    return %c0_i32, %c0_i32_0 : i32, i32
  }
  func.func @transform_2(%arg0: i32) -> (i32, i32) {
    %c0_i32 = arith.constant 0 : i32
    %c0_i32_0 = arith.constant 0 : i32
    %c0_i32_1 = arith.constant 0 : i32
    return %c0_i32, %c0_i32_0 : i32, i32
  }
  func.func @transform_3(%arg0: i32) -> (i32, i32) {
    %c0_i32 = arith.constant 0 : i32
    %c0_i32_0 = arith.constant 0 : i32
    return %arg0, %c0_i32 : i32, i32
  }
}

module attributes {stable_mosaic.version = 11 : i64} {
  func.func @_matmul_bias_relu_kernel(%arg0: i32, %arg1: memref<16x3456xbf16, #tpu.memory_space<vmem>>, %arg2: memref<3456x256xbf16, #tpu.memory_space<vmem>>, %arg3: memref<1x256xf32, #tpu.memory_space<vmem>>, %arg4: memref<16x256xbf16, #tpu.memory_space<vmem>>) attributes {dimension_semantics = [#tpu.dimension_semantics<parallel>], iteration_bounds = array<i64: 1>, scalar_prefetch = 0 : i64, scratch_operands = 0 : i64, tpu.core_type = #tpu.core_type<tc>, window_params = [{transform_indices = @transform_0, window_bounds = array<i64: 16, 3456>}, {pipeline_mode = #tpu.pipeline_mode<synchronous>, transform_indices = @transform_1, window_bounds = array<i64: 3456, 256>}, {pipeline_mode = #tpu.pipeline_mode<synchronous>, transform_indices = @transform_2, window_bounds = array<i64: 1, 256>}, {transform_indices = @transform_3, window_bounds = array<i64: 16, 256>}]} {
    %c0 = arith.constant 0 : index
    %c0_0 = arith.constant 0 : index
    %0 = vector.load %arg1[%c0, %c0_0] : memref<16x3456xbf16, #tpu.memory_space<vmem>>, vector<16x3456xbf16>
    %c0_1 = arith.constant 0 : index
    %c0_2 = arith.constant 0 : index
    %1 = vector.load %arg2[%c0_1, %c0_2] : memref<3456x256xbf16, #tpu.memory_space<vmem>>, vector<3456x256xbf16>
    %cst = arith.constant dense<0.000000e+00> : vector<16x256xf32>
    %2 = tpu.matmul %0, %1, %cst {dimension_numbers = #tpu.dot_dimension_numbers<[1], [0], [0], [1], [0, 0, 1, 1], [], []>} : vector<16x3456xbf16>, vector<3456x256xbf16>, vector<16x256xf32> -> vector<16x256xf32>
    %c0_3 = arith.constant 0 : index
    %c0_4 = arith.constant 0 : index
    %3 = vector.load %arg3[%c0_3, %c0_4] : memref<1x256xf32, #tpu.memory_space<vmem>>, vector<1x256xf32>
    %4 = vector.broadcast %3 : vector<1x256xf32> to vector<16x256xf32>
    %5 = arith.addf %2, %4 : vector<16x256xf32>
    %cst_5 = arith.constant 0.000000e+00 : f32
    %6 = vector.broadcast %cst_5 : f32 to vector<16x256xf32>
    %7 = arith.maximumf %5, %6 : vector<16x256xf32>
    %8 = arith.truncf %7 : vector<16x256xf32> to vector<16x256xbf16>
    %c0_6 = arith.constant 0 : index
    %c0_7 = arith.constant 0 : index
    %9 = vector.load %arg4[%c0_6, %c0_7] : memref<16x256xbf16, #tpu.memory_space<vmem>>, vector<16x256xbf16>
    tpu.vector_store %arg4[%c0_6, %c0_7], %8 {strides = array<i32>} : memref<16x256xbf16, #tpu.memory_space<vmem>>, vector<16x256xbf16>,
    return
  }
  func.func @transform_0(%arg0: i32) -> (i32, i32) {
    %c0_i32 = arith.constant 0 : i32
    %c0_i32_0 = arith.constant 0 : i32
    return %arg0, %c0_i32 : i32, i32
  }
  func.func @transform_1(%arg0: i32) -> (i32, i32) {
    %c0_i32 = arith.constant 0 : i32
    %c0_i32_0 = arith.constant 0 : i32
    %c0_i32_1 = arith.constant 0 : i32
    return %c0_i32, %c0_i32_0 : i32, i32
  }
  func.func @transform_2(%arg0: i32) -> (i32, i32) {
    %c0_i32 = arith.constant 0 : i32
    %c0_i32_0 = arith.constant 0 : i32
    %c0_i32_1 = arith.constant 0 : i32
    return %c0_i32, %c0_i32_0 : i32, i32
  }
  func.func @transform_3(%arg0: i32) -> (i32, i32) {
    %c0_i32 = arith.constant 0 : i32
    %c0_i32_0 = arith.constant 0 : i32
    return %arg0, %c0_i32 : i32, i32
  }
}

module attributes {stable_mosaic.version = 11 : i64} {
  func.func @_matmul_bias_relu_kernel(%arg0: i32, %arg1: memref<16x2304xbf16, #tpu.memory_space<vmem>>, %arg2: memref<2304x256xbf16, #tpu.memory_space<vmem>>, %arg3: memref<1x256xf32, #tpu.memory_space<vmem>>, %arg4: memref<16x256xbf16, #tpu.memory_space<vmem>>) attributes {dimension_semantics = [#tpu.dimension_semantics<parallel>], iteration_bounds = array<i64: 1>, scalar_prefetch = 0 : i64, scratch_operands = 0 : i64, tpu.core_type = #tpu.core_type<tc>, window_params = [{transform_indices = @transform_0, window_bounds = array<i64: 16, 2304>}, {pipeline_mode = #tpu.pipeline_mode<synchronous>, transform_indices = @transform_1, window_bounds = array<i64: 2304, 256>}, {pipeline_mode = #tpu.pipeline_mode<synchronous>, transform_indices = @transform_2, window_bounds = array<i64: 1, 256>}, {transform_indices = @transform_3, window_bounds = array<i64: 16, 256>}]} {
    %c0 = arith.constant 0 : index
    %c0_0 = arith.constant 0 : index
    %0 = vector.load %arg1[%c0, %c0_0] : memref<16x2304xbf16, #tpu.memory_space<vmem>>, vector<16x2304xbf16>
    %c0_1 = arith.constant 0 : index
    %c0_2 = arith.constant 0 : index
    %1 = vector.load %arg2[%c0_1, %c0_2] : memref<2304x256xbf16, #tpu.memory_space<vmem>>, vector<2304x256xbf16>
    %cst = arith.constant dense<0.000000e+00> : vector<16x256xf32>
    %2 = tpu.matmul %0, %1, %cst {dimension_numbers = #tpu.dot_dimension_numbers<[1], [0], [0], [1], [0, 0, 1, 1], [], []>} : vector<16x2304xbf16>, vector<2304x256xbf16>, vector<16x256xf32> -> vector<16x256xf32>
    %c0_3 = arith.constant 0 : index
    %c0_4 = arith.constant 0 : index
    %3 = vector.load %arg3[%c0_3, %c0_4] : memref<1x256xf32, #tpu.memory_space<vmem>>, vector<1x256xf32>
    %4 = vector.broadcast %3 : vector<1x256xf32> to vector<16x256xf32>
    %5 = arith.addf %2, %4 : vector<16x256xf32>
    %cst_5 = arith.constant 0.000000e+00 : f32
    %6 = vector.broadcast %cst_5 : f32 to vector<16x256xf32>
    %7 = arith.maximumf %5, %6 : vector<16x256xf32>
    %8 = arith.truncf %7 : vector<16x256xf32> to vector<16x256xbf16>
    %c0_6 = arith.constant 0 : index
    %c0_7 = arith.constant 0 : index
    %9 = vector.load %arg4[%c0_6, %c0_7] : memref<16x256xbf16, #tpu.memory_space<vmem>>, vector<16x256xbf16>
    tpu.vector_store %arg4[%c0_6, %c0_7], %8 {strides = array<i32>} : memref<16x256xbf16, #tpu.memory_space<vmem>>, vector<16x256xbf16>,
    return
  }
  func.func @transform_0(%arg0: i32) -> (i32, i32) {
    %c0_i32 = arith.constant 0 : i32
    %c0_i32_0 = arith.constant 0 : i32
    return %arg0, %c0_i32 : i32, i32
  }
  func.func @transform_1(%arg0: i32) -> (i32, i32) {
    %c0_i32 = arith.constant 0 : i32
    %c0_i32_0 = arith.constant 0 : i32
    %c0_i32_1 = arith.constant 0 : i32
    return %c0_i32, %c0_i32_0 : i32, i32
  }
  func.func @transform_2(%arg0: i32) -> (i32, i32) {
    %c0_i32 = arith.constant 0 : i32
    %c0_i32_0 = arith.constant 0 : i32
    %c0_i32_1 = arith.constant 0 : i32
    return %c0_i32, %c0_i32_0 : i32, i32
  }
  func.func @transform_3(%arg0: i32) -> (i32, i32) {
    %c0_i32 = arith.constant 0 : i32
    %c0_i32_0 = arith.constant 0 : i32
    return %arg0, %c0_i32 : i32, i32
  }
}

module attributes {stable_mosaic.version = 11 : i64} {
  func.func @_lpips_dist_kernel(%arg0: i32, %arg1: memref<1x16x256xbf16, #tpu.memory_space<vmem>>, %arg2: memref<1x16x256xbf16, #tpu.memory_space<vmem>>, %arg3: memref<1x256xf32, #tpu.memory_space<vmem>>, %arg4: memref<1x1xf32, #tpu.memory_space<vmem>>, %arg5: memref<1x256xf32, #tpu.memory_space<vmem>>) attributes {dimension_semantics = [#tpu.dimension_semantics<arbitrary>], iteration_bounds = array<i64: 1>, scalar_prefetch = 0 : i64, scratch_operands = 1 : i64, tpu.core_type = #tpu.core_type<tc>, window_params = [{transform_indices = @transform_0, window_bounds = array<i64: 1, 16, 256>}, {transform_indices = @transform_1, window_bounds = array<i64: 1, 16, 256>}, {pipeline_mode = #tpu.pipeline_mode<synchronous>, transform_indices = @transform_2, window_bounds = array<i64: 1, 256>}, {pipeline_mode = #tpu.pipeline_mode<synchronous>, transform_indices = @transform_3, window_bounds = array<i64: 1, 1>}]} {
    %c0_i32 = arith.constant 0 : i32
    %0 = arith.cmpi eq, %arg0, %c0_i32 : i32
    %1 = arith.extui %0 : i1 to i32
    %c0_i32_0 = arith.constant 0 : i32
    %2 = arith.cmpi ne, %1, %c0_i32_0 : i32
    scf.if %2 {
      %cst_16 = arith.constant 0.000000e+00 : f32
      %37 = vector.broadcast %cst_16 : f32 to vector<1x256xf32>
      %c0_17 = arith.constant 0 : index
      %c0_18 = arith.constant 0 : index
      %38 = vector.load %arg5[%c0_17, %c0_18] : memref<1x256xf32, #tpu.memory_space<vmem>>, vector<1x256xf32>
      tpu.vector_store %arg5[%c0_17, %c0_18], %37 {strides = array<i32>} : memref<1x256xf32, #tpu.memory_space<vmem>>, vector<1x256xf32>,
    } else {
    }
    %c0 = arith.constant 0 : index
    %c0_1 = arith.constant 0 : index
    %c0_2 = arith.constant 0 : index
    %3 = vector.load %arg1[%c0, %c0_1, %c0_2] : memref<1x16x256xbf16, #tpu.memory_space<vmem>>, vector<1x16x256xbf16>
    %4 = vector.shape_cast %3 : vector<1x16x256xbf16> to vector<16x256xbf16>
    %5 = arith.extf %4 : vector<16x256xbf16> to vector<16x256xf32>
    %c0_3 = arith.constant 0 : index
    %c0_4 = arith.constant 0 : index
    %c0_5 = arith.constant 0 : index
    %6 = vector.load %arg2[%c0_3, %c0_4, %c0_5] : memref<1x16x256xbf16, #tpu.memory_space<vmem>>, vector<1x16x256xbf16>
    %7 = vector.shape_cast %6 : vector<1x16x256xbf16> to vector<16x256xbf16>
    %8 = arith.extf %7 : vector<16x256xbf16> to vector<16x256xf32>
    %9 = arith.mulf %5, %5 : vector<16x256xf32>
    %cst = arith.constant dense<0.000000e+00> : vector<16xf32>
    %10 = vector.multi_reduction <add>, %9, %cst [1] : vector<16x256xf32> to vector<16xf32>
    %11 = vector.shape_cast %10 : vector<16xf32> to vector<16x1xf32>
    %12 = math.sqrt %11 : vector<16x1xf32>
    %13 = arith.mulf %8, %8 : vector<16x256xf32>
    %cst_6 = arith.constant dense<0.000000e+00> : vector<16xf32>
    %14 = vector.multi_reduction <add>, %13, %cst_6 [1] : vector<16x256xf32> to vector<16xf32>
    %15 = vector.shape_cast %14 : vector<16xf32> to vector<16x1xf32>
    %16 = math.sqrt %15 : vector<16x1xf32>
    %cst_7 = arith.constant 1.000000e-10 : f32
    %17 = vector.broadcast %cst_7 : f32 to vector<16x1xf32>
    %18 = arith.addf %12, %17 : vector<16x1xf32>
    %19 = tpu.reciprocal %18 {approx = true} : vector<16x1xf32> -> vector<16x1xf32>
    %20 = vector.broadcast %19 : vector<16x1xf32> to vector<16x256xf32>
    %21 = arith.mulf %5, %20 : vector<16x256xf32>
    %cst_8 = arith.constant 1.000000e-10 : f32
    %22 = vector.broadcast %cst_8 : f32 to vector<16x1xf32>
    %23 = arith.addf %16, %22 : vector<16x1xf32>
    %24 = tpu.reciprocal %23 {approx = true} : vector<16x1xf32> -> vector<16x1xf32>
    %25 = vector.broadcast %24 : vector<16x1xf32> to vector<16x256xf32>
    %26 = arith.mulf %8, %25 : vector<16x256xf32>
    %27 = arith.subf %21, %26 : vector<16x256xf32>
    %28 = arith.mulf %27, %27 : vector<16x256xf32>
    %c0_9 = arith.constant 0 : index
    %c0_10 = arith.constant 0 : index
    %29 = vector.load %arg5[%c0_9, %c0_10] : memref<1x256xf32, #tpu.memory_space<vmem>>, vector<1x256xf32>
    %cst_11 = arith.constant dense<0.000000e+00> : vector<256xf32>
    %30 = vector.multi_reduction <add>, %28, %cst_11 [0] : vector<16x256xf32> to vector<256xf32>
    %31 = vector.shape_cast %30 : vector<256xf32> to vector<1x256xf32>
    %32 = arith.addf %29, %31 : vector<1x256xf32>
    %c0_12 = arith.constant 0 : index
    %c0_13 = arith.constant 0 : index
    %33 = vector.load %arg5[%c0_12, %c0_13] : memref<1x256xf32, #tpu.memory_space<vmem>>, vector<1x256xf32>
    tpu.vector_store %arg5[%c0_12, %c0_13], %32 {strides = array<i32>} : memref<1x256xf32, #tpu.memory_space<vmem>>, vector<1x256xf32>,
    %c0_i32_14 = arith.constant 0 : i32
    %34 = arith.cmpi eq, %arg0, %c0_i32_14 : i32
    %35 = arith.extui %34 : i1 to i32
    %c0_i32_15 = arith.constant 0 : i32
    %36 = arith.cmpi ne, %35, %c0_i32_15 : i32
    scf.if %36 {
      %c0_16 = arith.constant 0 : index
      %c0_17 = arith.constant 0 : index
      %37 = vector.load %arg5[%c0_16, %c0_17] : memref<1x256xf32, #tpu.memory_space<vmem>>, vector<1x256xf32>
      %c0_18 = arith.constant 0 : index
      %c0_19 = arith.constant 0 : index
      %38 = vector.load %arg3[%c0_18, %c0_19] : memref<1x256xf32, #tpu.memory_space<vmem>>, vector<1x256xf32>
      %39 = arith.mulf %37, %38 : vector<1x256xf32>
      %cst_20 = arith.constant dense<0.000000e+00> : vector<1xf32>
      %40 = vector.multi_reduction <add>, %39, %cst_20 [1] : vector<1x256xf32> to vector<1xf32>
      %41 = vector.shape_cast %40 : vector<1xf32> to vector<1x1xf32>
      %c0_21 = arith.constant 0 : index
      %c0_22 = arith.constant 0 : index
      %42 = vector.load %arg4[%c0_21, %c0_22] : memref<1x1xf32, #tpu.memory_space<vmem>>, vector<1x1xf32>
      tpu.vector_store %arg4[%c0_21, %c0_22], %41 {strides = array<i32>} : memref<1x1xf32, #tpu.memory_space<vmem>>, vector<1x1xf32>,
    } else {
    }
    return
  }
  func.func @transform_0(%arg0: i32) -> (i32, i32, i32) {
    %c0_i32 = arith.constant 0 : i32
    %c0_i32_0 = arith.constant 0 : i32
    %c0_i32_1 = arith.constant 0 : i32
    return %c0_i32, %arg0, %c0_i32_0 : i32, i32, i32
  }
  func.func @transform_1(%arg0: i32) -> (i32, i32, i32) {
    %c1_i32 = arith.constant 1 : i32
    %c0_i32 = arith.constant 0 : i32
    %c0_i32_0 = arith.constant 0 : i32
    return %c1_i32, %arg0, %c0_i32 : i32, i32, i32
  }
  func.func @transform_2(%arg0: i32) -> (i32, i32) {
    %c0_i32 = arith.constant 0 : i32
    %c0_i32_0 = arith.constant 0 : i32
    %c0_i32_1 = arith.constant 0 : i32
    return %c0_i32, %c0_i32_0 : i32, i32
  }
  func.func @transform_3(%arg0: i32) -> (i32, i32) {
    %c0_i32 = arith.constant 0 : i32
    %c0_i32_0 = arith.constant 0 : i32
    %c0_i32_1 = arith.constant 0 : i32
    return %c0_i32, %c0_i32_0 : i32, i32
  }
}

module attributes {stable_mosaic.version = 11 : i64} {
  func.func @_lpips_dist_kernel(%arg0: i32, %arg1: memref<1x16x384xbf16, #tpu.memory_space<vmem>>, %arg2: memref<1x16x384xbf16, #tpu.memory_space<vmem>>, %arg3: memref<1x384xf32, #tpu.memory_space<vmem>>, %arg4: memref<1x1xf32, #tpu.memory_space<vmem>>, %arg5: memref<1x384xf32, #tpu.memory_space<vmem>>) attributes {dimension_semantics = [#tpu.dimension_semantics<arbitrary>], iteration_bounds = array<i64: 1>, scalar_prefetch = 0 : i64, scratch_operands = 1 : i64, tpu.core_type = #tpu.core_type<tc>, window_params = [{transform_indices = @transform_0, window_bounds = array<i64: 1, 16, 384>}, {transform_indices = @transform_1, window_bounds = array<i64: 1, 16, 384>}, {pipeline_mode = #tpu.pipeline_mode<synchronous>, transform_indices = @transform_2, window_bounds = array<i64: 1, 384>}, {pipeline_mode = #tpu.pipeline_mode<synchronous>, transform_indices = @transform_3, window_bounds = array<i64: 1, 1>}]} {
    %c0_i32 = arith.constant 0 : i32
    %0 = arith.cmpi eq, %arg0, %c0_i32 : i32
    %1 = arith.extui %0 : i1 to i32
    %c0_i32_0 = arith.constant 0 : i32
    %2 = arith.cmpi ne, %1, %c0_i32_0 : i32
    scf.if %2 {
      %cst_16 = arith.constant 0.000000e+00 : f32
      %37 = vector.broadcast %cst_16 : f32 to vector<1x384xf32>
      %c0_17 = arith.constant 0 : index
      %c0_18 = arith.constant 0 : index
      %38 = vector.load %arg5[%c0_17, %c0_18] : memref<1x384xf32, #tpu.memory_space<vmem>>, vector<1x384xf32>
      tpu.vector_store %arg5[%c0_17, %c0_18], %37 {strides = array<i32>} : memref<1x384xf32, #tpu.memory_space<vmem>>, vector<1x384xf32>,
    } else {
    }
    %c0 = arith.constant 0 : index
    %c0_1 = arith.constant 0 : index
    %c0_2 = arith.constant 0 : index
    %3 = vector.load %arg1[%c0, %c0_1, %c0_2] : memref<1x16x384xbf16, #tpu.memory_space<vmem>>, vector<1x16x384xbf16>
    %4 = vector.shape_cast %3 : vector<1x16x384xbf16> to vector<16x384xbf16>
    %5 = arith.extf %4 : vector<16x384xbf16> to vector<16x384xf32>
    %c0_3 = arith.constant 0 : index
    %c0_4 = arith.constant 0 : index
    %c0_5 = arith.constant 0 : index
    %6 = vector.load %arg2[%c0_3, %c0_4, %c0_5] : memref<1x16x384xbf16, #tpu.memory_space<vmem>>, vector<1x16x384xbf16>
    %7 = vector.shape_cast %6 : vector<1x16x384xbf16> to vector<16x384xbf16>
    %8 = arith.extf %7 : vector<16x384xbf16> to vector<16x384xf32>
    %9 = arith.mulf %5, %5 : vector<16x384xf32>
    %cst = arith.constant dense<0.000000e+00> : vector<16xf32>
    %10 = vector.multi_reduction <add>, %9, %cst [1] : vector<16x384xf32> to vector<16xf32>
    %11 = vector.shape_cast %10 : vector<16xf32> to vector<16x1xf32>
    %12 = math.sqrt %11 : vector<16x1xf32>
    %13 = arith.mulf %8, %8 : vector<16x384xf32>
    %cst_6 = arith.constant dense<0.000000e+00> : vector<16xf32>
    %14 = vector.multi_reduction <add>, %13, %cst_6 [1] : vector<16x384xf32> to vector<16xf32>
    %15 = vector.shape_cast %14 : vector<16xf32> to vector<16x1xf32>
    %16 = math.sqrt %15 : vector<16x1xf32>
    %cst_7 = arith.constant 1.000000e-10 : f32
    %17 = vector.broadcast %cst_7 : f32 to vector<16x1xf32>
    %18 = arith.addf %12, %17 : vector<16x1xf32>
    %19 = tpu.reciprocal %18 {approx = true} : vector<16x1xf32> -> vector<16x1xf32>
    %20 = vector.broadcast %19 : vector<16x1xf32> to vector<16x384xf32>
    %21 = arith.mulf %5, %20 : vector<16x384xf32>
    %cst_8 = arith.constant 1.000000e-10 : f32
    %22 = vector.broadcast %cst_8 : f32 to vector<16x1xf32>
    %23 = arith.addf %16, %22 : vector<16x1xf32>
    %24 = tpu.reciprocal %23 {approx = true} : vector<16x1xf32> -> vector<16x1xf32>
    %25 = vector.broadcast %24 : vector<16x1xf32> to vector<16x384xf32>
    %26 = arith.mulf %8, %25 : vector<16x384xf32>
    %27 = arith.subf %21, %26 : vector<16x384xf32>
    %28 = arith.mulf %27, %27 : vector<16x384xf32>
    %c0_9 = arith.constant 0 : index
    %c0_10 = arith.constant 0 : index
    %29 = vector.load %arg5[%c0_9, %c0_10] : memref<1x384xf32, #tpu.memory_space<vmem>>, vector<1x384xf32>
    %cst_11 = arith.constant dense<0.000000e+00> : vector<384xf32>
    %30 = vector.multi_reduction <add>, %28, %cst_11 [0] : vector<16x384xf32> to vector<384xf32>
    %31 = vector.shape_cast %30 : vector<384xf32> to vector<1x384xf32>
    %32 = arith.addf %29, %31 : vector<1x384xf32>
    %c0_12 = arith.constant 0 : index
    %c0_13 = arith.constant 0 : index
    %33 = vector.load %arg5[%c0_12, %c0_13] : memref<1x384xf32, #tpu.memory_space<vmem>>, vector<1x384xf32>
    tpu.vector_store %arg5[%c0_12, %c0_13], %32 {strides = array<i32>} : memref<1x384xf32, #tpu.memory_space<vmem>>, vector<1x384xf32>,
    %c0_i32_14 = arith.constant 0 : i32
    %34 = arith.cmpi eq, %arg0, %c0_i32_14 : i32
    %35 = arith.extui %34 : i1 to i32
    %c0_i32_15 = arith.constant 0 : i32
    %36 = arith.cmpi ne, %35, %c0_i32_15 : i32
    scf.if %36 {
      %c0_16 = arith.constant 0 : index
      %c0_17 = arith.constant 0 : index
      %37 = vector.load %arg5[%c0_16, %c0_17] : memref<1x384xf32, #tpu.memory_space<vmem>>, vector<1x384xf32>
      %c0_18 = arith.constant 0 : index
      %c0_19 = arith.constant 0 : index
      %38 = vector.load %arg3[%c0_18, %c0_19] : memref<1x384xf32, #tpu.memory_space<vmem>>, vector<1x384xf32>
      %39 = arith.mulf %37, %38 : vector<1x384xf32>
      %cst_20 = arith.constant dense<0.000000e+00> : vector<1xf32>
      %40 = vector.multi_reduction <add>, %39, %cst_20 [1] : vector<1x384xf32> to vector<1xf32>
      %41 = vector.shape_cast %40 : vector<1xf32> to vector<1x1xf32>
      %c0_21 = arith.constant 0 : index
      %c0_22 = arith.constant 0 : index
      %42 = vector.load %arg4[%c0_21, %c0_22] : memref<1x1xf32, #tpu.memory_space<vmem>>, vector<1x1xf32>
      tpu.vector_store %arg4[%c0_21, %c0_22], %41 {strides = array<i32>} : memref<1x1xf32, #tpu.memory_space<vmem>>, vector<1x1xf32>,
    } else {
    }
    return
  }
  func.func @transform_0(%arg0: i32) -> (i32, i32, i32) {
    %c0_i32 = arith.constant 0 : i32
    %c0_i32_0 = arith.constant 0 : i32
    %c0_i32_1 = arith.constant 0 : i32
    return %c0_i32, %arg0, %c0_i32_0 : i32, i32, i32
  }
  func.func @transform_1(%arg0: i32) -> (i32, i32, i32) {
    %c1_i32 = arith.constant 1 : i32
    %c0_i32 = arith.constant 0 : i32
    %c0_i32_0 = arith.constant 0 : i32
    return %c1_i32, %arg0, %c0_i32 : i32, i32, i32
  }
  func.func @transform_2(%arg0: i32) -> (i32, i32) {
    %c0_i32 = arith.constant 0 : i32
    %c0_i32_0 = arith.constant 0 : i32
    %c0_i32_1 = arith.constant 0 : i32
    return %c0_i32, %c0_i32_0 : i32, i32
  }
  func.func @transform_3(%arg0: i32) -> (i32, i32) {
    %c0_i32 = arith.constant 0 : i32
    %c0_i32_0 = arith.constant 0 : i32
    %c0_i32_1 = arith.constant 0 : i32
    return %c0_i32, %c0_i32_0 : i32, i32
  }
}

module attributes {stable_mosaic.version = 11 : i64} {
  func.func @_lpips_dist_kernel(%arg0: i32, %arg1: memref<1x32x192xbf16, #tpu.memory_space<vmem>>, %arg2: memref<1x32x192xbf16, #tpu.memory_space<vmem>>, %arg3: memref<1x192xf32, #tpu.memory_space<vmem>>, %arg4: memref<1x1xf32, #tpu.memory_space<vmem>>, %arg5: memref<1x192xf32, #tpu.memory_space<vmem>>) attributes {dimension_semantics = [#tpu.dimension_semantics<arbitrary>], iteration_bounds = array<i64: 1>, scalar_prefetch = 0 : i64, scratch_operands = 1 : i64, tpu.core_type = #tpu.core_type<tc>, window_params = [{transform_indices = @transform_0, window_bounds = array<i64: 1, 32, 192>}, {transform_indices = @transform_1, window_bounds = array<i64: 1, 32, 192>}, {pipeline_mode = #tpu.pipeline_mode<synchronous>, transform_indices = @transform_2, window_bounds = array<i64: 1, 192>}, {pipeline_mode = #tpu.pipeline_mode<synchronous>, transform_indices = @transform_3, window_bounds = array<i64: 1, 1>}]} {
    %c0_i32 = arith.constant 0 : i32
    %0 = arith.cmpi eq, %arg0, %c0_i32 : i32
    %1 = arith.extui %0 : i1 to i32
    %c0_i32_0 = arith.constant 0 : i32
    %2 = arith.cmpi ne, %1, %c0_i32_0 : i32
    scf.if %2 {
      %cst_16 = arith.constant 0.000000e+00 : f32
      %37 = vector.broadcast %cst_16 : f32 to vector<1x192xf32>
      %c0_17 = arith.constant 0 : index
      %c0_18 = arith.constant 0 : index
      %38 = vector.load %arg5[%c0_17, %c0_18] : memref<1x192xf32, #tpu.memory_space<vmem>>, vector<1x192xf32>
      tpu.vector_store %arg5[%c0_17, %c0_18], %37 {strides = array<i32>} : memref<1x192xf32, #tpu.memory_space<vmem>>, vector<1x192xf32>,
    } else {
    }
    %c0 = arith.constant 0 : index
    %c0_1 = arith.constant 0 : index
    %c0_2 = arith.constant 0 : index
    %3 = vector.load %arg1[%c0, %c0_1, %c0_2] : memref<1x32x192xbf16, #tpu.memory_space<vmem>>, vector<1x32x192xbf16>
    %4 = vector.shape_cast %3 : vector<1x32x192xbf16> to vector<32x192xbf16>
    %5 = arith.extf %4 : vector<32x192xbf16> to vector<32x192xf32>
    %c0_3 = arith.constant 0 : index
    %c0_4 = arith.constant 0 : index
    %c0_5 = arith.constant 0 : index
    %6 = vector.load %arg2[%c0_3, %c0_4, %c0_5] : memref<1x32x192xbf16, #tpu.memory_space<vmem>>, vector<1x32x192xbf16>
    %7 = vector.shape_cast %6 : vector<1x32x192xbf16> to vector<32x192xbf16>
    %8 = arith.extf %7 : vector<32x192xbf16> to vector<32x192xf32>
    %9 = arith.mulf %5, %5 : vector<32x192xf32>
    %cst = arith.constant dense<0.000000e+00> : vector<32xf32>
    %10 = vector.multi_reduction <add>, %9, %cst [1] : vector<32x192xf32> to vector<32xf32>
    %11 = vector.shape_cast %10 : vector<32xf32> to vector<32x1xf32>
    %12 = math.sqrt %11 : vector<32x1xf32>
    %13 = arith.mulf %8, %8 : vector<32x192xf32>
    %cst_6 = arith.constant dense<0.000000e+00> : vector<32xf32>
    %14 = vector.multi_reduction <add>, %13, %cst_6 [1] : vector<32x192xf32> to vector<32xf32>
    %15 = vector.shape_cast %14 : vector<32xf32> to vector<32x1xf32>
    %16 = math.sqrt %15 : vector<32x1xf32>
    %cst_7 = arith.constant 1.000000e-10 : f32
    %17 = vector.broadcast %cst_7 : f32 to vector<32x1xf32>
    %18 = arith.addf %12, %17 : vector<32x1xf32>
    %19 = tpu.reciprocal %18 {approx = true} : vector<32x1xf32> -> vector<32x1xf32>
    %20 = vector.broadcast %19 : vector<32x1xf32> to vector<32x192xf32>
    %21 = arith.mulf %5, %20 : vector<32x192xf32>
    %cst_8 = arith.constant 1.000000e-10 : f32
    %22 = vector.broadcast %cst_8 : f32 to vector<32x1xf32>
    %23 = arith.addf %16, %22 : vector<32x1xf32>
    %24 = tpu.reciprocal %23 {approx = true} : vector<32x1xf32> -> vector<32x1xf32>
    %25 = vector.broadcast %24 : vector<32x1xf32> to vector<32x192xf32>
    %26 = arith.mulf %8, %25 : vector<32x192xf32>
    %27 = arith.subf %21, %26 : vector<32x192xf32>
    %28 = arith.mulf %27, %27 : vector<32x192xf32>
    %c0_9 = arith.constant 0 : index
    %c0_10 = arith.constant 0 : index
    %29 = vector.load %arg5[%c0_9, %c0_10] : memref<1x192xf32, #tpu.memory_space<vmem>>, vector<1x192xf32>
    %cst_11 = arith.constant dense<0.000000e+00> : vector<192xf32>
    %30 = vector.multi_reduction <add>, %28, %cst_11 [0] : vector<32x192xf32> to vector<192xf32>
    %31 = vector.shape_cast %30 : vector<192xf32> to vector<1x192xf32>
    %32 = arith.addf %29, %31 : vector<1x192xf32>
    %c0_12 = arith.constant 0 : index
    %c0_13 = arith.constant 0 : index
    %33 = vector.load %arg5[%c0_12, %c0_13] : memref<1x192xf32, #tpu.memory_space<vmem>>, vector<1x192xf32>
    tpu.vector_store %arg5[%c0_12, %c0_13], %32 {strides = array<i32>} : memref<1x192xf32, #tpu.memory_space<vmem>>, vector<1x192xf32>,
    %c0_i32_14 = arith.constant 0 : i32
    %34 = arith.cmpi eq, %arg0, %c0_i32_14 : i32
    %35 = arith.extui %34 : i1 to i32
    %c0_i32_15 = arith.constant 0 : i32
    %36 = arith.cmpi ne, %35, %c0_i32_15 : i32
    scf.if %36 {
      %c0_16 = arith.constant 0 : index
      %c0_17 = arith.constant 0 : index
      %37 = vector.load %arg5[%c0_16, %c0_17] : memref<1x192xf32, #tpu.memory_space<vmem>>, vector<1x192xf32>
      %c0_18 = arith.constant 0 : index
      %c0_19 = arith.constant 0 : index
      %38 = vector.load %arg3[%c0_18, %c0_19] : memref<1x192xf32, #tpu.memory_space<vmem>>, vector<1x192xf32>
      %39 = arith.mulf %37, %38 : vector<1x192xf32>
      %cst_20 = arith.constant dense<0.000000e+00> : vector<1xf32>
      %40 = vector.multi_reduction <add>, %39, %cst_20 [1] : vector<1x192xf32> to vector<1xf32>
      %41 = vector.shape_cast %40 : vector<1xf32> to vector<1x1xf32>
      %c0_21 = arith.constant 0 : index
      %c0_22 = arith.constant 0 : index
      %42 = vector.load %arg4[%c0_21, %c0_22] : memref<1x1xf32, #tpu.memory_space<vmem>>, vector<1x1xf32>
      tpu.vector_store %arg4[%c0_21, %c0_22], %41 {strides = array<i32>} : memref<1x1xf32, #tpu.memory_space<vmem>>, vector<1x1xf32>,
    } else {
    }
    return
  }
  func.func @transform_0(%arg0: i32) -> (i32, i32, i32) {
    %c0_i32 = arith.constant 0 : i32
    %c0_i32_0 = arith.constant 0 : i32
    %c0_i32_1 = arith.constant 0 : i32
    return %c0_i32, %arg0, %c0_i32_0 : i32, i32, i32
  }
  func.func @transform_1(%arg0: i32) -> (i32, i32, i32) {
    %c1_i32 = arith.constant 1 : i32
    %c0_i32 = arith.constant 0 : i32
    %c0_i32_0 = arith.constant 0 : i32
    return %c1_i32, %arg0, %c0_i32 : i32, i32, i32
  }
  func.func @transform_2(%arg0: i32) -> (i32, i32) {
    %c0_i32 = arith.constant 0 : i32
    %c0_i32_0 = arith.constant 0 : i32
    %c0_i32_1 = arith.constant 0 : i32
    return %c0_i32, %c0_i32_0 : i32, i32
  }
  func.func @transform_3(%arg0: i32) -> (i32, i32) {
    %c0_i32 = arith.constant 0 : i32
    %c0_i32_0 = arith.constant 0 : i32
    %c0_i32_1 = arith.constant 0 : i32
    return %c0_i32, %c0_i32_0 : i32, i32
  }
}

module attributes {stable_mosaic.version = 11 : i64} {
  func.func @_lpips_dist_kernel(%arg0: i32, %arg1: memref<1x112x64xbf16, #tpu.memory_space<vmem>>, %arg2: memref<1x112x64xbf16, #tpu.memory_space<vmem>>, %arg3: memref<1x64xf32, #tpu.memory_space<vmem>>, %arg4: memref<1x1xf32, #tpu.memory_space<vmem>>, %arg5: memref<1x64xf32, #tpu.memory_space<vmem>>) attributes {dimension_semantics = [#tpu.dimension_semantics<arbitrary>], iteration_bounds = array<i64: 1>, scalar_prefetch = 0 : i64, scratch_operands = 1 : i64, tpu.core_type = #tpu.core_type<tc>, window_params = [{transform_indices = @transform_0, window_bounds = array<i64: 1, 112, 64>}, {transform_indices = @transform_1, window_bounds = array<i64: 1, 112, 64>}, {pipeline_mode = #tpu.pipeline_mode<synchronous>, transform_indices = @transform_2, window_bounds = array<i64: 1, 64>}, {pipeline_mode = #tpu.pipeline_mode<synchronous>, transform_indices = @transform_3, window_bounds = array<i64: 1, 1>}]} {
    %c0_i32 = arith.constant 0 : i32
    %0 = arith.cmpi eq, %arg0, %c0_i32 : i32
    %1 = arith.extui %0 : i1 to i32
    %c0_i32_0 = arith.constant 0 : i32
    %2 = arith.cmpi ne, %1, %c0_i32_0 : i32
    scf.if %2 {
      %cst_16 = arith.constant 0.000000e+00 : f32
      %37 = vector.broadcast %cst_16 : f32 to vector<1x64xf32>
      %c0_17 = arith.constant 0 : index
      %c0_18 = arith.constant 0 : index
      %38 = vector.load %arg5[%c0_17, %c0_18] : memref<1x64xf32, #tpu.memory_space<vmem>>, vector<1x64xf32>
      tpu.vector_store %arg5[%c0_17, %c0_18], %37 {strides = array<i32>} : memref<1x64xf32, #tpu.memory_space<vmem>>, vector<1x64xf32>,
    } else {
    }
    %c0 = arith.constant 0 : index
    %c0_1 = arith.constant 0 : index
    %c0_2 = arith.constant 0 : index
    %3 = vector.load %arg1[%c0, %c0_1, %c0_2] : memref<1x112x64xbf16, #tpu.memory_space<vmem>>, vector<1x112x64xbf16>
    %4 = vector.shape_cast %3 : vector<1x112x64xbf16> to vector<112x64xbf16>
    %5 = arith.extf %4 : vector<112x64xbf16> to vector<112x64xf32>
    %c0_3 = arith.constant 0 : index
    %c0_4 = arith.constant 0 : index
    %c0_5 = arith.constant 0 : index
    %6 = vector.load %arg2[%c0_3, %c0_4, %c0_5] : memref<1x112x64xbf16, #tpu.memory_space<vmem>>, vector<1x112x64xbf16>
    %7 = vector.shape_cast %6 : vector<1x112x64xbf16> to vector<112x64xbf16>
    %8 = arith.extf %7 : vector<112x64xbf16> to vector<112x64xf32>
    %9 = arith.mulf %5, %5 : vector<112x64xf32>
    %cst = arith.constant dense<0.000000e+00> : vector<112xf32>
    %10 = vector.multi_reduction <add>, %9, %cst [1] : vector<112x64xf32> to vector<112xf32>
    %11 = vector.shape_cast %10 : vector<112xf32> to vector<112x1xf32>
    %12 = math.sqrt %11 : vector<112x1xf32>
    %13 = arith.mulf %8, %8 : vector<112x64xf32>
    %cst_6 = arith.constant dense<0.000000e+00> : vector<112xf32>
    %14 = vector.multi_reduction <add>, %13, %cst_6 [1] : vector<112x64xf32> to vector<112xf32>
    %15 = vector.shape_cast %14 : vector<112xf32> to vector<112x1xf32>
    %16 = math.sqrt %15 : vector<112x1xf32>
    %cst_7 = arith.constant 1.000000e-10 : f32
    %17 = vector.broadcast %cst_7 : f32 to vector<112x1xf32>
    %18 = arith.addf %12, %17 : vector<112x1xf32>
    %19 = tpu.reciprocal %18 {approx = true} : vector<112x1xf32> -> vector<112x1xf32>
    %20 = vector.broadcast %19 : vector<112x1xf32> to vector<112x64xf32>
    %21 = arith.mulf %5, %20 : vector<112x64xf32>
    %cst_8 = arith.constant 1.000000e-10 : f32
    %22 = vector.broadcast %cst_8 : f32 to vector<112x1xf32>
    %23 = arith.addf %16, %22 : vector<112x1xf32>
    %24 = tpu.reciprocal %23 {approx = true} : vector<112x1xf32> -> vector<112x1xf32>
    %25 = vector.broadcast %24 : vector<112x1xf32> to vector<112x64xf32>
    %26 = arith.mulf %8, %25 : vector<112x64xf32>
    %27 = arith.subf %21, %26 : vector<112x64xf32>
    %28 = arith.mulf %27, %27 : vector<112x64xf32>
    %c0_9 = arith.constant 0 : index
    %c0_10 = arith.constant 0 : index
    %29 = vector.load %arg5[%c0_9, %c0_10] : memref<1x64xf32, #tpu.memory_space<vmem>>, vector<1x64xf32>
    %cst_11 = arith.constant dense<0.000000e+00> : vector<64xf32>
    %30 = vector.multi_reduction <add>, %28, %cst_11 [0] : vector<112x64xf32> to vector<64xf32>
    %31 = vector.shape_cast %30 : vector<64xf32> to vector<1x64xf32>
    %32 = arith.addf %29, %31 : vector<1x64xf32>
    %c0_12 = arith.constant 0 : index
    %c0_13 = arith.constant 0 : index
    %33 = vector.load %arg5[%c0_12, %c0_13] : memref<1x64xf32, #tpu.memory_space<vmem>>, vector<1x64xf32>
    tpu.vector_store %arg5[%c0_12, %c0_13], %32 {strides = array<i32>} : memref<1x64xf32, #tpu.memory_space<vmem>>, vector<1x64xf32>,
    %c0_i32_14 = arith.constant 0 : i32
    %34 = arith.cmpi eq, %arg0, %c0_i32_14 : i32
    %35 = arith.extui %34 : i1 to i32
    %c0_i32_15 = arith.constant 0 : i32
    %36 = arith.cmpi ne, %35, %c0_i32_15 : i32
    scf.if %36 {
      %c0_16 = arith.constant 0 : index
      %c0_17 = arith.constant 0 : index
      %37 = vector.load %arg5[%c0_16, %c0_17] : memref<1x64xf32, #tpu.memory_space<vmem>>, vector<1x64xf32>
      %c0_18 = arith.constant 0 : index
      %c0_19 = arith.constant 0 : index
      %38 = vector.load %arg3[%c0_18, %c0_19] : memref<1x64xf32, #tpu.memory_space<vmem>>, vector<1x64xf32>
      %39 = arith.mulf %37, %38 : vector<1x64xf32>
      %cst_20 = arith.constant dense<0.000000e+00> : vector<1xf32>
      %40 = vector.multi_reduction <add>, %39, %cst_20 [1] : vector<1x64xf32> to vector<1xf32>
      %41 = vector.shape_cast %40 : vector<1xf32> to vector<1x1xf32>
      %c0_21 = arith.constant 0 : index
      %c0_22 = arith.constant 0 : index
      %42 = vector.load %arg4[%c0_21, %c0_22] : memref<1x1xf32, #tpu.memory_space<vmem>>, vector<1x1xf32>
      tpu.vector_store %arg4[%c0_21, %c0_22], %41 {strides = array<i32>} : memref<1x1xf32, #tpu.memory_space<vmem>>, vector<1x1xf32>,
    } else {
    }
    return
  }
  func.func @transform_0(%arg0: i32) -> (i32, i32, i32) {
    %c0_i32 = arith.constant 0 : i32
    %c0_i32_0 = arith.constant 0 : i32
    %c0_i32_1 = arith.constant 0 : i32
    return %c0_i32, %arg0, %c0_i32_0 : i32, i32, i32
  }
  func.func @transform_1(%arg0: i32) -> (i32, i32, i32) {
    %c1_i32 = arith.constant 1 : i32
    %c0_i32 = arith.constant 0 : i32
    %c0_i32_0 = arith.constant 0 : i32
    return %c1_i32, %arg0, %c0_i32 : i32, i32, i32
  }
  func.func @transform_2(%arg0: i32) -> (i32, i32) {
    %c0_i32 = arith.constant 0 : i32
    %c0_i32_0 = arith.constant 0 : i32
    %c0_i32_1 = arith.constant 0 : i32
    return %c0_i32, %c0_i32_0 : i32, i32
  }
  func.func @transform_3(%arg0: i32) -> (i32, i32) {
    %c0_i32 = arith.constant 0 : i32
    %c0_i32_0 = arith.constant 0 : i32
    %c0_i32_1 = arith.constant 0 : i32
    return %c0_i32, %c0_i32_0 : i32, i32
  }
}

module attributes {stable_mosaic.version = 11 : i64} {
  func.func @_sq_diff_sum_kernel(%arg0: i32, %arg1: memref<8x1024xf32, #tpu.memory_space<vmem>>, %arg2: memref<8x1024xf32, #tpu.memory_space<vmem>>, %arg3: memref<1x1xf32, #tpu.memory_space<vmem>>, %arg4: memref<1x1xf32, #tpu.memory_space<vmem>>) attributes {dimension_semantics = [#tpu.dimension_semantics<arbitrary>], iteration_bounds = array<i64: 1>, scalar_prefetch = 0 : i64, scratch_operands = 1 : i64, tpu.core_type = #tpu.core_type<tc>, window_params = [{transform_indices = @transform_0, window_bounds = array<i64: 8, 1024>}, {transform_indices = @transform_1, window_bounds = array<i64: 8, 1024>}, {pipeline_mode = #tpu.pipeline_mode<synchronous>, transform_indices = @transform_2, window_bounds = array<i64: 1, 1>}]} {
    %c0_i32 = arith.constant 0 : i32
    %0 = arith.cmpi eq, %arg0, %c0_i32 : i32
    %1 = arith.extui %0 : i1 to i32
    %c0_i32_0 = arith.constant 0 : i32
    %2 = arith.cmpi ne, %1, %c0_i32_0 : i32
    scf.if %2 {
      %cst_10 = arith.constant 0.000000e+00 : f32
      %18 = vector.broadcast %cst_10 : f32 to vector<1x1xf32>
      %c0_11 = arith.constant 0 : index
      %c0_12 = arith.constant 0 : index
      %19 = vector.load %arg4[%c0_11, %c0_12] : memref<1x1xf32, #tpu.memory_space<vmem>>, vector<1x1xf32>
      tpu.vector_store %arg4[%c0_11, %c0_12], %18 {strides = array<i32>} : memref<1x1xf32, #tpu.memory_space<vmem>>, vector<1x1xf32>,
    } else {
    }
    %c0 = arith.constant 0 : index
    %c0_1 = arith.constant 0 : index
    %3 = vector.load %arg1[%c0, %c0_1] : memref<8x1024xf32, #tpu.memory_space<vmem>>, vector<8x1024xf32>
    %c0_2 = arith.constant 0 : index
    %c0_3 = arith.constant 0 : index
    %4 = vector.load %arg2[%c0_2, %c0_3] : memref<8x1024xf32, #tpu.memory_space<vmem>>, vector<8x1024xf32>
    %5 = arith.subf %3, %4 : vector<8x1024xf32>
    %c0_4 = arith.constant 0 : index
    %c0_5 = arith.constant 0 : index
    %6 = vector.load %arg4[%c0_4, %c0_5] : memref<1x1xf32, #tpu.memory_space<vmem>>, vector<1x1xf32>
    %7 = arith.mulf %5, %5 : vector<8x1024xf32>
    %8 = vector.shape_cast %7 : vector<8x1024xf32> to vector<1x8x1024xf32>
    %cst = arith.constant dense<0.000000e+00> : vector<1xf32>
    %9 = vector.multi_reduction <add>, %8, %cst [1, 2] : vector<1x8x1024xf32> to vector<1xf32>
    %10 = vector.shape_cast %9 : vector<1xf32> to vector<1x1x1xf32>
    %11 = vector.extract %10[0, 0, 0] : f32 from vector<1x1x1xf32>
    %12 = vector.broadcast %11 : f32 to vector<1x1xf32>
    %13 = arith.addf %6, %12 : vector<1x1xf32>
    %c0_6 = arith.constant 0 : index
    %c0_7 = arith.constant 0 : index
    %14 = vector.load %arg4[%c0_6, %c0_7] : memref<1x1xf32, #tpu.memory_space<vmem>>, vector<1x1xf32>
    tpu.vector_store %arg4[%c0_6, %c0_7], %13 {strides = array<i32>} : memref<1x1xf32, #tpu.memory_space<vmem>>, vector<1x1xf32>,
    %c0_i32_8 = arith.constant 0 : i32
    %15 = arith.cmpi eq, %arg0, %c0_i32_8 : i32
    %16 = arith.extui %15 : i1 to i32
    %c0_i32_9 = arith.constant 0 : i32
    %17 = arith.cmpi ne, %16, %c0_i32_9 : i32
    scf.if %17 {
      %c0_10 = arith.constant 0 : index
      %c0_11 = arith.constant 0 : index
      %18 = vector.load %arg4[%c0_10, %c0_11] : memref<1x1xf32, #tpu.memory_space<vmem>>, vector<1x1xf32>
      %c0_12 = arith.constant 0 : index
      %c0_13 = arith.constant 0 : index
      %19 = vector.load %arg3[%c0_12, %c0_13] : memref<1x1xf32, #tpu.memory_space<vmem>>, vector<1x1xf32>
      tpu.vector_store %arg3[%c0_12, %c0_13], %18 {strides = array<i32>} : memref<1x1xf32, #tpu.memory_space<vmem>>, vector<1x1xf32>,
    } else {
    }
    return
  }
  func.func @transform_0(%arg0: i32) -> (i32, i32) {
    %c0_i32 = arith.constant 0 : i32
    %c0_i32_0 = arith.constant 0 : i32
    return %c0_i32, %arg0 : i32, i32
  }
  func.func @transform_1(%arg0: i32) -> (i32, i32) {
    %c0_i32 = arith.constant 0 : i32
    %c0_i32_0 = arith.constant 0 : i32
    return %c0_i32, %arg0 : i32, i32
  }
  func.func @transform_2(%arg0: i32) -> (i32, i32) {
    %c0_i32 = arith.constant 0 : i32
    %c0_i32_0 = arith.constant 0 : i32
    %c0_i32_1 = arith.constant 0 : i32
    return %c0_i32, %c0_i32_0 : i32, i32
  }
}

</mosaic_0001>

<llo_original>
// kernel: tile.23
$region0: #{tile.23}
  #allocation0 [shape = 's32[1]{0}', space=sflag, size = 0x4, scoped, tag = 'scoped memory for tile.23']
  %s0 = inlined_call_operand.vmem [shape: f32[3], index: 0, kind: input, shape index: {}]
  %s1 = inlined_call_operand.vmem [shape: f32[2,3], index: 1, kind: output, shape index: {}]
  // Predicated region
  $region2: #{tile.23} parent=0 // pred_check
    _
  $region3: #{tile.23} parent=0 // pred_check_branch
    %3 = sbr.rel (0) target = $region5
  $region4: #{tile.23} parent=0 // pred_region
    _
  $region5: #{tile.23} parent=0 // pred_fallthru
    _
  %v4 = vld [vmem:[%s0] ss:$0 sm:$0xff]
  %5 = vst [vmem:[%s1] sm:$0x3] %v4

// kernel: tile.24
$region0: #{tile.24}
  %s0 = inlined_call_operand.vmem [shape: f32[2,3], index: 0, kind: input, shape index: {}]
  %s1 = inlined_call_operand.vmem [shape: f32[6], index: 1, kind: output, shape index: {}]
  $region1: #{tile.24} parent=0
    #allocation0 [shape = 'u8[4096]{0}', space=vmem, size = 0x1000, scoped, tag = 'scoped mem for output reshape']
    #allocation1 [shape = 'u8[4096]{0}', space=vmem, size = 0x1000, scoped, tag = 'scoped mem for input reshape']
    %s3 = sshll.u32 1, 2
    %s4 = ssub.s32 %s3, 1
    %v5 = vld [vmem:[%s0] sm:%s4]
    %6 = vst [vmem:[#allocation1] sm:%s4] %v5
    %v7 = vld [vmem:[#allocation1] sm:$0x1]
    %vm8 = vcmask 23552
    %9 = vst.msk [vmem:[#allocation0] sm:$0x1] %vm8, %v7
    %s10 = scalar_lea.vmem [#allocation1], 1
    %v11 = vld [vmem:[%s10] sm:$0x1]
    %12 = vrot.lane.b32.xlu0 %v11, 3
    %v13 = vpop.permute.xlu0 %12
    %vm14 = vcmask 48152
    %15 = vst.msk [vmem:[#allocation0] sm:$0x1] %vm14, %v13
    %s17 = sshll.u32 1, 1
    %s18 = ssub.s32 %s17, 1
    %v20 = vld [vmem:[#allocation0] sm:%s18]
    %s21 = sshll.u32 1, 1
    %s22 = ssub.s32 %s21, 1
    %23 = vst [vmem:[%s1] sm:%s22] %v20

// kernel: lpips_loss.14
$region0: #{lpips_loss.14}
  #allocation0 [shape = 'u32[]', space=smem, size = 0x4, offset = 0x4, fixed_abs, tag = 'smem constant byte address 0x4 - core index']
  #allocation1 [shape = 'u32[144,128]{1,0:T(1,128)}', space=vmem, size = 0x12000, scoped, tag = 'internal scratch']
  %s0 = inlined_call_operand.vmem [shape: f32[16,1024], index: 0, kind: input, shape index: {}]
  %s1 = inlined_call_operand.vmem [shape: f32[16,1], index: 1, kind: input, shape index: {}]
  %s2 = inlined_call_operand.vmem [shape: f32[16,1], index: 2, kind: input, shape index: {}]
  %s3 = inlined_call_operand.vmem [shape: bf16[16,1024], index: 3, kind: output, shape index: {}]
  %s4 = sld [smem:[#allocation0]]
  $region22: #{lpips_loss.14} parent=0
    _
  %s6 = ssub.s32 1, %s4
  %s7 = scalar_select 0, %s6, %s4
  // Predicated region
  $region2: #{lpips_loss.14} parent=0 // pred_check
    _
  $region3: #{lpips_loss.14} parent=0 // pred_check_branch
    %9 = sbr.rel (0) target = $region5
  $region4: #{lpips_loss.14} parent=0 // pred_region
    _
  $region5: #{lpips_loss.14} parent=0 // pred_fallthru
    _
  // Predicated region
  $region6: #{lpips_loss.14} parent=0 // pred_check
    _
  $region7: #{lpips_loss.14} parent=0 // pred_check_branch
    %11 = sbr.rel (0) target = $region9
  $region8: #{lpips_loss.14} parent=0 // pred_region
    _
  $region9: #{lpips_loss.14} parent=0 // pred_fallthru
    _
  // Predicated region
  $region10: #{lpips_loss.14} parent=0 // pred_check
    _
  $region11: #{lpips_loss.14} parent=0 // pred_check_branch
    %13 = sbr.rel (0) target = $region13
  $region12: #{lpips_loss.14} parent=0 // pred_region
    _
  $region13: #{lpips_loss.14} parent=0 // pred_fallthru
    _
  %v14 = vld [vmem:[%s0] sm:$0xff]
  %v15 = vld [vmem:[%s0 + $0x8] sm:$0xff]
  %v16 = vld [vmem:[%s0 + $0x10] sm:$0xff]
  %v17 = vld [vmem:[%s0 + $0x18] sm:$0xff]
  %v18 = vld [vmem:[%s0 + $0x20] sm:$0xff]
  %v19 = vld [vmem:[%s0 + $0x28] sm:$0xff]
  %v20 = vld [vmem:[%s0 + $0x30] sm:$0xff]
  %v21 = vld [vmem:[%s0 + $0x38] sm:$0xff]
  %v22 = vld [vmem:[%s0 + $0x40] sm:$0xff]
  %v23 = vld [vmem:[%s0 + $0x48] sm:$0xff]
  %v24 = vld [vmem:[%s0 + $0x50] sm:$0xff]
  %v25 = vld [vmem:[%s0 + $0x58] sm:$0xff]
  %v26 = vld [vmem:[%s0 + $0x60] sm:$0xff]
  %v27 = vld [vmem:[%s0 + $0x68] sm:$0xff]
  %v28 = vld [vmem:[%s0 + $0x70] sm:$0xff]
  %v29 = vld [vmem:[%s0 + $0x78] sm:$0xff]
  %v30 = vld [vmem:[%s1] sm:$0xff]
  %v31 = vld [vmem:[%s1 + $0x8] sm:$0xff]
  %33 = vset.pattern.permute.xlu0 0
  %34 = vperm.xlu0 %33, %v30
  %v35 = vpop.permute.xlu0 %34
  %38 = vset.pattern.permute.xlu0 0
  %39 = vperm.xlu0 %38, %v31
  %v40 = vpop.permute.xlu0 %39
  %v42 = vmul.f32 %v14, %v35
  %v43 = vmul.f32 %v15, %v35
  %v44 = vmul.f32 %v16, %v35
  %v45 = vmul.f32 %v17, %v35
  %v46 = vmul.f32 %v18, %v35
  %v47 = vmul.f32 %v19, %v35
  %v48 = vmul.f32 %v20, %v35
  %v49 = vmul.f32 %v21, %v35
  %v50 = vmul.f32 %v22, %v40
  %v51 = vmul.f32 %v23, %v40
  %v52 = vmul.f32 %v24, %v40
  %v53 = vmul.f32 %v25, %v40
  %v54 = vmul.f32 %v26, %v40
  %v55 = vmul.f32 %v27, %v40
  %v56 = vmul.f32 %v28, %v40
  %v57 = vmul.f32 %v29, %v40
  %v58 = vld [vmem:[%s2] sm:$0xff]
  %v59 = vld [vmem:[%s2 + $0x8] sm:$0xff]
  %61 = vset.pattern.permute.xlu0 0
  %62 = vperm.xlu0 %61, %v58
  %v63 = vpop.permute.xlu0 %62
  %66 = vset.pattern.permute.xlu0 0
  %67 = vperm.xlu0 %66, %v59
  %v68 = vpop.permute.xlu0 %67
  %v70 = vadd.f32 %v42, %v63
  %v71 = vadd.f32 %v43, %v63
  %v72 = vadd.f32 %v44, %v63
  %v73 = vadd.f32 %v45, %v63
  %v74 = vadd.f32 %v46, %v63
  %v75 = vadd.f32 %v47, %v63
  %v76 = vadd.f32 %v48, %v63
  %v77 = vadd.f32 %v49, %v63
  %v78 = vadd.f32 %v50, %v68
  %v79 = vadd.f32 %v51, %v68
  %v80 = vadd.f32 %v52, %v68
  %v81 = vadd.f32 %v53, %v68
  %v82 = vadd.f32 %v54, %v68
  %v83 = vadd.f32 %v55, %v68
  %v84 = vadd.f32 %v56, %v68
  %v85 = vadd.f32 %v57, %v68
  %v86 = vpack.c.bf16 %v78, %v70
  %v87 = vpack.c.bf16 %v79, %v71
  %v88 = vpack.c.bf16 %v80, %v72
  %v89 = vpack.c.bf16 %v81, %v73
  %v90 = vpack.c.bf16 %v82, %v74
  %v91 = vpack.c.bf16 %v83, %v75
  %v92 = vpack.c.bf16 %v84, %v76
  %v93 = vpack.c.bf16 %v85, %v77
  %v102 = vunpack.c.l.b16 %v86
  %v103 = vunpack.c.l.b16 %v87
  %v104 = vunpack.c.l.b16 %v88
  %v105 = vunpack.c.l.b16 %v89
  %v106 = vunpack.c.l.b16 %v90
  %v107 = vunpack.c.l.b16 %v91
  %v108 = vunpack.c.l.b16 %v92
  %v109 = vunpack.c.l.b16 %v93
  %v110 = vunpack.c.h.b16 %v86
  %v111 = vunpack.c.h.b16 %v87
  %v112 = vunpack.c.h.b16 %v88
  %v113 = vunpack.c.h.b16 %v89
  %v114 = vunpack.c.h.b16 %v90
  %v115 = vunpack.c.h.b16 %v91
  %v116 = vunpack.c.h.b16 %v92
  %v117 = vunpack.c.h.b16 %v93
  %v118 = vpack.c.b16 %v103, %v102
  %v119 = vpack.c.b16 %v105, %v104
  %v120 = vpack.c.b16 %v107, %v106
  %v121 = vpack.c.b16 %v109, %v108
  %v122 = vpack.c.b16 %v111, %v110
  %v123 = vpack.c.b16 %v113, %v112
  %v124 = vpack.c.b16 %v115, %v114
  %v125 = vpack.c.b16 %v117, %v116
  %134 = vst [vmem:[%s3] sm:$0xff] %v118
  %135 = vst [vmem:[%s3 + $0x8] sm:$0xff] %v119
  %136 = vst [vmem:[%s3 + $0x10] sm:$0xff] %v120
  %137 = vst [vmem:[%s3 + $0x18] sm:$0xff] %v121
  %138 = vst [vmem:[%s3 + $0x20] sm:$0xff] %v122
  %139 = vst [vmem:[%s3 + $0x28] sm:$0xff] %v123
  %140 = vst [vmem:[%s3 + $0x30] sm:$0xff] %v124
  %141 = vst [vmem:[%s3 + $0x38] sm:$0xff] %v125
  // Predicated region
  $region14: #{lpips_loss.14} parent=0 // pred_check
    _
  $region15: #{lpips_loss.14} parent=0 // pred_check_branch
    %143 = sbr.rel (0) target = $region17
  $region16: #{lpips_loss.14} parent=0 // pred_region
    _
  $region17: #{lpips_loss.14} parent=0 // pred_fallthru
    _
  // Predicated region
  $region18: #{lpips_loss.14} parent=0 // pred_check
    _
  $region19: #{lpips_loss.14} parent=0 // pred_check_branch
    %145 = sbr.rel (0) target = $region21
  $region20: #{lpips_loss.14} parent=0 // pred_region
    _
  $region21: #{lpips_loss.14} parent=0 // pred_fallthru
    _

// kernel: lpips_loss.15
$region0: #{lpips_loss.15}
  #allocation0 [shape = 'u32[]', space=smem, size = 0x4, offset = 0x4, fixed_abs, tag = 'smem constant byte address 0x4 - core index']
  #allocation1 [shape = 'u32[144,128]{1,0:T(1,128)}', space=vmem, size = 0x12000, scoped, tag = 'internal scratch']
  %s0 = inlined_call_operand.vmem [shape: bf16[208,384], index: 0, kind: input, shape index: {}]
  %s1 = inlined_call_operand.vmem [shape: bf16[384,64], index: 1, kind: input, shape index: {}]
  %s2 = inlined_call_operand.vmem [shape: f32[1,64], index: 2, kind: input, shape index: {}]
  %s3 = inlined_call_operand.vmem [shape: bf16[208,64], index: 3, kind: output, shape index: {}]
  %s4 = sld [smem:[#allocation0]]
  $region22: #{lpips_loss.15} parent=0
    _
  %s6 = ssub.s32 1, %s4
  %s7 = scalar_select 0, %s6, %s4
  // Predicated region
  $region2: #{lpips_loss.15} parent=0 // pred_check
    _
  $region3: #{lpips_loss.15} parent=0 // pred_check_branch
    %9 = sbr.rel (0) target = $region5
  $region4: #{lpips_loss.15} parent=0 // pred_region
    _
  $region5: #{lpips_loss.15} parent=0 // pred_fallthru
    _
  // Predicated region
  $region6: #{lpips_loss.15} parent=0 // pred_check
    _
  $region7: #{lpips_loss.15} parent=0 // pred_check_branch
    %11 = sbr.rel (0) target = $region9
  $region8: #{lpips_loss.15} parent=0 // pred_region
    _
  $region9: #{lpips_loss.15} parent=0 // pred_fallthru
    _
  // Predicated region
  $region10: #{lpips_loss.15} parent=0 // pred_check
    _
  $region11: #{lpips_loss.15} parent=0 // pred_check_branch
    %13 = sbr.rel (0) target = $region13
  $region12: #{lpips_loss.15} parent=0 // pred_region
    _
  $region13: #{lpips_loss.15} parent=0 // pred_fallthru
    _
  %v15 = vld [vmem:[%s0] sm:$0xff]
  %v16 = vld [vmem:[%s0 + $0x8] sm:$0xf]
  %v17 = vld [vmem:[%s0 + $0xc] sm:$0xff]
  %v18 = vld [vmem:[%s0 + $0x14] sm:$0xf]
  %v19 = vld [vmem:[%s0 + $0x18] sm:$0xff]
  %v20 = vld [vmem:[%s0 + $0x20] sm:$0xf]
  %v21 = vld [vmem:[%s0 + $0x24] sm:$0xff]
  %v22 = vld [vmem:[%s0 + $0x2c] sm:$0xf]
  %v23 = vld [vmem:[%s0 + $0x30] sm:$0xff]
  %v24 = vld [vmem:[%s0 + $0x38] sm:$0xf]
  %v25 = vld [vmem:[%s0 + $0x3c] sm:$0xff]
  %v26 = vld [vmem:[%s0 + $0x44] sm:$0xf]
  %v27 = vld [vmem:[%s0 + $0x48] sm:$0xff]
  %v28 = vld [vmem:[%s0 + $0x50] sm:$0xf]
  %v29 = vld [vmem:[%s0 + $0x54] sm:$0xff]
  %v30 = vld [vmem:[%s0 + $0x5c] sm:$0xf]
  %v31 = vld [vmem:[%s0 + $0x60] sm:$0xff]
  %v32 = vld [vmem:[%s0 + $0x68] sm:$0xf]
  %v33 = vld [vmem:[%s0 + $0x6c] sm:$0xff]
  %v34 = vld [vmem:[%s0 + $0x74] sm:$0xf]
  %v35 = vld [vmem:[%s0 + $0x78] sm:$0xff]
  %v36 = vld [vmem:[%s0 + $0x80] sm:$0xf]
  %v37 = vld [vmem:[%s0 + $0x84] sm:$0xff]
  %v38 = vld [vmem:[%s0 + $0x8c] sm:$0xf]
  %v39 = vld [vmem:[%s0 + $0x90] sm:$0xff]
  %v40 = vld [vmem:[%s0 + $0x98] sm:$0xf]
  %v41 = vld [vmem:[%s0 + $0x9c] sm:$0xff]
  %v42 = vld [vmem:[%s0 + $0xa4] sm:$0xf]
  %v43 = vld [vmem:[%s0 + $0xa8] sm:$0xff]
  %v44 = vld [vmem:[%s0 + $0xb0] sm:$0xf]
  %v45 = vld [vmem:[%s0 + $0xb4] sm:$0xff]
  %v46 = vld [vmem:[%s0 + $0xbc] sm:$0xf]
  %v47 = vld [vmem:[%s0 + $0xc0] sm:$0xff]
  %v48 = vld [vmem:[%s0 + $0xc8] sm:$0xf]
  %v49 = vld [vmem:[%s0 + $0xcc] sm:$0xff]
  %v50 = vld [vmem:[%s0 + $0xd4] sm:$0xf]
  %v51 = vld [vmem:[%s0 + $0xd8] sm:$0xff]
  %v52 = vld [vmem:[%s0 + $0xe0] sm:$0xf]
  %v53 = vld [vmem:[%s0 + $0xe4] sm:$0xff]
  %v54 = vld [vmem:[%s0 + $0xec] sm:$0xf]
  %v55 = vld [vmem:[%s0 + $0xf0] sm:$0xff]
  %v56 = vld [vmem:[%s0 + $0xf8] sm:$0xf]
  %v57 = vld [vmem:[%s0 + $0xfc] sm:$0xff]
  %v58 = vld [vmem:[%s0 + $0x104] sm:$0xf]
  %v59 = vld [vmem:[%s0 + $0x108] sm:$0xff]
  %v60 = vld [vmem:[%s0 + $0x110] sm:$0xf]
  %v61 = vld [vmem:[%s0 + $0x114] sm:$0xff]
  %v62 = vld [vmem:[%s0 + $0x11c] sm:$0xf]
  %v63 = vld [vmem:[%s0 + $0x120] sm:$0xff]
  %v64 = vld [vmem:[%s0 + $0x128] sm:$0xf]
  %v65 = vld [vmem:[%s0 + $0x12c] sm:$0xff]
  %v66 = vld [vmem:[%s0 + $0x134] sm:$0xf]
  %v67 = vld [vmem:[%s1] sm:$0xf]
  %v68 = vld [vmem:[%s1 + $0x4] sm:$0xf]
  %v69 = vld [vmem:[%s1 + $0x8] sm:$0xf]
  %v70 = vld [vmem:[%s1 + $0xc] sm:$0xf]
  %v71 = vld [vmem:[%s1 + $0x10] sm:$0xf]
  %v72 = vld [vmem:[%s1 + $0x14] sm:$0xf]
  %v73 = vld [vmem:[%s1 + $0x18] sm:$0xf]
  %v74 = vld [vmem:[%s1 + $0x1c] sm:$0xf]
  %v75 = vld [vmem:[%s1 + $0x20] sm:$0xf]
  %v76 = vld [vmem:[%s1 + $0x24] sm:$0xf]
  %v77 = vld [vmem:[%s1 + $0x28] sm:$0xf]
  %v78 = vld [vmem:[%s1 + $0x2c] sm:$0xf]
  %v79 = vld [vmem:[%s1 + $0x30] sm:$0xf]
  %v80 = vld [vmem:[%s1 + $0x34] sm:$0xf]
  %v81 = vld [vmem:[%s1 + $0x38] sm:$0xf]
  %v82 = vld [vmem:[%s1 + $0x3c] sm:$0xf]
  %v83 = vld [vmem:[%s1 + $0x40] sm:$0xf]
  %v84 = vld [vmem:[%s1 + $0x44] sm:$0xf]
  %v85 = vld [vmem:[%s1 + $0x48] sm:$0xf]
  %v86 = vld [vmem:[%s1 + $0x4c] sm:$0xf]
  %v87 = vld [vmem:[%s1 + $0x50] sm:$0xf]
  %v88 = vld [vmem:[%s1 + $0x54] sm:$0xf]
  %v89 = vld [vmem:[%s1 + $0x58] sm:$0xf]
  %v90 = vld [vmem:[%s1 + $0x5c] sm:$0xf]
  %v91 = vld [vmem:[%s1 + $0x60] sm:$0xf]
  %v92 = vld [vmem:[%s1 + $0x64] sm:$0xf]
  %v93 = vld [vmem:[%s1 + $0x68] sm:$0xf]
  %v94 = vld [vmem:[%s1 + $0x6c] sm:$0xf]
  %v95 = vld [vmem:[%s1 + $0x70] sm:$0xf]
  %v96 = vld [vmem:[%s1 + $0x74] sm:$0xf]
  %v97 = vld [vmem:[%s1 + $0x78] sm:$0xf]
  %v98 = vld [vmem:[%s1 + $0x7c] sm:$0xf]
  %v99 = vld [vmem:[%s1 + $0x80] sm:$0xf]
  %v100 = vld [vmem:[%s1 + $0x84] sm:$0xf]
  %v101 = vld [vmem:[%s1 + $0x88] sm:$0xf]
  %v102 = vld [vmem:[%s1 + $0x8c] sm:$0xf]
  %v103 = vld [vmem:[%s1 + $0x90] sm:$0xf]
  %v104 = vld [vmem:[%s1 + $0x94] sm:$0xf]
  %v105 = vld [vmem:[%s1 + $0x98] sm:$0xf]
  %v106 = vld [vmem:[%s1 + $0x9c] sm:$0xf]
  %v107 = vld [vmem:[%s1 + $0xa0] sm:$0xf]
  %v108 = vld [vmem:[%s1 + $0xa4] sm:$0xf]
  %v109 = vld [vmem:[%s1 + $0xa8] sm:$0xf]
  %v110 = vld [vmem:[%s1 + $0xac] sm:$0xf]
  %v111 = vld [vmem:[%s1 + $0xb0] sm:$0xf]
  %v112 = vld [vmem:[%s1 + $0xb4] sm:$0xf]
  %v113 = vld [vmem:[%s1 + $0xb8] sm:$0xf]
  %v114 = vld [vmem:[%s1 + $0xbc] sm:$0xf]
  %v115 = vld [vmem:[%s2] sm:$0x1]
  %v117 = vlaneseq
  %v118 = vshrl.u32 %v117, 7
  %v119 = vsub.s32 0, %v118
  %v120 = vrot.slane %v115, %v119
  %v174 = vunpack.c.l.b16 %v15
  %v175 = vunpack.c.h.b16 %v15
  %v176 = vunpack.c.l.b16 %v16
  %v177 = vunpack.c.l.b16 %v17
  %v178 = vunpack.c.h.b16 %v17
  %v179 = vunpack.c.l.b16 %v18
  %v180 = vunpack.c.l.b16 %v19
  %v181 = vunpack.c.h.b16 %v19
  %v182 = vunpack.c.l.b16 %v20
  %v183 = vunpack.c.l.b16 %v21
  %v184 = vunpack.c.h.b16 %v21
  %v185 = vunpack.c.l.b16 %v22
  %v186 = vunpack.c.l.b16 %v23
  %v187 = vunpack.c.h.b16 %v23
  %v188 = vunpack.c.l.b16 %v24
  %v189 = vunpack.c.l.b16 %v25
  %v190 = vunpack.c.h.b16 %v25
  %v191 = vunpack.c.l.b16 %v26
  %v192 = vunpack.c.l.b16 %v27
  %v193 = vunpack.c.h.b16 %v27
  %v194 = vunpack.c.l.b16 %v28
  %v195 = vunpack.c.l.b16 %v29
  %v196 = vunpack.c.h.b16 %v29
  %v197 = vunpack.c.l.b16 %v30
  %v198 = vunpack.c.l.b16 %v31
  %v199 = vunpack.c.h.b16 %v31
  %v200 = vunpack.c.l.b16 %v32
  %v201 = vunpack.c.l.b16 %v33
  %v202 = vunpack.c.h.b16 %v33
  %v203 = vunpack.c.l.b16 %v34
  %v204 = vunpack.c.l.b16 %v35
  %v205 = vunpack.c.h.b16 %v35
  %v206 = vunpack.c.l.b16 %v36
  %v207 = vunpack.c.l.b16 %v37
  %v208 = vunpack.c.h.b16 %v37
  %v209 = vunpack.c.l.b16 %v38
  %v210 = vunpack.c.l.b16 %v39
  %v211 = vunpack.c.h.b16 %v39
  %v212 = vunpack.c.l.b16 %v40
  %v213 = vunpack.c.l.b16 %v41
  %v214 = vunpack.c.h.b16 %v41
  %v215 = vunpack.c.l.b16 %v42
  %v216 = vunpack.c.l.b16 %v43
  %v217 = vunpack.c.h.b16 %v43
  %v218 = vunpack.c.l.b16 %v44
  %v219 = vunpack.c.l.b16 %v45
  %v220 = vunpack.c.h.b16 %v45
  %v221 = vunpack.c.l.b16 %v46
  %v222 = vunpack.c.l.b16 %v47
  %v223 = vunpack.c.h.b16 %v47
  %v224 = vunpack.c.l.b16 %v48
  %v225 = vunpack.c.l.b16 %v49
  %v226 = vunpack.c.h.b16 %v49
  %v227 = vunpack.c.l.b16 %v50
  %v228 = vunpack.c.l.b16 %v51
  %v229 = vunpack.c.h.b16 %v51
  %v230 = vunpack.c.l.b16 %v52
  %v231 = vunpack.c.l.b16 %v53
  %v232 = vunpack.c.h.b16 %v53
  %v233 = vunpack.c.l.b16 %v54
  %v234 = vunpack.c.l.b16 %v55
  %v235 = vunpack.c.h.b16 %v55
  %v236 = vunpack.c.l.b16 %v56
  %v237 = vunpack.c.l.b16 %v57
  %v238 = vunpack.c.h.b16 %v57
  %v239 = vunpack.c.l.b16 %v58
  %v240 = vunpack.c.l.b16 %v59
  %v241 = vunpack.c.h.b16 %v59
  %v242 = vunpack.c.l.b16 %v60
  %v243 = vunpack.c.l.b16 %v61
  %v244 = vunpack.c.h.b16 %v61
  %v245 = vunpack.c.l.b16 %v62
  %v246 = vunpack.c.l.b16 %v63
  %v247 = vunpack.c.h.b16 %v63
  %v248 = vunpack.c.l.b16 %v64
  %v249 = vunpack.c.l.b16 %v65
  %v250 = vunpack.c.h.b16 %v65
  %v251 = vunpack.c.l.b16 %v66
  %v252 = vpack.c.b16 %v177, %v174
  %v253 = vpack.c.b16 %v178, %v175
  %v254 = vpack.c.b16 %v179, %v176
  %v255 = vpack.c.b16 %v183, %v180
  %v256 = vpack.c.b16 %v184, %v181
  %v257 = vpack.c.b16 %v185, %v182
  %v258 = vpack.c.b16 %v189, %v186
  %v259 = vpack.c.b16 %v190, %v187
  %v260 = vpack.c.b16 %v191, %v188
  %v261 = vpack.c.b16 %v195, %v192
  %v262 = vpack.c.b16 %v196, %v193
  %v263 = vpack.c.b16 %v197, %v194
  %v264 = vpack.c.b16 %v201, %v198
  %v265 = vpack.c.b16 %v202, %v199
  %v266 = vpack.c.b16 %v203, %v200
  %v267 = vpack.c.b16 %v207, %v204
  %v268 = vpack.c.b16 %v208, %v205
  %v269 = vpack.c.b16 %v209, %v206
  %v270 = vpack.c.b16 %v213, %v210
  %v271 = vpack.c.b16 %v214, %v211
  %v272 = vpack.c.b16 %v215, %v212
  %v273 = vpack.c.b16 %v219, %v216
  %v274 = vpack.c.b16 %v220, %v217
  %v275 = vpack.c.b16 %v221, %v218
  %v276 = vpack.c.b16 %v225, %v222
  %v277 = vpack.c.b16 %v226, %v223
  %v278 = vpack.c.b16 %v227, %v224
  %v279 = vpack.c.b16 %v231, %v228
  %v280 = vpack.c.b16 %v232, %v229
  %v281 = vpack.c.b16 %v233, %v230
  %v282 = vpack.c.b16 %v237, %v234
  %v283 = vpack.c.b16 %v238, %v235
  %v284 = vpack.c.b16 %v239, %v236
  %v285 = vpack.c.b16 %v243, %v240
  %v286 = vpack.c.b16 %v244, %v241
  %v287 = vpack.c.b16 %v245, %v242
  %v288 = vpack.c.b16 %v249, %v246
  %v289 = vpack.c.b16 %v250, %v247
  %v290 = vpack.c.b16 %v251, %v248
  %v378 = vunpack.c.l.b16 %v67
  %v379 = vunpack.c.l.b16 %v68
  %v380 = vunpack.c.l.b16 %v69
  %v381 = vunpack.c.l.b16 %v70
  %v382 = vunpack.c.l.b16 %v71
  %v383 = vunpack.c.l.b16 %v72
  %v384 = vunpack.c.l.b16 %v73
  %v385 = vunpack.c.l.b16 %v74
  %v386 = vunpack.c.l.b16 %v75
  %v387 = vunpack.c.l.b16 %v76
  %v388 = vunpack.c.l.b16 %v77
  %v389 = vunpack.c.l.b16 %v78
  %v390 = vunpack.c.l.b16 %v79
  %v391 = vunpack.c.l.b16 %v80
  %v392 = vunpack.c.l.b16 %v81
  %v393 = vunpack.c.l.b16 %v82
  %v394 = vunpack.c.l.b16 %v83
  %v395 = vunpack.c.l.b16 %v84
  %v396 = vunpack.c.l.b16 %v85
  %v397 = vunpack.c.l.b16 %v86
  %v398 = vunpack.c.l.b16 %v87
  %v399 = vunpack.c.l.b16 %v88
  %v400 = vunpack.c.l.b16 %v89
  %v401 = vunpack.c.l.b16 %v90
  %v402 = vunpack.c.l.b16 %v91
  %v403 = vunpack.c.l.b16 %v92
  %v404 = vunpack.c.l.b16 %v93
  %v405 = vunpack.c.l.b16 %v94
  %v406 = vunpack.c.l.b16 %v95
  %v407 = vunpack.c.l.b16 %v96
  %v408 = vunpack.c.l.b16 %v97
  %v409 = vunpack.c.l.b16 %v98
  %v410 = vunpack.c.l.b16 %v99
  %v411 = vunpack.c.l.b16 %v100
  %v412 = vunpack.c.l.b16 %v101
  %v413 = vunpack.c.l.b16 %v102
  %v414 = vunpack.c.l.b16 %v103
  %v415 = vunpack.c.l.b16 %v104
  %v416 = vunpack.c.l.b16 %v105
  %v417 = vunpack.c.l.b16 %v106
  %v418 = vunpack.c.l.b16 %v107
  %v419 = vunpack.c.l.b16 %v108
  %v420 = vunpack.c.l.b16 %v109
  %v421 = vunpack.c.l.b16 %v110
  %v422 = vunpack.c.l.b16 %v111
  %v423 = vunpack.c.l.b16 %v112
  %v424 = vunpack.c.l.b16 %v113
  %v425 = vunpack.c.l.b16 %v114
  %v426 = vpack.c.b16 %v379, %v378
  %v427 = vpack.c.b16 %v381, %v380
  %v428 = vpack.c.b16 %v383, %v382
  %v429 = vpack.c.b16 %v385, %v384
  %v430 = vpack.c.b16 %v387, %v386
  %v431 = vpack.c.b16 %v389, %v388
  %v432 = vpack.c.b16 %v391, %v390
  %v433 = vpack.c.b16 %v393, %v392
  %v434 = vpack.c.b16 %v395, %v394
  %v435 = vpack.c.b16 %v397, %v396
  %v436 = vpack.c.b16 %v399, %v398
  %v437 = vpack.c.b16 %v401, %v400
  %v438 = vpack.c.b16 %v403, %v402
  %v439 = vpack.c.b16 %v405, %v404
  %v440 = vpack.c.b16 %v407, %v406
  %v441 = vpack.c.b16 %v409, %v408
  %v442 = vpack.c.b16 %v411, %v410
  %v443 = vpack.c.b16 %v413, %v412
  %v444 = vpack.c.b16 %v415, %v414
  %v445 = vpack.c.b16 %v417, %v416
  %v446 = vpack.c.b16 %v419, %v418
  %v447 = vpack.c.b16 %v421, %v420
  %v448 = vpack.c.b16 %v423, %v422
  %v449 = vpack.c.b16 %v425, %v424
  %474 = vmatprep.subr.bf16.mxu0 0
  %475 = vmatpush1.bf16.msra.mxu0 %v433
  %476 = vmatprep.subr.bf16.mxu0 0
  %477 = vmatpush1.bf16.msra.mxu0 %v432
  %478 = vmatprep.subr.bf16.mxu0 0
  %479 = vmatpush1.bf16.msra.mxu0 %v431
  %480 = vmatprep.subr.bf16.mxu0 0
  %481 = vmatpush1.bf16.msra.mxu0 %v430
  %482 = vmatprep.subr.bf16.mxu0 0
  %483 = vmatpush1.bf16.msra.mxu0 %v429
  %484 = vmatprep.subr.bf16.mxu0 0
  %485 = vmatpush1.bf16.msra.mxu0 %v428
  %486 = vmatprep.subr.bf16.mxu0 0
  %487 = vmatpush1.bf16.msra.mxu0 %v427
  %488 = vmatprep.subr.bf16.mxu0 0
  %489 = vmatpush1.bf16.msra.mxu0 %v426
  %490 = vmatprep.subr.bf16.mxu0 0
  %491 = vmatpush2.bf16.msra.mxu0 %v441
  %492 = vmatprep.subr.bf16.mxu0 0
  %493 = vmatpush2.bf16.msra.mxu0 %v440
  %494 = vmatprep.subr.bf16.mxu0 0
  %495 = vmatpush2.bf16.msra.mxu0 %v439
  %496 = vmatprep.subr.bf16.mxu0 0
  %497 = vmatpush2.bf16.msra.mxu0 %v438
  %498 = vmatprep.subr.bf16.mxu0 0
  %499 = vmatpush2.bf16.msra.mxu0 %v437
  %500 = vmatprep.subr.bf16.mxu0 0
  %501 = vmatpush2.bf16.msra.mxu0 %v436
  %502 = vmatprep.subr.bf16.mxu0 0
  %503 = vmatpush2.bf16.msra.mxu0 %v435
  %504 = vmatprep.subr.bf16.mxu0 0
  %505 = vmatpush2.bf16.msra.mxu0 %v434
  %506 = vmatprep.mubr.bf16.mxu0 %v253
  %507 = vmatmul.mubr.bf16.gmra.mxu0 %v252
  %v508 = vpop.f32.mrf.mxu0
  %v509 = vadd.f32 %v120, %v508
  %v510 = vpop.f32.mrf.mxu0
  %v511 = vpop.f32.mrf.mxu0
  %v512 = vadd.f32 %v120, %v511
  %v513 = vpop.f32.mrf.mxu0
  %514 = vmatprep.mubr.bf16.mxu0 %v256
  %515 = vmatmul.mubr.bf16.gmra.mxu0 %v255
  %v516 = vpop.f32.mrf.mxu0
  %v517 = vadd.f32 %v120, %v516
  %v518 = vpop.f32.mrf.mxu0
  %v519 = vpop.f32.mrf.mxu0
  %v520 = vadd.f32 %v120, %v519
  %v521 = vpop.f32.mrf.mxu0
  %522 = vmatprep.mubr.bf16.mxu0 %v259
  %523 = vmatmul.mubr.bf16.gmra.mxu0 %v258
  %v524 = vpop.f32.mrf.mxu0
  %v525 = vadd.f32 %v120, %v524
  %v526 = vpop.f32.mrf.mxu0
  %v527 = vpop.f32.mrf.mxu0
  %v528 = vadd.f32 %v120, %v527
  %v529 = vpop.f32.mrf.mxu0
  %530 = vmatprep.mubr.bf16.mxu0 %v262
  %531 = vmatmul.mubr.bf16.gmra.mxu0 %v261
  %v532 = vpop.f32.mrf.mxu0
  %v533 = vadd.f32 %v120, %v532
  %v534 = vpop.f32.mrf.mxu0
  %v535 = vpop.f32.mrf.mxu0
  %v536 = vadd.f32 %v120, %v535
  %v537 = vpop.f32.mrf.mxu0
  %538 = vmatprep.mubr.bf16.mxu0 %v265
  %539 = vmatmul.mubr.bf16.gmra.mxu0 %v264
  %v540 = vpop.f32.mrf.mxu0
  %v541 = vadd.f32 %v120, %v540
  %v542 = vpop.f32.mrf.mxu0
  %v543 = vpop.f32.mrf.mxu0
  %v544 = vadd.f32 %v120, %v543
  %v545 = vpop.f32.mrf.mxu0
  %546 = vmatprep.mubr.bf16.mxu0 %v268
  %547 = vmatmul.mubr.bf16.gmra.mxu0 %v267
  %v548 = vpop.f32.mrf.mxu0
  %v549 = vadd.f32 %v120, %v548
  %v550 = vpop.f32.mrf.mxu0
  %v551 = vpop.f32.mrf.mxu0
  %v552 = vadd.f32 %v120, %v551
  %v553 = vpop.f32.mrf.mxu0
  %554 = vmatprep.mubr.bf16.mxu0 %v271
  %555 = vmatmul.mubr.bf16.gmra.mxu0 %v270
  %v556 = vpop.f32.mrf.mxu0
  %v557 = vadd.f32 %v120, %v556
  %v558 = vpop.f32.mrf.mxu0
  %v559 = vpop.f32.mrf.mxu0
  %v560 = vadd.f32 %v120, %v559
  %v561 = vpop.f32.mrf.mxu0
  %562 = vmatprep.mubr.bf16.mxu0 %v274
  %563 = vmatmul.mubr.bf16.gmra.mxu0 %v273
  %v564 = vpop.f32.mrf.mxu0
  %v565 = vadd.f32 %v120, %v564
  %v566 = vpop.f32.mrf.mxu0
  %v567 = vpop.f32.mrf.mxu0
  %v568 = vadd.f32 %v120, %v567
  %v569 = vpop.f32.mrf.mxu0
  %570 = vmatprep.mubr.bf16.mxu0 %v277
  %571 = vmatmul.mubr.bf16.gmra.mxu0 %v276
  %v572 = vpop.f32.mrf.mxu0
  %v573 = vadd.f32 %v120, %v572
  %v574 = vpop.f32.mrf.mxu0
  %v575 = vpop.f32.mrf.mxu0
  %v576 = vadd.f32 %v120, %v575
  %v577 = vpop.f32.mrf.mxu0
  %578 = vmatprep.mubr.bf16.mxu0 %v280
  %579 = vmatmul.mubr.bf16.gmra.mxu0 %v279
  %v580 = vpop.f32.mrf.mxu0
  %v581 = vadd.f32 %v120, %v580
  %v582 = vpop.f32.mrf.mxu0
  %v583 = vpop.f32.mrf.mxu0
  %v584 = vadd.f32 %v120, %v583
  %v585 = vpop.f32.mrf.mxu0
  %586 = vmatprep.mubr.bf16.mxu0 %v283
  %587 = vmatmul.mubr.bf16.gmra.mxu0 %v282
  %v588 = vpop.f32.mrf.mxu0
  %v589 = vadd.f32 %v120, %v588
  %v590 = vpop.f32.mrf.mxu0
  %v591 = vpop.f32.mrf.mxu0
  %v592 = vadd.f32 %v120, %v591
  %v593 = vpop.f32.mrf.mxu0
  %594 = vmatprep.mubr.bf16.mxu0 %v286
  %595 = vmatmul.mubr.bf16.gmra.mxu0 %v285
  %v596 = vpop.f32.mrf.mxu0
  %v597 = vadd.f32 %v120, %v596
  %v598 = vpop.f32.mrf.mxu0
  %v599 = vpop.f32.mrf.mxu0
  %v600 = vadd.f32 %v120, %v599
  %v601 = vpop.f32.mrf.mxu0
  %602 = vmatprep.mubr.bf16.mxu0 %v289
  %603 = vmatmul.mubr.bf16.gmra.mxu0 %v288
  %v604 = vpop.f32.mrf.mxu0
  %v605 = vadd.f32 %v120, %v604
  %v606 = vpop.f32.mrf.mxu0
  %v607 = vpop.f32.mrf.mxu0
  %v608 = vadd.f32 %v120, %v607
  %v609 = vpop.f32.mrf.mxu0
  %610 = vdwg.mxu0
  %611 = vmatprep.subr.bf16.mxu0 0
  %612 = vmatpush1.bf16.msra.mxu0 %v449
  %613 = vmatprep.subr.bf16.mxu0 0
  %614 = vmatpush1.bf16.msra.mxu0 %v448
  %615 = vmatprep.subr.bf16.mxu0 0
  %616 = vmatpush1.bf16.msra.mxu0 %v447
  %617 = vmatprep.subr.bf16.mxu0 0
  %618 = vmatpush1.bf16.msra.mxu0 %v446
  %619 = vmatprep.subr.bf16.mxu0 0
  %620 = vmatpush1.bf16.msra.mxu0 %v445
  %621 = vmatprep.subr.bf16.mxu0 0
  %622 = vmatpush1.bf16.msra.mxu0 %v444
  %623 = vmatprep.subr.bf16.mxu0 0
  %624 = vmatpush1.bf16.msra.mxu0 %v443
  %625 = vmatprep.subr.bf16.mxu0 0
  %626 = vmatpush1.bf16.msra.mxu0 %v442
  %627 = vmatprep.subr.bf16.mxu0 0
  %628 = vmatpush2.bf16.msra.mxu0 0
  %629 = vmatprep.subr.bf16.mxu0 0
  %630 = vmatpush2.bf16.msra.mxu0 0
  %631 = vmatprep.subr.bf16.mxu0 0
  %632 = vmatpush2.bf16.msra.mxu0 0
  %633 = vmatprep.subr.bf16.mxu0 0
  %634 = vmatpush2.bf16.msra.mxu0 0
  %635 = vmatprep.subr.bf16.mxu0 0
  %636 = vmatpush2.bf16.msra.mxu0 0
  %637 = vmatprep.subr.bf16.mxu0 0
  %638 = vmatpush2.bf16.msra.mxu0 0
  %639 = vmatprep.subr.bf16.mxu0 0
  %640 = vmatpush2.bf16.msra.mxu0 0
  %641 = vmatprep.subr.bf16.mxu0 0
  %642 = vmatpush2.bf16.msra.mxu0 0
  %643 = vmatprep.mubr.bf16.mxu0 0
  %644 = vmatmul.mubr.bf16.gmra.mxu0 %v254
  %v645 = vpop.f32.mrf.mxu0
  %v646 = vadd.f32 %v509, %v645
  %v647 = vpop.f32.mrf.mxu0
  %v648 = vpop.f32.mrf.mxu0
  %v649 = vadd.f32 %v512, %v648
  %v650 = vpop.f32.mrf.mxu0
  %651 = vmatprep.mubr.bf16.mxu0 0
  %652 = vmatmul.mubr.bf16.gmra.mxu0 %v257
  %v653 = vpop.f32.mrf.mxu0
  %v654 = vadd.f32 %v517, %v653
  %v655 = vpop.f32.mrf.mxu0
  %v656 = vpop.f32.mrf.mxu0
  %v657 = vadd.f32 %v520, %v656
  %v658 = vpop.f32.mrf.mxu0
  %659 = vmatprep.mubr.bf16.mxu0 0
  %660 = vmatmul.mubr.bf16.gmra.mxu0 %v260
  %v661 = vpop.f32.mrf.mxu0
  %v662 = vadd.f32 %v525, %v661
  %v663 = vpop.f32.mrf.mxu0
  %v664 = vpop.f32.mrf.mxu0
  %v665 = vadd.f32 %v528, %v664
  %v666 = vpop.f32.mrf.mxu0
  %667 = vmatprep.mubr.bf16.mxu0 0
  %668 = vmatmul.mubr.bf16.gmra.mxu0 %v263
  %v669 = vpop.f32.mrf.mxu0
  %v670 = vadd.f32 %v533, %v669
  %v671 = vpop.f32.mrf.mxu0
  %v672 = vpop.f32.mrf.mxu0
  %v673 = vadd.f32 %v536, %v672
  %v674 = vpop.f32.mrf.mxu0
  %675 = vmatprep.mubr.bf16.mxu0 0
  %676 = vmatmul.mubr.bf16.gmra.mxu0 %v266
  %v677 = vpop.f32.mrf.mxu0
  %v678 = vadd.f32 %v541, %v677
  %v679 = vpop.f32.mrf.mxu0
  %v680 = vpop.f32.mrf.mxu0
  %v681 = vadd.f32 %v544, %v680
  %v682 = vpop.f32.mrf.mxu0
  %683 = vmatprep.mubr.bf16.mxu0 0
  %684 = vmatmul.mubr.bf16.gmra.mxu0 %v269
  %v685 = vpop.f32.mrf.mxu0
  %v686 = vadd.f32 %v549, %v685
  %v687 = vpop.f32.mrf.mxu0
  %v688 = vpop.f32.mrf.mxu0
  %v689 = vadd.f32 %v552, %v688
  %v690 = vpop.f32.mrf.mxu0
  %691 = vmatprep.mubr.bf16.mxu0 0
  %692 = vmatmul.mubr.bf16.gmra.mxu0 %v272
  %v693 = vpop.f32.mrf.mxu0
  %v694 = vadd.f32 %v557, %v693
  %v695 = vpop.f32.mrf.mxu0
  %v696 = vpop.f32.mrf.mxu0
  %v697 = vadd.f32 %v560, %v696
  %v698 = vpop.f32.mrf.mxu0
  %699 = vmatprep.mubr.bf16.mxu0 0
  %700 = vmatmul.mubr.bf16.gmra.mxu0 %v275
  %v701 = vpop.f32.mrf.mxu0
  %v702 = vadd.f32 %v565, %v701
  %v703 = vpop.f32.mrf.mxu0
  %v704 = vpop.f32.mrf.mxu0
  %v705 = vadd.f32 %v568, %v704
  %v706 = vpop.f32.mrf.mxu0
  %707 = vmatprep.mubr.bf16.mxu0 0
  %708 = vmatmul.mubr.bf16.gmra.mxu0 %v278
  %v709 = vpop.f32.mrf.mxu0
  %v710 = vadd.f32 %v573, %v709
  %v711 = vpop.f32.mrf.mxu0
  %v712 = vpop.f32.mrf.mxu0
  %v713 = vadd.f32 %v576, %v712
  %v714 = vpop.f32.mrf.mxu0
  %715 = vmatprep.mubr.bf16.mxu0 0
  %716 = vmatmul.mubr.bf16.gmra.mxu0 %v281
  %v717 = vpop.f32.mrf.mxu0
  %v718 = vadd.f32 %v581, %v717
  %v719 = vpop.f32.mrf.mxu0
  %v720 = vpop.f32.mrf.mxu0
  %v721 = vadd.f32 %v584, %v720
  %v722 = vpop.f32.mrf.mxu0
  %723 = vmatprep.mubr.bf16.mxu0 0
  %724 = vmatmul.mubr.bf16.gmra.mxu0 %v284
  %v725 = vpop.f32.mrf.mxu0
  %v726 = vadd.f32 %v589, %v725
  %v727 = vpop.f32.mrf.mxu0
  %v728 = vpop.f32.mrf.mxu0
  %v729 = vadd.f32 %v592, %v728
  %v730 = vpop.f32.mrf.mxu0
  %731 = vmatprep.mubr.bf16.mxu0 0
  %732 = vmatmul.mubr.bf16.gmra.mxu0 %v287
  %v733 = vpop.f32.mrf.mxu0
  %v734 = vadd.f32 %v597, %v733
  %v735 = vpop.f32.mrf.mxu0
  %v736 = vpop.f32.mrf.mxu0
  %v737 = vadd.f32 %v600, %v736
  %v738 = vpop.f32.mrf.mxu0
  %739 = vmatprep.mubr.bf16.mxu0 0
  %740 = vmatmul.mubr.bf16.gmra.mxu0 %v290
  %v741 = vpop.f32.mrf.mxu0
  %v742 = vadd.f32 %v605, %v741
  %v743 = vpop.f32.mrf.mxu0
  %v744 = vpop.f32.mrf.mxu0
  %v745 = vadd.f32 %v608, %v744
  %v746 = vpop.f32.mrf.mxu0
  %747 = vdwg.mxu0
  %v748 = vmax.f32 %v646, 0.0
  %v749 = vmax.f32 %v649, 0.0
  %v750 = vmax.f32 %v654, 0.0
  %v751 = vmax.f32 %v657, 0.0
  %v752 = vmax.f32 %v662, 0.0
  %v753 = vmax.f32 %v665, 0.0
  %v754 = vmax.f32 %v670, 0.0
  %v755 = vmax.f32 %v673, 0.0
  %v756 = vmax.f32 %v678, 0.0
  %v757 = vmax.f32 %v681, 0.0
  %v758 = vmax.f32 %v686, 0.0
  %v759 = vmax.f32 %v689, 0.0
  %v760 = vmax.f32 %v694, 0.0
  %v761 = vmax.f32 %v697, 0.0
  %v762 = vmax.f32 %v702, 0.0
  %v763 = vmax.f32 %v705, 0.0
  %v764 = vmax.f32 %v710, 0.0
  %v765 = vmax.f32 %v713, 0.0
  %v766 = vmax.f32 %v718, 0.0
  %v767 = vmax.f32 %v721, 0.0
  %v768 = vmax.f32 %v726, 0.0
  %v769 = vmax.f32 %v729, 0.0
  %v770 = vmax.f32 %v734, 0.0
  %v771 = vmax.f32 %v737, 0.0
  %v772 = vmax.f32 %v742, 0.0
  %v773 = vmax.f32 %v745, 0.0
  %v774 = vpack.c.bf16 %v749, %v748
  %v775 = vpack.c.bf16 %v751, %v750
  %v776 = vpack.c.bf16 %v753, %v752
  %v777 = vpack.c.bf16 %v755, %v754
  %v778 = vpack.c.bf16 %v757, %v756
  %v779 = vpack.c.bf16 %v759, %v758
  %v780 = vpack.c.bf16 %v761, %v760
  %v781 = vpack.c.bf16 %v763, %v762
  %v782 = vpack.c.bf16 %v765, %v764
  %v783 = vpack.c.bf16 %v767, %v766
  %v784 = vpack.c.bf16 %v769, %v768
  %v785 = vpack.c.bf16 %v771, %v770
  %v786 = vpack.c.bf16 %v773, %v772
  %v800 = vunpack.c.l.b16 %v774
  %v801 = vunpack.c.h.b16 %v774
  %v802 = vunpack.c.l.b16 %v775
  %v803 = vunpack.c.h.b16 %v775
  %v804 = vunpack.c.l.b16 %v776
  %v805 = vunpack.c.h.b16 %v776
  %v806 = vunpack.c.l.b16 %v777
  %v807 = vunpack.c.h.b16 %v777
  %v808 = vunpack.c.l.b16 %v778
  %v809 = vunpack.c.h.b16 %v778
  %v810 = vunpack.c.l.b16 %v779
  %v811 = vunpack.c.h.b16 %v779
  %v812 = vunpack.c.l.b16 %v780
  %v813 = vunpack.c.h.b16 %v780
  %v814 = vunpack.c.l.b16 %v781
  %v815 = vunpack.c.h.b16 %v781
  %v816 = vunpack.c.l.b16 %v782
  %v817 = vunpack.c.h.b16 %v782
  %v818 = vunpack.c.l.b16 %v783
  %v819 = vunpack.c.h.b16 %v783
  %v820 = vunpack.c.l.b16 %v784
  %v821 = vunpack.c.h.b16 %v784
  %v822 = vunpack.c.l.b16 %v785
  %v823 = vunpack.c.h.b16 %v785
  %v824 = vunpack.c.l.b16 %v786
  %v825 = vunpack.c.h.b16 %v786
  %v826 = vpack.c.b16 %v800, %v800
  %v827 = vpack.c.b16 %v801, %v801
  %v828 = vpack.c.b16 %v802, %v802
  %v829 = vpack.c.b16 %v803, %v803
  %v830 = vpack.c.b16 %v804, %v804
  %v831 = vpack.c.b16 %v805, %v805
  %v832 = vpack.c.b16 %v806, %v806
  %v833 = vpack.c.b16 %v807, %v807
  %v834 = vpack.c.b16 %v808, %v808
  %v835 = vpack.c.b16 %v809, %v809
  %v836 = vpack.c.b16 %v810, %v810
  %v837 = vpack.c.b16 %v811, %v811
  %v838 = vpack.c.b16 %v812, %v812
  %v839 = vpack.c.b16 %v813, %v813
  %v840 = vpack.c.b16 %v814, %v814
  %v841 = vpack.c.b16 %v815, %v815
  %v842 = vpack.c.b16 %v816, %v816
  %v843 = vpack.c.b16 %v817, %v817
  %v844 = vpack.c.b16 %v818, %v818
  %v845 = vpack.c.b16 %v819, %v819
  %v846 = vpack.c.b16 %v820, %v820
  %v847 = vpack.c.b16 %v821, %v821
  %v848 = vpack.c.b16 %v822, %v822
  %v849 = vpack.c.b16 %v823, %v823
  %v850 = vpack.c.b16 %v824, %v824
  %v851 = vpack.c.b16 %v825, %v825
  %vm878 = vcmask 519168
  %879 = vst.msk [vmem:[%s3] sm:$0xf] %vm878, %v826
  %880 = vst.msk [vmem:[%s3 + $0x4] sm:$0xf] %vm878, %v827
  %881 = vst.msk [vmem:[%s3 + $0x8] sm:$0xf] %vm878, %v828
  %882 = vst.msk [vmem:[%s3 + $0xc] sm:$0xf] %vm878, %v829
  %883 = vst.msk [vmem:[%s3 + $0x10] sm:$0xf] %vm878, %v830
  %884 = vst.msk [vmem:[%s3 + $0x14] sm:$0xf] %vm878, %v831
  %885 = vst.msk [vmem:[%s3 + $0x18] sm:$0xf] %vm878, %v832
  %886 = vst.msk [vmem:[%s3 + $0x1c] sm:$0xf] %vm878, %v833
  %887 = vst.msk [vmem:[%s3 + $0x20] sm:$0xf] %vm878, %v834
  %888 = vst.msk [vmem:[%s3 + $0x24] sm:$0xf] %vm878, %v835
  %889 = vst.msk [vmem:[%s3 + $0x28] sm:$0xf] %vm878, %v836
  %890 = vst.msk [vmem:[%s3 + $0x2c] sm:$0xf] %vm878, %v837
  %891 = vst.msk [vmem:[%s3 + $0x30] sm:$0xf] %vm878, %v838
  %892 = vst.msk [vmem:[%s3 + $0x34] sm:$0xf] %vm878, %v839
  %893 = vst.msk [vmem:[%s3 + $0x38] sm:$0xf] %vm878, %v840
  %894 = vst.msk [vmem:[%s3 + $0x3c] sm:$0xf] %vm878, %v841
  %895 = vst.msk [vmem:[%s3 + $0x40] sm:$0xf] %vm878, %v842
  %896 = vst.msk [vmem:[%s3 + $0x44] sm:$0xf] %vm878, %v843
  %897 = vst.msk [vmem:[%s3 + $0x48] sm:$0xf] %vm878, %v844
  %898 = vst.msk [vmem:[%s3 + $0x4c] sm:$0xf] %vm878, %v845
  %899 = vst.msk [vmem:[%s3 + $0x50] sm:$0xf] %vm878, %v846
  %900 = vst.msk [vmem:[%s3 + $0x54] sm:$0xf] %vm878, %v847
  %901 = vst.msk [vmem:[%s3 + $0x58] sm:$0xf] %vm878, %v848
  %902 = vst.msk [vmem:[%s3 + $0x5c] sm:$0xf] %vm878, %v849
  %903 = vst.msk [vmem:[%s3 + $0x60] sm:$0xf] %vm878, %v850
  %904 = vst.msk [vmem:[%s3 + $0x64] sm:$0xf] %vm878, %v851
  // Predicated region
  $region14: #{lpips_loss.15} parent=0 // pred_check
    _
  $region15: #{lpips_loss.15} parent=0 // pred_check_branch
    %906 = sbr.rel (0) target = $region17
  $region16: #{lpips_loss.15} parent=0 // pred_region
    _
  $region17: #{lpips_loss.15} parent=0 // pred_fallthru
    _
  // Predicated region
  $region18: #{lpips_loss.15} parent=0 // pred_check
    _
  $region19: #{lpips_loss.15} parent=0 // pred_check_branch
    %908 = sbr.rel (0) target = $region21
  $region20: #{lpips_loss.15} parent=0 // pred_region
    _
  $region21: #{lpips_loss.15} parent=0 // pred_fallthru
    _

// kernel: lpips_loss.16
$region0: #{lpips_loss.16}
  #allocation0 [shape = 'u32[]', space=smem, size = 0x4, offset = 0x4, fixed_abs, tag = 'smem constant byte address 0x4 - core index']
  #allocation1 [shape = 'u32[144,128]{1,0:T(1,128)}', space=vmem, size = 0x12000, scoped, tag = 'internal scratch']
  %s0 = inlined_call_operand.vmem [shape: bf16[9,48,64], index: 0, kind: input, shape index: {}]
  %s1 = inlined_call_operand.vmem [shape: bf16[48,64], index: 1, kind: output, shape index: {}]
  %s2 = sld [smem:[#allocation0]]
  $region14: #{lpips_loss.16} parent=0
    _
  %s4 = ssub.s32 1, %s2
  %s5 = scalar_select 0, %s4, %s2
  // Predicated region
  $region2: #{lpips_loss.16} parent=0 // pred_check
    _
  $region3: #{lpips_loss.16} parent=0 // pred_check_branch
    %7 = sbr.rel (0) target = $region5
  $region4: #{lpips_loss.16} parent=0 // pred_region
    _
  $region5: #{lpips_loss.16} parent=0 // pred_fallthru
    _
  %v9 = vld [vmem:[%s0] sm:$0xf]
  %v10 = vld [vmem:[%s0 + $0x4] sm:$0xf]
  %v11 = vld [vmem:[%s0 + $0x8] sm:$0xf]
  %v12 = vld [vmem:[%s0 + $0xc] sm:$0xf]
  %v13 = vld [vmem:[%s0 + $0x10] sm:$0xf]
  %v14 = vld [vmem:[%s0 + $0x14] sm:$0xf]
  %v15 = vld [vmem:[%s0 + $0x18] sm:$0xf]
  %v16 = vld [vmem:[%s0 + $0x1c] sm:$0xf]
  %v17 = vld [vmem:[%s0 + $0x20] sm:$0xf]
  %v18 = vld [vmem:[%s0 + $0x24] sm:$0xf]
  %v19 = vld [vmem:[%s0 + $0x28] sm:$0xf]
  %v20 = vld [vmem:[%s0 + $0x2c] sm:$0xf]
  %v21 = vld [vmem:[%s0 + $0x30] sm:$0xf]
  %v22 = vld [vmem:[%s0 + $0x34] sm:$0xf]
  %v23 = vld [vmem:[%s0 + $0x38] sm:$0xf]
  %v24 = vld [vmem:[%s0 + $0x3c] sm:$0xf]
  %v25 = vld [vmem:[%s0 + $0x40] sm:$0xf]
  %v26 = vld [vmem:[%s0 + $0x44] sm:$0xf]
  %v27 = vld [vmem:[%s0 + $0x48] sm:$0xf]
  %v28 = vld [vmem:[%s0 + $0x4c] sm:$0xf]
  %v29 = vld [vmem:[%s0 + $0x50] sm:$0xf]
  %v30 = vld [vmem:[%s0 + $0x54] sm:$0xf]
  %v31 = vld [vmem:[%s0 + $0x58] sm:$0xf]
  %v32 = vld [vmem:[%s0 + $0x5c] sm:$0xf]
  %v33 = vld [vmem:[%s0 + $0x60] sm:$0xf]
  %v34 = vld [vmem:[%s0 + $0x64] sm:$0xf]
  %v35 = vld [vmem:[%s0 + $0x68] sm:$0xf]
  %v36 = vld [vmem:[%s0 + $0x6c] sm:$0xf]
  %v37 = vld [vmem:[%s0 + $0x70] sm:$0xf]
  %v38 = vld [vmem:[%s0 + $0x74] sm:$0xf]
  %v39 = vld [vmem:[%s0 + $0x78] sm:$0xf]
  %v40 = vld [vmem:[%s0 + $0x7c] sm:$0xf]
  %v41 = vld [vmem:[%s0 + $0x80] sm:$0xf]
  %v42 = vld [vmem:[%s0 + $0x84] sm:$0xf]
  %v43 = vld [vmem:[%s0 + $0x88] sm:$0xf]
  %v44 = vld [vmem:[%s0 + $0x8c] sm:$0xf]
  %v45 = vld [vmem:[%s0 + $0x90] sm:$0xf]
  %v46 = vld [vmem:[%s0 + $0x94] sm:$0xf]
  %v47 = vld [vmem:[%s0 + $0x98] sm:$0xf]
  %v48 = vld [vmem:[%s0 + $0x9c] sm:$0xf]
  %v49 = vld [vmem:[%s0 + $0xa0] sm:$0xf]
  %v50 = vld [vmem:[%s0 + $0xa4] sm:$0xf]
  %v51 = vld [vmem:[%s0 + $0xa8] sm:$0xf]
  %v52 = vld [vmem:[%s0 + $0xac] sm:$0xf]
  %v53 = vld [vmem:[%s0 + $0xb0] sm:$0xf]
  %v54 = vld [vmem:[%s0 + $0xb4] sm:$0xf]
  %v55 = vld [vmem:[%s0 + $0xb8] sm:$0xf]
  %v56 = vld [vmem:[%s0 + $0xbc] sm:$0xf]
  %v57 = vld [vmem:[%s0 + $0xc0] sm:$0xf]
  %v58 = vld [vmem:[%s0 + $0xc4] sm:$0xf]
  %v59 = vld [vmem:[%s0 + $0xc8] sm:$0xf]
  %v60 = vld [vmem:[%s0 + $0xcc] sm:$0xf]
  %v61 = vld [vmem:[%s0 + $0xd0] sm:$0xf]
  %v62 = vld [vmem:[%s0 + $0xd4] sm:$0xf]
  %vm63 = vcmask 519168
  %v66 = vsel %vm63, %v9, 4286644096
  %v69 = vsel %vm63, %v15, 4286644096
  %v71 = vmax.bf16 %v66, %v69
  %v73 = vsel %vm63, %v21, 4286644096
  %v75 = vmax.bf16 %v71, %v73
  %v77 = vsel %vm63, %v27, 4286644096
  %v79 = vmax.bf16 %v75, %v77
  %v81 = vsel %vm63, %v33, 4286644096
  %v83 = vmax.bf16 %v79, %v81
  %v85 = vsel %vm63, %v39, 4286644096
  %v87 = vmax.bf16 %v83, %v85
  %v89 = vsel %vm63, %v45, 4286644096
  %v91 = vmax.bf16 %v87, %v89
  %v93 = vsel %vm63, %v51, 4286644096
  %v95 = vmax.bf16 %v91, %v93
  %v97 = vsel %vm63, %v57, 4286644096
  %v99 = vmax.bf16 %v95, %v97
  %v101 = vsel %vm63, %v10, 4286644096
  %v104 = vsel %vm63, %v16, 4286644096
  %v106 = vmax.bf16 %v101, %v104
  %v108 = vsel %vm63, %v22, 4286644096
  %v110 = vmax.bf16 %v106, %v108
  %v112 = vsel %vm63, %v28, 4286644096
  %v114 = vmax.bf16 %v110, %v112
  %v116 = vsel %vm63, %v34, 4286644096
  %v118 = vmax.bf16 %v114, %v116
  %v120 = vsel %vm63, %v40, 4286644096
  %v122 = vmax.bf16 %v118, %v120
  %v124 = vsel %vm63, %v46, 4286644096
  %v126 = vmax.bf16 %v122, %v124
  %v128 = vsel %vm63, %v52, 4286644096
  %v130 = vmax.bf16 %v126, %v128
  %v132 = vsel %vm63, %v58, 4286644096
  %v134 = vmax.bf16 %v130, %v132
  %v136 = vsel %vm63, %v11, 4286644096
  %v139 = vsel %vm63, %v17, 4286644096
  %v141 = vmax.bf16 %v136, %v139
  %v143 = vsel %vm63, %v23, 4286644096
  %v145 = vmax.bf16 %v141, %v143
  %v147 = vsel %vm63, %v29, 4286644096
  %v149 = vmax.bf16 %v145, %v147
  %v151 = vsel %vm63, %v35, 4286644096
  %v153 = vmax.bf16 %v149, %v151
  %v155 = vsel %vm63, %v41, 4286644096
  %v157 = vmax.bf16 %v153, %v155
  %v159 = vsel %vm63, %v47, 4286644096
  %v161 = vmax.bf16 %v157, %v159
  %v163 = vsel %vm63, %v53, 4286644096
  %v165 = vmax.bf16 %v161, %v163
  %v167 = vsel %vm63, %v59, 4286644096
  %v169 = vmax.bf16 %v165, %v167
  %v171 = vsel %vm63, %v12, 4286644096
  %v174 = vsel %vm63, %v18, 4286644096
  %v176 = vmax.bf16 %v171, %v174
  %v178 = vsel %vm63, %v24, 4286644096
  %v180 = vmax.bf16 %v176, %v178
  %v182 = vsel %vm63, %v30, 4286644096
  %v184 = vmax.bf16 %v180, %v182
  %v186 = vsel %vm63, %v36, 4286644096
  %v188 = vmax.bf16 %v184, %v186
  %v190 = vsel %vm63, %v42, 4286644096
  %v192 = vmax.bf16 %v188, %v190
  %v194 = vsel %vm63, %v48, 4286644096
  %v196 = vmax.bf16 %v192, %v194
  %v198 = vsel %vm63, %v54, 4286644096
  %v200 = vmax.bf16 %v196, %v198
  %v202 = vsel %vm63, %v60, 4286644096
  %v204 = vmax.bf16 %v200, %v202
  %v206 = vsel %vm63, %v13, 4286644096
  %v209 = vsel %vm63, %v19, 4286644096
  %v211 = vmax.bf16 %v206, %v209
  %v213 = vsel %vm63, %v25, 4286644096
  %v215 = vmax.bf16 %v211, %v213
  %v217 = vsel %vm63, %v31, 4286644096
  %v219 = vmax.bf16 %v215, %v217
  %v221 = vsel %vm63, %v37, 4286644096
  %v223 = vmax.bf16 %v219, %v221
  %v225 = vsel %vm63, %v43, 4286644096
  %v227 = vmax.bf16 %v223, %v225
  %v229 = vsel %vm63, %v49, 4286644096
  %v231 = vmax.bf16 %v227, %v229
  %v233 = vsel %vm63, %v55, 4286644096
  %v235 = vmax.bf16 %v231, %v233
  %v237 = vsel %vm63, %v61, 4286644096
  %v239 = vmax.bf16 %v235, %v237
  %v241 = vsel %vm63, %v14, 4286644096
  %v244 = vsel %vm63, %v20, 4286644096
  %v246 = vmax.bf16 %v241, %v244
  %v248 = vsel %vm63, %v26, 4286644096
  %v250 = vmax.bf16 %v246, %v248
  %v252 = vsel %vm63, %v32, 4286644096
  %v254 = vmax.bf16 %v250, %v252
  %v256 = vsel %vm63, %v38, 4286644096
  %v258 = vmax.bf16 %v254, %v256
  %v260 = vsel %vm63, %v44, 4286644096
  %v262 = vmax.bf16 %v258, %v260
  %v264 = vsel %vm63, %v50, 4286644096
  %v266 = vmax.bf16 %v262, %v264
  %v268 = vsel %vm63, %v56, 4286644096
  %v270 = vmax.bf16 %v266, %v268
  %v272 = vsel %vm63, %v62, 4286644096
  %v274 = vmax.bf16 %v270, %v272
  %275 = vst.msk [vmem:[%s1] sm:$0xf] %vm63, %v99
  %276 = vst.msk [vmem:[%s1 + $0x4] sm:$0xf] %vm63, %v134
  %277 = vst.msk [vmem:[%s1 + $0x8] sm:$0xf] %vm63, %v169
  %278 = vst.msk [vmem:[%s1 + $0xc] sm:$0xf] %vm63, %v204
  %279 = vst.msk [vmem:[%s1 + $0x10] sm:$0xf] %vm63, %v239
  %280 = vst.msk [vmem:[%s1 + $0x14] sm:$0xf] %vm63, %v274
  // Predicated region
  $region6: #{lpips_loss.16} parent=0 // pred_check
    _
  $region7: #{lpips_loss.16} parent=0 // pred_check_branch
    %282 = sbr.rel (0) target = $region9
  $region8: #{lpips_loss.16} parent=0 // pred_region
    _
  $region9: #{lpips_loss.16} parent=0 // pred_fallthru
    _
  // Predicated region
  $region10: #{lpips_loss.16} parent=0 // pred_check
    _
  $region11: #{lpips_loss.16} parent=0 // pred_check_branch
    %284 = sbr.rel (0) target = $region13
  $region12: #{lpips_loss.16} parent=0 // pred_region
    _
  $region13: #{lpips_loss.16} parent=0 // pred_fallthru
    _

// kernel: lpips_loss.18
$region0: #{lpips_loss.18}
  #allocation0 [shape = 'u32[]', space=smem, size = 0x4, offset = 0x4, fixed_abs, tag = 'smem constant byte address 0x4 - core index']
  #allocation1 [shape = 'u32[144,128]{1,0:T(1,128)}', space=vmem, size = 0x12000, scoped, tag = 'internal scratch']
  %s0 = inlined_call_operand.vmem [shape: bf16[9,16,192], index: 0, kind: input, shape index: {}]
  %s1 = inlined_call_operand.vmem [shape: bf16[16,192], index: 1, kind: output, shape index: {}]
  %s2 = sld [smem:[#allocation0]]
  $region14: #{lpips_loss.18} parent=0
    _
  %s4 = ssub.s32 1, %s2
  %s5 = scalar_select 0, %s4, %s2
  // Predicated region
  $region2: #{lpips_loss.18} parent=0 // pred_check
    _
  $region3: #{lpips_loss.18} parent=0 // pred_check_branch
    %7 = sbr.rel (0) target = $region5
  $region4: #{lpips_loss.18} parent=0 // pred_region
    _
  $region5: #{lpips_loss.18} parent=0 // pred_fallthru
    _
  %v9 = vld [vmem:[%s0] sm:$0xff]
  %v10 = vld [vmem:[%s0 + $0x8] sm:$0xff]
  %v11 = vld [vmem:[%s0 + $0x10] sm:$0xff]
  %v12 = vld [vmem:[%s0 + $0x18] sm:$0xff]
  %v13 = vld [vmem:[%s0 + $0x20] sm:$0xff]
  %v14 = vld [vmem:[%s0 + $0x28] sm:$0xff]
  %v15 = vld [vmem:[%s0 + $0x30] sm:$0xff]
  %v16 = vld [vmem:[%s0 + $0x38] sm:$0xff]
  %v17 = vld [vmem:[%s0 + $0x40] sm:$0xff]
  %v18 = vld [vmem:[%s0 + $0x48] sm:$0xff]
  %v19 = vld [vmem:[%s0 + $0x50] sm:$0xff]
  %v20 = vld [vmem:[%s0 + $0x58] sm:$0xff]
  %v21 = vld [vmem:[%s0 + $0x60] sm:$0xff]
  %v22 = vld [vmem:[%s0 + $0x68] sm:$0xff]
  %v23 = vld [vmem:[%s0 + $0x70] sm:$0xff]
  %v24 = vld [vmem:[%s0 + $0x78] sm:$0xff]
  %v25 = vld [vmem:[%s0 + $0x80] sm:$0xff]
  %v26 = vld [vmem:[%s0 + $0x88] sm:$0xff]
  %vm27 = vcmask 1043456
  %vm28 = vcmask 523268
  %vm29 = vmor %vm28, %vm27
  %v32 = vsel %vm29, %v9, 4286644096
  %v35 = vsel %vm29, %v11, 4286644096
  %v38 = vsel %vm29, %v13, 4286644096
  %v40 = vmax.bf16 %v32, %v38
  %v42 = vsel %vm29, %v15, 4286644096
  %v44 = vmax.bf16 %v35, %v42
  %v46 = vsel %vm29, %v17, 4286644096
  %v48 = vmax.bf16 %v40, %v46
  %v50 = vsel %vm29, %v19, 4286644096
  %v52 = vmax.bf16 %v44, %v50
  %v54 = vsel %vm29, %v21, 4286644096
  %v56 = vmax.bf16 %v48, %v54
  %v58 = vsel %vm29, %v23, 4286644096
  %v60 = vmax.bf16 %v52, %v58
  %v62 = vsel %vm29, %v25, 4286644096
  %v64 = vmax.bf16 %v56, %v62
  %v65 = vmax.bf16 %v64, %v60
  %v67 = vsel %vm29, %v10, 4286644096
  %v70 = vsel %vm29, %v12, 4286644096
  %v73 = vsel %vm29, %v14, 4286644096
  %v75 = vmax.bf16 %v67, %v73
  %v77 = vsel %vm29, %v16, 4286644096
  %v79 = vmax.bf16 %v70, %v77
  %v81 = vsel %vm29, %v18, 4286644096
  %v83 = vmax.bf16 %v75, %v81
  %v85 = vsel %vm29, %v20, 4286644096
  %v87 = vmax.bf16 %v79, %v85
  %v89 = vsel %vm29, %v22, 4286644096
  %v91 = vmax.bf16 %v83, %v89
  %v93 = vsel %vm29, %v24, 4286644096
  %v95 = vmax.bf16 %v87, %v93
  %v97 = vsel %vm29, %v26, 4286644096
  %v99 = vmax.bf16 %v91, %v97
  %v100 = vmax.bf16 %v99, %v95
  %101 = vst.msk [vmem:[%s1] sm:$0xff] %vm29, %v65
  %102 = vst.msk [vmem:[%s1 + $0x8] sm:$0xff] %vm29, %v100
  // Predicated region
  $region6: #{lpips_loss.18} parent=0 // pred_check
    _
  $region7: #{lpips_loss.18} parent=0 // pred_check_branch
    %104 = sbr.rel (0) target = $region9
  $region8: #{lpips_loss.18} parent=0 // pred_region
    _
  $region9: #{lpips_loss.18} parent=0 // pred_fallthru
    _
  // Predicated region
  $region10: #{lpips_loss.18} parent=0 // pred_check
    _
  $region11: #{lpips_loss.18} parent=0 // pred_check_branch
    %106 = sbr.rel (0) target = $region13
  $region12: #{lpips_loss.18} parent=0 // pred_region
    _
  $region13: #{lpips_loss.18} parent=0 // pred_fallthru
    _

// kernel: lpips_loss.17
$region0: #{lpips_loss.17}
  #allocation0 [shape = 'u32[]', space=smem, size = 0x4, offset = 0x4, fixed_abs, tag = 'smem constant byte address 0x4 - core index']
  #allocation1 [shape = 'u32[144,128]{1,0:T(1,128)}', space=vmem, size = 0x12000, scoped, tag = 'internal scratch']
  %s0 = inlined_call_operand.vmem [shape: bf16[48,1664], index: 0, kind: input, shape index: {}]
  %s1 = inlined_call_operand.vmem [shape: bf16[1664,192], index: 1, kind: input, shape index: {}]
  %s2 = inlined_call_operand.vmem [shape: f32[1,192], index: 2, kind: input, shape index: {}]
  %s3 = inlined_call_operand.vmem [shape: bf16[48,192], index: 3, kind: output, shape index: {}]
  %s4 = sld [smem:[#allocation0]]
  $region22: #{lpips_loss.17} parent=0
    _
  %s6 = ssub.s32 1, %s4
  %s7 = scalar_select 0, %s6, %s4
  // Predicated region
  $region2: #{lpips_loss.17} parent=0 // pred_check
    _
  $region3: #{lpips_loss.17} parent=0 // pred_check_branch
    %9 = sbr.rel (0) target = $region5
  $region4: #{lpips_loss.17} parent=0 // pred_region
    _
  $region5: #{lpips_loss.17} parent=0 // pred_fallthru
    _
  // Predicated region
  $region6: #{lpips_loss.17} parent=0 // pred_check
    _
  $region7: #{lpips_loss.17} parent=0 // pred_check_branch
    %11 = sbr.rel (0) target = $region9
  $region8: #{lpips_loss.17} parent=0 // pred_region
    _
  $region9: #{lpips_loss.17} parent=0 // pred_fallthru
    _
  // Predicated region
  $region10: #{lpips_loss.17} parent=0 // pred_check
    _
  $region11: #{lpips_loss.17} parent=0 // pred_check_branch
    %13 = sbr.rel (0) target = $region13
  $region12: #{lpips_loss.17} parent=0 // pred_region
    _
  $region13: #{lpips_loss.17} parent=0 // pred_fallthru
    _
  %v15 = vld [vmem:[%s0] sm:$0xff]
  %v16 = vld [vmem:[%s0 + $0x8] sm:$0xff]
  %v17 = vld [vmem:[%s0 + $0x10] sm:$0xff]
  %v18 = vld [vmem:[%s0 + $0x18] sm:$0xff]
  %v19 = vld [vmem:[%s0 + $0x20] sm:$0xff]
  %v20 = vld [vmem:[%s0 + $0x28] sm:$0xff]
  %v21 = vld [vmem:[%s0 + $0x30] sm:$0xf]
  %v22 = vld [vmem:[%s0 + $0x34] sm:$0xff]
  %v23 = vld [vmem:[%s0 + $0x3c] sm:$0xff]
  %v24 = vld [vmem:[%s0 + $0x44] sm:$0xff]
  %v25 = vld [vmem:[%s0 + $0x4c] sm:$0xff]
  %v26 = vld [vmem:[%s0 + $0x54] sm:$0xff]
  %v27 = vld [vmem:[%s0 + $0x5c] sm:$0xff]
  %v28 = vld [vmem:[%s0 + $0x64] sm:$0xf]
  %v29 = vld [vmem:[%s0 + $0x68] sm:$0xff]
  %v30 = vld [vmem:[%s0 + $0x70] sm:$0xff]
  %v31 = vld [vmem:[%s0 + $0x78] sm:$0xff]
  %v32 = vld [vmem:[%s0 + $0x80] sm:$0xff]
  %v33 = vld [vmem:[%s0 + $0x88] sm:$0xff]
  %v34 = vld [vmem:[%s0 + $0x90] sm:$0xff]
  %v35 = vld [vmem:[%s0 + $0x98] sm:$0xf]
  %v36 = vld [vmem:[%s0 + $0x9c] sm:$0xff]
  %v37 = vld [vmem:[%s0 + $0xa4] sm:$0xff]
  %v38 = vld [vmem:[%s0 + $0xac] sm:$0xff]
  %v39 = vld [vmem:[%s0 + $0xb4] sm:$0xff]
  %v40 = vld [vmem:[%s0 + $0xbc] sm:$0xff]
  %v41 = vld [vmem:[%s0 + $0xc4] sm:$0xff]
  %v42 = vld [vmem:[%s0 + $0xcc] sm:$0xf]
  %v43 = vld [vmem:[%s0 + $0xd0] sm:$0xff]
  %v44 = vld [vmem:[%s0 + $0xd8] sm:$0xff]
  %v45 = vld [vmem:[%s0 + $0xe0] sm:$0xff]
  %v46 = vld [vmem:[%s0 + $0xe8] sm:$0xff]
  %v47 = vld [vmem:[%s0 + $0xf0] sm:$0xff]
  %v48 = vld [vmem:[%s0 + $0xf8] sm:$0xff]
  %v49 = vld [vmem:[%s0 + $0x100] sm:$0xf]
  %v50 = vld [vmem:[%s0 + $0x104] sm:$0xff]
  %v51 = vld [vmem:[%s0 + $0x10c] sm:$0xff]
  %v52 = vld [vmem:[%s0 + $0x114] sm:$0xff]
  %v53 = vld [vmem:[%s0 + $0x11c] sm:$0xff]
  %v54 = vld [vmem:[%s0 + $0x124] sm:$0xff]
  %v55 = vld [vmem:[%s0 + $0x12c] sm:$0xff]
  %v56 = vld [vmem:[%s0 + $0x134] sm:$0xf]
  %v57 = vld [vmem:[%s1] sm:$0xff]
  %v58 = vld [vmem:[%s1 + $0x8] sm:$0xff]
  %v59 = vld [vmem:[%s1 + $0x10] sm:$0xff]
  %v60 = vld [vmem:[%s1 + $0x18] sm:$0xff]
  %v61 = vld [vmem:[%s1 + $0x20] sm:$0xff]
  %v62 = vld [vmem:[%s1 + $0x28] sm:$0xff]
  %v63 = vld [vmem:[%s1 + $0x30] sm:$0xff]
  %v64 = vld [vmem:[%s1 + $0x38] sm:$0xff]
  %v65 = vld [vmem:[%s1 + $0x40] sm:$0xff]
  %v66 = vld [vmem:[%s1 + $0x48] sm:$0xff]
  %v67 = vld [vmem:[%s1 + $0x50] sm:$0xff]
  %v68 = vld [vmem:[%s1 + $0x58] sm:$0xff]
  %v69 = vld [vmem:[%s1 + $0x60] sm:$0xff]
  %v70 = vld [vmem:[%s1 + $0x68] sm:$0xff]
  %v71 = vld [vmem:[%s1 + $0x70] sm:$0xff]
  %v72 = vld [vmem:[%s1 + $0x78] sm:$0xff]
  %v73 = vld [vmem:[%s1 + $0x80] sm:$0xff]
  %v74 = vld [vmem:[%s1 + $0x88] sm:$0xff]
  %v75 = vld [vmem:[%s1 + $0x90] sm:$0xff]
  %v76 = vld [vmem:[%s1 + $0x98] sm:$0xff]
  %v77 = vld [vmem:[%s1 + $0xa0] sm:$0xff]
  %v78 = vld [vmem:[%s1 + $0xa8] sm:$0xff]
  %v79 = vld [vmem:[%s1 + $0xb0] sm:$0xff]
  %v80 = vld [vmem:[%s1 + $0xb8] sm:$0xff]
  %v81 = vld [vmem:[%s1 + $0xc0] sm:$0xff]
  %v82 = vld [vmem:[%s1 + $0xc8] sm:$0xff]
  %v83 = vld [vmem:[%s1 + $0xd0] sm:$0xff]
  %v84 = vld [vmem:[%s1 + $0xd8] sm:$0xff]
  %v85 = vld [vmem:[%s1 + $0xe0] sm:$0xff]
  %v86 = vld [vmem:[%s1 + $0xe8] sm:$0xff]
  %v87 = vld [vmem:[%s1 + $0xf0] sm:$0xff]
  %v88 = vld [vmem:[%s1 + $0xf8] sm:$0xff]
  %v89 = vld [vmem:[%s1 + $0x100] sm:$0xff]
  %v90 = vld [vmem:[%s1 + $0x108] sm:$0xff]
  %v91 = vld [vmem:[%s1 + $0x110] sm:$0xff]
  %v92 = vld [vmem:[%s1 + $0x118] sm:$0xff]
  %v93 = vld [vmem:[%s1 + $0x120] sm:$0xff]
  %v94 = vld [vmem:[%s1 + $0x128] sm:$0xff]
  %v95 = vld [vmem:[%s1 + $0x130] sm:$0xff]
  %v96 = vld [vmem:[%s1 + $0x138] sm:$0xff]
  %v97 = vld [vmem:[%s1 + $0x140] sm:$0xff]
  %v98 = vld [vmem:[%s1 + $0x148] sm:$0xff]
  %v99 = vld [vmem:[%s1 + $0x150] sm:$0xff]
  %v100 = vld [vmem:[%s1 + $0x158] sm:$0xff]
  %v101 = vld [vmem:[%s1 + $0x160] sm:$0xff]
  %v102 = vld [vmem:[%s1 + $0x168] sm:$0xff]
  %v103 = vld [vmem:[%s1 + $0x170] sm:$0xff]
  %v104 = vld [vmem:[%s1 + $0x178] sm:$0xff]
  %v105 = vld [vmem:[%s1 + $0x180] sm:$0xff]
  %v106 = vld [vmem:[%s1 + $0x188] sm:$0xff]
  %v107 = vld [vmem:[%s1 + $0x190] sm:$0xff]
  %v108 = vld [vmem:[%s1 + $0x198] sm:$0xff]
  %v109 = vld [vmem:[%s1 + $0x1a0] sm:$0xff]
  %v110 = vld [vmem:[%s1 + $0x1a8] sm:$0xff]
  %v111 = vld [vmem:[%s1 + $0x1b0] sm:$0xff]
  %v112 = vld [vmem:[%s1 + $0x1b8] sm:$0xff]
  %v113 = vld [vmem:[%s1 + $0x1c0] sm:$0xff]
  %v114 = vld [vmem:[%s1 + $0x1c8] sm:$0xff]
  %v115 = vld [vmem:[%s1 + $0x1d0] sm:$0xff]
  %v116 = vld [vmem:[%s1 + $0x1d8] sm:$0xff]
  %v117 = vld [vmem:[%s1 + $0x1e0] sm:$0xff]
  %v118 = vld [vmem:[%s1 + $0x1e8] sm:$0xff]
  %v119 = vld [vmem:[%s1 + $0x1f0] sm:$0xff]
  %v120 = vld [vmem:[%s1 + $0x1f8] sm:$0xff]
  %v121 = vld [vmem:[%s1 + $0x200] sm:$0xff]
  %v122 = vld [vmem:[%s1 + $0x208] sm:$0xff]
  %v123 = vld [vmem:[%s1 + $0x210] sm:$0xff]
  %v124 = vld [vmem:[%s1 + $0x218] sm:$0xff]
  %v125 = vld [vmem:[%s1 + $0x220] sm:$0xff]
  %v126 = vld [vmem:[%s1 + $0x228] sm:$0xff]
  %v127 = vld [vmem:[%s1 + $0x230] sm:$0xff]
  %v128 = vld [vmem:[%s1 + $0x238] sm:$0xff]
  %v129 = vld [vmem:[%s1 + $0x240] sm:$0xff]
  %v130 = vld [vmem:[%s1 + $0x248] sm:$0xff]
  %v131 = vld [vmem:[%s1 + $0x250] sm:$0xff]
  %v132 = vld [vmem:[%s1 + $0x258] sm:$0xff]
  %v133 = vld [vmem:[%s1 + $0x260] sm:$0xff]
  %v134 = vld [vmem:[%s1 + $0x268] sm:$0xff]
  %v135 = vld [vmem:[%s1 + $0x270] sm:$0xff]
  %v136 = vld [vmem:[%s1 + $0x278] sm:$0xff]
  %v137 = vld [vmem:[%s1 + $0x280] sm:$0xff]
  %v138 = vld [vmem:[%s1 + $0x288] sm:$0xff]
  %v139 = vld [vmem:[%s1 + $0x290] sm:$0xff]
  %v140 = vld [vmem:[%s1 + $0x298] sm:$0xff]
  %v141 = vld [vmem:[%s1 + $0x2a0] sm:$0xff]
  %v142 = vld [vmem:[%s1 + $0x2a8] sm:$0xff]
  %v143 = vld [vmem:[%s1 + $0x2b0] sm:$0xff]
  %v144 = vld [vmem:[%s1 + $0x2b8] sm:$0xff]
  %v145 = vld [vmem:[%s1 + $0x2c0] sm:$0xff]
  %v146 = vld [vmem:[%s1 + $0x2c8] sm:$0xff]
  %v147 = vld [vmem:[%s1 + $0x2d0] sm:$0xff]
  %v148 = vld [vmem:[%s1 + $0x2d8] sm:$0xff]
  %v149 = vld [vmem:[%s1 + $0x2e0] sm:$0xff]
  %v150 = vld [vmem:[%s1 + $0x2e8] sm:$0xff]
  %v151 = vld [vmem:[%s1 + $0x2f0] sm:$0xff]
  %v152 = vld [vmem:[%s1 + $0x2f8] sm:$0xff]
  %v153 = vld [vmem:[%s1 + $0x300] sm:$0xff]
  %v154 = vld [vmem:[%s1 + $0x308] sm:$0xff]
  %v155 = vld [vmem:[%s1 + $0x310] sm:$0xff]
  %v156 = vld [vmem:[%s1 + $0x318] sm:$0xff]
  %v157 = vld [vmem:[%s1 + $0x320] sm:$0xff]
  %v158 = vld [vmem:[%s1 + $0x328] sm:$0xff]
  %v159 = vld [vmem:[%s1 + $0x330] sm:$0xff]
  %v160 = vld [vmem:[%s1 + $0x338] sm:$0xff]
  %v161 = vld [vmem:[%s1 + $0x340] sm:$0xff]
  %v162 = vld [vmem:[%s1 + $0x348] sm:$0xff]
  %v163 = vld [vmem:[%s1 + $0x350] sm:$0xff]
  %v164 = vld [vmem:[%s1 + $0x358] sm:$0xff]
  %v165 = vld [vmem:[%s1 + $0x360] sm:$0xff]
  %v166 = vld [vmem:[%s1 + $0x368] sm:$0xff]
  %v167 = vld [vmem:[%s1 + $0x370] sm:$0xff]
  %v168 = vld [vmem:[%s1 + $0x378] sm:$0xff]
  %v169 = vld [vmem:[%s1 + $0x380] sm:$0xff]
  %v170 = vld [vmem:[%s1 + $0x388] sm:$0xff]
  %v171 = vld [vmem:[%s1 + $0x390] sm:$0xff]
  %v172 = vld [vmem:[%s1 + $0x398] sm:$0xff]
  %v173 = vld [vmem:[%s1 + $0x3a0] sm:$0xff]
  %v174 = vld [vmem:[%s1 + $0x3a8] sm:$0xff]
  %v175 = vld [vmem:[%s1 + $0x3b0] sm:$0xff]
  %v176 = vld [vmem:[%s1 + $0x3b8] sm:$0xff]
  %v177 = vld [vmem:[%s1 + $0x3c0] sm:$0xff]
  %v178 = vld [vmem:[%s1 + $0x3c8] sm:$0xff]
  %v179 = vld [vmem:[%s1 + $0x3d0] sm:$0xff]
  %v180 = vld [vmem:[%s1 + $0x3d8] sm:$0xff]
  %v181 = vld [vmem:[%s1 + $0x3e0] sm:$0xff]
  %v182 = vld [vmem:[%s1 + $0x3e8] sm:$0xff]
  %v183 = vld [vmem:[%s1 + $0x3f0] sm:$0xff]
  %v184 = vld [vmem:[%s1 + $0x3f8] sm:$0xff]
  %v185 = vld [vmem:[%s1 + $0x400] sm:$0xff]
  %v186 = vld [vmem:[%s1 + $0x408] sm:$0xff]
  %v187 = vld [vmem:[%s1 + $0x410] sm:$0xff]
  %v188 = vld [vmem:[%s1 + $0x418] sm:$0xff]
  %v189 = vld [vmem:[%s1 + $0x420] sm:$0xff]
  %v190 = vld [vmem:[%s1 + $0x428] sm:$0xff]
  %v191 = vld [vmem:[%s1 + $0x430] sm:$0xff]
  %v192 = vld [vmem:[%s1 + $0x438] sm:$0xff]
  %v193 = vld [vmem:[%s1 + $0x440] sm:$0xff]
  %v194 = vld [vmem:[%s1 + $0x448] sm:$0xff]
  %v195 = vld [vmem:[%s1 + $0x450] sm:$0xff]
  %v196 = vld [vmem:[%s1 + $0x458] sm:$0xff]
  %v197 = vld [vmem:[%s1 + $0x460] sm:$0xff]
  %v198 = vld [vmem:[%s1 + $0x468] sm:$0xff]
  %v199 = vld [vmem:[%s1 + $0x470] sm:$0xff]
  %v200 = vld [vmem:[%s1 + $0x478] sm:$0xff]
  %v201 = vld [vmem:[%s1 + $0x480] sm:$0xff]
  %v202 = vld [vmem:[%s1 + $0x488] sm:$0xff]
  %v203 = vld [vmem:[%s1 + $0x490] sm:$0xff]
  %v204 = vld [vmem:[%s1 + $0x498] sm:$0xff]
  %v205 = vld [vmem:[%s1 + $0x4a0] sm:$0xff]
  %v206 = vld [vmem:[%s1 + $0x4a8] sm:$0xff]
  %v207 = vld [vmem:[%s1 + $0x4b0] sm:$0xff]
  %v208 = vld [vmem:[%s1 + $0x4b8] sm:$0xff]
  %v209 = vld [vmem:[%s1 + $0x4c0] sm:$0xff]
  %v210 = vld [vmem:[%s1 + $0x4c8] sm:$0xff]
  %v211 = vld [vmem:[%s1 + $0x4d0] sm:$0xff]
  %v212 = vld [vmem:[%s1 + $0x4d8] sm:$0xff]
  %v213 = vld [vmem:[%s1 + $0x4e0] sm:$0xff]
  %v214 = vld [vmem:[%s1 + $0x4e8] sm:$0xff]
  %v215 = vld [vmem:[%s1 + $0x4f0] sm:$0xff]
  %v216 = vld [vmem:[%s1 + $0x4f8] sm:$0xff]
  %v217 = vld [vmem:[%s1 + $0x500] sm:$0xff]
  %v218 = vld [vmem:[%s1 + $0x508] sm:$0xff]
  %v219 = vld [vmem:[%s1 + $0x510] sm:$0xff]
  %v220 = vld [vmem:[%s1 + $0x518] sm:$0xff]
  %v221 = vld [vmem:[%s1 + $0x520] sm:$0xff]
  %v222 = vld [vmem:[%s1 + $0x528] sm:$0xff]
  %v223 = vld [vmem:[%s1 + $0x530] sm:$0xff]
  %v224 = vld [vmem:[%s1 + $0x538] sm:$0xff]
  %v225 = vld [vmem:[%s1 + $0x540] sm:$0xff]
  %v226 = vld [vmem:[%s1 + $0x548] sm:$0xff]
  %v227 = vld [vmem:[%s1 + $0x550] sm:$0xff]
  %v228 = vld [vmem:[%s1 + $0x558] sm:$0xff]
  %v229 = vld [vmem:[%s1 + $0x560] sm:$0xff]
  %v230 = vld [vmem:[%s1 + $0x568] sm:$0xff]
  %v231 = vld [vmem:[%s1 + $0x570] sm:$0xff]
  %v232 = vld [vmem:[%s1 + $0x578] sm:$0xff]
  %v233 = vld [vmem:[%s1 + $0x580] sm:$0xff]
  %v234 = vld [vmem:[%s1 + $0x588] sm:$0xff]
  %v235 = vld [vmem:[%s1 + $0x590] sm:$0xff]
  %v236 = vld [vmem:[%s1 + $0x598] sm:$0xff]
  %v237 = vld [vmem:[%s1 + $0x5a0] sm:$0xff]
  %v238 = vld [vmem:[%s1 + $0x5a8] sm:$0xff]
  %v239 = vld [vmem:[%s1 + $0x5b0] sm:$0xff]
  %v240 = vld [vmem:[%s1 + $0x5b8] sm:$0xff]
  %v241 = vld [vmem:[%s1 + $0x5c0] sm:$0xff]
  %v242 = vld [vmem:[%s1 + $0x5c8] sm:$0xff]
  %v243 = vld [vmem:[%s1 + $0x5d0] sm:$0xff]
  %v244 = vld [vmem:[%s1 + $0x5d8] sm:$0xff]
  %v245 = vld [vmem:[%s1 + $0x5e0] sm:$0xff]
  %v246 = vld [vmem:[%s1 + $0x5e8] sm:$0xff]
  %v247 = vld [vmem:[%s1 + $0x5f0] sm:$0xff]
  %v248 = vld [vmem:[%s1 + $0x5f8] sm:$0xff]
  %v249 = vld [vmem:[%s1 + $0x600] sm:$0xff]
  %v250 = vld [vmem:[%s1 + $0x608] sm:$0xff]
  %v251 = vld [vmem:[%s1 + $0x610] sm:$0xff]
  %v252 = vld [vmem:[%s1 + $0x618] sm:$0xff]
  %v253 = vld [vmem:[%s1 + $0x620] sm:$0xff]
  %v254 = vld [vmem:[%s1 + $0x628] sm:$0xff]
  %v255 = vld [vmem:[%s1 + $0x630] sm:$0xff]
  %v256 = vld [vmem:[%s1 + $0x638] sm:$0xff]
  %v257 = vld [vmem:[%s1 + $0x640] sm:$0xff]
  %v258 = vld [vmem:[%s1 + $0x648] sm:$0xff]
  %v259 = vld [vmem:[%s1 + $0x650] sm:$0xff]
  %v260 = vld [vmem:[%s1 + $0x658] sm:$0xff]
  %v261 = vld [vmem:[%s1 + $0x660] sm:$0xff]
  %v262 = vld [vmem:[%s1 + $0x668] sm:$0xff]
  %v263 = vld [vmem:[%s1 + $0x670] sm:$0xff]
  %v264 = vld [vmem:[%s1 + $0x678] sm:$0xff]
  %v265 = vld [vmem:[%s2] sm:$0x3]
  %v267 = vlaneseq
  %v268 = vshrl.u32 %v267, 7
  %v269 = vsub.s32 0, %v268
  %v270 = vrot.slane %v265, %v269
  %v271 = vlaneseq
  %v272 = vshrl.u32 %v271, 7
  %v273 = vsub.s32 1, %v272
  %v274 = vrot.slane %v265, %v273
  %v319 = vunpack.c.l.b16 %v15
  %v320 = vunpack.c.h.b16 %v15
  %v321 = vunpack.c.l.b16 %v16
  %v322 = vunpack.c.h.b16 %v16
  %v323 = vunpack.c.l.b16 %v17
  %v324 = vunpack.c.h.b16 %v17
  %v325 = vunpack.c.l.b16 %v18
  %v326 = vunpack.c.h.b16 %v18
  %v327 = vunpack.c.l.b16 %v19
  %v328 = vunpack.c.h.b16 %v19
  %v329 = vunpack.c.l.b16 %v20
  %v330 = vunpack.c.h.b16 %v20
  %v331 = vunpack.c.l.b16 %v21
  %v332 = vunpack.c.l.b16 %v22
  %v333 = vunpack.c.h.b16 %v22
  %v334 = vunpack.c.l.b16 %v23
  %v335 = vunpack.c.h.b16 %v23
  %v336 = vunpack.c.l.b16 %v24
  %v337 = vunpack.c.h.b16 %v24
  %v338 = vunpack.c.l.b16 %v25
  %v339 = vunpack.c.h.b16 %v25
  %v340 = vunpack.c.l.b16 %v26
  %v341 = vunpack.c.h.b16 %v26
  %v342 = vunpack.c.l.b16 %v27
  %v343 = vunpack.c.h.b16 %v27
  %v344 = vunpack.c.l.b16 %v28
  %v345 = vunpack.c.l.b16 %v29
  %v346 = vunpack.c.h.b16 %v29
  %v347 = vunpack.c.l.b16 %v30
  %v348 = vunpack.c.h.b16 %v30
  %v349 = vunpack.c.l.b16 %v31
  %v350 = vunpack.c.h.b16 %v31
  %v351 = vunpack.c.l.b16 %v32
  %v352 = vunpack.c.h.b16 %v32
  %v353 = vunpack.c.l.b16 %v33
  %v354 = vunpack.c.h.b16 %v33
  %v355 = vunpack.c.l.b16 %v34
  %v356 = vunpack.c.h.b16 %v34
  %v357 = vunpack.c.l.b16 %v35
  %v358 = vunpack.c.l.b16 %v36
  %v359 = vunpack.c.h.b16 %v36
  %v360 = vunpack.c.l.b16 %v37
  %v361 = vunpack.c.h.b16 %v37
  %v362 = vunpack.c.l.b16 %v38
  %v363 = vunpack.c.h.b16 %v38
  %v364 = vunpack.c.l.b16 %v39
  %v365 = vunpack.c.h.b16 %v39
  %v366 = vunpack.c.l.b16 %v40
  %v367 = vunpack.c.h.b16 %v40
  %v368 = vunpack.c.l.b16 %v41
  %v369 = vunpack.c.h.b16 %v41
  %v370 = vunpack.c.l.b16 %v42
  %v371 = vunpack.c.l.b16 %v43
  %v372 = vunpack.c.h.b16 %v43
  %v373 = vunpack.c.l.b16 %v44
  %v374 = vunpack.c.h.b16 %v44
  %v375 = vunpack.c.l.b16 %v45
  %v376 = vunpack.c.h.b16 %v45
  %v377 = vunpack.c.l.b16 %v46
  %v378 = vunpack.c.h.b16 %v46
  %v379 = vunpack.c.l.b16 %v47
  %v380 = vunpack.c.h.b16 %v47
  %v381 = vunpack.c.l.b16 %v48
  %v382 = vunpack.c.h.b16 %v48
  %v383 = vunpack.c.l.b16 %v49
  %v384 = vunpack.c.l.b16 %v50
  %v385 = vunpack.c.h.b16 %v50
  %v386 = vunpack.c.l.b16 %v51
  %v387 = vunpack.c.h.b16 %v51
  %v388 = vunpack.c.l.b16 %v52
  %v389 = vunpack.c.h.b16 %v52
  %v390 = vunpack.c.l.b16 %v53
  %v391 = vunpack.c.h.b16 %v53
  %v392 = vunpack.c.l.b16 %v54
  %v393 = vunpack.c.h.b16 %v54
  %v394 = vunpack.c.l.b16 %v55
  %v395 = vunpack.c.h.b16 %v55
  %v396 = vunpack.c.l.b16 %v56
  %v397 = vpack.c.b16 %v332, %v319
  %v398 = vpack.c.b16 %v333, %v320
  %v399 = vpack.c.b16 %v334, %v321
  %v400 = vpack.c.b16 %v335, %v322
  %v401 = vpack.c.b16 %v336, %v323
  %v402 = vpack.c.b16 %v337, %v324
  %v403 = vpack.c.b16 %v338, %v325
  %v404 = vpack.c.b16 %v339, %v326
  %v405 = vpack.c.b16 %v340, %v327
  %v406 = vpack.c.b16 %v341, %v328
  %v407 = vpack.c.b16 %v342, %v329
  %v408 = vpack.c.b16 %v343, %v330
  %v409 = vpack.c.b16 %v344, %v331
  %v410 = vpack.c.b16 %v358, %v345
  %v411 = vpack.c.b16 %v359, %v346
  %v412 = vpack.c.b16 %v360, %v347
  %v413 = vpack.c.b16 %v361, %v348
  %v414 = vpack.c.b16 %v362, %v349
  %v415 = vpack.c.b16 %v363, %v350
  %v416 = vpack.c.b16 %v364, %v351
  %v417 = vpack.c.b16 %v365, %v352
  %v418 = vpack.c.b16 %v366, %v353
  %v419 = vpack.c.b16 %v367, %v354
  %v420 = vpack.c.b16 %v368, %v355
  %v421 = vpack.c.b16 %v369, %v356
  %v422 = vpack.c.b16 %v370, %v357
  %v423 = vpack.c.b16 %v384, %v371
  %v424 = vpack.c.b16 %v385, %v372
  %v425 = vpack.c.b16 %v386, %v373
  %v426 = vpack.c.b16 %v387, %v374
  %v427 = vpack.c.b16 %v388, %v375
  %v428 = vpack.c.b16 %v389, %v376
  %v429 = vpack.c.b16 %v390, %v377
  %v430 = vpack.c.b16 %v391, %v378
  %v431 = vpack.c.b16 %v392, %v379
  %v432 = vpack.c.b16 %v393, %v380
  %v433 = vpack.c.b16 %v394, %v381
  %v434 = vpack.c.b16 %v395, %v382
  %v435 = vpack.c.b16 %v396, %v383
  %v683 = vunpack.c.l.b16 %v57
  %v684 = vunpack.c.h.b16 %v57
  %v685 = vunpack.c.l.b16 %v58
  %v686 = vunpack.c.h.b16 %v58
  %v687 = vunpack.c.l.b16 %v59
  %v688 = vunpack.c.h.b16 %v59
  %v689 = vunpack.c.l.b16 %v60
  %v690 = vunpack.c.h.b16 %v60
  %v691 = vunpack.c.l.b16 %v61
  %v692 = vunpack.c.h.b16 %v61
  %v693 = vunpack.c.l.b16 %v62
  %v694 = vunpack.c.h.b16 %v62
  %v695 = vunpack.c.l.b16 %v63
  %v696 = vunpack.c.h.b16 %v63
  %v697 = vunpack.c.l.b16 %v64
  %v698 = vunpack.c.h.b16 %v64
  %v699 = vunpack.c.l.b16 %v65
  %v700 = vunpack.c.h.b16 %v65
  %v701 = vunpack.c.l.b16 %v66
  %v702 = vunpack.c.h.b16 %v66
  %v703 = vunpack.c.l.b16 %v67
  %v704 = vunpack.c.h.b16 %v67
  %v705 = vunpack.c.l.b16 %v68
  %v706 = vunpack.c.h.b16 %v68
  %v707 = vunpack.c.l.b16 %v69
  %v708 = vunpack.c.h.b16 %v69
  %v709 = vunpack.c.l.b16 %v70
  %v710 = vunpack.c.h.b16 %v70
  %v711 = vunpack.c.l.b16 %v71
  %v712 = vunpack.c.h.b16 %v71
  %v713 = vunpack.c.l.b16 %v72
  %v714 = vunpack.c.h.b16 %v72
  %v715 = vunpack.c.l.b16 %v73
  %v716 = vunpack.c.h.b16 %v73
  %v717 = vunpack.c.l.b16 %v74
  %v718 = vunpack.c.h.b16 %v74
  %v719 = vunpack.c.l.b16 %v75
  %v720 = vunpack.c.h.b16 %v75
  %v721 = vunpack.c.l.b16 %v76
  %v722 = vunpack.c.h.b16 %v76
  %v723 = vunpack.c.l.b16 %v77
  %v724 = vunpack.c.h.b16 %v77
  %v725 = vunpack.c.l.b16 %v78
  %v726 = vunpack.c.h.b16 %v78
  %v727 = vunpack.c.l.b16 %v79
  %v728 = vunpack.c.h.b16 %v79
  %v729 = vunpack.c.l.b16 %v80
  %v730 = vunpack.c.h.b16 %v80
  %v731 = vunpack.c.l.b16 %v81
  %v732 = vunpack.c.h.b16 %v81
  %v733 = vunpack.c.l.b16 %v82
  %v734 = vunpack.c.h.b16 %v82
  %v735 = vunpack.c.l.b16 %v83
  %v736 = vunpack.c.h.b16 %v83
  %v737 = vunpack.c.l.b16 %v84
  %v738 = vunpack.c.h.b16 %v84
  %v739 = vunpack.c.l.b16 %v85
  %v740 = vunpack.c.h.b16 %v85
  %v741 = vunpack.c.l.b16 %v86
  %v742 = vunpack.c.h.b16 %v86
  %v743 = vunpack.c.l.b16 %v87
  %v744 = vunpack.c.h.b16 %v87
  %v745 = vunpack.c.l.b16 %v88
  %v746 = vunpack.c.h.b16 %v88
  %v747 = vunpack.c.l.b16 %v89
  %v748 = vunpack.c.h.b16 %v89
  %v749 = vunpack.c.l.b16 %v90
  %v750 = vunpack.c.h.b16 %v90
  %v751 = vunpack.c.l.b16 %v91
  %v752 = vunpack.c.h.b16 %v91
  %v753 = vunpack.c.l.b16 %v92
  %v754 = vunpack.c.h.b16 %v92
  %v755 = vunpack.c.l.b16 %v93
  %v756 = vunpack.c.h.b16 %v93
  %v757 = vunpack.c.l.b16 %v94
  %v758 = vunpack.c.h.b16 %v94
  %v759 = vunpack.c.l.b16 %v95
  %v760 = vunpack.c.h.b16 %v95
  %v761 = vunpack.c.l.b16 %v96
  %v762 = vunpack.c.h.b16 %v96
  %v763 = vunpack.c.l.b16 %v97
  %v764 = vunpack.c.h.b16 %v97
  %v765 = vunpack.c.l.b16 %v98
  %v766 = vunpack.c.h.b16 %v98
  %v767 = vunpack.c.l.b16 %v99
  %v768 = vunpack.c.h.b16 %v99
  %v769 = vunpack.c.l.b16 %v100
  %v770 = vunpack.c.h.b16 %v100
  %v771 = vunpack.c.l.b16 %v101
  %v772 = vunpack.c.h.b16 %v101
  %v773 = vunpack.c.l.b16 %v102
  %v774 = vunpack.c.h.b16 %v102
  %v775 = vunpack.c.l.b16 %v103
  %v776 = vunpack.c.h.b16 %v103
  %v777 = vunpack.c.l.b16 %v104
  %v778 = vunpack.c.h.b16 %v104
  %v779 = vunpack.c.l.b16 %v105
  %v780 = vunpack.c.h.b16 %v105
  %v781 = vunpack.c.l.b16 %v106
  %v782 = vunpack.c.h.b16 %v106
  %v783 = vunpack.c.l.b16 %v107
  %v784 = vunpack.c.h.b16 %v107
  %v785 = vunpack.c.l.b16 %v108
  %v786 = vunpack.c.h.b16 %v108
  %v787 = vunpack.c.l.b16 %v109
  %v788 = vunpack.c.h.b16 %v109
  %v789 = vunpack.c.l.b16 %v110
  %v790 = vunpack.c.h.b16 %v110
  %v791 = vunpack.c.l.b16 %v111
  %v792 = vunpack.c.h.b16 %v111
  %v793 = vunpack.c.l.b16 %v112
  %v794 = vunpack.c.h.b16 %v112
  %v795 = vunpack.c.l.b16 %v113
  %v796 = vunpack.c.h.b16 %v113
  %v797 = vunpack.c.l.b16 %v114
  %v798 = vunpack.c.h.b16 %v114
  %v799 = vunpack.c.l.b16 %v115
  %v800 = vunpack.c.h.b16 %v115
  %v801 = vunpack.c.l.b16 %v116
  %v802 = vunpack.c.h.b16 %v116
  %v803 = vunpack.c.l.b16 %v117
  %v804 = vunpack.c.h.b16 %v117
  %v805 = vunpack.c.l.b16 %v118
  %v806 = vunpack.c.h.b16 %v118
  %v807 = vunpack.c.l.b16 %v119
  %v808 = vunpack.c.h.b16 %v119
  %v809 = vunpack.c.l.b16 %v120
  %v810 = vunpack.c.h.b16 %v120
  %v811 = vunpack.c.l.b16 %v121
  %v812 = vunpack.c.h.b16 %v121
  %v813 = vunpack.c.l.b16 %v122
  %v814 = vunpack.c.h.b16 %v122
  %v815 = vunpack.c.l.b16 %v123
  %v816 = vunpack.c.h.b16 %v123
  %v817 = vunpack.c.l.b16 %v124
  %v818 = vunpack.c.h.b16 %v124
  %v819 = vunpack.c.l.b16 %v125
  %v820 = vunpack.c.h.b16 %v125
  %v821 = vunpack.c.l.b16 %v126
  %v822 = vunpack.c.h.b16 %v126
  %v823 = vunpack.c.l.b16 %v127
  %v824 = vunpack.c.h.b16 %v127
  %v825 = vunpack.c.l.b16 %v128
  %v826 = vunpack.c.h.b16 %v128
  %v827 = vunpack.c.l.b16 %v129
  %v828 = vunpack.c.h.b16 %v129
  %v829 = vunpack.c.l.b16 %v130
  %v830 = vunpack.c.h.b16 %v130
  %v831 = vunpack.c.l.b16 %v131
  %v832 = vunpack.c.h.b16 %v131
  %v833 = vunpack.c.l.b16 %v132
  %v834 = vunpack.c.h.b16 %v132
  %v835 = vunpack.c.l.b16 %v133
  %v836 = vunpack.c.h.b16 %v133
  %v837 = vunpack.c.l.b16 %v134
  %v838 = vunpack.c.h.b16 %v134
  %v839 = vunpack.c.l.b16 %v135
  %v840 = vunpack.c.h.b16 %v135
  %v841 = vunpack.c.l.b16 %v136
  %v842 = vunpack.c.h.b16 %v136
  %v843 = vunpack.c.l.b16 %v137
  %v844 = vunpack.c.h.b16 %v137
  %v845 = vunpack.c.l.b16 %v138
  %v846 = vunpack.c.h.b16 %v138
  %v847 = vunpack.c.l.b16 %v139
  %v848 = vunpack.c.h.b16 %v139
  %v849 = vunpack.c.l.b16 %v140
  %v850 = vunpack.c.h.b16 %v140
  %v851 = vunpack.c.l.b16 %v141
  %v852 = vunpack.c.h.b16 %v141
  %v853 = vunpack.c.l.b16 %v142
  %v854 = vunpack.c.h.b16 %v142
  %v855 = vunpack.c.l.b16 %v143
  %v856 = vunpack.c.h.b16 %v143
  %v857 = vunpack.c.l.b16 %v144
  %v858 = vunpack.c.h.b16 %v144
  %v859 = vunpack.c.l.b16 %v145
  %v860 = vunpack.c.h.b16 %v145
  %v861 = vunpack.c.l.b16 %v146
  %v862 = vunpack.c.h.b16 %v146
  %v863 = vunpack.c.l.b16 %v147
  %v864 = vunpack.c.h.b16 %v147
  %v865 = vunpack.c.l.b16 %v148
  %v866 = vunpack.c.h.b16 %v148
  %v867 = vunpack.c.l.b16 %v149
  %v868 = vunpack.c.h.b16 %v149
  %v869 = vunpack.c.l.b16 %v150
  %v870 = vunpack.c.h.b16 %v150
  %v871 = vunpack.c.l.b16 %v151
  %v872 = vunpack.c.h.b16 %v151
  %v873 = vunpack.c.l.b16 %v152
  %v874 = vunpack.c.h.b16 %v152
  %v875 = vunpack.c.l.b16 %v153
  %v876 = vunpack.c.h.b16 %v153
  %v877 = vunpack.c.l.b16 %v154
  %v878 = vunpack.c.h.b16 %v154
  %v879 = vunpack.c.l.b16 %v155
  %v880 = vunpack.c.h.b16 %v155
  %v881 = vunpack.c.l.b16 %v156
  %v882 = vunpack.c.h.b16 %v156
  %v883 = vunpack.c.l.b16 %v157
  %v884 = vunpack.c.h.b16 %v157
  %v885 = vunpack.c.l.b16 %v158
  %v886 = vunpack.c.h.b16 %v158
  %v887 = vunpack.c.l.b16 %v159
  %v888 = vunpack.c.h.b16 %v159
  %v889 = vunpack.c.l.b16 %v160
  %v890 = vunpack.c.h.b16 %v160
  %v891 = vunpack.c.l.b16 %v161
  %v892 = vunpack.c.h.b16 %v161
  %v893 = vunpack.c.l.b16 %v162
  %v894 = vunpack.c.h.b16 %v162
  %v895 = vunpack.c.l.b16 %v163
  %v896 = vunpack.c.h.b16 %v163
  %v897 = vunpack.c.l.b16 %v164
  %v898 = vunpack.c.h.b16 %v164
  %v899 = vunpack.c.l.b16 %v165
  %v900 = vunpack.c.h.b16 %v165
  %v901 = vunpack.c.l.b16 %v166
  %v902 = vunpack.c.h.b16 %v166
  %v903 = vunpack.c.l.b16 %v167
  %v904 = vunpack.c.h.b16 %v167
  %v905 = vunpack.c.l.b16 %v168
  %v906 = vunpack.c.h.b16 %v168
  %v907 = vunpack.c.l.b16 %v169
  %v908 = vunpack.c.h.b16 %v169
  %v909 = vunpack.c.l.b16 %v170
  %v910 = vunpack.c.h.b16 %v170
  %v911 = vunpack.c.l.b16 %v171
  %v912 = vunpack.c.h.b16 %v171
  %v913 = vunpack.c.l.b16 %v172
  %v914 = vunpack.c.h.b16 %v172
  %v915 = vunpack.c.l.b16 %v173
  %v916 = vunpack.c.h.b16 %v173
  %v917 = vunpack.c.l.b16 %v174
  %v918 = vunpack.c.h.b16 %v174
  %v919 = vunpack.c.l.b16 %v175
  %v920 = vunpack.c.h.b16 %v175
  %v921 = vunpack.c.l.b16 %v176
  %v922 = vunpack.c.h.b16 %v176
  %v923 = vunpack.c.l.b16 %v177
  %v924 = vunpack.c.h.b16 %v177
  %v925 = vunpack.c.l.b16 %v178
  %v926 = vunpack.c.h.b16 %v178
  %v927 = vunpack.c.l.b16 %v179
  %v928 = vunpack.c.h.b16 %v179
  %v929 = vunpack.c.l.b16 %v180
  %v930 = vunpack.c.h.b16 %v180
  %v931 = vunpack.c.l.b16 %v181
  %v932 = vunpack.c.h.b16 %v181
  %v933 = vunpack.c.l.b16 %v182
  %v934 = vunpack.c.h.b16 %v182
  %v935 = vunpack.c.l.b16 %v183
  %v936 = vunpack.c.h.b16 %v183
  %v937 = vunpack.c.l.b16 %v184
  %v938 = vunpack.c.h.b16 %v184
  %v939 = vunpack.c.l.b16 %v185
  %v940 = vunpack.c.h.b16 %v185
  %v941 = vunpack.c.l.b16 %v186
  %v942 = vunpack.c.h.b16 %v186
  %v943 = vunpack.c.l.b16 %v187
  %v944 = vunpack.c.h.b16 %v187
  %v945 = vunpack.c.l.b16 %v188
  %v946 = vunpack.c.h.b16 %v188
  %v947 = vunpack.c.l.b16 %v189
  %v948 = vunpack.c.h.b16 %v189
  %v949 = vunpack.c.l.b16 %v190
  %v950 = vunpack.c.h.b16 %v190
  %v951 = vunpack.c.l.b16 %v191
  %v952 = vunpack.c.h.b16 %v191
  %v953 = vunpack.c.l.b16 %v192
  %v954 = vunpack.c.h.b16 %v192
  %v955 = vunpack.c.l.b16 %v193
  %v956 = vunpack.c.h.b16 %v193
  %v957 = vunpack.c.l.b16 %v194
  %v958 = vunpack.c.h.b16 %v194
  %v959 = vunpack.c.l.b16 %v195
  %v960 = vunpack.c.h.b16 %v195
  %v961 = vunpack.c.l.b16 %v196
  %v962 = vunpack.c.h.b16 %v196
  %v963 = vunpack.c.l.b16 %v197
  %v964 = vunpack.c.h.b16 %v197
  %v965 = vunpack.c.l.b16 %v198
  %v966 = vunpack.c.h.b16 %v198
  %v967 = vunpack.c.l.b16 %v199
  %v968 = vunpack.c.h.b16 %v199
  %v969 = vunpack.c.l.b16 %v200
  %v970 = vunpack.c.h.b16 %v200
  %v971 = vunpack.c.l.b16 %v201
  %v972 = vunpack.c.h.b16 %v201
  %v973 = vunpack.c.l.b16 %v202
  %v974 = vunpack.c.h.b16 %v202
  %v975 = vunpack.c.l.b16 %v203
  %v976 = vunpack.c.h.b16 %v203
  %v977 = vunpack.c.l.b16 %v204
  %v978 = vunpack.c.h.b16 %v204
  %v979 = vunpack.c.l.b16 %v205
  %v980 = vunpack.c.h.b16 %v205
  %v981 = vunpack.c.l.b16 %v206
  %v982 = vunpack.c.h.b16 %v206
  %v983 = vunpack.c.l.b16 %v207
  %v984 = vunpack.c.h.b16 %v207
  %v985 = vunpack.c.l.b16 %v208
  %v986 = vunpack.c.h.b16 %v208
  %v987 = vunpack.c.l.b16 %v209
  %v988 = vunpack.c.h.b16 %v209
  %v989 = vunpack.c.l.b16 %v210
  %v990 = vunpack.c.h.b16 %v210
  %v991 = vunpack.c.l.b16 %v211
  %v992 = vunpack.c.h.b16 %v211
  %v993 = vunpack.c.l.b16 %v212
  %v994 = vunpack.c.h.b16 %v212
  %v995 = vunpack.c.l.b16 %v213
  %v996 = vunpack.c.h.b16 %v213
  %v997 = vunpack.c.l.b16 %v214
  %v998 = vunpack.c.h.b16 %v214
  %v999 = vunpack.c.l.b16 %v215
  %v1000 = vunpack.c.h.b16 %v215
  %v1001 = vunpack.c.l.b16 %v216
  %v1002 = vunpack.c.h.b16 %v216
  %v1003 = vunpack.c.l.b16 %v217
  %v1004 = vunpack.c.h.b16 %v217
  %v1005 = vunpack.c.l.b16 %v218
  %v1006 = vunpack.c.h.b16 %v218
  %v1007 = vunpack.c.l.b16 %v219
  %v1008 = vunpack.c.h.b16 %v219
  %v1009 = vunpack.c.l.b16 %v220
  %v1010 = vunpack.c.h.b16 %v220
  %v1011 = vunpack.c.l.b16 %v221
  %v1012 = vunpack.c.h.b16 %v221
  %v1013 = vunpack.c.l.b16 %v222
  %v1014 = vunpack.c.h.b16 %v222
  %v1015 = vunpack.c.l.b16 %v223
  %v1016 = vunpack.c.h.b16 %v223
  %v1017 = vunpack.c.l.b16 %v224
  %v1018 = vunpack.c.h.b16 %v224
  %v1019 = vunpack.c.l.b16 %v225
  %v1020 = vunpack.c.h.b16 %v225
  %v1021 = vunpack.c.l.b16 %v226
  %v1022 = vunpack.c.h.b16 %v226
  %v1023 = vunpack.c.l.b16 %v227
  %v1024 = vunpack.c.h.b16 %v227
  %v1025 = vunpack.c.l.b16 %v228
  %v1026 = vunpack.c.h.b16 %v228
  %v1027 = vunpack.c.l.b16 %v229
  %v1028 = vunpack.c.h.b16 %v229
  %v1029 = vunpack.c.l.b16 %v230
  %v1030 = vunpack.c.h.b16 %v230
  %v1031 = vunpack.c.l.b16 %v231
  %v1032 = vunpack.c.h.b16 %v231
  %v1033 = vunpack.c.l.b16 %v232
  %v1034 = vunpack.c.h.b16 %v232
  %v1035 = vunpack.c.l.b16 %v233
  %v1036 = vunpack.c.h.b16 %v233
  %v1037 = vunpack.c.l.b16 %v234
  %v1038 = vunpack.c.h.b16 %v234
  %v1039 = vunpack.c.l.b16 %v235
  %v1040 = vunpack.c.h.b16 %v235
  %v1041 = vunpack.c.l.b16 %v236
  %v1042 = vunpack.c.h.b16 %v236
  %v1043 = vunpack.c.l.b16 %v237
  %v1044 = vunpack.c.h.b16 %v237
  %v1045 = vunpack.c.l.b16 %v238
  %v1046 = vunpack.c.h.b16 %v238
  %v1047 = vunpack.c.l.b16 %v239
  %v1048 = vunpack.c.h.b16 %v239
  %v1049 = vunpack.c.l.b16 %v240
  %v1050 = vunpack.c.h.b16 %v240
  %v1051 = vunpack.c.l.b16 %v241
  %v1052 = vunpack.c.h.b16 %v241
  %v1053 = vunpack.c.l.b16 %v242
  %v1054 = vunpack.c.h.b16 %v242
  %v1055 = vunpack.c.l.b16 %v243
  %v1056 = vunpack.c.h.b16 %v243
  %v1057 = vunpack.c.l.b16 %v244
  %v1058 = vunpack.c.h.b16 %v244
  %v1059 = vunpack.c.l.b16 %v245
  %v1060 = vunpack.c.h.b16 %v245
  %v1061 = vunpack.c.l.b16 %v246
  %v1062 = vunpack.c.h.b16 %v246
  %v1063 = vunpack.c.l.b16 %v247
  %v1064 = vunpack.c.h.b16 %v247
  %v1065 = vunpack.c.l.b16 %v248
  %v1066 = vunpack.c.h.b16 %v248
  %v1067 = vunpack.c.l.b16 %v249
  %v1068 = vunpack.c.h.b16 %v249
  %v1069 = vunpack.c.l.b16 %v250
  %v1070 = vunpack.c.h.b16 %v250
  %v1071 = vunpack.c.l.b16 %v251
  %v1072 = vunpack.c.h.b16 %v251
  %v1073 = vunpack.c.l.b16 %v252
  %v1074 = vunpack.c.h.b16 %v252
  %v1075 = vunpack.c.l.b16 %v253
  %v1076 = vunpack.c.h.b16 %v253
  %v1077 = vunpack.c.l.b16 %v254
  %v1078 = vunpack.c.h.b16 %v254
  %v1079 = vunpack.c.l.b16 %v255
  %v1080 = vunpack.c.h.b16 %v255
  %v1081 = vunpack.c.l.b16 %v256
  %v1082 = vunpack.c.h.b16 %v256
  %v1083 = vunpack.c.l.b16 %v257
  %v1084 = vunpack.c.h.b16 %v257
  %v1085 = vunpack.c.l.b16 %v258
  %v1086 = vunpack.c.h.b16 %v258
  %v1087 = vunpack.c.l.b16 %v259
  %v1088 = vunpack.c.h.b16 %v259
  %v1089 = vunpack.c.l.b16 %v260
  %v1090 = vunpack.c.h.b16 %v260
  %v1091 = vunpack.c.l.b16 %v261
  %v1092 = vunpack.c.h.b16 %v261
  %v1093 = vunpack.c.l.b16 %v262
  %v1094 = vunpack.c.h.b16 %v262
  %v1095 = vunpack.c.l.b16 %v263
  %v1096 = vunpack.c.h.b16 %v263
  %v1097 = vunpack.c.l.b16 %v264
  %v1098 = vunpack.c.h.b16 %v264
  %v1099 = vpack.c.b16 %v685, %v683
  %v1100 = vpack.c.b16 %v686, %v684
  %v1101 = vpack.c.b16 %v689, %v687
  %v1102 = vpack.c.b16 %v690, %v688
  %v1103 = vpack.c.b16 %v693, %v691
  %v1104 = vpack.c.b16 %v694, %v692
  %v1105 = vpack.c.b16 %v697, %v695
  %v1106 = vpack.c.b16 %v698, %v696
  %v1107 = vpack.c.b16 %v701, %v699
  %v1108 = vpack.c.b16 %v702, %v700
  %v1109 = vpack.c.b16 %v705, %v703
  %v1110 = vpack.c.b16 %v706, %v704
  %v1111 = vpack.c.b16 %v709, %v707
  %v1112 = vpack.c.b16 %v710, %v708
  %v1113 = vpack.c.b16 %v713, %v711
  %v1114 = vpack.c.b16 %v714, %v712
  %v1115 = vpack.c.b16 %v717, %v715
  %v1116 = vpack.c.b16 %v718, %v716
  %v1117 = vpack.c.b16 %v721, %v719
  %v1118 = vpack.c.b16 %v722, %v720
  %v1119 = vpack.c.b16 %v725, %v723
  %v1120 = vpack.c.b16 %v726, %v724
  %v1121 = vpack.c.b16 %v729, %v727
  %v1122 = vpack.c.b16 %v730, %v728
  %v1123 = vpack.c.b16 %v733, %v731
  %v1124 = vpack.c.b16 %v734, %v732
  %v1125 = vpack.c.b16 %v737, %v735
  %v1126 = vpack.c.b16 %v738, %v736
  %v1127 = vpack.c.b16 %v741, %v739
  %v1128 = vpack.c.b16 %v742, %v740
  %v1129 = vpack.c.b16 %v745, %v743
  %v1130 = vpack.c.b16 %v746, %v744
  %v1131 = vpack.c.b16 %v749, %v747
  %v1132 = vpack.c.b16 %v750, %v748
  %v1133 = vpack.c.b16 %v753, %v751
  %v1134 = vpack.c.b16 %v754, %v752
  %v1135 = vpack.c.b16 %v757, %v755
  %v1136 = vpack.c.b16 %v758, %v756
  %v1137 = vpack.c.b16 %v761, %v759
  %v1138 = vpack.c.b16 %v762, %v760
  %v1139 = vpack.c.b16 %v765, %v763
  %v1140 = vpack.c.b16 %v766, %v764
  %v1141 = vpack.c.b16 %v769, %v767
  %v1142 = vpack.c.b16 %v770, %v768
  %v1143 = vpack.c.b16 %v773, %v771
  %v1144 = vpack.c.b16 %v774, %v772
  %v1145 = vpack.c.b16 %v777, %v775
  %v1146 = vpack.c.b16 %v778, %v776
  %v1147 = vpack.c.b16 %v781, %v779
  %v1148 = vpack.c.b16 %v782, %v780
  %v1149 = vpack.c.b16 %v785, %v783
  %v1150 = vpack.c.b16 %v786, %v784
  %v1151 = vpack.c.b16 %v789, %v787
  %v1152 = vpack.c.b16 %v790, %v788
  %v1153 = vpack.c.b16 %v793, %v791
  %v1154 = vpack.c.b16 %v794, %v792
  %v1155 = vpack.c.b16 %v797, %v795
  %v1156 = vpack.c.b16 %v798, %v796
  %v1157 = vpack.c.b16 %v801, %v799
  %v1158 = vpack.c.b16 %v802, %v800
  %v1159 = vpack.c.b16 %v805, %v803
  %v1160 = vpack.c.b16 %v806, %v804
  %v1161 = vpack.c.b16 %v809, %v807
  %v1162 = vpack.c.b16 %v810, %v808
  %v1163 = vpack.c.b16 %v813, %v811
  %v1164 = vpack.c.b16 %v814, %v812
  %v1165 = vpack.c.b16 %v817, %v815
  %v1166 = vpack.c.b16 %v818, %v816
  %v1167 = vpack.c.b16 %v821, %v819
  %v1168 = vpack.c.b16 %v822, %v820
  %v1169 = vpack.c.b16 %v825, %v823
  %v1170 = vpack.c.b16 %v826, %v824
  %v1171 = vpack.c.b16 %v829, %v827
  %v1172 = vpack.c.b16 %v830, %v828
  %v1173 = vpack.c.b16 %v833, %v831
  %v1174 = vpack.c.b16 %v834, %v832
  %v1175 = vpack.c.b16 %v837, %v835
  %v1176 = vpack.c.b16 %v838, %v836
  %v1177 = vpack.c.b16 %v841, %v839
  %v1178 = vpack.c.b16 %v842, %v840
  %v1179 = vpack.c.b16 %v845, %v843
  %v1180 = vpack.c.b16 %v846, %v844
  %v1181 = vpack.c.b16 %v849, %v847
  %v1182 = vpack.c.b16 %v850, %v848
  %v1183 = vpack.c.b16 %v853, %v851
  %v1184 = vpack.c.b16 %v854, %v852
  %v1185 = vpack.c.b16 %v857, %v855
  %v1186 = vpack.c.b16 %v858, %v856
  %v1187 = vpack.c.b16 %v861, %v859
  %v1188 = vpack.c.b16 %v862, %v860
  %v1189 = vpack.c.b16 %v865, %v863
  %v1190 = vpack.c.b16 %v866, %v864
  %v1191 = vpack.c.b16 %v869, %v867
  %v1192 = vpack.c.b16 %v870, %v868
  %v1193 = vpack.c.b16 %v873, %v871
  %v1194 = vpack.c.b16 %v874, %v872
  %v1195 = vpack.c.b16 %v877, %v875
  %v1196 = vpack.c.b16 %v878, %v876
  %v1197 = vpack.c.b16 %v881, %v879
  %v1198 = vpack.c.b16 %v882, %v880
  %v1199 = vpack.c.b16 %v885, %v883
  %v1200 = vpack.c.b16 %v886, %v884
  %v1201 = vpack.c.b16 %v889, %v887
  %v1202 = vpack.c.b16 %v890, %v888
  %v1203 = vpack.c.b16 %v893, %v891
  %v1204 = vpack.c.b16 %v894, %v892
  %v1205 = vpack.c.b16 %v897, %v895
  %v1206 = vpack.c.b16 %v898, %v896
  %v1207 = vpack.c.b16 %v901, %v899
  %v1208 = vpack.c.b16 %v902, %v900
  %v1209 = vpack.c.b16 %v905, %v903
  %v1210 = vpack.c.b16 %v906, %v904
  %v1211 = vpack.c.b16 %v909, %v907
  %v1212 = vpack.c.b16 %v910, %v908
  %v1213 = vpack.c.b16 %v913, %v911
  %v1214 = vpack.c.b16 %v914, %v912
  %v1215 = vpack.c.b16 %v917, %v915
  %v1216 = vpack.c.b16 %v918, %v916
  %v1217 = vpack.c.b16 %v921, %v919
  %v1218 = vpack.c.b16 %v922, %v920
  %v1219 = vpack.c.b16 %v925, %v923
  %v1220 = vpack.c.b16 %v926, %v924
  %v1221 = vpack.c.b16 %v929, %v927
  %v1222 = vpack.c.b16 %v930, %v928
  %v1223 = vpack.c.b16 %v933, %v931
  %v1224 = vpack.c.b16 %v934, %v932
  %v1225 = vpack.c.b16 %v937, %v935
  %v1226 = vpack.c.b16 %v938, %v936
  %v1227 = vpack.c.b16 %v941, %v939
  %v1228 = vpack.c.b16 %v942, %v940
  %v1229 = vpack.c.b16 %v945, %v943
  %v1230 = vpack.c.b16 %v946, %v944
  %v1231 = vpack.c.b16 %v949, %v947
  %v1232 = vpack.c.b16 %v950, %v948
  %v1233 = vpack.c.b16 %v953, %v951
  %v1234 = vpack.c.b16 %v954, %v952
  %v1235 = vpack.c.b16 %v957, %v955
  %v1236 = vpack.c.b16 %v958, %v956
  %v1237 = vpack.c.b16 %v961, %v959
  %v1238 = vpack.c.b16 %v962, %v960
  %v1239 = vpack.c.b16 %v965, %v963
  %v1240 = vpack.c.b16 %v966, %v964
  %v1241 = vpack.c.b16 %v969, %v967
  %v1242 = vpack.c.b16 %v970, %v968
  %v1243 = vpack.c.b16 %v973, %v971
  %v1244 = vpack.c.b16 %v974, %v972
  %v1245 = vpack.c.b16 %v977, %v975
  %v1246 = vpack.c.b16 %v978, %v976
  %v1247 = vpack.c.b16 %v981, %v979
  %v1248 = vpack.c.b16 %v982, %v980
  %v1249 = vpack.c.b16 %v985, %v983
  %v1250 = vpack.c.b16 %v986, %v984
  %v1251 = vpack.c.b16 %v989, %v987
  %v1252 = vpack.c.b16 %v990, %v988
  %v1253 = vpack.c.b16 %v993, %v991
  %v1254 = vpack.c.b16 %v994, %v992
  %v1255 = vpack.c.b16 %v997, %v995
  %v1256 = vpack.c.b16 %v998, %v996
  %v1257 = vpack.c.b16 %v1001, %v999
  %v1258 = vpack.c.b16 %v1002, %v1000
  %v1259 = vpack.c.b16 %v1005, %v1003
  %v1260 = vpack.c.b16 %v1006, %v1004
  %v1261 = vpack.c.b16 %v1009, %v1007
  %v1262 = vpack.c.b16 %v1010, %v1008
  %v1263 = vpack.c.b16 %v1013, %v1011
  %v1264 = vpack.c.b16 %v1014, %v1012
  %v1265 = vpack.c.b16 %v1017, %v1015
  %v1266 = vpack.c.b16 %v1018, %v1016
  %v1267 = vpack.c.b16 %v1021, %v1019
  %v1268 = vpack.c.b16 %v1022, %v1020
  %v1269 = vpack.c.b16 %v1025, %v1023
  %v1270 = vpack.c.b16 %v1026, %v1024
  %v1271 = vpack.c.b16 %v1029, %v1027
  %v1272 = vpack.c.b16 %v1030, %v1028
  %v1273 = vpack.c.b16 %v1033, %v1031
  %v1274 = vpack.c.b16 %v1034, %v1032
  %v1275 = vpack.c.b16 %v1037, %v1035
  %v1276 = vpack.c.b16 %v1038, %v1036
  %v1277 = vpack.c.b16 %v1041, %v1039
  %v1278 = vpack.c.b16 %v1042, %v1040
  %v1279 = vpack.c.b16 %v1045, %v1043
  %v1280 = vpack.c.b16 %v1046, %v1044
  %v1281 = vpack.c.b16 %v1049, %v1047
  %v1282 = vpack.c.b16 %v1050, %v1048
  %v1283 = vpack.c.b16 %v1053, %v1051
  %v1284 = vpack.c.b16 %v1054, %v1052
  %v1285 = vpack.c.b16 %v1057, %v1055
  %v1286 = vpack.c.b16 %v1058, %v1056
  %v1287 = vpack.c.b16 %v1061, %v1059
  %v1288 = vpack.c.b16 %v1062, %v1060
  %v1289 = vpack.c.b16 %v1065, %v1063
  %v1290 = vpack.c.b16 %v1066, %v1064
  %v1291 = vpack.c.b16 %v1069, %v1067
  %v1292 = vpack.c.b16 %v1070, %v1068
  %v1293 = vpack.c.b16 %v1073, %v1071
  %v1294 = vpack.c.b16 %v1074, %v1072
  %v1295 = vpack.c.b16 %v1077, %v1075
  %v1296 = vpack.c.b16 %v1078, %v1076
  %v1297 = vpack.c.b16 %v1081, %v1079
  %v1298 = vpack.c.b16 %v1082, %v1080
  %v1299 = vpack.c.b16 %v1085, %v1083
  %v1300 = vpack.c.b16 %v1086, %v1084
  %v1301 = vpack.c.b16 %v1089, %v1087
  %v1302 = vpack.c.b16 %v1090, %v1088
  %v1303 = vpack.c.b16 %v1093, %v1091
  %v1304 = vpack.c.b16 %v1094, %v1092
  %v1305 = vpack.c.b16 %v1097, %v1095
  %v1306 = vpack.c.b16 %v1098, %v1096
  %1515 = vmatprep.subr.bf16.mxu0 %v1114
  %1516 = vmatpush1.bf16.msra.mxu0 %v1113
  %1517 = vmatprep.subr.bf16.mxu0 %v1112
  %1518 = vmatpush1.bf16.msra.mxu0 %v1111
  %1519 = vmatprep.subr.bf16.mxu0 %v1110
  %1520 = vmatpush1.bf16.msra.mxu0 %v1109
  %1521 = vmatprep.subr.bf16.mxu0 %v1108
  %1522 = vmatpush1.bf16.msra.mxu0 %v1107
  %1523 = vmatprep.subr.bf16.mxu0 %v1106
  %1524 = vmatpush1.bf16.msra.mxu0 %v1105
  %1525 = vmatprep.subr.bf16.mxu0 %v1104
  %1526 = vmatpush1.bf16.msra.mxu0 %v1103
  %1527 = vmatprep.subr.bf16.mxu0 %v1102
  %1528 = vmatpush1.bf16.msra.mxu0 %v1101
  %1529 = vmatprep.subr.bf16.mxu0 %v1100
  %1530 = vmatpush1.bf16.msra.mxu0 %v1099
  %1531 = vmatprep.subr.bf16.mxu0 %v1130
  %1532 = vmatpush2.bf16.msra.mxu0 %v1129
  %1533 = vmatprep.subr.bf16.mxu0 %v1128
  %1534 = vmatpush2.bf16.msra.mxu0 %v1127
  %1535 = vmatprep.subr.bf16.mxu0 %v1126
  %1536 = vmatpush2.bf16.msra.mxu0 %v1125
  %1537 = vmatprep.subr.bf16.mxu0 %v1124
  %1538 = vmatpush2.bf16.msra.mxu0 %v1123
  %1539 = vmatprep.subr.bf16.mxu0 %v1122
  %1540 = vmatpush2.bf16.msra.mxu0 %v1121
  %1541 = vmatprep.subr.bf16.mxu0 %v1120
  %1542 = vmatpush2.bf16.msra.mxu0 %v1119
  %1543 = vmatprep.subr.bf16.mxu0 %v1118
  %1544 = vmatpush2.bf16.msra.mxu0 %v1117
  %1545 = vmatprep.subr.bf16.mxu0 %v1116
  %1546 = vmatpush2.bf16.msra.mxu0 %v1115
  %1547 = vmatprep.mubr.bf16.mxu0 %v398
  %1548 = vmatmul.mubr.bf16.gmra.mxu0 %v397
  %v1549 = vpop.f32.mrf.mxu0
  %v1550 = vadd.f32 %v270, %v1549
  %v1551 = vpop.f32.mrf.mxu0
  %v1552 = vadd.f32 %v274, %v1551
  %v1553 = vpop.f32.mrf.mxu0
  %v1554 = vadd.f32 %v270, %v1553
  %v1555 = vpop.f32.mrf.mxu0
  %v1556 = vadd.f32 %v274, %v1555
  %1557 = vmatprep.mubr.bf16.mxu0 %v411
  %1558 = vmatmul.mubr.bf16.gmra.mxu0 %v410
  %v1559 = vpop.f32.mrf.mxu0
  %v1560 = vadd.f32 %v270, %v1559
  %v1561 = vpop.f32.mrf.mxu0
  %v1562 = vadd.f32 %v274, %v1561
  %v1563 = vpop.f32.mrf.mxu0
  %v1564 = vadd.f32 %v270, %v1563
  %v1565 = vpop.f32.mrf.mxu0
  %v1566 = vadd.f32 %v274, %v1565
  %1567 = vmatprep.mubr.bf16.mxu0 %v424
  %1568 = vmatmul.mubr.bf16.gmra.mxu0 %v423
  %v1569 = vpop.f32.mrf.mxu0
  %v1570 = vadd.f32 %v270, %v1569
  %v1571 = vpop.f32.mrf.mxu0
  %v1572 = vadd.f32 %v274, %v1571
  %v1573 = vpop.f32.mrf.mxu0
  %v1574 = vadd.f32 %v270, %v1573
  %v1575 = vpop.f32.mrf.mxu0
  %v1576 = vadd.f32 %v274, %v1575
  %1577 = vdwg.mxu0
  %1578 = vmatprep.subr.bf16.mxu0 %v1146
  %1579 = vmatpush1.bf16.msra.mxu0 %v1145
  %1580 = vmatprep.subr.bf16.mxu0 %v1144
  %1581 = vmatpush1.bf16.msra.mxu0 %v1143
  %1582 = vmatprep.subr.bf16.mxu0 %v1142
  %1583 = vmatpush1.bf16.msra.mxu0 %v1141
  %1584 = vmatprep.subr.bf16.mxu0 %v1140
  %1585 = vmatpush1.bf16.msra.mxu0 %v1139
  %1586 = vmatprep.subr.bf16.mxu0 %v1138
  %1587 = vmatpush1.bf16.msra.mxu0 %v1137
  %1588 = vmatprep.subr.bf16.mxu0 %v1136
  %1589 = vmatpush1.bf16.msra.mxu0 %v1135
  %1590 = vmatprep.subr.bf16.mxu0 %v1134
  %1591 = vmatpush1.bf16.msra.mxu0 %v1133
  %1592 = vmatprep.subr.bf16.mxu0 %v1132
  %1593 = vmatpush1.bf16.msra.mxu0 %v1131
  %1594 = vmatprep.subr.bf16.mxu0 %v1162
  %1595 = vmatpush2.bf16.msra.mxu0 %v1161
  %1596 = vmatprep.subr.bf16.mxu0 %v1160
  %1597 = vmatpush2.bf16.msra.mxu0 %v1159
  %1598 = vmatprep.subr.bf16.mxu0 %v1158
  %1599 = vmatpush2.bf16.msra.mxu0 %v1157
  %1600 = vmatprep.subr.bf16.mxu0 %v1156
  %1601 = vmatpush2.bf16.msra.mxu0 %v1155
  %1602 = vmatprep.subr.bf16.mxu0 %v1154
  %1603 = vmatpush2.bf16.msra.mxu0 %v1153
  %1604 = vmatprep.subr.bf16.mxu0 %v1152
  %1605 = vmatpush2.bf16.msra.mxu0 %v1151
  %1606 = vmatprep.subr.bf16.mxu0 %v1150
  %1607 = vmatpush2.bf16.msra.mxu0 %v1149
  %1608 = vmatprep.subr.bf16.mxu0 %v1148
  %1609 = vmatpush2.bf16.msra.mxu0 %v1147
  %1610 = vmatprep.mubr.bf16.mxu0 %v400
  %1611 = vmatmul.mubr.bf16.gmra.mxu0 %v399
  %v1612 = vpop.f32.mrf.mxu0
  %v1613 = vadd.f32 %v1550, %v1612
  %v1614 = vpop.f32.mrf.mxu0
  %v1615 = vadd.f32 %v1552, %v1614
  %v1616 = vpop.f32.mrf.mxu0
  %v1617 = vadd.f32 %v1554, %v1616
  %v1618 = vpop.f32.mrf.mxu0
  %v1619 = vadd.f32 %v1556, %v1618
  %1620 = vmatprep.mubr.bf16.mxu0 %v413
  %1621 = vmatmul.mubr.bf16.gmra.mxu0 %v412
  %v1622 = vpop.f32.mrf.mxu0
  %v1623 = vadd.f32 %v1560, %v1622
  %v1624 = vpop.f32.mrf.mxu0
  %v1625 = vadd.f32 %v1562, %v1624
  %v1626 = vpop.f32.mrf.mxu0
  %v1627 = vadd.f32 %v1564, %v1626
  %v1628 = vpop.f32.mrf.mxu0
  %v1629 = vadd.f32 %v1566, %v1628
  %1630 = vmatprep.mubr.bf16.mxu0 %v426
  %1631 = vmatmul.mubr.bf16.gmra.mxu0 %v425
  %v1632 = vpop.f32.mrf.mxu0
  %v1633 = vadd.f32 %v1570, %v1632
  %v1634 = vpop.f32.mrf.mxu0
  %v1635 = vadd.f32 %v1572, %v1634
  %v1636 = vpop.f32.mrf.mxu0
  %v1637 = vadd.f32 %v1574, %v1636
  %v1638 = vpop.f32.mrf.mxu0
  %v1639 = vadd.f32 %v1576, %v1638
  %1640 = vdwg.mxu0
  %1641 = vmatprep.subr.bf16.mxu0 %v1178
  %1642 = vmatpush1.bf16.msra.mxu0 %v1177
  %1643 = vmatprep.subr.bf16.mxu0 %v1176
  %1644 = vmatpush1.bf16.msra.mxu0 %v1175
  %1645 = vmatprep.subr.bf16.mxu0 %v1174
  %1646 = vmatpush1.bf16.msra.mxu0 %v1173
  %1647 = vmatprep.subr.bf16.mxu0 %v1172
  %1648 = vmatpush1.bf16.msra.mxu0 %v1171
  %1649 = vmatprep.subr.bf16.mxu0 %v1170
  %1650 = vmatpush1.bf16.msra.mxu0 %v1169
  %1651 = vmatprep.subr.bf16.mxu0 %v1168
  %1652 = vmatpush1.bf16.msra.mxu0 %v1167
  %1653 = vmatprep.subr.bf16.mxu0 %v1166
  %1654 = vmatpush1.bf16.msra.mxu0 %v1165
  %1655 = vmatprep.subr.bf16.mxu0 %v1164
  %1656 = vmatpush1.bf16.msra.mxu0 %v1163
  %1657 = vmatprep.subr.bf16.mxu0 %v1194
  %1658 = vmatpush2.bf16.msra.mxu0 %v1193
  %1659 = vmatprep.subr.bf16.mxu0 %v1192
  %1660 = vmatpush2.bf16.msra.mxu0 %v1191
  %1661 = vmatprep.subr.bf16.mxu0 %v1190
  %1662 = vmatpush2.bf16.msra.mxu0 %v1189
  %1663 = vmatprep.subr.bf16.mxu0 %v1188
  %1664 = vmatpush2.bf16.msra.mxu0 %v1187
  %1665 = vmatprep.subr.bf16.mxu0 %v1186
  %1666 = vmatpush2.bf16.msra.mxu0 %v1185
  %1667 = vmatprep.subr.bf16.mxu0 %v1184
  %1668 = vmatpush2.bf16.msra.mxu0 %v1183
  %1669 = vmatprep.subr.bf16.mxu0 %v1182
  %1670 = vmatpush2.bf16.msra.mxu0 %v1181
  %1671 = vmatprep.subr.bf16.mxu0 %v1180
  %1672 = vmatpush2.bf16.msra.mxu0 %v1179
  %1673 = vmatprep.mubr.bf16.mxu0 %v402
  %1674 = vmatmul.mubr.bf16.gmra.mxu0 %v401
  %v1675 = vpop.f32.mrf.mxu0
  %v1676 = vadd.f32 %v1613, %v1675
  %v1677 = vpop.f32.mrf.mxu0
  %v1678 = vadd.f32 %v1615, %v1677
  %v1679 = vpop.f32.mrf.mxu0
  %v1680 = vadd.f32 %v1617, %v1679
  %v1681 = vpop.f32.mrf.mxu0
  %v1682 = vadd.f32 %v1619, %v1681
  %1683 = vmatprep.mubr.bf16.mxu0 %v415
  %1684 = vmatmul.mubr.bf16.gmra.mxu0 %v414
  %v1685 = vpop.f32.mrf.mxu0
  %v1686 = vadd.f32 %v1623, %v1685
  %v1687 = vpop.f32.mrf.mxu0
  %v1688 = vadd.f32 %v1625, %v1687
  %v1689 = vpop.f32.mrf.mxu0
  %v1690 = vadd.f32 %v1627, %v1689
  %v1691 = vpop.f32.mrf.mxu0
  %v1692 = vadd.f32 %v1629, %v1691
  %1693 = vmatprep.mubr.bf16.mxu0 %v428
  %1694 = vmatmul.mubr.bf16.gmra.mxu0 %v427
  %v1695 = vpop.f32.mrf.mxu0
  %v1696 = vadd.f32 %v1633, %v1695
  %v1697 = vpop.f32.mrf.mxu0
  %v1698 = vadd.f32 %v1635, %v1697
  %v1699 = vpop.f32.mrf.mxu0
  %v1700 = vadd.f32 %v1637, %v1699
  %v1701 = vpop.f32.mrf.mxu0
  %v1702 = vadd.f32 %v1639, %v1701
  %1703 = vdwg.mxu0
  %1704 = vmatprep.subr.bf16.mxu0 %v1210
  %1705 = vmatpush1.bf16.msra.mxu0 %v1209
  %1706 = vmatprep.subr.bf16.mxu0 %v1208
  %1707 = vmatpush1.bf16.msra.mxu0 %v1207
  %1708 = vmatprep.subr.bf16.mxu0 %v1206
  %1709 = vmatpush1.bf16.msra.mxu0 %v1205
  %1710 = vmatprep.subr.bf16.mxu0 %v1204
  %1711 = vmatpush1.bf16.msra.mxu0 %v1203
  %1712 = vmatprep.subr.bf16.mxu0 %v1202
  %1713 = vmatpush1.bf16.msra.mxu0 %v1201
  %1714 = vmatprep.subr.bf16.mxu0 %v1200
  %1715 = vmatpush1.bf16.msra.mxu0 %v1199
  %1716 = vmatprep.subr.bf16.mxu0 %v1198
  %1717 = vmatpush1.bf16.msra.mxu0 %v1197
  %1718 = vmatprep.subr.bf16.mxu0 %v1196
  %1719 = vmatpush1.bf16.msra.mxu0 %v1195
  %1720 = vmatprep.subr.bf16.mxu0 %v1226
  %1721 = vmatpush2.bf16.msra.mxu0 %v1225
  %1722 = vmatprep.subr.bf16.mxu0 %v1224
  %1723 = vmatpush2.bf16.msra.mxu0 %v1223
  %1724 = vmatprep.subr.bf16.mxu0 %v1222
  %1725 = vmatpush2.bf16.msra.mxu0 %v1221
  %1726 = vmatprep.subr.bf16.mxu0 %v1220
  %1727 = vmatpush2.bf16.msra.mxu0 %v1219
  %1728 = vmatprep.subr.bf16.mxu0 %v1218
  %1729 = vmatpush2.bf16.msra.mxu0 %v1217
  %1730 = vmatprep.subr.bf16.mxu0 %v1216
  %1731 = vmatpush2.bf16.msra.mxu0 %v1215
  %1732 = vmatprep.subr.bf16.mxu0 %v1214
  %1733 = vmatpush2.bf16.msra.mxu0 %v1213
  %1734 = vmatprep.subr.bf16.mxu0 %v1212
  %1735 = vmatpush2.bf16.msra.mxu0 %v1211
  %1736 = vmatprep.mubr.bf16.mxu0 %v404
  %1737 = vmatmul.mubr.bf16.gmra.mxu0 %v403
  %v1738 = vpop.f32.mrf.mxu0
  %v1739 = vadd.f32 %v1676, %v1738
  %v1740 = vpop.f32.mrf.mxu0
  %v1741 = vadd.f32 %v1678, %v1740
  %v1742 = vpop.f32.mrf.mxu0
  %v1743 = vadd.f32 %v1680, %v1742
  %v1744 = vpop.f32.mrf.mxu0
  %v1745 = vadd.f32 %v1682, %v1744
  %1746 = vmatprep.mubr.bf16.mxu0 %v417
  %1747 = vmatmul.mubr.bf16.gmra.mxu0 %v416
  %v1748 = vpop.f32.mrf.mxu0
  %v1749 = vadd.f32 %v1686, %v1748
  %v1750 = vpop.f32.mrf.mxu0
  %v1751 = vadd.f32 %v1688, %v1750
  %v1752 = vpop.f32.mrf.mxu0
  %v1753 = vadd.f32 %v1690, %v1752
  %v1754 = vpop.f32.mrf.mxu0
  %v1755 = vadd.f32 %v1692, %v1754
  %1756 = vmatprep.mubr.bf16.mxu0 %v430
  %1757 = vmatmul.mubr.bf16.gmra.mxu0 %v429
  %v1758 = vpop.f32.mrf.mxu0
  %v1759 = vadd.f32 %v1696, %v1758
  %v1760 = vpop.f32.mrf.mxu0
  %v1761 = vadd.f32 %v1698, %v1760
  %v1762 = vpop.f32.mrf.mxu0
  %v1763 = vadd.f32 %v1700, %v1762
  %v1764 = vpop.f32.mrf.mxu0
  %v1765 = vadd.f32 %v1702, %v1764
  %1766 = vdwg.mxu0
  %1767 = vmatprep.subr.bf16.mxu0 %v1242
  %1768 = vmatpush1.bf16.msra.mxu0 %v1241
  %1769 = vmatprep.subr.bf16.mxu0 %v1240
  %1770 = vmatpush1.bf16.msra.mxu0 %v1239
  %1771 = vmatprep.subr.bf16.mxu0 %v1238
  %1772 = vmatpush1.bf16.msra.mxu0 %v1237
  %1773 = vmatprep.subr.bf16.mxu0 %v1236
  %1774 = vmatpush1.bf16.msra.mxu0 %v1235
  %1775 = vmatprep.subr.bf16.mxu0 %v1234
  %1776 = vmatpush1.bf16.msra.mxu0 %v1233
  %1777 = vmatprep.subr.bf16.mxu0 %v1232
  %1778 = vmatpush1.bf16.msra.mxu0 %v1231
  %1779 = vmatprep.subr.bf16.mxu0 %v1230
  %1780 = vmatpush1.bf16.msra.mxu0 %v1229
  %1781 = vmatprep.subr.bf16.mxu0 %v1228
  %1782 = vmatpush1.bf16.msra.mxu0 %v1227
  %1783 = vmatprep.subr.bf16.mxu0 %v1258
  %1784 = vmatpush2.bf16.msra.mxu0 %v1257
  %1785 = vmatprep.subr.bf16.mxu0 %v1256
  %1786 = vmatpush2.bf16.msra.mxu0 %v1255
  %1787 = vmatprep.subr.bf16.mxu0 %v1254
  %1788 = vmatpush2.bf16.msra.mxu0 %v1253
  %1789 = vmatprep.subr.bf16.mxu0 %v1252
  %1790 = vmatpush2.bf16.msra.mxu0 %v1251
  %1791 = vmatprep.subr.bf16.mxu0 %v1250
  %1792 = vmatpush2.bf16.msra.mxu0 %v1249
  %1793 = vmatprep.subr.bf16.mxu0 %v1248
  %1794 = vmatpush2.bf16.msra.mxu0 %v1247
  %1795 = vmatprep.subr.bf16.mxu0 %v1246
  %1796 = vmatpush2.bf16.msra.mxu0 %v1245
  %1797 = vmatprep.subr.bf16.mxu0 %v1244
  %1798 = vmatpush2.bf16.msra.mxu0 %v1243
  %1799 = vmatprep.mubr.bf16.mxu0 %v406
  %1800 = vmatmul.mubr.bf16.gmra.mxu0 %v405
  %v1801 = vpop.f32.mrf.mxu0
  %v1802 = vadd.f32 %v1739, %v1801
  %v1803 = vpop.f32.mrf.mxu0
  %v1804 = vadd.f32 %v1741, %v1803
  %v1805 = vpop.f32.mrf.mxu0
  %v1806 = vadd.f32 %v1743, %v1805
  %v1807 = vpop.f32.mrf.mxu0
  %v1808 = vadd.f32 %v1745, %v1807
  %1809 = vmatprep.mubr.bf16.mxu0 %v419
  %1810 = vmatmul.mubr.bf16.gmra.mxu0 %v418
  %v1811 = vpop.f32.mrf.mxu0
  %v1812 = vadd.f32 %v1749, %v1811
  %v1813 = vpop.f32.mrf.mxu0
  %v1814 = vadd.f32 %v1751, %v1813
  %v1815 = vpop.f32.mrf.mxu0
  %v1816 = vadd.f32 %v1753, %v1815
  %v1817 = vpop.f32.mrf.mxu0
  %v1818 = vadd.f32 %v1755, %v1817
  %1819 = vmatprep.mubr.bf16.mxu0 %v432
  %1820 = vmatmul.mubr.bf16.gmra.mxu0 %v431
  %v1821 = vpop.f32.mrf.mxu0
  %v1822 = vadd.f32 %v1759, %v1821
  %v1823 = vpop.f32.mrf.mxu0
  %v1824 = vadd.f32 %v1761, %v1823
  %v1825 = vpop.f32.mrf.mxu0
  %v1826 = vadd.f32 %v1763, %v1825
  %v1827 = vpop.f32.mrf.mxu0
  %v1828 = vadd.f32 %v1765, %v1827
  %1829 = vdwg.mxu0
  %1830 = vmatprep.subr.bf16.mxu0 %v1274
  %1831 = vmatpush1.bf16.msra.mxu0 %v1273
  %1832 = vmatprep.subr.bf16.mxu0 %v1272
  %1833 = vmatpush1.bf16.msra.mxu0 %v1271
  %1834 = vmatprep.subr.bf16.mxu0 %v1270
  %1835 = vmatpush1.bf16.msra.mxu0 %v1269
  %1836 = vmatprep.subr.bf16.mxu0 %v1268
  %1837 = vmatpush1.bf16.msra.mxu0 %v1267
  %1838 = vmatprep.subr.bf16.mxu0 %v1266
  %1839 = vmatpush1.bf16.msra.mxu0 %v1265
  %1840 = vmatprep.subr.bf16.mxu0 %v1264
  %1841 = vmatpush1.bf16.msra.mxu0 %v1263
  %1842 = vmatprep.subr.bf16.mxu0 %v1262
  %1843 = vmatpush1.bf16.msra.mxu0 %v1261
  %1844 = vmatprep.subr.bf16.mxu0 %v1260
  %1845 = vmatpush1.bf16.msra.mxu0 %v1259
  %1846 = vmatprep.subr.bf16.mxu0 %v1290
  %1847 = vmatpush2.bf16.msra.mxu0 %v1289
  %1848 = vmatprep.subr.bf16.mxu0 %v1288
  %1849 = vmatpush2.bf16.msra.mxu0 %v1287
  %1850 = vmatprep.subr.bf16.mxu0 %v1286
  %1851 = vmatpush2.bf16.msra.mxu0 %v1285
  %1852 = vmatprep.subr.bf16.mxu0 %v1284
  %1853 = vmatpush2.bf16.msra.mxu0 %v1283
  %1854 = vmatprep.subr.bf16.mxu0 %v1282
  %1855 = vmatpush2.bf16.msra.mxu0 %v1281
  %1856 = vmatprep.subr.bf16.mxu0 %v1280
  %1857 = vmatpush2.bf16.msra.mxu0 %v1279
  %1858 = vmatprep.subr.bf16.mxu0 %v1278
  %1859 = vmatpush2.bf16.msra.mxu0 %v1277
  %1860 = vmatprep.subr.bf16.mxu0 %v1276
  %1861 = vmatpush2.bf16.msra.mxu0 %v1275
  %1862 = vmatprep.mubr.bf16.mxu0 %v408
  %1863 = vmatmul.mubr.bf16.gmra.mxu0 %v407
  %v1864 = vpop.f32.mrf.mxu0
  %v1865 = vadd.f32 %v1802, %v1864
  %v1866 = vpop.f32.mrf.mxu0
  %v1867 = vadd.f32 %v1804, %v1866
  %v1868 = vpop.f32.mrf.mxu0
  %v1869 = vadd.f32 %v1806, %v1868
  %v1870 = vpop.f32.mrf.mxu0
  %v1871 = vadd.f32 %v1808, %v1870
  %1872 = vmatprep.mubr.bf16.mxu0 %v421
  %1873 = vmatmul.mubr.bf16.gmra.mxu0 %v420
  %v1874 = vpop.f32.mrf.mxu0
  %v1875 = vadd.f32 %v1812, %v1874
  %v1876 = vpop.f32.mrf.mxu0
  %v1877 = vadd.f32 %v1814, %v1876
  %v1878 = vpop.f32.mrf.mxu0
  %v1879 = vadd.f32 %v1816, %v1878
  %v1880 = vpop.f32.mrf.mxu0
  %v1881 = vadd.f32 %v1818, %v1880
  %1882 = vmatprep.mubr.bf16.mxu0 %v434
  %1883 = vmatmul.mubr.bf16.gmra.mxu0 %v433
  %v1884 = vpop.f32.mrf.mxu0
  %v1885 = vadd.f32 %v1822, %v1884
  %v1886 = vpop.f32.mrf.mxu0
  %v1887 = vadd.f32 %v1824, %v1886
  %v1888 = vpop.f32.mrf.mxu0
  %v1889 = vadd.f32 %v1826, %v1888
  %v1890 = vpop.f32.mrf.mxu0
  %v1891 = vadd.f32 %v1828, %v1890
  %1892 = vdwg.mxu0
  %1893 = vmatprep.subr.bf16.mxu0 %v1306
  %1894 = vmatpush1.bf16.msra.mxu0 %v1305
  %1895 = vmatprep.subr.bf16.mxu0 %v1304
  %1896 = vmatpush1.bf16.msra.mxu0 %v1303
  %1897 = vmatprep.subr.bf16.mxu0 %v1302
  %1898 = vmatpush1.bf16.msra.mxu0 %v1301
  %1899 = vmatprep.subr.bf16.mxu0 %v1300
  %1900 = vmatpush1.bf16.msra.mxu0 %v1299
  %1901 = vmatprep.subr.bf16.mxu0 %v1298
  %1902 = vmatpush1.bf16.msra.mxu0 %v1297
  %1903 = vmatprep.subr.bf16.mxu0 %v1296
  %1904 = vmatpush1.bf16.msra.mxu0 %v1295
  %1905 = vmatprep.subr.bf16.mxu0 %v1294
  %1906 = vmatpush1.bf16.msra.mxu0 %v1293
  %1907 = vmatprep.subr.bf16.mxu0 %v1292
  %1908 = vmatpush1.bf16.msra.mxu0 %v1291
  %1909 = vmatprep.subr.bf16.mxu0 0
  %1910 = vmatpush2.bf16.msra.mxu0 0
  %1911 = vmatprep.subr.bf16.mxu0 0
  %1912 = vmatpush2.bf16.msra.mxu0 0
  %1913 = vmatprep.subr.bf16.mxu0 0
  %1914 = vmatpush2.bf16.msra.mxu0 0
  %1915 = vmatprep.subr.bf16.mxu0 0
  %1916 = vmatpush2.bf16.msra.mxu0 0
  %1917 = vmatprep.subr.bf16.mxu0 0
  %1918 = vmatpush2.bf16.msra.mxu0 0
  %1919 = vmatprep.subr.bf16.mxu0 0
  %1920 = vmatpush2.bf16.msra.mxu0 0
  %1921 = vmatprep.subr.bf16.mxu0 0
  %1922 = vmatpush2.bf16.msra.mxu0 0
  %1923 = vmatprep.subr.bf16.mxu0 0
  %1924 = vmatpush2.bf16.msra.mxu0 0
  %1925 = vmatprep.mubr.bf16.mxu0 0
  %1926 = vmatmul.mubr.bf16.gmra.mxu0 %v409
  %v1927 = vpop.f32.mrf.mxu0
  %v1928 = vadd.f32 %v1865, %v1927
  %v1929 = vpop.f32.mrf.mxu0
  %v1930 = vadd.f32 %v1867, %v1929
  %v1931 = vpop.f32.mrf.mxu0
  %v1932 = vadd.f32 %v1869, %v1931
  %v1933 = vpop.f32.mrf.mxu0
  %v1934 = vadd.f32 %v1871, %v1933
  %1935 = vmatprep.mubr.bf16.mxu0 0
  %1936 = vmatmul.mubr.bf16.gmra.mxu0 %v422
  %v1937 = vpop.f32.mrf.mxu0
  %v1938 = vadd.f32 %v1875, %v1937
  %v1939 = vpop.f32.mrf.mxu0
  %v1940 = vadd.f32 %v1877, %v1939
  %v1941 = vpop.f32.mrf.mxu0
  %v1942 = vadd.f32 %v1879, %v1941
  %v1943 = vpop.f32.mrf.mxu0
  %v1944 = vadd.f32 %v1881, %v1943
  %1945 = vmatprep.mubr.bf16.mxu0 0
  %1946 = vmatmul.mubr.bf16.gmra.mxu0 %v435
  %v1947 = vpop.f32.mrf.mxu0
  %v1948 = vadd.f32 %v1885, %v1947
  %v1949 = vpop.f32.mrf.mxu0
  %v1950 = vadd.f32 %v1887, %v1949
  %v1951 = vpop.f32.mrf.mxu0
  %v1952 = vadd.f32 %v1889, %v1951
  %v1953 = vpop.f32.mrf.mxu0
  %v1954 = vadd.f32 %v1891, %v1953
  %1955 = vdwg.mxu0
  %v1956 = vmax.f32 %v1928, 0.0
  %v1957 = vmax.f32 %v1930, 0.0
  %v1958 = vmax.f32 %v1932, 0.0
  %v1959 = vmax.f32 %v1934, 0.0
  %v1960 = vmax.f32 %v1938, 0.0
  %v1961 = vmax.f32 %v1940, 0.0
  %v1962 = vmax.f32 %v1942, 0.0
  %v1963 = vmax.f32 %v1944, 0.0
  %v1964 = vmax.f32 %v1948, 0.0
  %v1965 = vmax.f32 %v1950, 0.0
  %v1966 = vmax.f32 %v1952, 0.0
  %v1967 = vmax.f32 %v1954, 0.0
  %v1968 = vpack.c.bf16 %v1958, %v1956
  %v1969 = vpack.c.bf16 %v1959, %v1957
  %v1970 = vpack.c.bf16 %v1962, %v1960
  %v1971 = vpack.c.bf16 %v1963, %v1961
  %v1972 = vpack.c.bf16 %v1966, %v1964
  %v1973 = vpack.c.bf16 %v1967, %v1965
  %v1980 = vunpack.c.l.b16 %v1968
  %v1981 = vunpack.c.l.b16 %v1969
  %v1982 = vunpack.c.h.b16 %v1968
  %v1983 = vunpack.c.h.b16 %v1969
  %v1984 = vunpack.c.l.b16 %v1970
  %v1985 = vunpack.c.l.b16 %v1971
  %v1986 = vunpack.c.h.b16 %v1970
  %v1987 = vunpack.c.h.b16 %v1971
  %v1988 = vunpack.c.l.b16 %v1972
  %v1989 = vunpack.c.l.b16 %v1973
  %v1990 = vunpack.c.h.b16 %v1972
  %v1991 = vunpack.c.h.b16 %v1973
  %v1992 = vpack.c.b16 %v1981, %v1980
  %v1993 = vpack.c.b16 %v1983, %v1982
  %v1994 = vpack.c.b16 %v1985, %v1984
  %v1995 = vpack.c.b16 %v1987, %v1986
  %v1996 = vpack.c.b16 %v1989, %v1988
  %v1997 = vpack.c.b16 %v1991, %v1990
  %vm2004 = vcmask 1043456
  %vm2005 = vcmask 523268
  %vm2006 = vmor %vm2005, %vm2004
  %2007 = vst.msk [vmem:[%s3] sm:$0xff] %vm2006, %v1992
  %2008 = vst.msk [vmem:[%s3 + $0x8] sm:$0xff] %vm2006, %v1993
  %2009 = vst.msk [vmem:[%s3 + $0x10] sm:$0xff] %vm2006, %v1994
  %2010 = vst.msk [vmem:[%s3 + $0x18] sm:$0xff] %vm2006, %v1995
  %2011 = vst.msk [vmem:[%s3 + $0x20] sm:$0xff] %vm2006, %v1996
  %2012 = vst.msk [vmem:[%s3 + $0x28] sm:$0xff] %vm2006, %v1997
  // Predicated region
  $region14: #{lpips_loss.17} parent=0 // pred_check
    _
  $region15: #{lpips_loss.17} parent=0 // pred_check_branch
    %2014 = sbr.rel (0) target = $region17
  $region16: #{lpips_loss.17} parent=0 // pred_region
    _
  $region17: #{lpips_loss.17} parent=0 // pred_fallthru
    _
  // Predicated region
  $region18: #{lpips_loss.17} parent=0 // pred_check
    _
  $region19: #{lpips_loss.17} parent=0 // pred_check_branch
    %2016 = sbr.rel (0) target = $region21
  $region20: #{lpips_loss.17} parent=0 // pred_region
    _
  $region21: #{lpips_loss.17} parent=0 // pred_fallthru
    _

// kernel: lpips_loss.26
$region0: #{lpips_loss.26}
  #allocation0 [shape = 'u32[]', space=smem, size = 0x4, offset = 0x4, fixed_abs, tag = 'smem constant byte address 0x4 - core index']
  #allocation1 [shape = 'u32[144,128]{1,0:T(1,128)}', space=vmem, size = 0x12000, scoped, tag = 'internal scratch']
  #allocation2 [shape = 'f32[1,256]{1,0:T(1,128)}', space=vmem, size = 0x400, scoped, tag = 'scratch operand']
  %s0 = inlined_call_operand.vmem [shape: bf16[2,16,256], index: 0, kind: input, shape index: {}, may-alias: {0,1}]
  %s1 = inlined_call_operand.vmem [shape: bf16[2,16,256], index: 1, kind: input, shape index: {}, may-alias: {0,1}]
  %s2 = inlined_call_operand.vmem [shape: f32[1,256], index: 2, kind: input, shape index: {}]
  %s3 = inlined_call_operand.hbm [shape: f32[1,1], index: 3, kind: output, shape index: {}]
  %s4 = sld [smem:[#allocation0]]
  $region30: #{lpips_loss.26} parent=0
    _
  %s6 = ssub.s32 1, %s4
  %s7 = scalar_select 0, %s6, %s4
  $region1: #{lpips_loss.26} parent=0
    #allocation3 [shape = 'u8[512]{0}', space=vmem, size = 0x400, scoped, tag = 'output window, operand 0, single buffered']
    #allocation4 [shape = 's32[1]{0}', space=sflag, size = 0x4, scoped, tag = 'scoped memory for lpips_loss.26']
    %8 = vsyncpa [#allocation4], 0
    // Predicated region
    $region2: #{lpips_loss.26} parent=1 // pred_check
      _
    $region3: #{lpips_loss.26} parent=1 // pred_check_branch
      %10 = sbr.rel (0) target = $region5
    $region4: #{lpips_loss.26} parent=1 // pred_region
      _
    $region5: #{lpips_loss.26} parent=1 // pred_fallthru
      _
    // Predicated region
    $region6: #{lpips_loss.26} parent=1 // pred_check
      _
    $region7: #{lpips_loss.26} parent=1 // pred_check_branch
      %12 = sbr.rel (0) target = $region9
    $region8: #{lpips_loss.26} parent=1 // pred_region
      %s13 = scalar_lea.vmem %s1, 16
    $region9: #{lpips_loss.26} parent=1 // pred_fallthru
      _
    // Predicated region
    $region10: #{lpips_loss.26} parent=1 // pred_check
      _
    $region11: #{lpips_loss.26} parent=1 // pred_check_branch
      %15 = sbr.rel (0) target = $region13
    $region12: #{lpips_loss.26} parent=1 // pred_region
      _
    $region13: #{lpips_loss.26} parent=1 // pred_fallthru
      _
    %s16 = scalar_lea.vmem %s1, 16
    %s17 = scalar_lea.vmem %s1, 16
    %p18 = scmp.eq.s32.totalorder 0, 0
    // Predicated region
    $region14: #{lpips_loss.26} parent=1 // pred_check
      %p19 = pneg %p18
    $region15: #{lpips_loss.26} parent=1 // pred_check_branch
      %21 = sbr.rel (%p19) target = $region17
    $region16: #{lpips_loss.26} parent=1 // pred_region
      %v22 = vlaneseq
      %vm23 = vcmp.ge.s32.totalorder %v22, 0
      %vm24 = vcmp.lt.s32.totalorder %v22, 256
      %vm25 = vmand %vm23, %vm24
      %26 = vst.msk [vmem:[#allocation2] sm:$0x3] %vm25, 0.0
    $region17: #{lpips_loss.26} parent=1 // pred_fallthru
      _
    %v27 = vld [vmem:[%s0] sm:$0xff]
    %v28 = vld [vmem:[%s0 + $0x8] sm:$0xff]
    %v29 = vunpack.c.l.bf16 %v27
    %v30 = vunpack.c.h.bf16 %v27
    %v31 = vunpack.c.l.bf16 %v28
    %v32 = vunpack.c.h.bf16 %v28
    %v33 = vld [vmem:[%s17] sm:$0xff]
    %v34 = vld [vmem:[%s17 + $0x8] sm:$0xff]
    %v35 = vunpack.c.l.bf16 %v33
    %v36 = vunpack.c.h.bf16 %v33
    %v37 = vunpack.c.l.bf16 %v34
    %v38 = vunpack.c.h.bf16 %v34
    %v39 = vmul.f32 %v29, %v29
    %v40 = vmul.f32 %v30, %v30
    %v41 = vmul.f32 %v31, %v31
    %v42 = vmul.f32 %v32, %v32
    %v43 = vadd.f32 %v39, %v40
    %44 = vadd.xlane.f32.xlu0 %v43
    %v45 = vpop.xlane.xlu0 %44
    %v46 = vadd.f32 %v41, %v42
    %47 = vadd.xlane.f32.xlu0 %v46
    %v48 = vpop.xlane.xlu0 %47
    %v49 = vrsqrt.pop %v45
    %v50 = vmul.f32 %v45, %v49
    %vm51 = vcmp.eq.f32.partialorder %v45, inf
    %v52 = vsel %vm51, %v45, %v50
    %vm53 = vcmp.eq.f32.partialorder %v45, 0.0
    %v54 = vand.u32 %v45, 2147483648
    %v55 = vsel %vm53, %v54, %v52
    %v56 = vrsqrt.pop %v48
    %v57 = vmul.f32 %v48, %v56
    %vm58 = vcmp.eq.f32.partialorder %v48, inf
    %v59 = vsel %vm58, %v48, %v57
    %vm60 = vcmp.eq.f32.partialorder %v48, 0.0
    %v61 = vand.u32 %v48, 2147483648
    %v62 = vsel %vm60, %v61, %v59
    %v63 = vmul.f32 %v35, %v35
    %v64 = vmul.f32 %v36, %v36
    %v65 = vmul.f32 %v37, %v37
    %v66 = vmul.f32 %v38, %v38
    %v67 = vadd.f32 %v63, %v64
    %68 = vadd.xlane.f32.xlu0 %v67
    %v69 = vpop.xlane.xlu0 %68
    %v70 = vadd.f32 %v65, %v66
    %71 = vadd.xlane.f32.xlu0 %v70
    %v72 = vpop.xlane.xlu0 %71
    %v73 = vrsqrt.pop %v69
    %v74 = vmul.f32 %v69, %v73
    %vm75 = vcmp.eq.f32.partialorder %v69, inf
    %v76 = vsel %vm75, %v69, %v74
    %vm77 = vcmp.eq.f32.partialorder %v69, 0.0
    %v78 = vand.u32 %v69, 2147483648
    %v79 = vsel %vm77, %v78, %v76
    %v80 = vrsqrt.pop %v72
    %v81 = vmul.f32 %v72, %v80
    %vm82 = vcmp.eq.f32.partialorder %v72, inf
    %v83 = vsel %vm82, %v72, %v81
    %vm84 = vcmp.eq.f32.partialorder %v72, 0.0
    %v85 = vand.u32 %v72, 2147483648
    %v86 = vsel %vm84, %v85, %v83
    %v87 = vadd.f32 %v55, 1e-10
    %v88 = vadd.f32 %v62, 1e-10
    %v89 = vrcp.pop %v87
    %v90 = vrcp.pop %v88
    %v91 = vmul.f32 %v29, %v89
    %v92 = vmul.f32 %v30, %v89
    %v93 = vmul.f32 %v31, %v90
    %v94 = vmul.f32 %v32, %v90
    %v95 = vadd.f32 %v79, 1e-10
    %v96 = vadd.f32 %v86, 1e-10
    %v97 = vrcp.pop %v95
    %v98 = vrcp.pop %v96
    %v99 = vmul.f32 %v35, %v97
    %v100 = vmul.f32 %v36, %v97
    %v101 = vmul.f32 %v37, %v98
    %v102 = vmul.f32 %v38, %v98
    %v103 = vsub.f32 %v91, %v99
    %v104 = vsub.f32 %v92, %v100
    %v105 = vsub.f32 %v93, %v101
    %v106 = vsub.f32 %v94, %v102
    %v107 = vmul.f32 %v103, %v103
    %v108 = vmul.f32 %v104, %v104
    %v109 = vmul.f32 %v105, %v105
    %v110 = vmul.f32 %v106, %v106
    %v111 = vld [vmem:[#allocation2] sm:$0x3]
    %v112 = vadd.f32 %v107, %v109
    %v113 = vrot.slane %v112, 4
    %v114 = vadd.f32 %v112, %v113
    %v115 = vrot.slane %v114, 2
    %v116 = vadd.f32 %v114, %v115
    %v117 = vrot.slane %v116, 1
    %v118 = vadd.f32 %v116, %v117
    %v119 = vadd.f32 %v108, %v110
    %v120 = vrot.slane %v119, 4
    %v121 = vadd.f32 %v119, %v120
    %v122 = vrot.slane %v121, 2
    %v123 = vadd.f32 %v121, %v122
    %v124 = vrot.slane %v123, 1
    %v125 = vadd.f32 %v123, %v124
    %v128 = vcombine.low %v118, %v125
    %v130 = vunpack.c.l.s4 1966171168
    %v131 = vunpack.c.0.s8 %v130
    %v132 = vlaneseq
    %v133 = vshrl.u32 %v132, 7
    %v134 = vsub.s32 %v131, %v133
    %v135 = vrot.slane %v128, %v134
    %v137 = vunpack.c.l.s4 1966171168
    %v138 = vunpack.c.0.s8 %v137
    %v139 = vlaneseq
    %v140 = vshrl.u32 %v139, 7
    %v141 = vsub.s32 %v138, %v140
    %v142 = vrot.slane %v135, %v141
    %v144 = vadd.f32 %v111, %v142
    %v145 = vlaneseq
    %vm146 = vcmp.ge.s32.totalorder %v145, 0
    %vm147 = vcmp.lt.s32.totalorder %v145, 256
    %vm148 = vmand %vm146, %vm147
    %149 = vst.msk [vmem:[#allocation2] sm:$0x3] %vm148, %v144
    // Predicated region
    $region18: #{lpips_loss.26} parent=1 // pred_check
      %p150 = pneg %p18
    $region19: #{lpips_loss.26} parent=1 // pred_check_branch
      %152 = sbr.rel (%p150) target = $region21
    $region20: #{lpips_loss.26} parent=1 // pred_region
      %v153 = vld [vmem:[#allocation2] sm:$0x3]
      %v154 = vld [vmem:[%s2] sm:$0x3]
      %v155 = vmul.f32 %v153, %v154
      %v157 = vlaneseq
      %v158 = vshrl.u32 %v157, 7
      %v159 = vsub.s32 0, %v158
      %v160 = vrot.slane %v155, %v159
      %v161 = vlaneseq
      %v162 = vshrl.u32 %v161, 7
      %v163 = vsub.s32 1, %v162
      %v164 = vrot.slane %v155, %v163
      %vm167 = vcmask 1040384
      %v168 = vsel %vm167, %v160, 0.0
      %v169 = vsel %vm167, %v164, 0.0
      %v170 = vadd.f32 %v168, %v169
      %171 = vadd.xlane.f32.xlu0 %v170
      %v172 = vpop.xlane.xlu0 %171
      %vm173 = vcmask 0
      %174 = vst.msk [vmem:[#allocation3] sm:$0x1] %vm173, %v172
    $region21: #{lpips_loss.26} parent=1 // pred_fallthru
      _
    // Predicated region
    $region22: #{lpips_loss.26} parent=1 // pred_check
      _
    $region23: #{lpips_loss.26} parent=1 // pred_check_branch
      %176 = sbr.rel (0) target = $region25
    $region24: #{lpips_loss.26} parent=1 // pred_region
      %s178 = ssub.s32 16, 16
      %179 = vsyncadd [#allocation4], %s178
      %s181 = sshll.u32 [#allocation3], 4
      %s182 = int_to_ptr.vmem [resolvable:$true] %s181
      %184 = dma.vmem_to_hbm [thread:$0]  %s182, 16, %s3, [#allocation4]
    $region25: #{lpips_loss.26} parent=1 // pred_fallthru
      _
    // Predicated region
    $region26: #{lpips_loss.26} parent=1 // pred_check
      _
    $region27: #{lpips_loss.26} parent=1 // pred_check_branch
      %186 = sbr.rel (0) target = $region29
    $region28: #{lpips_loss.26} parent=1 // pred_region
      %187 = dma.done [#allocation4], 16
    $region29: #{lpips_loss.26} parent=1 // pred_fallthru
      _
    %188 = vsyncpa [#allocation4], 1

// kernel: lpips_loss.19
$region0: #{lpips_loss.19}
  #allocation0 [shape = 'u32[]', space=smem, size = 0x4, offset = 0x4, fixed_abs, tag = 'smem constant byte address 0x4 - core index']
  #allocation1 [shape = 'u32[144,128]{1,0:T(1,128)}', space=vmem, size = 0x12000, scoped, tag = 'internal scratch']
  %s0 = inlined_call_operand.vmem [shape: bf16[16,1792], index: 0, kind: input, shape index: {}]
  %s1 = inlined_call_operand.vmem [shape: bf16[1792,384], index: 1, kind: input, shape index: {}]
  %s2 = inlined_call_operand.vmem [shape: f32[1,384], index: 2, kind: input, shape index: {}]
  %s3 = inlined_call_operand.vmem [shape: bf16[16,384], index: 3, kind: output, shape index: {}]
  %s4 = sld [smem:[#allocation0]]
  $region22: #{lpips_loss.19} parent=0
    _
  %s6 = ssub.s32 1, %s4
  %s7 = scalar_select 0, %s6, %s4
  // Predicated region
  $region2: #{lpips_loss.19} parent=0 // pred_check
    _
  $region3: #{lpips_loss.19} parent=0 // pred_check_branch
    %9 = sbr.rel (0) target = $region5
  $region4: #{lpips_loss.19} parent=0 // pred_region
    _
  $region5: #{lpips_loss.19} parent=0 // pred_fallthru
    _
  // Predicated region
  $region6: #{lpips_loss.19} parent=0 // pred_check
    _
  $region7: #{lpips_loss.19} parent=0 // pred_check_branch
    %11 = sbr.rel (0) target = $region9
  $region8: #{lpips_loss.19} parent=0 // pred_region
    _
  $region9: #{lpips_loss.19} parent=0 // pred_fallthru
    _
  // Predicated region
  $region10: #{lpips_loss.19} parent=0 // pred_check
    _
  $region11: #{lpips_loss.19} parent=0 // pred_check_branch
    %13 = sbr.rel (0) target = $region13
  $region12: #{lpips_loss.19} parent=0 // pred_region
    _
  $region13: #{lpips_loss.19} parent=0 // pred_fallthru
    _
  %v15 = vld [vmem:[%s0] sm:$0xff]
  %v16 = vld [vmem:[%s0 + $0x8] sm:$0xff]
  %v17 = vld [vmem:[%s0 + $0x10] sm:$0xff]
  %v18 = vld [vmem:[%s0 + $0x18] sm:$0xff]
  %v19 = vld [vmem:[%s0 + $0x20] sm:$0xff]
  %v20 = vld [vmem:[%s0 + $0x28] sm:$0xff]
  %v21 = vld [vmem:[%s0 + $0x30] sm:$0xff]
  %v22 = vld [vmem:[%s0 + $0x38] sm:$0xff]
  %v23 = vld [vmem:[%s0 + $0x40] sm:$0xff]
  %v24 = vld [vmem:[%s0 + $0x48] sm:$0xff]
  %v25 = vld [vmem:[%s0 + $0x50] sm:$0xff]
  %v26 = vld [vmem:[%s0 + $0x58] sm:$0xff]
  %v27 = vld [vmem:[%s0 + $0x60] sm:$0xff]
  %v28 = vld [vmem:[%s0 + $0x68] sm:$0xff]
  %v29 = vld [vmem:[%s1] sm:$0xff]
  %v30 = vld [vmem:[%s1 + $0x8] sm:$0xf]
  %v31 = vld [vmem:[%s1 + $0xc] sm:$0xff]
  %v32 = vld [vmem:[%s1 + $0x14] sm:$0xf]
  %v33 = vld [vmem:[%s1 + $0x18] sm:$0xff]
  %v34 = vld [vmem:[%s1 + $0x20] sm:$0xf]
  %v35 = vld [vmem:[%s1 + $0x24] sm:$0xff]
  %v36 = vld [vmem:[%s1 + $0x2c] sm:$0xf]
  %v37 = vld [vmem:[%s1 + $0x30] sm:$0xff]
  %v38 = vld [vmem:[%s1 + $0x38] sm:$0xf]
  %v39 = vld [vmem:[%s1 + $0x3c] sm:$0xff]
  %v40 = vld [vmem:[%s1 + $0x44] sm:$0xf]
  %v41 = vld [vmem:[%s1 + $0x48] sm:$0xff]
  %v42 = vld [vmem:[%s1 + $0x50] sm:$0xf]
  %v43 = vld [vmem:[%s1 + $0x54] sm:$0xff]
  %v44 = vld [vmem:[%s1 + $0x5c] sm:$0xf]
  %v45 = vld [vmem:[%s1 + $0x60] sm:$0xff]
  %v46 = vld [vmem:[%s1 + $0x68] sm:$0xf]
  %v47 = vld [vmem:[%s1 + $0x6c] sm:$0xff]
  %v48 = vld [vmem:[%s1 + $0x74] sm:$0xf]
  %v49 = vld [vmem:[%s1 + $0x78] sm:$0xff]
  %v50 = vld [vmem:[%s1 + $0x80] sm:$0xf]
  %v51 = vld [vmem:[%s1 + $0x84] sm:$0xff]
  %v52 = vld [vmem:[%s1 + $0x8c] sm:$0xf]
  %v53 = vld [vmem:[%s1 + $0x90] sm:$0xff]
  %v54 = vld [vmem:[%s1 + $0x98] sm:$0xf]
  %v55 = vld [vmem:[%s1 + $0x9c] sm:$0xff]
  %v56 = vld [vmem:[%s1 + $0xa4] sm:$0xf]
  %v57 = vld [vmem:[%s1 + $0xa8] sm:$0xff]
  %v58 = vld [vmem:[%s1 + $0xb0] sm:$0xf]
  %v59 = vld [vmem:[%s1 + $0xb4] sm:$0xff]
  %v60 = vld [vmem:[%s1 + $0xbc] sm:$0xf]
  %v61 = vld [vmem:[%s1 + $0xc0] sm:$0xff]
  %v62 = vld [vmem:[%s1 + $0xc8] sm:$0xf]
  %v63 = vld [vmem:[%s1 + $0xcc] sm:$0xff]
  %v64 = vld [vmem:[%s1 + $0xd4] sm:$0xf]
  %v65 = vld [vmem:[%s1 + $0xd8] sm:$0xff]
  %v66 = vld [vmem:[%s1 + $0xe0] sm:$0xf]
  %v67 = vld [vmem:[%s1 + $0xe4] sm:$0xff]
  %v68 = vld [vmem:[%s1 + $0xec] sm:$0xf]
  %v69 = vld [vmem:[%s1 + $0xf0] sm:$0xff]
  %v70 = vld [vmem:[%s1 + $0xf8] sm:$0xf]
  %v71 = vld [vmem:[%s1 + $0xfc] sm:$0xff]
  %v72 = vld [vmem:[%s1 + $0x104] sm:$0xf]
  %v73 = vld [vmem:[%s1 + $0x108] sm:$0xff]
  %v74 = vld [vmem:[%s1 + $0x110] sm:$0xf]
  %v75 = vld [vmem:[%s1 + $0x114] sm:$0xff]
  %v76 = vld [vmem:[%s1 + $0x11c] sm:$0xf]
  %v77 = vld [vmem:[%s1 + $0x120] sm:$0xff]
  %v78 = vld [vmem:[%s1 + $0x128] sm:$0xf]
  %v79 = vld [vmem:[%s1 + $0x12c] sm:$0xff]
  %v80 = vld [vmem:[%s1 + $0x134] sm:$0xf]
  %v81 = vld [vmem:[%s1 + $0x138] sm:$0xff]
  %v82 = vld [vmem:[%s1 + $0x140] sm:$0xf]
  %v83 = vld [vmem:[%s1 + $0x144] sm:$0xff]
  %v84 = vld [vmem:[%s1 + $0x14c] sm:$0xf]
  %v85 = vld [vmem:[%s1 + $0x150] sm:$0xff]
  %v86 = vld [vmem:[%s1 + $0x158] sm:$0xf]
  %v87 = vld [vmem:[%s1 + $0x15c] sm:$0xff]
  %v88 = vld [vmem:[%s1 + $0x164] sm:$0xf]
  %v89 = vld [vmem:[%s1 + $0x168] sm:$0xff]
  %v90 = vld [vmem:[%s1 + $0x170] sm:$0xf]
  %v91 = vld [vmem:[%s1 + $0x174] sm:$0xff]
  %v92 = vld [vmem:[%s1 + $0x17c] sm:$0xf]
  %v93 = vld [vmem:[%s1 + $0x180] sm:$0xff]
  %v94 = vld [vmem:[%s1 + $0x188] sm:$0xf]
  %v95 = vld [vmem:[%s1 + $0x18c] sm:$0xff]
  %v96 = vld [vmem:[%s1 + $0x194] sm:$0xf]
  %v97 = vld [vmem:[%s1 + $0x198] sm:$0xff]
  %v98 = vld [vmem:[%s1 + $0x1a0] sm:$0xf]
  %v99 = vld [vmem:[%s1 + $0x1a4] sm:$0xff]
  %v100 = vld [vmem:[%s1 + $0x1ac] sm:$0xf]
  %v101 = vld [vmem:[%s1 + $0x1b0] sm:$0xff]
  %v102 = vld [vmem:[%s1 + $0x1b8] sm:$0xf]
  %v103 = vld [vmem:[%s1 + $0x1bc] sm:$0xff]
  %v104 = vld [vmem:[%s1 + $0x1c4] sm:$0xf]
  %v105 = vld [vmem:[%s1 + $0x1c8] sm:$0xff]
  %v106 = vld [vmem:[%s1 + $0x1d0] sm:$0xf]
  %v107 = vld [vmem:[%s1 + $0x1d4] sm:$0xff]
  %v108 = vld [vmem:[%s1 + $0x1dc] sm:$0xf]
  %v109 = vld [vmem:[%s1 + $0x1e0] sm:$0xff]
  %v110 = vld [vmem:[%s1 + $0x1e8] sm:$0xf]
  %v111 = vld [vmem:[%s1 + $0x1ec] sm:$0xff]
  %v112 = vld [vmem:[%s1 + $0x1f4] sm:$0xf]
  %v113 = vld [vmem:[%s1 + $0x1f8] sm:$0xff]
  %v114 = vld [vmem:[%s1 + $0x200] sm:$0xf]
  %v115 = vld [vmem:[%s1 + $0x204] sm:$0xff]
  %v116 = vld [vmem:[%s1 + $0x20c] sm:$0xf]
  %v117 = vld [vmem:[%s1 + $0x210] sm:$0xff]
  %v118 = vld [vmem:[%s1 + $0x218] sm:$0xf]
  %v119 = vld [vmem:[%s1 + $0x21c] sm:$0xff]
  %v120 = vld [vmem:[%s1 + $0x224] sm:$0xf]
  %v121 = vld [vmem:[%s1 + $0x228] sm:$0xff]
  %v122 = vld [vmem:[%s1 + $0x230] sm:$0xf]
  %v123 = vld [vmem:[%s1 + $0x234] sm:$0xff]
  %v124 = vld [vmem:[%s1 + $0x23c] sm:$0xf]
  %v125 = vld [vmem:[%s1 + $0x240] sm:$0xff]
  %v126 = vld [vmem:[%s1 + $0x248] sm:$0xf]
  %v127 = vld [vmem:[%s1 + $0x24c] sm:$0xff]
  %v128 = vld [vmem:[%s1 + $0x254] sm:$0xf]
  %v129 = vld [vmem:[%s1 + $0x258] sm:$0xff]
  %v130 = vld [vmem:[%s1 + $0x260] sm:$0xf]
  %v131 = vld [vmem:[%s1 + $0x264] sm:$0xff]
  %v132 = vld [vmem:[%s1 + $0x26c] sm:$0xf]
  %v133 = vld [vmem:[%s1 + $0x270] sm:$0xff]
  %v134 = vld [vmem:[%s1 + $0x278] sm:$0xf]
  %v135 = vld [vmem:[%s1 + $0x27c] sm:$0xff]
  %v136 = vld [vmem:[%s1 + $0x284] sm:$0xf]
  %v137 = vld [vmem:[%s1 + $0x288] sm:$0xff]
  %v138 = vld [vmem:[%s1 + $0x290] sm:$0xf]
  %v139 = vld [vmem:[%s1 + $0x294] sm:$0xff]
  %v140 = vld [vmem:[%s1 + $0x29c] sm:$0xf]
  %v141 = vld [vmem:[%s1 + $0x2a0] sm:$0xff]
  %v142 = vld [vmem:[%s1 + $0x2a8] sm:$0xf]
  %v143 = vld [vmem:[%s1 + $0x2ac] sm:$0xff]
  %v144 = vld [vmem:[%s1 + $0x2b4] sm:$0xf]
  %v145 = vld [vmem:[%s1 + $0x2b8] sm:$0xff]
  %v146 = vld [vmem:[%s1 + $0x2c0] sm:$0xf]
  %v147 = vld [vmem:[%s1 + $0x2c4] sm:$0xff]
  %v148 = vld [vmem:[%s1 + $0x2cc] sm:$0xf]
  %v149 = vld [vmem:[%s1 + $0x2d0] sm:$0xff]
  %v150 = vld [vmem:[%s1 + $0x2d8] sm:$0xf]
  %v151 = vld [vmem:[%s1 + $0x2dc] sm:$0xff]
  %v152 = vld [vmem:[%s1 + $0x2e4] sm:$0xf]
  %v153 = vld [vmem:[%s1 + $0x2e8] sm:$0xff]
  %v154 = vld [vmem:[%s1 + $0x2f0] sm:$0xf]
  %v155 = vld [vmem:[%s1 + $0x2f4] sm:$0xff]
  %v156 = vld [vmem:[%s1 + $0x2fc] sm:$0xf]
  %v157 = vld [vmem:[%s1 + $0x300] sm:$0xff]
  %v158 = vld [vmem:[%s1 + $0x308] sm:$0xf]
  %v159 = vld [vmem:[%s1 + $0x30c] sm:$0xff]
  %v160 = vld [vmem:[%s1 + $0x314] sm:$0xf]
  %v161 = vld [vmem:[%s1 + $0x318] sm:$0xff]
  %v162 = vld [vmem:[%s1 + $0x320] sm:$0xf]
  %v163 = vld [vmem:[%s1 + $0x324] sm:$0xff]
  %v164 = vld [vmem:[%s1 + $0x32c] sm:$0xf]
  %v165 = vld [vmem:[%s1 + $0x330] sm:$0xff]
  %v166 = vld [vmem:[%s1 + $0x338] sm:$0xf]
  %v167 = vld [vmem:[%s1 + $0x33c] sm:$0xff]
  %v168 = vld [vmem:[%s1 + $0x344] sm:$0xf]
  %v169 = vld [vmem:[%s1 + $0x348] sm:$0xff]
  %v170 = vld [vmem:[%s1 + $0x350] sm:$0xf]
  %v171 = vld [vmem:[%s1 + $0x354] sm:$0xff]
  %v172 = vld [vmem:[%s1 + $0x35c] sm:$0xf]
  %v173 = vld [vmem:[%s1 + $0x360] sm:$0xff]
  %v174 = vld [vmem:[%s1 + $0x368] sm:$0xf]
  %v175 = vld [vmem:[%s1 + $0x36c] sm:$0xff]
  %v176 = vld [vmem:[%s1 + $0x374] sm:$0xf]
  %v177 = vld [vmem:[%s1 + $0x378] sm:$0xff]
  %v178 = vld [vmem:[%s1 + $0x380] sm:$0xf]
  %v179 = vld [vmem:[%s1 + $0x384] sm:$0xff]
  %v180 = vld [vmem:[%s1 + $0x38c] sm:$0xf]
  %v181 = vld [vmem:[%s1 + $0x390] sm:$0xff]
  %v182 = vld [vmem:[%s1 + $0x398] sm:$0xf]
  %v183 = vld [vmem:[%s1 + $0x39c] sm:$0xff]
  %v184 = vld [vmem:[%s1 + $0x3a4] sm:$0xf]
  %v185 = vld [vmem:[%s1 + $0x3a8] sm:$0xff]
  %v186 = vld [vmem:[%s1 + $0x3b0] sm:$0xf]
  %v187 = vld [vmem:[%s1 + $0x3b4] sm:$0xff]
  %v188 = vld [vmem:[%s1 + $0x3bc] sm:$0xf]
  %v189 = vld [vmem:[%s1 + $0x3c0] sm:$0xff]
  %v190 = vld [vmem:[%s1 + $0x3c8] sm:$0xf]
  %v191 = vld [vmem:[%s1 + $0x3cc] sm:$0xff]
  %v192 = vld [vmem:[%s1 + $0x3d4] sm:$0xf]
  %v193 = vld [vmem:[%s1 + $0x3d8] sm:$0xff]
  %v194 = vld [vmem:[%s1 + $0x3e0] sm:$0xf]
  %v195 = vld [vmem:[%s1 + $0x3e4] sm:$0xff]
  %v196 = vld [vmem:[%s1 + $0x3ec] sm:$0xf]
  %v197 = vld [vmem:[%s1 + $0x3f0] sm:$0xff]
  %v198 = vld [vmem:[%s1 + $0x3f8] sm:$0xf]
  %v199 = vld [vmem:[%s1 + $0x3fc] sm:$0xff]
  %v200 = vld [vmem:[%s1 + $0x404] sm:$0xf]
  %v201 = vld [vmem:[%s1 + $0x408] sm:$0xff]
  %v202 = vld [vmem:[%s1 + $0x410] sm:$0xf]
  %v203 = vld [vmem:[%s1 + $0x414] sm:$0xff]
  %v204 = vld [vmem:[%s1 + $0x41c] sm:$0xf]
  %v205 = vld [vmem:[%s1 + $0x420] sm:$0xff]
  %v206 = vld [vmem:[%s1 + $0x428] sm:$0xf]
  %v207 = vld [vmem:[%s1 + $0x42c] sm:$0xff]
  %v208 = vld [vmem:[%s1 + $0x434] sm:$0xf]
  %v209 = vld [vmem:[%s1 + $0x438] sm:$0xff]
  %v210 = vld [vmem:[%s1 + $0x440] sm:$0xf]
  %v211 = vld [vmem:[%s1 + $0x444] sm:$0xff]
  %v212 = vld [vmem:[%s1 + $0x44c] sm:$0xf]
  %v213 = vld [vmem:[%s1 + $0x450] sm:$0xff]
  %v214 = vld [vmem:[%s1 + $0x458] sm:$0xf]
  %v215 = vld [vmem:[%s1 + $0x45c] sm:$0xff]
  %v216 = vld [vmem:[%s1 + $0x464] sm:$0xf]
  %v217 = vld [vmem:[%s1 + $0x468] sm:$0xff]
  %v218 = vld [vmem:[%s1 + $0x470] sm:$0xf]
  %v219 = vld [vmem:[%s1 + $0x474] sm:$0xff]
  %v220 = vld [vmem:[%s1 + $0x47c] sm:$0xf]
  %v221 = vld [vmem:[%s1 + $0x480] sm:$0xff]
  %v222 = vld [vmem:[%s1 + $0x488] sm:$0xf]
  %v223 = vld [vmem:[%s1 + $0x48c] sm:$0xff]
  %v224 = vld [vmem:[%s1 + $0x494] sm:$0xf]
  %v225 = vld [vmem:[%s1 + $0x498] sm:$0xff]
  %v226 = vld [vmem:[%s1 + $0x4a0] sm:$0xf]
  %v227 = vld [vmem:[%s1 + $0x4a4] sm:$0xff]
  %v228 = vld [vmem:[%s1 + $0x4ac] sm:$0xf]
  %v229 = vld [vmem:[%s1 + $0x4b0] sm:$0xff]
  %v230 = vld [vmem:[%s1 + $0x4b8] sm:$0xf]
  %v231 = vld [vmem:[%s1 + $0x4bc] sm:$0xff]
  %v232 = vld [vmem:[%s1 + $0x4c4] sm:$0xf]
  %v233 = vld [vmem:[%s1 + $0x4c8] sm:$0xff]
  %v234 = vld [vmem:[%s1 + $0x4d0] sm:$0xf]
  %v235 = vld [vmem:[%s1 + $0x4d4] sm:$0xff]
  %v236 = vld [vmem:[%s1 + $0x4dc] sm:$0xf]
  %v237 = vld [vmem:[%s1 + $0x4e0] sm:$0xff]
  %v238 = vld [vmem:[%s1 + $0x4e8] sm:$0xf]
  %v239 = vld [vmem:[%s1 + $0x4ec] sm:$0xff]
  %v240 = vld [vmem:[%s1 + $0x4f4] sm:$0xf]
  %v241 = vld [vmem:[%s1 + $0x4f8] sm:$0xff]
  %v242 = vld [vmem:[%s1 + $0x500] sm:$0xf]
  %v243 = vld [vmem:[%s1 + $0x504] sm:$0xff]
  %v244 = vld [vmem:[%s1 + $0x50c] sm:$0xf]
  %v245 = vld [vmem:[%s1 + $0x510] sm:$0xff]
  %v246 = vld [vmem:[%s1 + $0x518] sm:$0xf]
  %v247 = vld [vmem:[%s1 + $0x51c] sm:$0xff]
  %v248 = vld [vmem:[%s1 + $0x524] sm:$0xf]
  %v249 = vld [vmem:[%s1 + $0x528] sm:$0xff]
  %v250 = vld [vmem:[%s1 + $0x530] sm:$0xf]
  %v251 = vld [vmem:[%s1 + $0x534] sm:$0xff]
  %v252 = vld [vmem:[%s1 + $0x53c] sm:$0xf]
  %v253 = vld [vmem:[%s1 + $0x540] sm:$0xff]
  %v254 = vld [vmem:[%s1 + $0x548] sm:$0xf]
  %v255 = vld [vmem:[%s1 + $0x54c] sm:$0xff]
  %v256 = vld [vmem:[%s1 + $0x554] sm:$0xf]
  %v257 = vld [vmem:[%s1 + $0x558] sm:$0xff]
  %v258 = vld [vmem:[%s1 + $0x560] sm:$0xf]
  %v259 = vld [vmem:[%s1 + $0x564] sm:$0xff]
  %v260 = vld [vmem:[%s1 + $0x56c] sm:$0xf]
  %v261 = vld [vmem:[%s1 + $0x570] sm:$0xff]
  %v262 = vld [vmem:[%s1 + $0x578] sm:$0xf]
  %v263 = vld [vmem:[%s1 + $0x57c] sm:$0xff]
  %v264 = vld [vmem:[%s1 + $0x584] sm:$0xf]
  %v265 = vld [vmem:[%s1 + $0x588] sm:$0xff]
  %v266 = vld [vmem:[%s1 + $0x590] sm:$0xf]
  %v267 = vld [vmem:[%s1 + $0x594] sm:$0xff]
  %v268 = vld [vmem:[%s1 + $0x59c] sm:$0xf]
  %v269 = vld [vmem:[%s1 + $0x5a0] sm:$0xff]
  %v270 = vld [vmem:[%s1 + $0x5a8] sm:$0xf]
  %v271 = vld [vmem:[%s1 + $0x5ac] sm:$0xff]
  %v272 = vld [vmem:[%s1 + $0x5b4] sm:$0xf]
  %v273 = vld [vmem:[%s1 + $0x5b8] sm:$0xff]
  %v274 = vld [vmem:[%s1 + $0x5c0] sm:$0xf]
  %v275 = vld [vmem:[%s1 + $0x5c4] sm:$0xff]
  %v276 = vld [vmem:[%s1 + $0x5cc] sm:$0xf]
  %v277 = vld [vmem:[%s1 + $0x5d0] sm:$0xff]
  %v278 = vld [vmem:[%s1 + $0x5d8] sm:$0xf]
  %v279 = vld [vmem:[%s1 + $0x5dc] sm:$0xff]
  %v280 = vld [vmem:[%s1 + $0x5e4] sm:$0xf]
  %v281 = vld [vmem:[%s1 + $0x5e8] sm:$0xff]
  %v282 = vld [vmem:[%s1 + $0x5f0] sm:$0xf]
  %v283 = vld [vmem:[%s1 + $0x5f4] sm:$0xff]
  %v284 = vld [vmem:[%s1 + $0x5fc] sm:$0xf]
  %v285 = vld [vmem:[%s1 + $0x600] sm:$0xff]
  %v286 = vld [vmem:[%s1 + $0x608] sm:$0xf]
  %v287 = vld [vmem:[%s1 + $0x60c] sm:$0xff]
  %v288 = vld [vmem:[%s1 + $0x614] sm:$0xf]
  %v289 = vld [vmem:[%s1 + $0x618] sm:$0xff]
  %v290 = vld [vmem:[%s1 + $0x620] sm:$0xf]
  %v291 = vld [vmem:[%s1 + $0x624] sm:$0xff]
  %v292 = vld [vmem:[%s1 + $0x62c] sm:$0xf]
  %v293 = vld [vmem:[%s1 + $0x630] sm:$0xff]
  %v294 = vld [vmem:[%s1 + $0x638] sm:$0xf]
  %v295 = vld [vmem:[%s1 + $0x63c] sm:$0xff]
  %v296 = vld [vmem:[%s1 + $0x644] sm:$0xf]
  %v297 = vld [vmem:[%s1 + $0x648] sm:$0xff]
  %v298 = vld [vmem:[%s1 + $0x650] sm:$0xf]
  %v299 = vld [vmem:[%s1 + $0x654] sm:$0xff]
  %v300 = vld [vmem:[%s1 + $0x65c] sm:$0xf]
  %v301 = vld [vmem:[%s1 + $0x660] sm:$0xff]
  %v302 = vld [vmem:[%s1 + $0x668] sm:$0xf]
  %v303 = vld [vmem:[%s1 + $0x66c] sm:$0xff]
  %v304 = vld [vmem:[%s1 + $0x674] sm:$0xf]
  %v305 = vld [vmem:[%s1 + $0x678] sm:$0xff]
  %v306 = vld [vmem:[%s1 + $0x680] sm:$0xf]
  %v307 = vld [vmem:[%s1 + $0x684] sm:$0xff]
  %v308 = vld [vmem:[%s1 + $0x68c] sm:$0xf]
  %v309 = vld [vmem:[%s1 + $0x690] sm:$0xff]
  %v310 = vld [vmem:[%s1 + $0x698] sm:$0xf]
  %v311 = vld [vmem:[%s1 + $0x69c] sm:$0xff]
  %v312 = vld [vmem:[%s1 + $0x6a4] sm:$0xf]
  %v313 = vld [vmem:[%s1 + $0x6a8] sm:$0xff]
  %v314 = vld [vmem:[%s1 + $0x6b0] sm:$0xf]
  %v315 = vld [vmem:[%s1 + $0x6b4] sm:$0xff]
  %v316 = vld [vmem:[%s1 + $0x6bc] sm:$0xf]
  %v317 = vld [vmem:[%s1 + $0x6c0] sm:$0xff]
  %v318 = vld [vmem:[%s1 + $0x6c8] sm:$0xf]
  %v319 = vld [vmem:[%s1 + $0x6cc] sm:$0xff]
  %v320 = vld [vmem:[%s1 + $0x6d4] sm:$0xf]
  %v321 = vld [vmem:[%s1 + $0x6d8] sm:$0xff]
  %v322 = vld [vmem:[%s1 + $0x6e0] sm:$0xf]
  %v323 = vld [vmem:[%s1 + $0x6e4] sm:$0xff]
  %v324 = vld [vmem:[%s1 + $0x6ec] sm:$0xf]
  %v325 = vld [vmem:[%s1 + $0x6f0] sm:$0xff]
  %v326 = vld [vmem:[%s1 + $0x6f8] sm:$0xf]
  %v327 = vld [vmem:[%s1 + $0x6fc] sm:$0xff]
  %v328 = vld [vmem:[%s1 + $0x704] sm:$0xf]
  %v329 = vld [vmem:[%s1 + $0x708] sm:$0xff]
  %v330 = vld [vmem:[%s1 + $0x710] sm:$0xf]
  %v331 = vld [vmem:[%s1 + $0x714] sm:$0xff]
  %v332 = vld [vmem:[%s1 + $0x71c] sm:$0xf]
  %v333 = vld [vmem:[%s1 + $0x720] sm:$0xff]
  %v334 = vld [vmem:[%s1 + $0x728] sm:$0xf]
  %v335 = vld [vmem:[%s1 + $0x72c] sm:$0xff]
  %v336 = vld [vmem:[%s1 + $0x734] sm:$0xf]
  %v337 = vld [vmem:[%s1 + $0x738] sm:$0xff]
  %v338 = vld [vmem:[%s1 + $0x740] sm:$0xf]
  %v339 = vld [vmem:[%s1 + $0x744] sm:$0xff]
  %v340 = vld [vmem:[%s1 + $0x74c] sm:$0xf]
  %v341 = vld [vmem:[%s1 + $0x750] sm:$0xff]
  %v342 = vld [vmem:[%s1 + $0x758] sm:$0xf]
  %v343 = vld [vmem:[%s1 + $0x75c] sm:$0xff]
  %v344 = vld [vmem:[%s1 + $0x764] sm:$0xf]
  %v345 = vld [vmem:[%s1 + $0x768] sm:$0xff]
  %v346 = vld [vmem:[%s1 + $0x770] sm:$0xf]
  %v347 = vld [vmem:[%s1 + $0x774] sm:$0xff]
  %v348 = vld [vmem:[%s1 + $0x77c] sm:$0xf]
  %v349 = vld [vmem:[%s1 + $0x780] sm:$0xff]
  %v350 = vld [vmem:[%s1 + $0x788] sm:$0xf]
  %v351 = vld [vmem:[%s1 + $0x78c] sm:$0xff]
  %v352 = vld [vmem:[%s1 + $0x794] sm:$0xf]
  %v353 = vld [vmem:[%s1 + $0x798] sm:$0xff]
  %v354 = vld [vmem:[%s1 + $0x7a0] sm:$0xf]
  %v355 = vld [vmem:[%s1 + $0x7a4] sm:$0xff]
  %v356 = vld [vmem:[%s1 + $0x7ac] sm:$0xf]
  %v357 = vld [vmem:[%s1 + $0x7b0] sm:$0xff]
  %v358 = vld [vmem:[%s1 + $0x7b8] sm:$0xf]
  %v359 = vld [vmem:[%s1 + $0x7bc] sm:$0xff]
  %v360 = vld [vmem:[%s1 + $0x7c4] sm:$0xf]
  %v361 = vld [vmem:[%s1 + $0x7c8] sm:$0xff]
  %v362 = vld [vmem:[%s1 + $0x7d0] sm:$0xf]
  %v363 = vld [vmem:[%s1 + $0x7d4] sm:$0xff]
  %v364 = vld [vmem:[%s1 + $0x7dc] sm:$0xf]
  %v365 = vld [vmem:[%s1 + $0x7e0] sm:$0xff]
  %v366 = vld [vmem:[%s1 + $0x7e8] sm:$0xf]
  %v367 = vld [vmem:[%s1 + $0x7ec] sm:$0xff]
  %v368 = vld [vmem:[%s1 + $0x7f4] sm:$0xf]
  %v369 = vld [vmem:[%s1 + $0x7f8] sm:$0xff]
  %v370 = vld [vmem:[%s1 + $0x800] sm:$0xf]
  %v371 = vld [vmem:[%s1 + $0x804] sm:$0xff]
  %v372 = vld [vmem:[%s1 + $0x80c] sm:$0xf]
  %v373 = vld [vmem:[%s1 + $0x810] sm:$0xff]
  %v374 = vld [vmem:[%s1 + $0x818] sm:$0xf]
  %v375 = vld [vmem:[%s1 + $0x81c] sm:$0xff]
  %v376 = vld [vmem:[%s1 + $0x824] sm:$0xf]
  %v377 = vld [vmem:[%s1 + $0x828] sm:$0xff]
  %v378 = vld [vmem:[%s1 + $0x830] sm:$0xf]
  %v379 = vld [vmem:[%s1 + $0x834] sm:$0xff]
  %v380 = vld [vmem:[%s1 + $0x83c] sm:$0xf]
  %v381 = vld [vmem:[%s1 + $0x840] sm:$0xff]
  %v382 = vld [vmem:[%s1 + $0x848] sm:$0xf]
  %v383 = vld [vmem:[%s1 + $0x84c] sm:$0xff]
  %v384 = vld [vmem:[%s1 + $0x854] sm:$0xf]
  %v385 = vld [vmem:[%s1 + $0x858] sm:$0xff]
  %v386 = vld [vmem:[%s1 + $0x860] sm:$0xf]
  %v387 = vld [vmem:[%s1 + $0x864] sm:$0xff]
  %v388 = vld [vmem:[%s1 + $0x86c] sm:$0xf]
  %v389 = vld [vmem:[%s1 + $0x870] sm:$0xff]
  %v390 = vld [vmem:[%s1 + $0x878] sm:$0xf]
  %v391 = vld [vmem:[%s1 + $0x87c] sm:$0xff]
  %v392 = vld [vmem:[%s1 + $0x884] sm:$0xf]
  %v393 = vld [vmem:[%s1 + $0x888] sm:$0xff]
  %v394 = vld [vmem:[%s1 + $0x890] sm:$0xf]
  %v395 = vld [vmem:[%s1 + $0x894] sm:$0xff]
  %v396 = vld [vmem:[%s1 + $0x89c] sm:$0xf]
  %v397 = vld [vmem:[%s1 + $0x8a0] sm:$0xff]
  %v398 = vld [vmem:[%s1 + $0x8a8] sm:$0xf]
  %v399 = vld [vmem:[%s1 + $0x8ac] sm:$0xff]
  %v400 = vld [vmem:[%s1 + $0x8b4] sm:$0xf]
  %v401 = vld [vmem:[%s1 + $0x8b8] sm:$0xff]
  %v402 = vld [vmem:[%s1 + $0x8c0] sm:$0xf]
  %v403 = vld [vmem:[%s1 + $0x8c4] sm:$0xff]
  %v404 = vld [vmem:[%s1 + $0x8cc] sm:$0xf]
  %v405 = vld [vmem:[%s1 + $0x8d0] sm:$0xff]
  %v406 = vld [vmem:[%s1 + $0x8d8] sm:$0xf]
  %v407 = vld [vmem:[%s1 + $0x8dc] sm:$0xff]
  %v408 = vld [vmem:[%s1 + $0x8e4] sm:$0xf]
  %v409 = vld [vmem:[%s1 + $0x8e8] sm:$0xff]
  %v410 = vld [vmem:[%s1 + $0x8f0] sm:$0xf]
  %v411 = vld [vmem:[%s1 + $0x8f4] sm:$0xff]
  %v412 = vld [vmem:[%s1 + $0x8fc] sm:$0xf]
  %v413 = vld [vmem:[%s1 + $0x900] sm:$0xff]
  %v414 = vld [vmem:[%s1 + $0x908] sm:$0xf]
  %v415 = vld [vmem:[%s1 + $0x90c] sm:$0xff]
  %v416 = vld [vmem:[%s1 + $0x914] sm:$0xf]
  %v417 = vld [vmem:[%s1 + $0x918] sm:$0xff]
  %v418 = vld [vmem:[%s1 + $0x920] sm:$0xf]
  %v419 = vld [vmem:[%s1 + $0x924] sm:$0xff]
  %v420 = vld [vmem:[%s1 + $0x92c] sm:$0xf]
  %v421 = vld [vmem:[%s1 + $0x930] sm:$0xff]
  %v422 = vld [vmem:[%s1 + $0x938] sm:$0xf]
  %v423 = vld [vmem:[%s1 + $0x93c] sm:$0xff]
  %v424 = vld [vmem:[%s1 + $0x944] sm:$0xf]
  %v425 = vld [vmem:[%s1 + $0x948] sm:$0xff]
  %v426 = vld [vmem:[%s1 + $0x950] sm:$0xf]
  %v427 = vld [vmem:[%s1 + $0x954] sm:$0xff]
  %v428 = vld [vmem:[%s1 + $0x95c] sm:$0xf]
  %v429 = vld [vmem:[%s1 + $0x960] sm:$0xff]
  %v430 = vld [vmem:[%s1 + $0x968] sm:$0xf]
  %v431 = vld [vmem:[%s1 + $0x96c] sm:$0xff]
  %v432 = vld [vmem:[%s1 + $0x974] sm:$0xf]
  %v433 = vld [vmem:[%s1 + $0x978] sm:$0xff]
  %v434 = vld [vmem:[%s1 + $0x980] sm:$0xf]
  %v435 = vld [vmem:[%s1 + $0x984] sm:$0xff]
  %v436 = vld [vmem:[%s1 + $0x98c] sm:$0xf]
  %v437 = vld [vmem:[%s1 + $0x990] sm:$0xff]
  %v438 = vld [vmem:[%s1 + $0x998] sm:$0xf]
  %v439 = vld [vmem:[%s1 + $0x99c] sm:$0xff]
  %v440 = vld [vmem:[%s1 + $0x9a4] sm:$0xf]
  %v441 = vld [vmem:[%s1 + $0x9a8] sm:$0xff]
  %v442 = vld [vmem:[%s1 + $0x9b0] sm:$0xf]
  %v443 = vld [vmem:[%s1 + $0x9b4] sm:$0xff]
  %v444 = vld [vmem:[%s1 + $0x9bc] sm:$0xf]
  %v445 = vld [vmem:[%s1 + $0x9c0] sm:$0xff]
  %v446 = vld [vmem:[%s1 + $0x9c8] sm:$0xf]
  %v447 = vld [vmem:[%s1 + $0x9cc] sm:$0xff]
  %v448 = vld [vmem:[%s1 + $0x9d4] sm:$0xf]
  %v449 = vld [vmem:[%s1 + $0x9d8] sm:$0xff]
  %v450 = vld [vmem:[%s1 + $0x9e0] sm:$0xf]
  %v451 = vld [vmem:[%s1 + $0x9e4] sm:$0xff]
  %v452 = vld [vmem:[%s1 + $0x9ec] sm:$0xf]
  %v453 = vld [vmem:[%s1 + $0x9f0] sm:$0xff]
  %v454 = vld [vmem:[%s1 + $0x9f8] sm:$0xf]
  %v455 = vld [vmem:[%s1 + $0x9fc] sm:$0xff]
  %v456 = vld [vmem:[%s1 + $0xa04] sm:$0xf]
  %v457 = vld [vmem:[%s1 + $0xa08] sm:$0xff]
  %v458 = vld [vmem:[%s1 + $0xa10] sm:$0xf]
  %v459 = vld [vmem:[%s1 + $0xa14] sm:$0xff]
  %v460 = vld [vmem:[%s1 + $0xa1c] sm:$0xf]
  %v461 = vld [vmem:[%s1 + $0xa20] sm:$0xff]
  %v462 = vld [vmem:[%s1 + $0xa28] sm:$0xf]
  %v463 = vld [vmem:[%s1 + $0xa2c] sm:$0xff]
  %v464 = vld [vmem:[%s1 + $0xa34] sm:$0xf]
  %v465 = vld [vmem:[%s1 + $0xa38] sm:$0xff]
  %v466 = vld [vmem:[%s1 + $0xa40] sm:$0xf]
  %v467 = vld [vmem:[%s1 + $0xa44] sm:$0xff]
  %v468 = vld [vmem:[%s1 + $0xa4c] sm:$0xf]
  %v469 = vld [vmem:[%s1 + $0xa50] sm:$0xff]
  %v470 = vld [vmem:[%s1 + $0xa58] sm:$0xf]
  %v471 = vld [vmem:[%s1 + $0xa5c] sm:$0xff]
  %v472 = vld [vmem:[%s1 + $0xa64] sm:$0xf]
  %v473 = vld [vmem:[%s1 + $0xa68] sm:$0xff]
  %v474 = vld [vmem:[%s1 + $0xa70] sm:$0xf]
  %v475 = vld [vmem:[%s1 + $0xa74] sm:$0xff]
  %v476 = vld [vmem:[%s1 + $0xa7c] sm:$0xf]
  %v477 = vld [vmem:[%s2] sm:$0x7]
  %v479 = vlaneseq
  %v480 = vshrl.u32 %v479, 7
  %v481 = vsub.s32 0, %v480
  %v482 = vrot.slane %v477, %v481
  %v483 = vlaneseq
  %v484 = vshrl.u32 %v483, 7
  %v485 = vsub.s32 1, %v484
  %v486 = vrot.slane %v477, %v485
  %v487 = vlaneseq
  %v488 = vshrl.u32 %v487, 7
  %v489 = vsub.s32 2, %v488
  %v490 = vrot.slane %v477, %v489
  %v508 = vunpack.c.l.b16 %v15
  %v509 = vunpack.c.h.b16 %v15
  %v510 = vunpack.c.l.b16 %v16
  %v511 = vunpack.c.h.b16 %v16
  %v512 = vunpack.c.l.b16 %v17
  %v513 = vunpack.c.h.b16 %v17
  %v514 = vunpack.c.l.b16 %v18
  %v515 = vunpack.c.h.b16 %v18
  %v516 = vunpack.c.l.b16 %v19
  %v517 = vunpack.c.h.b16 %v19
  %v518 = vunpack.c.l.b16 %v20
  %v519 = vunpack.c.h.b16 %v20
  %v520 = vunpack.c.l.b16 %v21
  %v521 = vunpack.c.h.b16 %v21
  %v522 = vunpack.c.l.b16 %v22
  %v523 = vunpack.c.h.b16 %v22
  %v524 = vunpack.c.l.b16 %v23
  %v525 = vunpack.c.h.b16 %v23
  %v526 = vunpack.c.l.b16 %v24
  %v527 = vunpack.c.h.b16 %v24
  %v528 = vunpack.c.l.b16 %v25
  %v529 = vunpack.c.h.b16 %v25
  %v530 = vunpack.c.l.b16 %v26
  %v531 = vunpack.c.h.b16 %v26
  %v532 = vunpack.c.l.b16 %v27
  %v533 = vunpack.c.h.b16 %v27
  %v534 = vunpack.c.l.b16 %v28
  %v535 = vunpack.c.h.b16 %v28
  %v536 = vpack.c.b16 %v522, %v508
  %v537 = vpack.c.b16 %v523, %v509
  %v538 = vpack.c.b16 %v524, %v510
  %v539 = vpack.c.b16 %v525, %v511
  %v540 = vpack.c.b16 %v526, %v512
  %v541 = vpack.c.b16 %v527, %v513
  %v542 = vpack.c.b16 %v528, %v514
  %v543 = vpack.c.b16 %v529, %v515
  %v544 = vpack.c.b16 %v530, %v516
  %v545 = vpack.c.b16 %v531, %v517
  %v546 = vpack.c.b16 %v532, %v518
  %v547 = vpack.c.b16 %v533, %v519
  %v548 = vpack.c.b16 %v534, %v520
  %v549 = vpack.c.b16 %v535, %v521
  %v1012 = vunpack.c.l.b16 %v29
  %v1013 = vunpack.c.h.b16 %v29
  %v1014 = vunpack.c.l.b16 %v30
  %v1015 = vunpack.c.l.b16 %v31
  %v1016 = vunpack.c.h.b16 %v31
  %v1017 = vunpack.c.l.b16 %v32
  %v1018 = vunpack.c.l.b16 %v33
  %v1019 = vunpack.c.h.b16 %v33
  %v1020 = vunpack.c.l.b16 %v34
  %v1021 = vunpack.c.l.b16 %v35
  %v1022 = vunpack.c.h.b16 %v35
  %v1023 = vunpack.c.l.b16 %v36
  %v1024 = vunpack.c.l.b16 %v37
  %v1025 = vunpack.c.h.b16 %v37
  %v1026 = vunpack.c.l.b16 %v38
  %v1027 = vunpack.c.l.b16 %v39
  %v1028 = vunpack.c.h.b16 %v39
  %v1029 = vunpack.c.l.b16 %v40
  %v1030 = vunpack.c.l.b16 %v41
  %v1031 = vunpack.c.h.b16 %v41
  %v1032 = vunpack.c.l.b16 %v42
  %v1033 = vunpack.c.l.b16 %v43
  %v1034 = vunpack.c.h.b16 %v43
  %v1035 = vunpack.c.l.b16 %v44
  %v1036 = vunpack.c.l.b16 %v45
  %v1037 = vunpack.c.h.b16 %v45
  %v1038 = vunpack.c.l.b16 %v46
  %v1039 = vunpack.c.l.b16 %v47
  %v1040 = vunpack.c.h.b16 %v47
  %v1041 = vunpack.c.l.b16 %v48
  %v1042 = vunpack.c.l.b16 %v49
  %v1043 = vunpack.c.h.b16 %v49
  %v1044 = vunpack.c.l.b16 %v50
  %v1045 = vunpack.c.l.b16 %v51
  %v1046 = vunpack.c.h.b16 %v51
  %v1047 = vunpack.c.l.b16 %v52
  %v1048 = vunpack.c.l.b16 %v53
  %v1049 = vunpack.c.h.b16 %v53
  %v1050 = vunpack.c.l.b16 %v54
  %v1051 = vunpack.c.l.b16 %v55
  %v1052 = vunpack.c.h.b16 %v55
  %v1053 = vunpack.c.l.b16 %v56
  %v1054 = vunpack.c.l.b16 %v57
  %v1055 = vunpack.c.h.b16 %v57
  %v1056 = vunpack.c.l.b16 %v58
  %v1057 = vunpack.c.l.b16 %v59
  %v1058 = vunpack.c.h.b16 %v59
  %v1059 = vunpack.c.l.b16 %v60
  %v1060 = vunpack.c.l.b16 %v61
  %v1061 = vunpack.c.h.b16 %v61
  %v1062 = vunpack.c.l.b16 %v62
  %v1063 = vunpack.c.l.b16 %v63
  %v1064 = vunpack.c.h.b16 %v63
  %v1065 = vunpack.c.l.b16 %v64
  %v1066 = vunpack.c.l.b16 %v65
  %v1067 = vunpack.c.h.b16 %v65
  %v1068 = vunpack.c.l.b16 %v66
  %v1069 = vunpack.c.l.b16 %v67
  %v1070 = vunpack.c.h.b16 %v67
  %v1071 = vunpack.c.l.b16 %v68
  %v1072 = vunpack.c.l.b16 %v69
  %v1073 = vunpack.c.h.b16 %v69
  %v1074 = vunpack.c.l.b16 %v70
  %v1075 = vunpack.c.l.b16 %v71
  %v1076 = vunpack.c.h.b16 %v71
  %v1077 = vunpack.c.l.b16 %v72
  %v1078 = vunpack.c.l.b16 %v73
  %v1079 = vunpack.c.h.b16 %v73
  %v1080 = vunpack.c.l.b16 %v74
  %v1081 = vunpack.c.l.b16 %v75
  %v1082 = vunpack.c.h.b16 %v75
  %v1083 = vunpack.c.l.b16 %v76
  %v1084 = vunpack.c.l.b16 %v77
  %v1085 = vunpack.c.h.b16 %v77
  %v1086 = vunpack.c.l.b16 %v78
  %v1087 = vunpack.c.l.b16 %v79
  %v1088 = vunpack.c.h.b16 %v79
  %v1089 = vunpack.c.l.b16 %v80
  %v1090 = vunpack.c.l.b16 %v81
  %v1091 = vunpack.c.h.b16 %v81
  %v1092 = vunpack.c.l.b16 %v82
  %v1093 = vunpack.c.l.b16 %v83
  %v1094 = vunpack.c.h.b16 %v83
  %v1095 = vunpack.c.l.b16 %v84
  %v1096 = vunpack.c.l.b16 %v85
  %v1097 = vunpack.c.h.b16 %v85
  %v1098 = vunpack.c.l.b16 %v86
  %v1099 = vunpack.c.l.b16 %v87
  %v1100 = vunpack.c.h.b16 %v87
  %v1101 = vunpack.c.l.b16 %v88
  %v1102 = vunpack.c.l.b16 %v89
  %v1103 = vunpack.c.h.b16 %v89
  %v1104 = vunpack.c.l.b16 %v90
  %v1105 = vunpack.c.l.b16 %v91
  %v1106 = vunpack.c.h.b16 %v91
  %v1107 = vunpack.c.l.b16 %v92
  %v1108 = vunpack.c.l.b16 %v93
  %v1109 = vunpack.c.h.b16 %v93
  %v1110 = vunpack.c.l.b16 %v94
  %v1111 = vunpack.c.l.b16 %v95
  %v1112 = vunpack.c.h.b16 %v95
  %v1113 = vunpack.c.l.b16 %v96
  %v1114 = vunpack.c.l.b16 %v97
  %v1115 = vunpack.c.h.b16 %v97
  %v1116 = vunpack.c.l.b16 %v98
  %v1117 = vunpack.c.l.b16 %v99
  %v1118 = vunpack.c.h.b16 %v99
  %v1119 = vunpack.c.l.b16 %v100
  %v1120 = vunpack.c.l.b16 %v101
  %v1121 = vunpack.c.h.b16 %v101
  %v1122 = vunpack.c.l.b16 %v102
  %v1123 = vunpack.c.l.b16 %v103
  %v1124 = vunpack.c.h.b16 %v103
  %v1125 = vunpack.c.l.b16 %v104
  %v1126 = vunpack.c.l.b16 %v105
  %v1127 = vunpack.c.h.b16 %v105
  %v1128 = vunpack.c.l.b16 %v106
  %v1129 = vunpack.c.l.b16 %v107
  %v1130 = vunpack.c.h.b16 %v107
  %v1131 = vunpack.c.l.b16 %v108
  %v1132 = vunpack.c.l.b16 %v109
  %v1133 = vunpack.c.h.b16 %v109
  %v1134 = vunpack.c.l.b16 %v110
  %v1135 = vunpack.c.l.b16 %v111
  %v1136 = vunpack.c.h.b16 %v111
  %v1137 = vunpack.c.l.b16 %v112
  %v1138 = vunpack.c.l.b16 %v113
  %v1139 = vunpack.c.h.b16 %v113
  %v1140 = vunpack.c.l.b16 %v114
  %v1141 = vunpack.c.l.b16 %v115
  %v1142 = vunpack.c.h.b16 %v115
  %v1143 = vunpack.c.l.b16 %v116
  %v1144 = vunpack.c.l.b16 %v117
  %v1145 = vunpack.c.h.b16 %v117
  %v1146 = vunpack.c.l.b16 %v118
  %v1147 = vunpack.c.l.b16 %v119
  %v1148 = vunpack.c.h.b16 %v119
  %v1149 = vunpack.c.l.b16 %v120
  %v1150 = vunpack.c.l.b16 %v121
  %v1151 = vunpack.c.h.b16 %v121
  %v1152 = vunpack.c.l.b16 %v122
  %v1153 = vunpack.c.l.b16 %v123
  %v1154 = vunpack.c.h.b16 %v123
  %v1155 = vunpack.c.l.b16 %v124
  %v1156 = vunpack.c.l.b16 %v125
  %v1157 = vunpack.c.h.b16 %v125
  %v1158 = vunpack.c.l.b16 %v126
  %v1159 = vunpack.c.l.b16 %v127
  %v1160 = vunpack.c.h.b16 %v127
  %v1161 = vunpack.c.l.b16 %v128
  %v1162 = vunpack.c.l.b16 %v129
  %v1163 = vunpack.c.h.b16 %v129
  %v1164 = vunpack.c.l.b16 %v130
  %v1165 = vunpack.c.l.b16 %v131
  %v1166 = vunpack.c.h.b16 %v131
  %v1167 = vunpack.c.l.b16 %v132
  %v1168 = vunpack.c.l.b16 %v133
  %v1169 = vunpack.c.h.b16 %v133
  %v1170 = vunpack.c.l.b16 %v134
  %v1171 = vunpack.c.l.b16 %v135
  %v1172 = vunpack.c.h.b16 %v135
  %v1173 = vunpack.c.l.b16 %v136
  %v1174 = vunpack.c.l.b16 %v137
  %v1175 = vunpack.c.h.b16 %v137
  %v1176 = vunpack.c.l.b16 %v138
  %v1177 = vunpack.c.l.b16 %v139
  %v1178 = vunpack.c.h.b16 %v139
  %v1179 = vunpack.c.l.b16 %v140
  %v1180 = vunpack.c.l.b16 %v141
  %v1181 = vunpack.c.h.b16 %v141
  %v1182 = vunpack.c.l.b16 %v142
  %v1183 = vunpack.c.l.b16 %v143
  %v1184 = vunpack.c.h.b16 %v143
  %v1185 = vunpack.c.l.b16 %v144
  %v1186 = vunpack.c.l.b16 %v145
  %v1187 = vunpack.c.h.b16 %v145
  %v1188 = vunpack.c.l.b16 %v146
  %v1189 = vunpack.c.l.b16 %v147
  %v1190 = vunpack.c.h.b16 %v147
  %v1191 = vunpack.c.l.b16 %v148
  %v1192 = vunpack.c.l.b16 %v149
  %v1193 = vunpack.c.h.b16 %v149
  %v1194 = vunpack.c.l.b16 %v150
  %v1195 = vunpack.c.l.b16 %v151
  %v1196 = vunpack.c.h.b16 %v151
  %v1197 = vunpack.c.l.b16 %v152
  %v1198 = vunpack.c.l.b16 %v153
  %v1199 = vunpack.c.h.b16 %v153
  %v1200 = vunpack.c.l.b16 %v154
  %v1201 = vunpack.c.l.b16 %v155
  %v1202 = vunpack.c.h.b16 %v155
  %v1203 = vunpack.c.l.b16 %v156
  %v1204 = vunpack.c.l.b16 %v157
  %v1205 = vunpack.c.h.b16 %v157
  %v1206 = vunpack.c.l.b16 %v158
  %v1207 = vunpack.c.l.b16 %v159
  %v1208 = vunpack.c.h.b16 %v159
  %v1209 = vunpack.c.l.b16 %v160
  %v1210 = vunpack.c.l.b16 %v161
  %v1211 = vunpack.c.h.b16 %v161
  %v1212 = vunpack.c.l.b16 %v162
  %v1213 = vunpack.c.l.b16 %v163
  %v1214 = vunpack.c.h.b16 %v163
  %v1215 = vunpack.c.l.b16 %v164
  %v1216 = vunpack.c.l.b16 %v165
  %v1217 = vunpack.c.h.b16 %v165
  %v1218 = vunpack.c.l.b16 %v166
  %v1219 = vunpack.c.l.b16 %v167
  %v1220 = vunpack.c.h.b16 %v167
  %v1221 = vunpack.c.l.b16 %v168
  %v1222 = vunpack.c.l.b16 %v169
  %v1223 = vunpack.c.h.b16 %v169
  %v1224 = vunpack.c.l.b16 %v170
  %v1225 = vunpack.c.l.b16 %v171
  %v1226 = vunpack.c.h.b16 %v171
  %v1227 = vunpack.c.l.b16 %v172
  %v1228 = vunpack.c.l.b16 %v173
  %v1229 = vunpack.c.h.b16 %v173
  %v1230 = vunpack.c.l.b16 %v174
  %v1231 = vunpack.c.l.b16 %v175
  %v1232 = vunpack.c.h.b16 %v175
  %v1233 = vunpack.c.l.b16 %v176
  %v1234 = vunpack.c.l.b16 %v177
  %v1235 = vunpack.c.h.b16 %v177
  %v1236 = vunpack.c.l.b16 %v178
  %v1237 = vunpack.c.l.b16 %v179
  %v1238 = vunpack.c.h.b16 %v179
  %v1239 = vunpack.c.l.b16 %v180
  %v1240 = vunpack.c.l.b16 %v181
  %v1241 = vunpack.c.h.b16 %v181
  %v1242 = vunpack.c.l.b16 %v182
  %v1243 = vunpack.c.l.b16 %v183
  %v1244 = vunpack.c.h.b16 %v183
  %v1245 = vunpack.c.l.b16 %v184
  %v1246 = vunpack.c.l.b16 %v185
  %v1247 = vunpack.c.h.b16 %v185
  %v1248 = vunpack.c.l.b16 %v186
  %v1249 = vunpack.c.l.b16 %v187
  %v1250 = vunpack.c.h.b16 %v187
  %v1251 = vunpack.c.l.b16 %v188
  %v1252 = vunpack.c.l.b16 %v189
  %v1253 = vunpack.c.h.b16 %v189
  %v1254 = vunpack.c.l.b16 %v190
  %v1255 = vunpack.c.l.b16 %v191
  %v1256 = vunpack.c.h.b16 %v191
  %v1257 = vunpack.c.l.b16 %v192
  %v1258 = vunpack.c.l.b16 %v193
  %v1259 = vunpack.c.h.b16 %v193
  %v1260 = vunpack.c.l.b16 %v194
  %v1261 = vunpack.c.l.b16 %v195
  %v1262 = vunpack.c.h.b16 %v195
  %v1263 = vunpack.c.l.b16 %v196
  %v1264 = vunpack.c.l.b16 %v197
  %v1265 = vunpack.c.h.b16 %v197
  %v1266 = vunpack.c.l.b16 %v198
  %v1267 = vunpack.c.l.b16 %v199
  %v1268 = vunpack.c.h.b16 %v199
  %v1269 = vunpack.c.l.b16 %v200
  %v1270 = vunpack.c.l.b16 %v201
  %v1271 = vunpack.c.h.b16 %v201
  %v1272 = vunpack.c.l.b16 %v202
  %v1273 = vunpack.c.l.b16 %v203
  %v1274 = vunpack.c.h.b16 %v203
  %v1275 = vunpack.c.l.b16 %v204
  %v1276 = vunpack.c.l.b16 %v205
  %v1277 = vunpack.c.h.b16 %v205
  %v1278 = vunpack.c.l.b16 %v206
  %v1279 = vunpack.c.l.b16 %v207
  %v1280 = vunpack.c.h.b16 %v207
  %v1281 = vunpack.c.l.b16 %v208
  %v1282 = vunpack.c.l.b16 %v209
  %v1283 = vunpack.c.h.b16 %v209
  %v1284 = vunpack.c.l.b16 %v210
  %v1285 = vunpack.c.l.b16 %v211
  %v1286 = vunpack.c.h.b16 %v211
  %v1287 = vunpack.c.l.b16 %v212
  %v1288 = vunpack.c.l.b16 %v213
  %v1289 = vunpack.c.h.b16 %v213
  %v1290 = vunpack.c.l.b16 %v214
  %v1291 = vunpack.c.l.b16 %v215
  %v1292 = vunpack.c.h.b16 %v215
  %v1293 = vunpack.c.l.b16 %v216
  %v1294 = vunpack.c.l.b16 %v217
  %v1295 = vunpack.c.h.b16 %v217
  %v1296 = vunpack.c.l.b16 %v218
  %v1297 = vunpack.c.l.b16 %v219
  %v1298 = vunpack.c.h.b16 %v219
  %v1299 = vunpack.c.l.b16 %v220
  %v1300 = vunpack.c.l.b16 %v221
  %v1301 = vunpack.c.h.b16 %v221
  %v1302 = vunpack.c.l.b16 %v222
  %v1303 = vunpack.c.l.b16 %v223
  %v1304 = vunpack.c.h.b16 %v223
  %v1305 = vunpack.c.l.b16 %v224
  %v1306 = vunpack.c.l.b16 %v225
  %v1307 = vunpack.c.h.b16 %v225
  %v1308 = vunpack.c.l.b16 %v226
  %v1309 = vunpack.c.l.b16 %v227
  %v1310 = vunpack.c.h.b16 %v227
  %v1311 = vunpack.c.l.b16 %v228
  %v1312 = vunpack.c.l.b16 %v229
  %v1313 = vunpack.c.h.b16 %v229
  %v1314 = vunpack.c.l.b16 %v230
  %v1315 = vunpack.c.l.b16 %v231
  %v1316 = vunpack.c.h.b16 %v231
  %v1317 = vunpack.c.l.b16 %v232
  %v1318 = vunpack.c.l.b16 %v233
  %v1319 = vunpack.c.h.b16 %v233
  %v1320 = vunpack.c.l.b16 %v234
  %v1321 = vunpack.c.l.b16 %v235
  %v1322 = vunpack.c.h.b16 %v235
  %v1323 = vunpack.c.l.b16 %v236
  %v1324 = vunpack.c.l.b16 %v237
  %v1325 = vunpack.c.h.b16 %v237
  %v1326 = vunpack.c.l.b16 %v238
  %v1327 = vunpack.c.l.b16 %v239
  %v1328 = vunpack.c.h.b16 %v239
  %v1329 = vunpack.c.l.b16 %v240
  %v1330 = vunpack.c.l.b16 %v241
  %v1331 = vunpack.c.h.b16 %v241
  %v1332 = vunpack.c.l.b16 %v242
  %v1333 = vunpack.c.l.b16 %v243
  %v1334 = vunpack.c.h.b16 %v243
  %v1335 = vunpack.c.l.b16 %v244
  %v1336 = vunpack.c.l.b16 %v245
  %v1337 = vunpack.c.h.b16 %v245
  %v1338 = vunpack.c.l.b16 %v246
  %v1339 = vunpack.c.l.b16 %v247
  %v1340 = vunpack.c.h.b16 %v247
  %v1341 = vunpack.c.l.b16 %v248
  %v1342 = vunpack.c.l.b16 %v249
  %v1343 = vunpack.c.h.b16 %v249
  %v1344 = vunpack.c.l.b16 %v250
  %v1345 = vunpack.c.l.b16 %v251
  %v1346 = vunpack.c.h.b16 %v251
  %v1347 = vunpack.c.l.b16 %v252
  %v1348 = vunpack.c.l.b16 %v253
  %v1349 = vunpack.c.h.b16 %v253
  %v1350 = vunpack.c.l.b16 %v254
  %v1351 = vunpack.c.l.b16 %v255
  %v1352 = vunpack.c.h.b16 %v255
  %v1353 = vunpack.c.l.b16 %v256
  %v1354 = vunpack.c.l.b16 %v257
  %v1355 = vunpack.c.h.b16 %v257
  %v1356 = vunpack.c.l.b16 %v258
  %v1357 = vunpack.c.l.b16 %v259
  %v1358 = vunpack.c.h.b16 %v259
  %v1359 = vunpack.c.l.b16 %v260
  %v1360 = vunpack.c.l.b16 %v261
  %v1361 = vunpack.c.h.b16 %v261
  %v1362 = vunpack.c.l.b16 %v262
  %v1363 = vunpack.c.l.b16 %v263
  %v1364 = vunpack.c.h.b16 %v263
  %v1365 = vunpack.c.l.b16 %v264
  %v1366 = vunpack.c.l.b16 %v265
  %v1367 = vunpack.c.h.b16 %v265
  %v1368 = vunpack.c.l.b16 %v266
  %v1369 = vunpack.c.l.b16 %v267
  %v1370 = vunpack.c.h.b16 %v267
  %v1371 = vunpack.c.l.b16 %v268
  %v1372 = vunpack.c.l.b16 %v269
  %v1373 = vunpack.c.h.b16 %v269
  %v1374 = vunpack.c.l.b16 %v270
  %v1375 = vunpack.c.l.b16 %v271
  %v1376 = vunpack.c.h.b16 %v271
  %v1377 = vunpack.c.l.b16 %v272
  %v1378 = vunpack.c.l.b16 %v273
  %v1379 = vunpack.c.h.b16 %v273
  %v1380 = vunpack.c.l.b16 %v274
  %v1381 = vunpack.c.l.b16 %v275
  %v1382 = vunpack.c.h.b16 %v275
  %v1383 = vunpack.c.l.b16 %v276
  %v1384 = vunpack.c.l.b16 %v277
  %v1385 = vunpack.c.h.b16 %v277
  %v1386 = vunpack.c.l.b16 %v278
  %v1387 = vunpack.c.l.b16 %v279
  %v1388 = vunpack.c.h.b16 %v279
  %v1389 = vunpack.c.l.b16 %v280
  %v1390 = vunpack.c.l.b16 %v281
  %v1391 = vunpack.c.h.b16 %v281
  %v1392 = vunpack.c.l.b16 %v282
  %v1393 = vunpack.c.l.b16 %v283
  %v1394 = vunpack.c.h.b16 %v283
  %v1395 = vunpack.c.l.b16 %v284
  %v1396 = vunpack.c.l.b16 %v285
  %v1397 = vunpack.c.h.b16 %v285
  %v1398 = vunpack.c.l.b16 %v286
  %v1399 = vunpack.c.l.b16 %v287
  %v1400 = vunpack.c.h.b16 %v287
  %v1401 = vunpack.c.l.b16 %v288
  %v1402 = vunpack.c.l.b16 %v289
  %v1403 = vunpack.c.h.b16 %v289
  %v1404 = vunpack.c.l.b16 %v290
  %v1405 = vunpack.c.l.b16 %v291
  %v1406 = vunpack.c.h.b16 %v291
  %v1407 = vunpack.c.l.b16 %v292
  %v1408 = vunpack.c.l.b16 %v293
  %v1409 = vunpack.c.h.b16 %v293
  %v1410 = vunpack.c.l.b16 %v294
  %v1411 = vunpack.c.l.b16 %v295
  %v1412 = vunpack.c.h.b16 %v295
  %v1413 = vunpack.c.l.b16 %v296
  %v1414 = vunpack.c.l.b16 %v297
  %v1415 = vunpack.c.h.b16 %v297
  %v1416 = vunpack.c.l.b16 %v298
  %v1417 = vunpack.c.l.b16 %v299
  %v1418 = vunpack.c.h.b16 %v299
  %v1419 = vunpack.c.l.b16 %v300
  %v1420 = vunpack.c.l.b16 %v301
  %v1421 = vunpack.c.h.b16 %v301
  %v1422 = vunpack.c.l.b16 %v302
  %v1423 = vunpack.c.l.b16 %v303
  %v1424 = vunpack.c.h.b16 %v303
  %v1425 = vunpack.c.l.b16 %v304
  %v1426 = vunpack.c.l.b16 %v305
  %v1427 = vunpack.c.h.b16 %v305
  %v1428 = vunpack.c.l.b16 %v306
  %v1429 = vunpack.c.l.b16 %v307
  %v1430 = vunpack.c.h.b16 %v307
  %v1431 = vunpack.c.l.b16 %v308
  %v1432 = vunpack.c.l.b16 %v309
  %v1433 = vunpack.c.h.b16 %v309
  %v1434 = vunpack.c.l.b16 %v310
  %v1435 = vunpack.c.l.b16 %v311
  %v1436 = vunpack.c.h.b16 %v311
  %v1437 = vunpack.c.l.b16 %v312
  %v1438 = vunpack.c.l.b16 %v313
  %v1439 = vunpack.c.h.b16 %v313
  %v1440 = vunpack.c.l.b16 %v314
  %v1441 = vunpack.c.l.b16 %v315
  %v1442 = vunpack.c.h.b16 %v315
  %v1443 = vunpack.c.l.b16 %v316
  %v1444 = vunpack.c.l.b16 %v317
  %v1445 = vunpack.c.h.b16 %v317
  %v1446 = vunpack.c.l.b16 %v318
  %v1447 = vunpack.c.l.b16 %v319
  %v1448 = vunpack.c.h.b16 %v319
  %v1449 = vunpack.c.l.b16 %v320
  %v1450 = vunpack.c.l.b16 %v321
  %v1451 = vunpack.c.h.b16 %v321
  %v1452 = vunpack.c.l.b16 %v322
  %v1453 = vunpack.c.l.b16 %v323
  %v1454 = vunpack.c.h.b16 %v323
  %v1455 = vunpack.c.l.b16 %v324
  %v1456 = vunpack.c.l.b16 %v325
  %v1457 = vunpack.c.h.b16 %v325
  %v1458 = vunpack.c.l.b16 %v326
  %v1459 = vunpack.c.l.b16 %v327
  %v1460 = vunpack.c.h.b16 %v327
  %v1461 = vunpack.c.l.b16 %v328
  %v1462 = vunpack.c.l.b16 %v329
  %v1463 = vunpack.c.h.b16 %v329
  %v1464 = vunpack.c.l.b16 %v330
  %v1465 = vunpack.c.l.b16 %v331
  %v1466 = vunpack.c.h.b16 %v331
  %v1467 = vunpack.c.l.b16 %v332
  %v1468 = vunpack.c.l.b16 %v333
  %v1469 = vunpack.c.h.b16 %v333
  %v1470 = vunpack.c.l.b16 %v334
  %v1471 = vunpack.c.l.b16 %v335
  %v1472 = vunpack.c.h.b16 %v335
  %v1473 = vunpack.c.l.b16 %v336
  %v1474 = vunpack.c.l.b16 %v337
  %v1475 = vunpack.c.h.b16 %v337
  %v1476 = vunpack.c.l.b16 %v338
  %v1477 = vunpack.c.l.b16 %v339
  %v1478 = vunpack.c.h.b16 %v339
  %v1479 = vunpack.c.l.b16 %v340
  %v1480 = vunpack.c.l.b16 %v341
  %v1481 = vunpack.c.h.b16 %v341
  %v1482 = vunpack.c.l.b16 %v342
  %v1483 = vunpack.c.l.b16 %v343
  %v1484 = vunpack.c.h.b16 %v343
  %v1485 = vunpack.c.l.b16 %v344
  %v1486 = vunpack.c.l.b16 %v345
  %v1487 = vunpack.c.h.b16 %v345
  %v1488 = vunpack.c.l.b16 %v346
  %v1489 = vunpack.c.l.b16 %v347
  %v1490 = vunpack.c.h.b16 %v347
  %v1491 = vunpack.c.l.b16 %v348
  %v1492 = vunpack.c.l.b16 %v349
  %v1493 = vunpack.c.h.b16 %v349
  %v1494 = vunpack.c.l.b16 %v350
  %v1495 = vunpack.c.l.b16 %v351
  %v1496 = vunpack.c.h.b16 %v351
  %v1497 = vunpack.c.l.b16 %v352
  %v1498 = vunpack.c.l.b16 %v353
  %v1499 = vunpack.c.h.b16 %v353
  %v1500 = vunpack.c.l.b16 %v354
  %v1501 = vunpack.c.l.b16 %v355
  %v1502 = vunpack.c.h.b16 %v355
  %v1503 = vunpack.c.l.b16 %v356
  %v1504 = vunpack.c.l.b16 %v357
  %v1505 = vunpack.c.h.b16 %v357
  %v1506 = vunpack.c.l.b16 %v358
  %v1507 = vunpack.c.l.b16 %v359
  %v1508 = vunpack.c.h.b16 %v359
  %v1509 = vunpack.c.l.b16 %v360
  %v1510 = vunpack.c.l.b16 %v361
  %v1511 = vunpack.c.h.b16 %v361
  %v1512 = vunpack.c.l.b16 %v362
  %v1513 = vunpack.c.l.b16 %v363
  %v1514 = vunpack.c.h.b16 %v363
  %v1515 = vunpack.c.l.b16 %v364
  %v1516 = vunpack.c.l.b16 %v365
  %v1517 = vunpack.c.h.b16 %v365
  %v1518 = vunpack.c.l.b16 %v366
  %v1519 = vunpack.c.l.b16 %v367
  %v1520 = vunpack.c.h.b16 %v367
  %v1521 = vunpack.c.l.b16 %v368
  %v1522 = vunpack.c.l.b16 %v369
  %v1523 = vunpack.c.h.b16 %v369
  %v1524 = vunpack.c.l.b16 %v370
  %v1525 = vunpack.c.l.b16 %v371
  %v1526 = vunpack.c.h.b16 %v371
  %v1527 = vunpack.c.l.b16 %v372
  %v1528 = vunpack.c.l.b16 %v373
  %v1529 = vunpack.c.h.b16 %v373
  %v1530 = vunpack.c.l.b16 %v374
  %v1531 = vunpack.c.l.b16 %v375
  %v1532 = vunpack.c.h.b16 %v375
  %v1533 = vunpack.c.l.b16 %v376
  %v1534 = vunpack.c.l.b16 %v377
  %v1535 = vunpack.c.h.b16 %v377
  %v1536 = vunpack.c.l.b16 %v378
  %v1537 = vunpack.c.l.b16 %v379
  %v1538 = vunpack.c.h.b16 %v379
  %v1539 = vunpack.c.l.b16 %v380
  %v1540 = vunpack.c.l.b16 %v381
  %v1541 = vunpack.c.h.b16 %v381
  %v1542 = vunpack.c.l.b16 %v382
  %v1543 = vunpack.c.l.b16 %v383
  %v1544 = vunpack.c.h.b16 %v383
  %v1545 = vunpack.c.l.b16 %v384
  %v1546 = vunpack.c.l.b16 %v385
  %v1547 = vunpack.c.h.b16 %v385
  %v1548 = vunpack.c.l.b16 %v386
  %v1549 = vunpack.c.l.b16 %v387
  %v1550 = vunpack.c.h.b16 %v387
  %v1551 = vunpack.c.l.b16 %v388
  %v1552 = vunpack.c.l.b16 %v389
  %v1553 = vunpack.c.h.b16 %v389
  %v1554 = vunpack.c.l.b16 %v390
  %v1555 = vunpack.c.l.b16 %v391
  %v1556 = vunpack.c.h.b16 %v391
  %v1557 = vunpack.c.l.b16 %v392
  %v1558 = vunpack.c.l.b16 %v393
  %v1559 = vunpack.c.h.b16 %v393
  %v1560 = vunpack.c.l.b16 %v394
  %v1561 = vunpack.c.l.b16 %v395
  %v1562 = vunpack.c.h.b16 %v395
  %v1563 = vunpack.c.l.b16 %v396
  %v1564 = vunpack.c.l.b16 %v397
  %v1565 = vunpack.c.h.b16 %v397
  %v1566 = vunpack.c.l.b16 %v398
  %v1567 = vunpack.c.l.b16 %v399
  %v1568 = vunpack.c.h.b16 %v399
  %v1569 = vunpack.c.l.b16 %v400
  %v1570 = vunpack.c.l.b16 %v401
  %v1571 = vunpack.c.h.b16 %v401
  %v1572 = vunpack.c.l.b16 %v402
  %v1573 = vunpack.c.l.b16 %v403
  %v1574 = vunpack.c.h.b16 %v403
  %v1575 = vunpack.c.l.b16 %v404
  %v1576 = vunpack.c.l.b16 %v405
  %v1577 = vunpack.c.h.b16 %v405
  %v1578 = vunpack.c.l.b16 %v406
  %v1579 = vunpack.c.l.b16 %v407
  %v1580 = vunpack.c.h.b16 %v407
  %v1581 = vunpack.c.l.b16 %v408
  %v1582 = vunpack.c.l.b16 %v409
  %v1583 = vunpack.c.h.b16 %v409
  %v1584 = vunpack.c.l.b16 %v410
  %v1585 = vunpack.c.l.b16 %v411
  %v1586 = vunpack.c.h.b16 %v411
  %v1587 = vunpack.c.l.b16 %v412
  %v1588 = vunpack.c.l.b16 %v413
  %v1589 = vunpack.c.h.b16 %v413
  %v1590 = vunpack.c.l.b16 %v414
  %v1591 = vunpack.c.l.b16 %v415
  %v1592 = vunpack.c.h.b16 %v415
  %v1593 = vunpack.c.l.b16 %v416
  %v1594 = vunpack.c.l.b16 %v417
  %v1595 = vunpack.c.h.b16 %v417
  %v1596 = vunpack.c.l.b16 %v418
  %v1597 = vunpack.c.l.b16 %v419
  %v1598 = vunpack.c.h.b16 %v419
  %v1599 = vunpack.c.l.b16 %v420
  %v1600 = vunpack.c.l.b16 %v421
  %v1601 = vunpack.c.h.b16 %v421
  %v1602 = vunpack.c.l.b16 %v422
  %v1603 = vunpack.c.l.b16 %v423
  %v1604 = vunpack.c.h.b16 %v423
  %v1605 = vunpack.c.l.b16 %v424
  %v1606 = vunpack.c.l.b16 %v425
  %v1607 = vunpack.c.h.b16 %v425
  %v1608 = vunpack.c.l.b16 %v426
  %v1609 = vunpack.c.l.b16 %v427
  %v1610 = vunpack.c.h.b16 %v427
  %v1611 = vunpack.c.l.b16 %v428
  %v1612 = vunpack.c.l.b16 %v429
  %v1613 = vunpack.c.h.b16 %v429
  %v1614 = vunpack.c.l.b16 %v430
  %v1615 = vunpack.c.l.b16 %v431
  %v1616 = vunpack.c.h.b16 %v431
  %v1617 = vunpack.c.l.b16 %v432
  %v1618 = vunpack.c.l.b16 %v433
  %v1619 = vunpack.c.h.b16 %v433
  %v1620 = vunpack.c.l.b16 %v434
  %v1621 = vunpack.c.l.b16 %v435
  %v1622 = vunpack.c.h.b16 %v435
  %v1623 = vunpack.c.l.b16 %v436
  %v1624 = vunpack.c.l.b16 %v437
  %v1625 = vunpack.c.h.b16 %v437
  %v1626 = vunpack.c.l.b16 %v438
  %v1627 = vunpack.c.l.b16 %v439
  %v1628 = vunpack.c.h.b16 %v439
  %v1629 = vunpack.c.l.b16 %v440
  %v1630 = vunpack.c.l.b16 %v441
  %v1631 = vunpack.c.h.b16 %v441
  %v1632 = vunpack.c.l.b16 %v442
  %v1633 = vunpack.c.l.b16 %v443
  %v1634 = vunpack.c.h.b16 %v443
  %v1635 = vunpack.c.l.b16 %v444
  %v1636 = vunpack.c.l.b16 %v445
  %v1637 = vunpack.c.h.b16 %v445
  %v1638 = vunpack.c.l.b16 %v446
  %v1639 = vunpack.c.l.b16 %v447
  %v1640 = vunpack.c.h.b16 %v447
  %v1641 = vunpack.c.l.b16 %v448
  %v1642 = vunpack.c.l.b16 %v449
  %v1643 = vunpack.c.h.b16 %v449
  %v1644 = vunpack.c.l.b16 %v450
  %v1645 = vunpack.c.l.b16 %v451
  %v1646 = vunpack.c.h.b16 %v451
  %v1647 = vunpack.c.l.b16 %v452
  %v1648 = vunpack.c.l.b16 %v453
  %v1649 = vunpack.c.h.b16 %v453
  %v1650 = vunpack.c.l.b16 %v454
  %v1651 = vunpack.c.l.b16 %v455
  %v1652 = vunpack.c.h.b16 %v455
  %v1653 = vunpack.c.l.b16 %v456
  %v1654 = vunpack.c.l.b16 %v457
  %v1655 = vunpack.c.h.b16 %v457
  %v1656 = vunpack.c.l.b16 %v458
  %v1657 = vunpack.c.l.b16 %v459
  %v1658 = vunpack.c.h.b16 %v459
  %v1659 = vunpack.c.l.b16 %v460
  %v1660 = vunpack.c.l.b16 %v461
  %v1661 = vunpack.c.h.b16 %v461
  %v1662 = vunpack.c.l.b16 %v462
  %v1663 = vunpack.c.l.b16 %v463
  %v1664 = vunpack.c.h.b16 %v463
  %v1665 = vunpack.c.l.b16 %v464
  %v1666 = vunpack.c.l.b16 %v465
  %v1667 = vunpack.c.h.b16 %v465
  %v1668 = vunpack.c.l.b16 %v466
  %v1669 = vunpack.c.l.b16 %v467
  %v1670 = vunpack.c.h.b16 %v467
  %v1671 = vunpack.c.l.b16 %v468
  %v1672 = vunpack.c.l.b16 %v469
  %v1673 = vunpack.c.h.b16 %v469
  %v1674 = vunpack.c.l.b16 %v470
  %v1675 = vunpack.c.l.b16 %v471
  %v1676 = vunpack.c.h.b16 %v471
  %v1677 = vunpack.c.l.b16 %v472
  %v1678 = vunpack.c.l.b16 %v473
  %v1679 = vunpack.c.h.b16 %v473
  %v1680 = vunpack.c.l.b16 %v474
  %v1681 = vunpack.c.l.b16 %v475
  %v1682 = vunpack.c.h.b16 %v475
  %v1683 = vunpack.c.l.b16 %v476
  %v1684 = vpack.c.b16 %v1015, %v1012
  %v1685 = vpack.c.b16 %v1016, %v1013
  %v1686 = vpack.c.b16 %v1017, %v1014
  %v1687 = vpack.c.b16 %v1021, %v1018
  %v1688 = vpack.c.b16 %v1022, %v1019
  %v1689 = vpack.c.b16 %v1023, %v1020
  %v1690 = vpack.c.b16 %v1027, %v1024
  %v1691 = vpack.c.b16 %v1028, %v1025
  %v1692 = vpack.c.b16 %v1029, %v1026
  %v1693 = vpack.c.b16 %v1033, %v1030
  %v1694 = vpack.c.b16 %v1034, %v1031
  %v1695 = vpack.c.b16 %v1035, %v1032
  %v1696 = vpack.c.b16 %v1039, %v1036
  %v1697 = vpack.c.b16 %v1040, %v1037
  %v1698 = vpack.c.b16 %v1041, %v1038
  %v1699 = vpack.c.b16 %v1045, %v1042
  %v1700 = vpack.c.b16 %v1046, %v1043
  %v1701 = vpack.c.b16 %v1047, %v1044
  %v1702 = vpack.c.b16 %v1051, %v1048
  %v1703 = vpack.c.b16 %v1052, %v1049
  %v1704 = vpack.c.b16 %v1053, %v1050
  %v1705 = vpack.c.b16 %v1057, %v1054
  %v1706 = vpack.c.b16 %v1058, %v1055
  %v1707 = vpack.c.b16 %v1059, %v1056
  %v1708 = vpack.c.b16 %v1063, %v1060
  %v1709 = vpack.c.b16 %v1064, %v1061
  %v1710 = vpack.c.b16 %v1065, %v1062
  %v1711 = vpack.c.b16 %v1069, %v1066
  %v1712 = vpack.c.b16 %v1070, %v1067
  %v1713 = vpack.c.b16 %v1071, %v1068
  %v1714 = vpack.c.b16 %v1075, %v1072
  %v1715 = vpack.c.b16 %v1076, %v1073
  %v1716 = vpack.c.b16 %v1077, %v1074
  %v1717 = vpack.c.b16 %v1081, %v1078
  %v1718 = vpack.c.b16 %v1082, %v1079
  %v1719 = vpack.c.b16 %v1083, %v1080
  %v1720 = vpack.c.b16 %v1087, %v1084
  %v1721 = vpack.c.b16 %v1088, %v1085
  %v1722 = vpack.c.b16 %v1089, %v1086
  %v1723 = vpack.c.b16 %v1093, %v1090
  %v1724 = vpack.c.b16 %v1094, %v1091
  %v1725 = vpack.c.b16 %v1095, %v1092
  %v1726 = vpack.c.b16 %v1099, %v1096
  %v1727 = vpack.c.b16 %v1100, %v1097
  %v1728 = vpack.c.b16 %v1101, %v1098
  %v1729 = vpack.c.b16 %v1105, %v1102
  %v1730 = vpack.c.b16 %v1106, %v1103
  %v1731 = vpack.c.b16 %v1107, %v1104
  %v1732 = vpack.c.b16 %v1111, %v1108
  %v1733 = vpack.c.b16 %v1112, %v1109
  %v1734 = vpack.c.b16 %v1113, %v1110
  %v1735 = vpack.c.b16 %v1117, %v1114
  %v1736 = vpack.c.b16 %v1118, %v1115
  %v1737 = vpack.c.b16 %v1119, %v1116
  %v1738 = vpack.c.b16 %v1123, %v1120
  %v1739 = vpack.c.b16 %v1124, %v1121
  %v1740 = vpack.c.b16 %v1125, %v1122
  %v1741 = vpack.c.b16 %v1129, %v1126
  %v1742 = vpack.c.b16 %v1130, %v1127
  %v1743 = vpack.c.b16 %v1131, %v1128
  %v1744 = vpack.c.b16 %v1135, %v1132
  %v1745 = vpack.c.b16 %v1136, %v1133
  %v1746 = vpack.c.b16 %v1137, %v1134
  %v1747 = vpack.c.b16 %v1141, %v1138
  %v1748 = vpack.c.b16 %v1142, %v1139
  %v1749 = vpack.c.b16 %v1143, %v1140
  %v1750 = vpack.c.b16 %v1147, %v1144
  %v1751 = vpack.c.b16 %v1148, %v1145
  %v1752 = vpack.c.b16 %v1149, %v1146
  %v1753 = vpack.c.b16 %v1153, %v1150
  %v1754 = vpack.c.b16 %v1154, %v1151
  %v1755 = vpack.c.b16 %v1155, %v1152
  %v1756 = vpack.c.b16 %v1159, %v1156
  %v1757 = vpack.c.b16 %v1160, %v1157
  %v1758 = vpack.c.b16 %v1161, %v1158
  %v1759 = vpack.c.b16 %v1165, %v1162
  %v1760 = vpack.c.b16 %v1166, %v1163
  %v1761 = vpack.c.b16 %v1167, %v1164
  %v1762 = vpack.c.b16 %v1171, %v1168
  %v1763 = vpack.c.b16 %v1172, %v1169
  %v1764 = vpack.c.b16 %v1173, %v1170
  %v1765 = vpack.c.b16 %v1177, %v1174
  %v1766 = vpack.c.b16 %v1178, %v1175
  %v1767 = vpack.c.b16 %v1179, %v1176
  %v1768 = vpack.c.b16 %v1183, %v1180
  %v1769 = vpack.c.b16 %v1184, %v1181
  %v1770 = vpack.c.b16 %v1185, %v1182
  %v1771 = vpack.c.b16 %v1189, %v1186
  %v1772 = vpack.c.b16 %v1190, %v1187
  %v1773 = vpack.c.b16 %v1191, %v1188
  %v1774 = vpack.c.b16 %v1195, %v1192
  %v1775 = vpack.c.b16 %v1196, %v1193
  %v1776 = vpack.c.b16 %v1197, %v1194
  %v1777 = vpack.c.b16 %v1201, %v1198
  %v1778 = vpack.c.b16 %v1202, %v1199
  %v1779 = vpack.c.b16 %v1203, %v1200
  %v1780 = vpack.c.b16 %v1207, %v1204
  %v1781 = vpack.c.b16 %v1208, %v1205
  %v1782 = vpack.c.b16 %v1209, %v1206
  %v1783 = vpack.c.b16 %v1213, %v1210
  %v1784 = vpack.c.b16 %v1214, %v1211
  %v1785 = vpack.c.b16 %v1215, %v1212
  %v1786 = vpack.c.b16 %v1219, %v1216
  %v1787 = vpack.c.b16 %v1220, %v1217
  %v1788 = vpack.c.b16 %v1221, %v1218
  %v1789 = vpack.c.b16 %v1225, %v1222
  %v1790 = vpack.c.b16 %v1226, %v1223
  %v1791 = vpack.c.b16 %v1227, %v1224
  %v1792 = vpack.c.b16 %v1231, %v1228
  %v1793 = vpack.c.b16 %v1232, %v1229
  %v1794 = vpack.c.b16 %v1233, %v1230
  %v1795 = vpack.c.b16 %v1237, %v1234
  %v1796 = vpack.c.b16 %v1238, %v1235
  %v1797 = vpack.c.b16 %v1239, %v1236
  %v1798 = vpack.c.b16 %v1243, %v1240
  %v1799 = vpack.c.b16 %v1244, %v1241
  %v1800 = vpack.c.b16 %v1245, %v1242
  %v1801 = vpack.c.b16 %v1249, %v1246
  %v1802 = vpack.c.b16 %v1250, %v1247
  %v1803 = vpack.c.b16 %v1251, %v1248
  %v1804 = vpack.c.b16 %v1255, %v1252
  %v1805 = vpack.c.b16 %v1256, %v1253
  %v1806 = vpack.c.b16 %v1257, %v1254
  %v1807 = vpack.c.b16 %v1261, %v1258
  %v1808 = vpack.c.b16 %v1262, %v1259
  %v1809 = vpack.c.b16 %v1263, %v1260
  %v1810 = vpack.c.b16 %v1267, %v1264
  %v1811 = vpack.c.b16 %v1268, %v1265
  %v1812 = vpack.c.b16 %v1269, %v1266
  %v1813 = vpack.c.b16 %v1273, %v1270
  %v1814 = vpack.c.b16 %v1274, %v1271
  %v1815 = vpack.c.b16 %v1275, %v1272
  %v1816 = vpack.c.b16 %v1279, %v1276
  %v1817 = vpack.c.b16 %v1280, %v1277
  %v1818 = vpack.c.b16 %v1281, %v1278
  %v1819 = vpack.c.b16 %v1285, %v1282
  %v1820 = vpack.c.b16 %v1286, %v1283
  %v1821 = vpack.c.b16 %v1287, %v1284
  %v1822 = vpack.c.b16 %v1291, %v1288
  %v1823 = vpack.c.b16 %v1292, %v1289
  %v1824 = vpack.c.b16 %v1293, %v1290
  %v1825 = vpack.c.b16 %v1297, %v1294
  %v1826 = vpack.c.b16 %v1298, %v1295
  %v1827 = vpack.c.b16 %v1299, %v1296
  %v1828 = vpack.c.b16 %v1303, %v1300
  %v1829 = vpack.c.b16 %v1304, %v1301
  %v1830 = vpack.c.b16 %v1305, %v1302
  %v1831 = vpack.c.b16 %v1309, %v1306
  %v1832 = vpack.c.b16 %v1310, %v1307
  %v1833 = vpack.c.b16 %v1311, %v1308
  %v1834 = vpack.c.b16 %v1315, %v1312
  %v1835 = vpack.c.b16 %v1316, %v1313
  %v1836 = vpack.c.b16 %v1317, %v1314
  %v1837 = vpack.c.b16 %v1321, %v1318
  %v1838 = vpack.c.b16 %v1322, %v1319
  %v1839 = vpack.c.b16 %v1323, %v1320
  %v1840 = vpack.c.b16 %v1327, %v1324
  %v1841 = vpack.c.b16 %v1328, %v1325
  %v1842 = vpack.c.b16 %v1329, %v1326
  %v1843 = vpack.c.b16 %v1333, %v1330
  %v1844 = vpack.c.b16 %v1334, %v1331
  %v1845 = vpack.c.b16 %v1335, %v1332
  %v1846 = vpack.c.b16 %v1339, %v1336
  %v1847 = vpack.c.b16 %v1340, %v1337
  %v1848 = vpack.c.b16 %v1341, %v1338
  %v1849 = vpack.c.b16 %v1345, %v1342
  %v1850 = vpack.c.b16 %v1346, %v1343
  %v1851 = vpack.c.b16 %v1347, %v1344
  %v1852 = vpack.c.b16 %v1351, %v1348
  %v1853 = vpack.c.b16 %v1352, %v1349
  %v1854 = vpack.c.b16 %v1353, %v1350
  %v1855 = vpack.c.b16 %v1357, %v1354
  %v1856 = vpack.c.b16 %v1358, %v1355
  %v1857 = vpack.c.b16 %v1359, %v1356
  %v1858 = vpack.c.b16 %v1363, %v1360
  %v1859 = vpack.c.b16 %v1364, %v1361
  %v1860 = vpack.c.b16 %v1365, %v1362
  %v1861 = vpack.c.b16 %v1369, %v1366
  %v1862 = vpack.c.b16 %v1370, %v1367
  %v1863 = vpack.c.b16 %v1371, %v1368
  %v1864 = vpack.c.b16 %v1375, %v1372
  %v1865 = vpack.c.b16 %v1376, %v1373
  %v1866 = vpack.c.b16 %v1377, %v1374
  %v1867 = vpack.c.b16 %v1381, %v1378
  %v1868 = vpack.c.b16 %v1382, %v1379
  %v1869 = vpack.c.b16 %v1383, %v1380
  %v1870 = vpack.c.b16 %v1387, %v1384
  %v1871 = vpack.c.b16 %v1388, %v1385
  %v1872 = vpack.c.b16 %v1389, %v1386
  %v1873 = vpack.c.b16 %v1393, %v1390
  %v1874 = vpack.c.b16 %v1394, %v1391
  %v1875 = vpack.c.b16 %v1395, %v1392
  %v1876 = vpack.c.b16 %v1399, %v1396
  %v1877 = vpack.c.b16 %v1400, %v1397
  %v1878 = vpack.c.b16 %v1401, %v1398
  %v1879 = vpack.c.b16 %v1405, %v1402
  %v1880 = vpack.c.b16 %v1406, %v1403
  %v1881 = vpack.c.b16 %v1407, %v1404
  %v1882 = vpack.c.b16 %v1411, %v1408
  %v1883 = vpack.c.b16 %v1412, %v1409
  %v1884 = vpack.c.b16 %v1413, %v1410
  %v1885 = vpack.c.b16 %v1417, %v1414
  %v1886 = vpack.c.b16 %v1418, %v1415
  %v1887 = vpack.c.b16 %v1419, %v1416
  %v1888 = vpack.c.b16 %v1423, %v1420
  %v1889 = vpack.c.b16 %v1424, %v1421
  %v1890 = vpack.c.b16 %v1425, %v1422
  %v1891 = vpack.c.b16 %v1429, %v1426
  %v1892 = vpack.c.b16 %v1430, %v1427
  %v1893 = vpack.c.b16 %v1431, %v1428
  %v1894 = vpack.c.b16 %v1435, %v1432
  %v1895 = vpack.c.b16 %v1436, %v1433
  %v1896 = vpack.c.b16 %v1437, %v1434
  %v1897 = vpack.c.b16 %v1441, %v1438
  %v1898 = vpack.c.b16 %v1442, %v1439
  %v1899 = vpack.c.b16 %v1443, %v1440
  %v1900 = vpack.c.b16 %v1447, %v1444
  %v1901 = vpack.c.b16 %v1448, %v1445
  %v1902 = vpack.c.b16 %v1449, %v1446
  %v1903 = vpack.c.b16 %v1453, %v1450
  %v1904 = vpack.c.b16 %v1454, %v1451
  %v1905 = vpack.c.b16 %v1455, %v1452
  %v1906 = vpack.c.b16 %v1459, %v1456
  %v1907 = vpack.c.b16 %v1460, %v1457
  %v1908 = vpack.c.b16 %v1461, %v1458
  %v1909 = vpack.c.b16 %v1465, %v1462
  %v1910 = vpack.c.b16 %v1466, %v1463
  %v1911 = vpack.c.b16 %v1467, %v1464
  %v1912 = vpack.c.b16 %v1471, %v1468
  %v1913 = vpack.c.b16 %v1472, %v1469
  %v1914 = vpack.c.b16 %v1473, %v1470
  %v1915 = vpack.c.b16 %v1477, %v1474
  %v1916 = vpack.c.b16 %v1478, %v1475
  %v1917 = vpack.c.b16 %v1479, %v1476
  %v1918 = vpack.c.b16 %v1483, %v1480
  %v1919 = vpack.c.b16 %v1484, %v1481
  %v1920 = vpack.c.b16 %v1485, %v1482
  %v1921 = vpack.c.b16 %v1489, %v1486
  %v1922 = vpack.c.b16 %v1490, %v1487
  %v1923 = vpack.c.b16 %v1491, %v1488
  %v1924 = vpack.c.b16 %v1495, %v1492
  %v1925 = vpack.c.b16 %v1496, %v1493
  %v1926 = vpack.c.b16 %v1497, %v1494
  %v1927 = vpack.c.b16 %v1501, %v1498
  %v1928 = vpack.c.b16 %v1502, %v1499
  %v1929 = vpack.c.b16 %v1503, %v1500
  %v1930 = vpack.c.b16 %v1507, %v1504
  %v1931 = vpack.c.b16 %v1508, %v1505
  %v1932 = vpack.c.b16 %v1509, %v1506
  %v1933 = vpack.c.b16 %v1513, %v1510
  %v1934 = vpack.c.b16 %v1514, %v1511
  %v1935 = vpack.c.b16 %v1515, %v1512
  %v1936 = vpack.c.b16 %v1519, %v1516
  %v1937 = vpack.c.b16 %v1520, %v1517
  %v1938 = vpack.c.b16 %v1521, %v1518
  %v1939 = vpack.c.b16 %v1525, %v1522
  %v1940 = vpack.c.b16 %v1526, %v1523
  %v1941 = vpack.c.b16 %v1527, %v1524
  %v1942 = vpack.c.b16 %v1531, %v1528
  %v1943 = vpack.c.b16 %v1532, %v1529
  %v1944 = vpack.c.b16 %v1533, %v1530
  %v1945 = vpack.c.b16 %v1537, %v1534
  %v1946 = vpack.c.b16 %v1538, %v1535
  %v1947 = vpack.c.b16 %v1539, %v1536
  %v1948 = vpack.c.b16 %v1543, %v1540
  %v1949 = vpack.c.b16 %v1544, %v1541
  %v1950 = vpack.c.b16 %v1545, %v1542
  %v1951 = vpack.c.b16 %v1549, %v1546
  %v1952 = vpack.c.b16 %v1550, %v1547
  %v1953 = vpack.c.b16 %v1551, %v1548
  %v1954 = vpack.c.b16 %v1555, %v1552
  %v1955 = vpack.c.b16 %v1556, %v1553
  %v1956 = vpack.c.b16 %v1557, %v1554
  %v1957 = vpack.c.b16 %v1561, %v1558
  %v1958 = vpack.c.b16 %v1562, %v1559
  %v1959 = vpack.c.b16 %v1563, %v1560
  %v1960 = vpack.c.b16 %v1567, %v1564
  %v1961 = vpack.c.b16 %v1568, %v1565
  %v1962 = vpack.c.b16 %v1569, %v1566
  %v1963 = vpack.c.b16 %v1573, %v1570
  %v1964 = vpack.c.b16 %v1574, %v1571
  %v1965 = vpack.c.b16 %v1575, %v1572
  %v1966 = vpack.c.b16 %v1579, %v1576
  %v1967 = vpack.c.b16 %v1580, %v1577
  %v1968 = vpack.c.b16 %v1581, %v1578
  %v1969 = vpack.c.b16 %v1585, %v1582
  %v1970 = vpack.c.b16 %v1586, %v1583
  %v1971 = vpack.c.b16 %v1587, %v1584
  %v1972 = vpack.c.b16 %v1591, %v1588
  %v1973 = vpack.c.b16 %v1592, %v1589
  %v1974 = vpack.c.b16 %v1593, %v1590
  %v1975 = vpack.c.b16 %v1597, %v1594
  %v1976 = vpack.c.b16 %v1598, %v1595
  %v1977 = vpack.c.b16 %v1599, %v1596
  %v1978 = vpack.c.b16 %v1603, %v1600
  %v1979 = vpack.c.b16 %v1604, %v1601
  %v1980 = vpack.c.b16 %v1605, %v1602
  %v1981 = vpack.c.b16 %v1609, %v1606
  %v1982 = vpack.c.b16 %v1610, %v1607
  %v1983 = vpack.c.b16 %v1611, %v1608
  %v1984 = vpack.c.b16 %v1615, %v1612
  %v1985 = vpack.c.b16 %v1616, %v1613
  %v1986 = vpack.c.b16 %v1617, %v1614
  %v1987 = vpack.c.b16 %v1621, %v1618
  %v1988 = vpack.c.b16 %v1622, %v1619
  %v1989 = vpack.c.b16 %v1623, %v1620
  %v1990 = vpack.c.b16 %v1627, %v1624
  %v1991 = vpack.c.b16 %v1628, %v1625
  %v1992 = vpack.c.b16 %v1629, %v1626
  %v1993 = vpack.c.b16 %v1633, %v1630
  %v1994 = vpack.c.b16 %v1634, %v1631
  %v1995 = vpack.c.b16 %v1635, %v1632
  %v1996 = vpack.c.b16 %v1639, %v1636
  %v1997 = vpack.c.b16 %v1640, %v1637
  %v1998 = vpack.c.b16 %v1641, %v1638
  %v1999 = vpack.c.b16 %v1645, %v1642
  %v2000 = vpack.c.b16 %v1646, %v1643
  %v2001 = vpack.c.b16 %v1647, %v1644
  %v2002 = vpack.c.b16 %v1651, %v1648
  %v2003 = vpack.c.b16 %v1652, %v1649
  %v2004 = vpack.c.b16 %v1653, %v1650
  %v2005 = vpack.c.b16 %v1657, %v1654
  %v2006 = vpack.c.b16 %v1658, %v1655
  %v2007 = vpack.c.b16 %v1659, %v1656
  %v2008 = vpack.c.b16 %v1663, %v1660
  %v2009 = vpack.c.b16 %v1664, %v1661
  %v2010 = vpack.c.b16 %v1665, %v1662
  %v2011 = vpack.c.b16 %v1669, %v1666
  %v2012 = vpack.c.b16 %v1670, %v1667
  %v2013 = vpack.c.b16 %v1671, %v1668
  %v2014 = vpack.c.b16 %v1675, %v1672
  %v2015 = vpack.c.b16 %v1676, %v1673
  %v2016 = vpack.c.b16 %v1677, %v1674
  %v2017 = vpack.c.b16 %v1681, %v1678
  %v2018 = vpack.c.b16 %v1682, %v1679
  %v2019 = vpack.c.b16 %v1683, %v1680
  %2356 = vmatprep.subr.bf16.mxu0 %v1706
  %2357 = vmatpush1.bf16.msra.mxu0 %v1705
  %2358 = vmatprep.subr.bf16.mxu0 %v1703
  %2359 = vmatpush1.bf16.msra.mxu0 %v1702
  %2360 = vmatprep.subr.bf16.mxu0 %v1700
  %2361 = vmatpush1.bf16.msra.mxu0 %v1699
  %2362 = vmatprep.subr.bf16.mxu0 %v1697
  %2363 = vmatpush1.bf16.msra.mxu0 %v1696
  %2364 = vmatprep.subr.bf16.mxu0 %v1694
  %2365 = vmatpush1.bf16.msra.mxu0 %v1693
  %2366 = vmatprep.subr.bf16.mxu0 %v1691
  %2367 = vmatpush1.bf16.msra.mxu0 %v1690
  %2368 = vmatprep.subr.bf16.mxu0 %v1688
  %2369 = vmatpush1.bf16.msra.mxu0 %v1687
  %2370 = vmatprep.subr.bf16.mxu0 %v1685
  %2371 = vmatpush1.bf16.msra.mxu0 %v1684
  %2372 = vmatprep.subr.bf16.mxu0 %v1730
  %2373 = vmatpush2.bf16.msra.mxu0 %v1729
  %2374 = vmatprep.subr.bf16.mxu0 %v1727
  %2375 = vmatpush2.bf16.msra.mxu0 %v1726
  %2376 = vmatprep.subr.bf16.mxu0 %v1724
  %2377 = vmatpush2.bf16.msra.mxu0 %v1723
  %2378 = vmatprep.subr.bf16.mxu0 %v1721
  %2379 = vmatpush2.bf16.msra.mxu0 %v1720
  %2380 = vmatprep.subr.bf16.mxu0 %v1718
  %2381 = vmatpush2.bf16.msra.mxu0 %v1717
  %2382 = vmatprep.subr.bf16.mxu0 %v1715
  %2383 = vmatpush2.bf16.msra.mxu0 %v1714
  %2384 = vmatprep.subr.bf16.mxu0 %v1712
  %2385 = vmatpush2.bf16.msra.mxu0 %v1711
  %2386 = vmatprep.subr.bf16.mxu0 %v1709
  %2387 = vmatpush2.bf16.msra.mxu0 %v1708
  %2388 = vmatprep.mubr.bf16.mxu0 %v537
  %2389 = vmatmul.mubr.bf16.gmra.mxu0 %v536
  %v2390 = vpop.f32.mrf.mxu0
  %v2391 = vadd.f32 %v482, %v2390
  %v2392 = vpop.f32.mrf.mxu0
  %v2393 = vadd.f32 %v486, %v2392
  %v2394 = vpop.f32.mrf.mxu0
  %v2395 = vadd.f32 %v482, %v2394
  %v2396 = vpop.f32.mrf.mxu0
  %v2397 = vadd.f32 %v486, %v2396
  %2398 = vdwg.mxu0
  %2399 = vmatprep.subr.bf16.mxu0 %v1754
  %2400 = vmatpush1.bf16.msra.mxu0 %v1753
  %2401 = vmatprep.subr.bf16.mxu0 %v1751
  %2402 = vmatpush1.bf16.msra.mxu0 %v1750
  %2403 = vmatprep.subr.bf16.mxu0 %v1748
  %2404 = vmatpush1.bf16.msra.mxu0 %v1747
  %2405 = vmatprep.subr.bf16.mxu0 %v1745
  %2406 = vmatpush1.bf16.msra.mxu0 %v1744
  %2407 = vmatprep.subr.bf16.mxu0 %v1742
  %2408 = vmatpush1.bf16.msra.mxu0 %v1741
  %2409 = vmatprep.subr.bf16.mxu0 %v1739
  %2410 = vmatpush1.bf16.msra.mxu0 %v1738
  %2411 = vmatprep.subr.bf16.mxu0 %v1736
  %2412 = vmatpush1.bf16.msra.mxu0 %v1735
  %2413 = vmatprep.subr.bf16.mxu0 %v1733
  %2414 = vmatpush1.bf16.msra.mxu0 %v1732
  %2415 = vmatprep.subr.bf16.mxu0 %v1778
  %2416 = vmatpush2.bf16.msra.mxu0 %v1777
  %2417 = vmatprep.subr.bf16.mxu0 %v1775
  %2418 = vmatpush2.bf16.msra.mxu0 %v1774
  %2419 = vmatprep.subr.bf16.mxu0 %v1772
  %2420 = vmatpush2.bf16.msra.mxu0 %v1771
  %2421 = vmatprep.subr.bf16.mxu0 %v1769
  %2422 = vmatpush2.bf16.msra.mxu0 %v1768
  %2423 = vmatprep.subr.bf16.mxu0 %v1766
  %2424 = vmatpush2.bf16.msra.mxu0 %v1765
  %2425 = vmatprep.subr.bf16.mxu0 %v1763
  %2426 = vmatpush2.bf16.msra.mxu0 %v1762
  %2427 = vmatprep.subr.bf16.mxu0 %v1760
  %2428 = vmatpush2.bf16.msra.mxu0 %v1759
  %2429 = vmatprep.subr.bf16.mxu0 %v1757
  %2430 = vmatpush2.bf16.msra.mxu0 %v1756
  %2431 = vmatprep.mubr.bf16.mxu0 %v539
  %2432 = vmatmul.mubr.bf16.gmra.mxu0 %v538
  %v2433 = vpop.f32.mrf.mxu0
  %v2434 = vadd.f32 %v2391, %v2433
  %v2435 = vpop.f32.mrf.mxu0
  %v2436 = vadd.f32 %v2393, %v2435
  %v2437 = vpop.f32.mrf.mxu0
  %v2438 = vadd.f32 %v2395, %v2437
  %v2439 = vpop.f32.mrf.mxu0
  %v2440 = vadd.f32 %v2397, %v2439
  %2441 = vdwg.mxu0
  %2442 = vmatprep.subr.bf16.mxu0 %v1802
  %2443 = vmatpush1.bf16.msra.mxu0 %v1801
  %2444 = vmatprep.subr.bf16.mxu0 %v1799
  %2445 = vmatpush1.bf16.msra.mxu0 %v1798
  %2446 = vmatprep.subr.bf16.mxu0 %v1796
  %2447 = vmatpush1.bf16.msra.mxu0 %v1795
  %2448 = vmatprep.subr.bf16.mxu0 %v1793
  %2449 = vmatpush1.bf16.msra.mxu0 %v1792
  %2450 = vmatprep.subr.bf16.mxu0 %v1790
  %2451 = vmatpush1.bf16.msra.mxu0 %v1789
  %2452 = vmatprep.subr.bf16.mxu0 %v1787
  %2453 = vmatpush1.bf16.msra.mxu0 %v1786
  %2454 = vmatprep.subr.bf16.mxu0 %v1784
  %2455 = vmatpush1.bf16.msra.mxu0 %v1783
  %2456 = vmatprep.subr.bf16.mxu0 %v1781
  %2457 = vmatpush1.bf16.msra.mxu0 %v1780
  %2458 = vmatprep.subr.bf16.mxu0 %v1826
  %2459 = vmatpush2.bf16.msra.mxu0 %v1825
  %2460 = vmatprep.subr.bf16.mxu0 %v1823
  %2461 = vmatpush2.bf16.msra.mxu0 %v1822
  %2462 = vmatprep.subr.bf16.mxu0 %v1820
  %2463 = vmatpush2.bf16.msra.mxu0 %v1819
  %2464 = vmatprep.subr.bf16.mxu0 %v1817
  %2465 = vmatpush2.bf16.msra.mxu0 %v1816
  %2466 = vmatprep.subr.bf16.mxu0 %v1814
  %2467 = vmatpush2.bf16.msra.mxu0 %v1813
  %2468 = vmatprep.subr.bf16.mxu0 %v1811
  %2469 = vmatpush2.bf16.msra.mxu0 %v1810
  %2470 = vmatprep.subr.bf16.mxu0 %v1808
  %2471 = vmatpush2.bf16.msra.mxu0 %v1807
  %2472 = vmatprep.subr.bf16.mxu0 %v1805
  %2473 = vmatpush2.bf16.msra.mxu0 %v1804
  %2474 = vmatprep.mubr.bf16.mxu0 %v541
  %2475 = vmatmul.mubr.bf16.gmra.mxu0 %v540
  %v2476 = vpop.f32.mrf.mxu0
  %v2477 = vadd.f32 %v2434, %v2476
  %v2478 = vpop.f32.mrf.mxu0
  %v2479 = vadd.f32 %v2436, %v2478
  %v2480 = vpop.f32.mrf.mxu0
  %v2481 = vadd.f32 %v2438, %v2480
  %v2482 = vpop.f32.mrf.mxu0
  %v2483 = vadd.f32 %v2440, %v2482
  %2484 = vdwg.mxu0
  %2485 = vmatprep.subr.bf16.mxu0 %v1850
  %2486 = vmatpush1.bf16.msra.mxu0 %v1849
  %2487 = vmatprep.subr.bf16.mxu0 %v1847
  %2488 = vmatpush1.bf16.msra.mxu0 %v1846
  %2489 = vmatprep.subr.bf16.mxu0 %v1844
  %2490 = vmatpush1.bf16.msra.mxu0 %v1843
  %2491 = vmatprep.subr.bf16.mxu0 %v1841
  %2492 = vmatpush1.bf16.msra.mxu0 %v1840
  %2493 = vmatprep.subr.bf16.mxu0 %v1838
  %2494 = vmatpush1.bf16.msra.mxu0 %v1837
  %2495 = vmatprep.subr.bf16.mxu0 %v1835
  %2496 = vmatpush1.bf16.msra.mxu0 %v1834
  %2497 = vmatprep.subr.bf16.mxu0 %v1832
  %2498 = vmatpush1.bf16.msra.mxu0 %v1831
  %2499 = vmatprep.subr.bf16.mxu0 %v1829
  %2500 = vmatpush1.bf16.msra.mxu0 %v1828
  %2501 = vmatprep.subr.bf16.mxu0 %v1874
  %2502 = vmatpush2.bf16.msra.mxu0 %v1873
  %2503 = vmatprep.subr.bf16.mxu0 %v1871
  %2504 = vmatpush2.bf16.msra.mxu0 %v1870
  %2505 = vmatprep.subr.bf16.mxu0 %v1868
  %2506 = vmatpush2.bf16.msra.mxu0 %v1867
  %2507 = vmatprep.subr.bf16.mxu0 %v1865
  %2508 = vmatpush2.bf16.msra.mxu0 %v1864
  %2509 = vmatprep.subr.bf16.mxu0 %v1862
  %2510 = vmatpush2.bf16.msra.mxu0 %v1861
  %2511 = vmatprep.subr.bf16.mxu0 %v1859
  %2512 = vmatpush2.bf16.msra.mxu0 %v1858
  %2513 = vmatprep.subr.bf16.mxu0 %v1856
  %2514 = vmatpush2.bf16.msra.mxu0 %v1855
  %2515 = vmatprep.subr.bf16.mxu0 %v1853
  %2516 = vmatpush2.bf16.msra.mxu0 %v1852
  %2517 = vmatprep.mubr.bf16.mxu0 %v543
  %2518 = vmatmul.mubr.bf16.gmra.mxu0 %v542
  %v2519 = vpop.f32.mrf.mxu0
  %v2520 = vadd.f32 %v2477, %v2519
  %v2521 = vpop.f32.mrf.mxu0
  %v2522 = vadd.f32 %v2479, %v2521
  %v2523 = vpop.f32.mrf.mxu0
  %v2524 = vadd.f32 %v2481, %v2523
  %v2525 = vpop.f32.mrf.mxu0
  %v2526 = vadd.f32 %v2483, %v2525
  %2527 = vdwg.mxu0
  %2528 = vmatprep.subr.bf16.mxu0 %v1898
  %2529 = vmatpush1.bf16.msra.mxu0 %v1897
  %2530 = vmatprep.subr.bf16.mxu0 %v1895
  %2531 = vmatpush1.bf16.msra.mxu0 %v1894
  %2532 = vmatprep.subr.bf16.mxu0 %v1892
  %2533 = vmatpush1.bf16.msra.mxu0 %v1891
  %2534 = vmatprep.subr.bf16.mxu0 %v1889
  %2535 = vmatpush1.bf16.msra.mxu0 %v1888
  %2536 = vmatprep.subr.bf16.mxu0 %v1886
  %2537 = vmatpush1.bf16.msra.mxu0 %v1885
  %2538 = vmatprep.subr.bf16.mxu0 %v1883
  %2539 = vmatpush1.bf16.msra.mxu0 %v1882
  %2540 = vmatprep.subr.bf16.mxu0 %v1880
  %2541 = vmatpush1.bf16.msra.mxu0 %v1879
  %2542 = vmatprep.subr.bf16.mxu0 %v1877
  %2543 = vmatpush1.bf16.msra.mxu0 %v1876
  %2544 = vmatprep.subr.bf16.mxu0 %v1922
  %2545 = vmatpush2.bf16.msra.mxu0 %v1921
  %2546 = vmatprep.subr.bf16.mxu0 %v1919
  %2547 = vmatpush2.bf16.msra.mxu0 %v1918
  %2548 = vmatprep.subr.bf16.mxu0 %v1916
  %2549 = vmatpush2.bf16.msra.mxu0 %v1915
  %2550 = vmatprep.subr.bf16.mxu0 %v1913
  %2551 = vmatpush2.bf16.msra.mxu0 %v1912
  %2552 = vmatprep.subr.bf16.mxu0 %v1910
  %2553 = vmatpush2.bf16.msra.mxu0 %v1909
  %2554 = vmatprep.subr.bf16.mxu0 %v1907
  %2555 = vmatpush2.bf16.msra.mxu0 %v1906
  %2556 = vmatprep.subr.bf16.mxu0 %v1904
  %2557 = vmatpush2.bf16.msra.mxu0 %v1903
  %2558 = vmatprep.subr.bf16.mxu0 %v1901
  %2559 = vmatpush2.bf16.msra.mxu0 %v1900
  %2560 = vmatprep.mubr.bf16.mxu0 %v545
  %2561 = vmatmul.mubr.bf16.gmra.mxu0 %v544
  %v2562 = vpop.f32.mrf.mxu0
  %v2563 = vadd.f32 %v2520, %v2562
  %v2564 = vpop.f32.mrf.mxu0
  %v2565 = vadd.f32 %v2522, %v2564
  %v2566 = vpop.f32.mrf.mxu0
  %v2567 = vadd.f32 %v2524, %v2566
  %v2568 = vpop.f32.mrf.mxu0
  %v2569 = vadd.f32 %v2526, %v2568
  %2570 = vdwg.mxu0
  %2571 = vmatprep.subr.bf16.mxu0 %v1946
  %2572 = vmatpush1.bf16.msra.mxu0 %v1945
  %2573 = vmatprep.subr.bf16.mxu0 %v1943
  %2574 = vmatpush1.bf16.msra.mxu0 %v1942
  %2575 = vmatprep.subr.bf16.mxu0 %v1940
  %2576 = vmatpush1.bf16.msra.mxu0 %v1939
  %2577 = vmatprep.subr.bf16.mxu0 %v1937
  %2578 = vmatpush1.bf16.msra.mxu0 %v1936
  %2579 = vmatprep.subr.bf16.mxu0 %v1934
  %2580 = vmatpush1.bf16.msra.mxu0 %v1933
  %2581 = vmatprep.subr.bf16.mxu0 %v1931
  %2582 = vmatpush1.bf16.msra.mxu0 %v1930
  %2583 = vmatprep.subr.bf16.mxu0 %v1928
  %2584 = vmatpush1.bf16.msra.mxu0 %v1927
  %2585 = vmatprep.subr.bf16.mxu0 %v1925
  %2586 = vmatpush1.bf16.msra.mxu0 %v1924
  %2587 = vmatprep.subr.bf16.mxu0 %v1970
  %2588 = vmatpush2.bf16.msra.mxu0 %v1969
  %2589 = vmatprep.subr.bf16.mxu0 %v1967
  %2590 = vmatpush2.bf16.msra.mxu0 %v1966
  %2591 = vmatprep.subr.bf16.mxu0 %v1964
  %2592 = vmatpush2.bf16.msra.mxu0 %v1963
  %2593 = vmatprep.subr.bf16.mxu0 %v1961
  %2594 = vmatpush2.bf16.msra.mxu0 %v1960
  %2595 = vmatprep.subr.bf16.mxu0 %v1958
  %2596 = vmatpush2.bf16.msra.mxu0 %v1957
  %2597 = vmatprep.subr.bf16.mxu0 %v1955
  %2598 = vmatpush2.bf16.msra.mxu0 %v1954
  %2599 = vmatprep.subr.bf16.mxu0 %v1952
  %2600 = vmatpush2.bf16.msra.mxu0 %v1951
  %2601 = vmatprep.subr.bf16.mxu0 %v1949
  %2602 = vmatpush2.bf16.msra.mxu0 %v1948
  %2603 = vmatprep.mubr.bf16.mxu0 %v547
  %2604 = vmatmul.mubr.bf16.gmra.mxu0 %v546
  %v2605 = vpop.f32.mrf.mxu0
  %v2606 = vadd.f32 %v2563, %v2605
  %v2607 = vpop.f32.mrf.mxu0
  %v2608 = vadd.f32 %v2565, %v2607
  %v2609 = vpop.f32.mrf.mxu0
  %v2610 = vadd.f32 %v2567, %v2609
  %v2611 = vpop.f32.mrf.mxu0
  %v2612 = vadd.f32 %v2569, %v2611
  %2613 = vdwg.mxu0
  %2614 = vmatprep.subr.bf16.mxu0 %v1994
  %2615 = vmatpush1.bf16.msra.mxu0 %v1993
  %2616 = vmatprep.subr.bf16.mxu0 %v1991
  %2617 = vmatpush1.bf16.msra.mxu0 %v1990
  %2618 = vmatprep.subr.bf16.mxu0 %v1988
  %2619 = vmatpush1.bf16.msra.mxu0 %v1987
  %2620 = vmatprep.subr.bf16.mxu0 %v1985
  %2621 = vmatpush1.bf16.msra.mxu0 %v1984
  %2622 = vmatprep.subr.bf16.mxu0 %v1982
  %2623 = vmatpush1.bf16.msra.mxu0 %v1981
  %2624 = vmatprep.subr.bf16.mxu0 %v1979
  %2625 = vmatpush1.bf16.msra.mxu0 %v1978
  %2626 = vmatprep.subr.bf16.mxu0 %v1976
  %2627 = vmatpush1.bf16.msra.mxu0 %v1975
  %2628 = vmatprep.subr.bf16.mxu0 %v1973
  %2629 = vmatpush1.bf16.msra.mxu0 %v1972
  %2630 = vmatprep.subr.bf16.mxu0 %v2018
  %2631 = vmatpush2.bf16.msra.mxu0 %v2017
  %2632 = vmatprep.subr.bf16.mxu0 %v2015
  %2633 = vmatpush2.bf16.msra.mxu0 %v2014
  %2634 = vmatprep.subr.bf16.mxu0 %v2012
  %2635 = vmatpush2.bf16.msra.mxu0 %v2011
  %2636 = vmatprep.subr.bf16.mxu0 %v2009
  %2637 = vmatpush2.bf16.msra.mxu0 %v2008
  %2638 = vmatprep.subr.bf16.mxu0 %v2006
  %2639 = vmatpush2.bf16.msra.mxu0 %v2005
  %2640 = vmatprep.subr.bf16.mxu0 %v2003
  %2641 = vmatpush2.bf16.msra.mxu0 %v2002
  %2642 = vmatprep.subr.bf16.mxu0 %v2000
  %2643 = vmatpush2.bf16.msra.mxu0 %v1999
  %2644 = vmatprep.subr.bf16.mxu0 %v1997
  %2645 = vmatpush2.bf16.msra.mxu0 %v1996
  %2646 = vmatprep.mubr.bf16.mxu0 %v549
  %2647 = vmatmul.mubr.bf16.gmra.mxu0 %v548
  %v2648 = vpop.f32.mrf.mxu0
  %v2649 = vadd.f32 %v2606, %v2648
  %v2650 = vpop.f32.mrf.mxu0
  %v2651 = vadd.f32 %v2608, %v2650
  %v2652 = vpop.f32.mrf.mxu0
  %v2653 = vadd.f32 %v2610, %v2652
  %v2654 = vpop.f32.mrf.mxu0
  %v2655 = vadd.f32 %v2612, %v2654
  %2656 = vdwg.mxu0
  %2657 = vmatprep.subr.bf16.mxu0 0
  %2658 = vmatpush1.bf16.msra.mxu0 %v1707
  %2659 = vmatprep.subr.bf16.mxu0 0
  %2660 = vmatpush1.bf16.msra.mxu0 %v1704
  %2661 = vmatprep.subr.bf16.mxu0 0
  %2662 = vmatpush1.bf16.msra.mxu0 %v1701
  %2663 = vmatprep.subr.bf16.mxu0 0
  %2664 = vmatpush1.bf16.msra.mxu0 %v1698
  %2665 = vmatprep.subr.bf16.mxu0 0
  %2666 = vmatpush1.bf16.msra.mxu0 %v1695
  %2667 = vmatprep.subr.bf16.mxu0 0
  %2668 = vmatpush1.bf16.msra.mxu0 %v1692
  %2669 = vmatprep.subr.bf16.mxu0 0
  %2670 = vmatpush1.bf16.msra.mxu0 %v1689
  %2671 = vmatprep.subr.bf16.mxu0 0
  %2672 = vmatpush1.bf16.msra.mxu0 %v1686
  %2673 = vmatprep.subr.bf16.mxu0 0
  %2674 = vmatpush2.bf16.msra.mxu0 %v1731
  %2675 = vmatprep.subr.bf16.mxu0 0
  %2676 = vmatpush2.bf16.msra.mxu0 %v1728
  %2677 = vmatprep.subr.bf16.mxu0 0
  %2678 = vmatpush2.bf16.msra.mxu0 %v1725
  %2679 = vmatprep.subr.bf16.mxu0 0
  %2680 = vmatpush2.bf16.msra.mxu0 %v1722
  %2681 = vmatprep.subr.bf16.mxu0 0
  %2682 = vmatpush2.bf16.msra.mxu0 %v1719
  %2683 = vmatprep.subr.bf16.mxu0 0
  %2684 = vmatpush2.bf16.msra.mxu0 %v1716
  %2685 = vmatprep.subr.bf16.mxu0 0
  %2686 = vmatpush2.bf16.msra.mxu0 %v1713
  %2687 = vmatprep.subr.bf16.mxu0 0
  %2688 = vmatpush2.bf16.msra.mxu0 %v1710
  %2689 = vmatprep.mubr.bf16.mxu0 %v537
  %2690 = vmatmul.mubr.bf16.gmra.mxu0 %v536
  %v2691 = vpop.f32.mrf.mxu0
  %v2692 = vadd.f32 %v490, %v2691
  %v2693 = vpop.f32.mrf.mxu0
  %v2694 = vpop.f32.mrf.mxu0
  %v2695 = vadd.f32 %v490, %v2694
  %v2696 = vpop.f32.mrf.mxu0
  %2697 = vdwg.mxu0
  %2698 = vmatprep.subr.bf16.mxu0 0
  %2699 = vmatpush1.bf16.msra.mxu0 %v1755
  %2700 = vmatprep.subr.bf16.mxu0 0
  %2701 = vmatpush1.bf16.msra.mxu0 %v1752
  %2702 = vmatprep.subr.bf16.mxu0 0
  %2703 = vmatpush1.bf16.msra.mxu0 %v1749
  %2704 = vmatprep.subr.bf16.mxu0 0
  %2705 = vmatpush1.bf16.msra.mxu0 %v1746
  %2706 = vmatprep.subr.bf16.mxu0 0
  %2707 = vmatpush1.bf16.msra.mxu0 %v1743
  %2708 = vmatprep.subr.bf16.mxu0 0
  %2709 = vmatpush1.bf16.msra.mxu0 %v1740
  %2710 = vmatprep.subr.bf16.mxu0 0
  %2711 = vmatpush1.bf16.msra.mxu0 %v1737
  %2712 = vmatprep.subr.bf16.mxu0 0
  %2713 = vmatpush1.bf16.msra.mxu0 %v1734
  %2714 = vmatprep.subr.bf16.mxu0 0
  %2715 = vmatpush2.bf16.msra.mxu0 %v1779
  %2716 = vmatprep.subr.bf16.mxu0 0
  %2717 = vmatpush2.bf16.msra.mxu0 %v1776
  %2718 = vmatprep.subr.bf16.mxu0 0
  %2719 = vmatpush2.bf16.msra.mxu0 %v1773
  %2720 = vmatprep.subr.bf16.mxu0 0
  %2721 = vmatpush2.bf16.msra.mxu0 %v1770
  %2722 = vmatprep.subr.bf16.mxu0 0
  %2723 = vmatpush2.bf16.msra.mxu0 %v1767
  %2724 = vmatprep.subr.bf16.mxu0 0
  %2725 = vmatpush2.bf16.msra.mxu0 %v1764
  %2726 = vmatprep.subr.bf16.mxu0 0
  %2727 = vmatpush2.bf16.msra.mxu0 %v1761
  %2728 = vmatprep.subr.bf16.mxu0 0
  %2729 = vmatpush2.bf16.msra.mxu0 %v1758
  %2730 = vmatprep.mubr.bf16.mxu0 %v539
  %2731 = vmatmul.mubr.bf16.gmra.mxu0 %v538
  %v2732 = vpop.f32.mrf.mxu0
  %v2733 = vadd.f32 %v2692, %v2732
  %v2734 = vpop.f32.mrf.mxu0
  %v2735 = vpop.f32.mrf.mxu0
  %v2736 = vadd.f32 %v2695, %v2735
  %v2737 = vpop.f32.mrf.mxu0
  %2738 = vdwg.mxu0
  %2739 = vmatprep.subr.bf16.mxu0 0
  %2740 = vmatpush1.bf16.msra.mxu0 %v1803
  %2741 = vmatprep.subr.bf16.mxu0 0
  %2742 = vmatpush1.bf16.msra.mxu0 %v1800
  %2743 = vmatprep.subr.bf16.mxu0 0
  %2744 = vmatpush1.bf16.msra.mxu0 %v1797
  %2745 = vmatprep.subr.bf16.mxu0 0
  %2746 = vmatpush1.bf16.msra.mxu0 %v1794
  %2747 = vmatprep.subr.bf16.mxu0 0
  %2748 = vmatpush1.bf16.msra.mxu0 %v1791
  %2749 = vmatprep.subr.bf16.mxu0 0
  %2750 = vmatpush1.bf16.msra.mxu0 %v1788
  %2751 = vmatprep.subr.bf16.mxu0 0
  %2752 = vmatpush1.bf16.msra.mxu0 %v1785
  %2753 = vmatprep.subr.bf16.mxu0 0
  %2754 = vmatpush1.bf16.msra.mxu0 %v1782
  %2755 = vmatprep.subr.bf16.mxu0 0
  %2756 = vmatpush2.bf16.msra.mxu0 %v1827
  %2757 = vmatprep.subr.bf16.mxu0 0
  %2758 = vmatpush2.bf16.msra.mxu0 %v1824
  %2759 = vmatprep.subr.bf16.mxu0 0
  %2760 = vmatpush2.bf16.msra.mxu0 %v1821
  %2761 = vmatprep.subr.bf16.mxu0 0
  %2762 = vmatpush2.bf16.msra.mxu0 %v1818
  %2763 = vmatprep.subr.bf16.mxu0 0
  %2764 = vmatpush2.bf16.msra.mxu0 %v1815
  %2765 = vmatprep.subr.bf16.mxu0 0
  %2766 = vmatpush2.bf16.msra.mxu0 %v1812
  %2767 = vmatprep.subr.bf16.mxu0 0
  %2768 = vmatpush2.bf16.msra.mxu0 %v1809
  %2769 = vmatprep.subr.bf16.mxu0 0
  %2770 = vmatpush2.bf16.msra.mxu0 %v1806
  %2771 = vmatprep.mubr.bf16.mxu0 %v541
  %2772 = vmatmul.mubr.bf16.gmra.mxu0 %v540
  %v2773 = vpop.f32.mrf.mxu0
  %v2774 = vadd.f32 %v2733, %v2773
  %v2775 = vpop.f32.mrf.mxu0
  %v2776 = vpop.f32.mrf.mxu0
  %v2777 = vadd.f32 %v2736, %v2776
  %v2778 = vpop.f32.mrf.mxu0
  %2779 = vdwg.mxu0
  %2780 = vmatprep.subr.bf16.mxu0 0
  %2781 = vmatpush1.bf16.msra.mxu0 %v1851
  %2782 = vmatprep.subr.bf16.mxu0 0
  %2783 = vmatpush1.bf16.msra.mxu0 %v1848
  %2784 = vmatprep.subr.bf16.mxu0 0
  %2785 = vmatpush1.bf16.msra.mxu0 %v1845
  %2786 = vmatprep.subr.bf16.mxu0 0
  %2787 = vmatpush1.bf16.msra.mxu0 %v1842
  %2788 = vmatprep.subr.bf16.mxu0 0
  %2789 = vmatpush1.bf16.msra.mxu0 %v1839
  %2790 = vmatprep.subr.bf16.mxu0 0
  %2791 = vmatpush1.bf16.msra.mxu0 %v1836
  %2792 = vmatprep.subr.bf16.mxu0 0
  %2793 = vmatpush1.bf16.msra.mxu0 %v1833
  %2794 = vmatprep.subr.bf16.mxu0 0
  %2795 = vmatpush1.bf16.msra.mxu0 %v1830
  %2796 = vmatprep.subr.bf16.mxu0 0
  %2797 = vmatpush2.bf16.msra.mxu0 %v1875
  %2798 = vmatprep.subr.bf16.mxu0 0
  %2799 = vmatpush2.bf16.msra.mxu0 %v1872
  %2800 = vmatprep.subr.bf16.mxu0 0
  %2801 = vmatpush2.bf16.msra.mxu0 %v1869
  %2802 = vmatprep.subr.bf16.mxu0 0
  %2803 = vmatpush2.bf16.msra.mxu0 %v1866
  %2804 = vmatprep.subr.bf16.mxu0 0
  %2805 = vmatpush2.bf16.msra.mxu0 %v1863
  %2806 = vmatprep.subr.bf16.mxu0 0
  %2807 = vmatpush2.bf16.msra.mxu0 %v1860
  %2808 = vmatprep.subr.bf16.mxu0 0
  %2809 = vmatpush2.bf16.msra.mxu0 %v1857
  %2810 = vmatprep.subr.bf16.mxu0 0
  %2811 = vmatpush2.bf16.msra.mxu0 %v1854
  %2812 = vmatprep.mubr.bf16.mxu0 %v543
  %2813 = vmatmul.mubr.bf16.gmra.mxu0 %v542
  %v2814 = vpop.f32.mrf.mxu0
  %v2815 = vadd.f32 %v2774, %v2814
  %v2816 = vpop.f32.mrf.mxu0
  %v2817 = vpop.f32.mrf.mxu0
  %v2818 = vadd.f32 %v2777, %v2817
  %v2819 = vpop.f32.mrf.mxu0
  %2820 = vdwg.mxu0
  %2821 = vmatprep.subr.bf16.mxu0 0
  %2822 = vmatpush1.bf16.msra.mxu0 %v1899
  %2823 = vmatprep.subr.bf16.mxu0 0
  %2824 = vmatpush1.bf16.msra.mxu0 %v1896
  %2825 = vmatprep.subr.bf16.mxu0 0
  %2826 = vmatpush1.bf16.msra.mxu0 %v1893
  %2827 = vmatprep.subr.bf16.mxu0 0
  %2828 = vmatpush1.bf16.msra.mxu0 %v1890
  %2829 = vmatprep.subr.bf16.mxu0 0
  %2830 = vmatpush1.bf16.msra.mxu0 %v1887
  %2831 = vmatprep.subr.bf16.mxu0 0
  %2832 = vmatpush1.bf16.msra.mxu0 %v1884
  %2833 = vmatprep.subr.bf16.mxu0 0
  %2834 = vmatpush1.bf16.msra.mxu0 %v1881
  %2835 = vmatprep.subr.bf16.mxu0 0
  %2836 = vmatpush1.bf16.msra.mxu0 %v1878
  %2837 = vmatprep.subr.bf16.mxu0 0
  %2838 = vmatpush2.bf16.msra.mxu0 %v1923
  %2839 = vmatprep.subr.bf16.mxu0 0
  %2840 = vmatpush2.bf16.msra.mxu0 %v1920
  %2841 = vmatprep.subr.bf16.mxu0 0
  %2842 = vmatpush2.bf16.msra.mxu0 %v1917
  %2843 = vmatprep.subr.bf16.mxu0 0
  %2844 = vmatpush2.bf16.msra.mxu0 %v1914
  %2845 = vmatprep.subr.bf16.mxu0 0
  %2846 = vmatpush2.bf16.msra.mxu0 %v1911
  %2847 = vmatprep.subr.bf16.mxu0 0
  %2848 = vmatpush2.bf16.msra.mxu0 %v1908
  %2849 = vmatprep.subr.bf16.mxu0 0
  %2850 = vmatpush2.bf16.msra.mxu0 %v1905
  %2851 = vmatprep.subr.bf16.mxu0 0
  %2852 = vmatpush2.bf16.msra.mxu0 %v1902
  %2853 = vmatprep.mubr.bf16.mxu0 %v545
  %2854 = vmatmul.mubr.bf16.gmra.mxu0 %v544
  %v2855 = vpop.f32.mrf.mxu0
  %v2856 = vadd.f32 %v2815, %v2855
  %v2857 = vpop.f32.mrf.mxu0
  %v2858 = vpop.f32.mrf.mxu0
  %v2859 = vadd.f32 %v2818, %v2858
  %v2860 = vpop.f32.mrf.mxu0
  %2861 = vdwg.mxu0
  %2862 = vmatprep.subr.bf16.mxu0 0
  %2863 = vmatpush1.bf16.msra.mxu0 %v1947
  %2864 = vmatprep.subr.bf16.mxu0 0
  %2865 = vmatpush1.bf16.msra.mxu0 %v1944
  %2866 = vmatprep.subr.bf16.mxu0 0
  %2867 = vmatpush1.bf16.msra.mxu0 %v1941
  %2868 = vmatprep.subr.bf16.mxu0 0
  %2869 = vmatpush1.bf16.msra.mxu0 %v1938
  %2870 = vmatprep.subr.bf16.mxu0 0
  %2871 = vmatpush1.bf16.msra.mxu0 %v1935
  %2872 = vmatprep.subr.bf16.mxu0 0
  %2873 = vmatpush1.bf16.msra.mxu0 %v1932
  %2874 = vmatprep.subr.bf16.mxu0 0
  %2875 = vmatpush1.bf16.msra.mxu0 %v1929
  %2876 = vmatprep.subr.bf16.mxu0 0
  %2877 = vmatpush1.bf16.msra.mxu0 %v1926
  %2878 = vmatprep.subr.bf16.mxu0 0
  %2879 = vmatpush2.bf16.msra.mxu0 %v1971
  %2880 = vmatprep.subr.bf16.mxu0 0
  %2881 = vmatpush2.bf16.msra.mxu0 %v1968
  %2882 = vmatprep.subr.bf16.mxu0 0
  %2883 = vmatpush2.bf16.msra.mxu0 %v1965
  %2884 = vmatprep.subr.bf16.mxu0 0
  %2885 = vmatpush2.bf16.msra.mxu0 %v1962
  %2886 = vmatprep.subr.bf16.mxu0 0
  %2887 = vmatpush2.bf16.msra.mxu0 %v1959
  %2888 = vmatprep.subr.bf16.mxu0 0
  %2889 = vmatpush2.bf16.msra.mxu0 %v1956
  %2890 = vmatprep.subr.bf16.mxu0 0
  %2891 = vmatpush2.bf16.msra.mxu0 %v1953
  %2892 = vmatprep.subr.bf16.mxu0 0
  %2893 = vmatpush2.bf16.msra.mxu0 %v1950
  %2894 = vmatprep.mubr.bf16.mxu0 %v547
  %2895 = vmatmul.mubr.bf16.gmra.mxu0 %v546
  %v2896 = vpop.f32.mrf.mxu0
  %v2897 = vadd.f32 %v2856, %v2896
  %v2898 = vpop.f32.mrf.mxu0
  %v2899 = vpop.f32.mrf.mxu0
  %v2900 = vadd.f32 %v2859, %v2899
  %v2901 = vpop.f32.mrf.mxu0
  %2902 = vdwg.mxu0
  %2903 = vmatprep.subr.bf16.mxu0 0
  %2904 = vmatpush1.bf16.msra.mxu0 %v1995
  %2905 = vmatprep.subr.bf16.mxu0 0
  %2906 = vmatpush1.bf16.msra.mxu0 %v1992
  %2907 = vmatprep.subr.bf16.mxu0 0
  %2908 = vmatpush1.bf16.msra.mxu0 %v1989
  %2909 = vmatprep.subr.bf16.mxu0 0
  %2910 = vmatpush1.bf16.msra.mxu0 %v1986
  %2911 = vmatprep.subr.bf16.mxu0 0
  %2912 = vmatpush1.bf16.msra.mxu0 %v1983
  %2913 = vmatprep.subr.bf16.mxu0 0
  %2914 = vmatpush1.bf16.msra.mxu0 %v1980
  %2915 = vmatprep.subr.bf16.mxu0 0
  %2916 = vmatpush1.bf16.msra.mxu0 %v1977
  %2917 = vmatprep.subr.bf16.mxu0 0
  %2918 = vmatpush1.bf16.msra.mxu0 %v1974
  %2919 = vmatprep.subr.bf16.mxu0 0
  %2920 = vmatpush2.bf16.msra.mxu0 %v2019
  %2921 = vmatprep.subr.bf16.mxu0 0
  %2922 = vmatpush2.bf16.msra.mxu0 %v2016
  %2923 = vmatprep.subr.bf16.mxu0 0
  %2924 = vmatpush2.bf16.msra.mxu0 %v2013
  %2925 = vmatprep.subr.bf16.mxu0 0
  %2926 = vmatpush2.bf16.msra.mxu0 %v2010
  %2927 = vmatprep.subr.bf16.mxu0 0
  %2928 = vmatpush2.bf16.msra.mxu0 %v2007
  %2929 = vmatprep.subr.bf16.mxu0 0
  %2930 = vmatpush2.bf16.msra.mxu0 %v2004
  %2931 = vmatprep.subr.bf16.mxu0 0
  %2932 = vmatpush2.bf16.msra.mxu0 %v2001
  %2933 = vmatprep.subr.bf16.mxu0 0
  %2934 = vmatpush2.bf16.msra.mxu0 %v1998
  %2935 = vmatprep.mubr.bf16.mxu0 %v549
  %2936 = vmatmul.mubr.bf16.gmra.mxu0 %v548
  %v2937 = vpop.f32.mrf.mxu0
  %v2938 = vadd.f32 %v2897, %v2937
  %v2939 = vpop.f32.mrf.mxu0
  %v2940 = vpop.f32.mrf.mxu0
  %v2941 = vadd.f32 %v2900, %v2940
  %v2942 = vpop.f32.mrf.mxu0
  %2943 = vdwg.mxu0
  %v2944 = vmax.f32 %v2649, 0.0
  %v2945 = vmax.f32 %v2651, 0.0
  %v2946 = vmax.f32 %v2938, 0.0
  %v2947 = vmax.f32 %v2653, 0.0
  %v2948 = vmax.f32 %v2655, 0.0
  %v2949 = vmax.f32 %v2941, 0.0
  %v2950 = vpack.c.bf16 %v2947, %v2944
  %v2951 = vpack.c.bf16 %v2948, %v2945
  %v2952 = vpack.c.bf16 %v2949, %v2946
  %v2956 = vunpack.c.l.b16 %v2950
  %v2957 = vunpack.c.l.b16 %v2951
  %v2958 = vunpack.c.l.b16 %v2952
  %v2959 = vunpack.c.h.b16 %v2950
  %v2960 = vunpack.c.h.b16 %v2951
  %v2961 = vunpack.c.h.b16 %v2952
  %v2962 = vpack.c.b16 %v2957, %v2956
  %v2963 = vpack.c.b16 %v2958, %v2958
  %v2964 = vpack.c.b16 %v2960, %v2959
  %v2965 = vpack.c.b16 %v2961, %v2961
  %2970 = vst [vmem:[%s3] sm:$0xff] %v2962
  %2971 = vst [vmem:[%s3 + $0x8] sm:$0xf] %v2963
  %2972 = vst [vmem:[%s3 + $0xc] sm:$0xff] %v2964
  %2973 = vst [vmem:[%s3 + $0x14] sm:$0xf] %v2965
  // Predicated region
  $region14: #{lpips_loss.19} parent=0 // pred_check
    _
  $region15: #{lpips_loss.19} parent=0 // pred_check_branch
    %2975 = sbr.rel (0) target = $region17
  $region16: #{lpips_loss.19} parent=0 // pred_region
    _
  $region17: #{lpips_loss.19} parent=0 // pred_fallthru
    _
  // Predicated region
  $region18: #{lpips_loss.19} parent=0 // pred_check
    _
  $region19: #{lpips_loss.19} parent=0 // pred_check_branch
    %2977 = sbr.rel (0) target = $region21
  $region20: #{lpips_loss.19} parent=0 // pred_region
    _
  $region21: #{lpips_loss.19} parent=0 // pred_fallthru
    _

// kernel: lpips_loss.20
$region0: #{lpips_loss.20}
  #allocation0 [shape = 'u32[]', space=smem, size = 0x4, offset = 0x4, fixed_abs, tag = 'smem constant byte address 0x4 - core index']
  #allocation1 [shape = 'u32[144,128]{1,0:T(1,128)}', space=vmem, size = 0x12000, scoped, tag = 'internal scratch']
  %s0 = inlined_call_operand.vmem [shape: bf16[16,3456], index: 0, kind: input, shape index: {}]
  %s1 = inlined_call_operand.vmem [shape: bf16[3456,256], index: 1, kind: input, shape index: {}]
  %s2 = inlined_call_operand.vmem [shape: f32[1,256], index: 2, kind: input, shape index: {}]
  %s3 = inlined_call_operand.vmem [shape: bf16[16,256], index: 3, kind: output, shape index: {}]
  %s4 = sld [smem:[#allocation0]]
  $region22: #{lpips_loss.20} parent=0
    _
  %s6 = ssub.s32 1, %s4
  %s7 = scalar_select 0, %s6, %s4
  // Predicated region
  $region2: #{lpips_loss.20} parent=0 // pred_check
    _
  $region3: #{lpips_loss.20} parent=0 // pred_check_branch
    %9 = sbr.rel (0) target = $region5
  $region4: #{lpips_loss.20} parent=0 // pred_region
    _
  $region5: #{lpips_loss.20} parent=0 // pred_fallthru
    _
  // Predicated region
  $region6: #{lpips_loss.20} parent=0 // pred_check
    _
  $region7: #{lpips_loss.20} parent=0 // pred_check_branch
    %11 = sbr.rel (0) target = $region9
  $region8: #{lpips_loss.20} parent=0 // pred_region
    _
  $region9: #{lpips_loss.20} parent=0 // pred_fallthru
    _
  // Predicated region
  $region10: #{lpips_loss.20} parent=0 // pred_check
    _
  $region11: #{lpips_loss.20} parent=0 // pred_check_branch
    %13 = sbr.rel (0) target = $region13
  $region12: #{lpips_loss.20} parent=0 // pred_region
    _
  $region13: #{lpips_loss.20} parent=0 // pred_fallthru
    _
  %v15 = vld [vmem:[%s0] sm:$0xff]
  %v16 = vld [vmem:[%s0 + $0x8] sm:$0xff]
  %v17 = vld [vmem:[%s0 + $0x10] sm:$0xff]
  %v18 = vld [vmem:[%s0 + $0x18] sm:$0xff]
  %v19 = vld [vmem:[%s0 + $0x20] sm:$0xff]
  %v20 = vld [vmem:[%s0 + $0x28] sm:$0xff]
  %v21 = vld [vmem:[%s0 + $0x30] sm:$0xff]
  %v22 = vld [vmem:[%s0 + $0x38] sm:$0xff]
  %v23 = vld [vmem:[%s0 + $0x40] sm:$0xff]
  %v24 = vld [vmem:[%s0 + $0x48] sm:$0xff]
  %v25 = vld [vmem:[%s0 + $0x50] sm:$0xff]
  %v26 = vld [vmem:[%s0 + $0x58] sm:$0xff]
  %v27 = vld [vmem:[%s0 + $0x60] sm:$0xff]
  %v28 = vld [vmem:[%s0 + $0x68] sm:$0xf]
  %v29 = vld [vmem:[%s0 + $0x6c] sm:$0xff]
  %v30 = vld [vmem:[%s0 + $0x74] sm:$0xff]
  %v31 = vld [vmem:[%s0 + $0x7c] sm:$0xff]
  %v32 = vld [vmem:[%s0 + $0x84] sm:$0xff]
  %v33 = vld [vmem:[%s0 + $0x8c] sm:$0xff]
  %v34 = vld [vmem:[%s0 + $0x94] sm:$0xff]
  %v35 = vld [vmem:[%s0 + $0x9c] sm:$0xff]
  %v36 = vld [vmem:[%s0 + $0xa4] sm:$0xff]
  %v37 = vld [vmem:[%s0 + $0xac] sm:$0xff]
  %v38 = vld [vmem:[%s0 + $0xb4] sm:$0xff]
  %v39 = vld [vmem:[%s0 + $0xbc] sm:$0xff]
  %v40 = vld [vmem:[%s0 + $0xc4] sm:$0xff]
  %v41 = vld [vmem:[%s0 + $0xcc] sm:$0xff]
  %v42 = vld [vmem:[%s0 + $0xd4] sm:$0xf]
  %v43 = vld [vmem:[%s1] sm:$0xff]
  %v44 = vld [vmem:[%s1 + $0x8] sm:$0xff]
  %v45 = vld [vmem:[%s1 + $0x10] sm:$0xff]
  %v46 = vld [vmem:[%s1 + $0x18] sm:$0xff]
  %v47 = vld [vmem:[%s1 + $0x20] sm:$0xff]
  %v48 = vld [vmem:[%s1 + $0x28] sm:$0xff]
  %v49 = vld [vmem:[%s1 + $0x30] sm:$0xff]
  %v50 = vld [vmem:[%s1 + $0x38] sm:$0xff]
  %v51 = vld [vmem:[%s1 + $0x40] sm:$0xff]
  %v52 = vld [vmem:[%s1 + $0x48] sm:$0xff]
  %v53 = vld [vmem:[%s1 + $0x50] sm:$0xff]
  %v54 = vld [vmem:[%s1 + $0x58] sm:$0xff]
  %v55 = vld [vmem:[%s1 + $0x60] sm:$0xff]
  %v56 = vld [vmem:[%s1 + $0x68] sm:$0xff]
  %v57 = vld [vmem:[%s1 + $0x70] sm:$0xff]
  %v58 = vld [vmem:[%s1 + $0x78] sm:$0xff]
  %v59 = vld [vmem:[%s1 + $0x80] sm:$0xff]
  %v60 = vld [vmem:[%s1 + $0x88] sm:$0xff]
  %v61 = vld [vmem:[%s1 + $0x90] sm:$0xff]
  %v62 = vld [vmem:[%s1 + $0x98] sm:$0xff]
  %v63 = vld [vmem:[%s1 + $0xa0] sm:$0xff]
  %v64 = vld [vmem:[%s1 + $0xa8] sm:$0xff]
  %v65 = vld [vmem:[%s1 + $0xb0] sm:$0xff]
  %v66 = vld [vmem:[%s1 + $0xb8] sm:$0xff]
  %v67 = vld [vmem:[%s1 + $0xc0] sm:$0xff]
  %v68 = vld [vmem:[%s1 + $0xc8] sm:$0xff]
  %v69 = vld [vmem:[%s1 + $0xd0] sm:$0xff]
  %v70 = vld [vmem:[%s1 + $0xd8] sm:$0xff]
  %v71 = vld [vmem:[%s1 + $0xe0] sm:$0xff]
  %v72 = vld [vmem:[%s1 + $0xe8] sm:$0xff]
  %v73 = vld [vmem:[%s1 + $0xf0] sm:$0xff]
  %v74 = vld [vmem:[%s1 + $0xf8] sm:$0xff]
  %v75 = vld [vmem:[%s1 + $0x100] sm:$0xff]
  %v76 = vld [vmem:[%s1 + $0x108] sm:$0xff]
  %v77 = vld [vmem:[%s1 + $0x110] sm:$0xff]
  %v78 = vld [vmem:[%s1 + $0x118] sm:$0xff]
  %v79 = vld [vmem:[%s1 + $0x120] sm:$0xff]
  %v80 = vld [vmem:[%s1 + $0x128] sm:$0xff]
  %v81 = vld [vmem:[%s1 + $0x130] sm:$0xff]
  %v82 = vld [vmem:[%s1 + $0x138] sm:$0xff]
  %v83 = vld [vmem:[%s1 + $0x140] sm:$0xff]
  %v84 = vld [vmem:[%s1 + $0x148] sm:$0xff]
  %v85 = vld [vmem:[%s1 + $0x150] sm:$0xff]
  %v86 = vld [vmem:[%s1 + $0x158] sm:$0xff]
  %v87 = vld [vmem:[%s1 + $0x160] sm:$0xff]
  %v88 = vld [vmem:[%s1 + $0x168] sm:$0xff]
  %v89 = vld [vmem:[%s1 + $0x170] sm:$0xff]
  %v90 = vld [vmem:[%s1 + $0x178] sm:$0xff]
  %v91 = vld [vmem:[%s1 + $0x180] sm:$0xff]
  %v92 = vld [vmem:[%s1 + $0x188] sm:$0xff]
  %v93 = vld [vmem:[%s1 + $0x190] sm:$0xff]
  %v94 = vld [vmem:[%s1 + $0x198] sm:$0xff]
  %v95 = vld [vmem:[%s1 + $0x1a0] sm:$0xff]
  %v96 = vld [vmem:[%s1 + $0x1a8] sm:$0xff]
  %v97 = vld [vmem:[%s1 + $0x1b0] sm:$0xff]
  %v98 = vld [vmem:[%s1 + $0x1b8] sm:$0xff]
  %v99 = vld [vmem:[%s1 + $0x1c0] sm:$0xff]
  %v100 = vld [vmem:[%s1 + $0x1c8] sm:$0xff]
  %v101 = vld [vmem:[%s1 + $0x1d0] sm:$0xff]
  %v102 = vld [vmem:[%s1 + $0x1d8] sm:$0xff]
  %v103 = vld [vmem:[%s1 + $0x1e0] sm:$0xff]
  %v104 = vld [vmem:[%s1 + $0x1e8] sm:$0xff]
  %v105 = vld [vmem:[%s1 + $0x1f0] sm:$0xff]
  %v106 = vld [vmem:[%s1 + $0x1f8] sm:$0xff]
  %v107 = vld [vmem:[%s1 + $0x200] sm:$0xff]
  %v108 = vld [vmem:[%s1 + $0x208] sm:$0xff]
  %v109 = vld [vmem:[%s1 + $0x210] sm:$0xff]
  %v110 = vld [vmem:[%s1 + $0x218] sm:$0xff]
  %v111 = vld [vmem:[%s1 + $0x220] sm:$0xff]
  %v112 = vld [vmem:[%s1 + $0x228] sm:$0xff]
  %v113 = vld [vmem:[%s1 + $0x230] sm:$0xff]
  %v114 = vld [vmem:[%s1 + $0x238] sm:$0xff]
  %v115 = vld [vmem:[%s1 + $0x240] sm:$0xff]
  %v116 = vld [vmem:[%s1 + $0x248] sm:$0xff]
  %v117 = vld [vmem:[%s1 + $0x250] sm:$0xff]
  %v118 = vld [vmem:[%s1 + $0x258] sm:$0xff]
  %v119 = vld [vmem:[%s1 + $0x260] sm:$0xff]
  %v120 = vld [vmem:[%s1 + $0x268] sm:$0xff]
  %v121 = vld [vmem:[%s1 + $0x270] sm:$0xff]
  %v122 = vld [vmem:[%s1 + $0x278] sm:$0xff]
  %v123 = vld [vmem:[%s1 + $0x280] sm:$0xff]
  %v124 = vld [vmem:[%s1 + $0x288] sm:$0xff]
  %v125 = vld [vmem:[%s1 + $0x290] sm:$0xff]
  %v126 = vld [vmem:[%s1 + $0x298] sm:$0xff]
  %v127 = vld [vmem:[%s1 + $0x2a0] sm:$0xff]
  %v128 = vld [vmem:[%s1 + $0x2a8] sm:$0xff]
  %v129 = vld [vmem:[%s1 + $0x2b0] sm:$0xff]
  %v130 = vld [vmem:[%s1 + $0x2b8] sm:$0xff]
  %v131 = vld [vmem:[%s1 + $0x2c0] sm:$0xff]
  %v132 = vld [vmem:[%s1 + $0x2c8] sm:$0xff]
  %v133 = vld [vmem:[%s1 + $0x2d0] sm:$0xff]
  %v134 = vld [vmem:[%s1 + $0x2d8] sm:$0xff]
  %v135 = vld [vmem:[%s1 + $0x2e0] sm:$0xff]
  %v136 = vld [vmem:[%s1 + $0x2e8] sm:$0xff]
  %v137 = vld [vmem:[%s1 + $0x2f0] sm:$0xff]
  %v138 = vld [vmem:[%s1 + $0x2f8] sm:$0xff]
  %v139 = vld [vmem:[%s1 + $0x300] sm:$0xff]
  %v140 = vld [vmem:[%s1 + $0x308] sm:$0xff]
  %v141 = vld [vmem:[%s1 + $0x310] sm:$0xff]
  %v142 = vld [vmem:[%s1 + $0x318] sm:$0xff]
  %v143 = vld [vmem:[%s1 + $0x320] sm:$0xff]
  %v144 = vld [vmem:[%s1 + $0x328] sm:$0xff]
  %v145 = vld [vmem:[%s1 + $0x330] sm:$0xff]
  %v146 = vld [vmem:[%s1 + $0x338] sm:$0xff]
  %v147 = vld [vmem:[%s1 + $0x340] sm:$0xff]
  %v148 = vld [vmem:[%s1 + $0x348] sm:$0xff]
  %v149 = vld [vmem:[%s1 + $0x350] sm:$0xff]
  %v150 = vld [vmem:[%s1 + $0x358] sm:$0xff]
  %v151 = vld [vmem:[%s1 + $0x360] sm:$0xff]
  %v152 = vld [vmem:[%s1 + $0x368] sm:$0xff]
  %v153 = vld [vmem:[%s1 + $0x370] sm:$0xff]
  %v154 = vld [vmem:[%s1 + $0x378] sm:$0xff]
  %v155 = vld [vmem:[%s1 + $0x380] sm:$0xff]
  %v156 = vld [vmem:[%s1 + $0x388] sm:$0xff]
  %v157 = vld [vmem:[%s1 + $0x390] sm:$0xff]
  %v158 = vld [vmem:[%s1 + $0x398] sm:$0xff]
  %v159 = vld [vmem:[%s1 + $0x3a0] sm:$0xff]
  %v160 = vld [vmem:[%s1 + $0x3a8] sm:$0xff]
  %v161 = vld [vmem:[%s1 + $0x3b0] sm:$0xff]
  %v162 = vld [vmem:[%s1 + $0x3b8] sm:$0xff]
  %v163 = vld [vmem:[%s1 + $0x3c0] sm:$0xff]
  %v164 = vld [vmem:[%s1 + $0x3c8] sm:$0xff]
  %v165 = vld [vmem:[%s1 + $0x3d0] sm:$0xff]
  %v166 = vld [vmem:[%s1 + $0x3d8] sm:$0xff]
  %v167 = vld [vmem:[%s1 + $0x3e0] sm:$0xff]
  %v168 = vld [vmem:[%s1 + $0x3e8] sm:$0xff]
  %v169 = vld [vmem:[%s1 + $0x3f0] sm:$0xff]
  %v170 = vld [vmem:[%s1 + $0x3f8] sm:$0xff]
  %v171 = vld [vmem:[%s1 + $0x400] sm:$0xff]
  %v172 = vld [vmem:[%s1 + $0x408] sm:$0xff]
  %v173 = vld [vmem:[%s1 + $0x410] sm:$0xff]
  %v174 = vld [vmem:[%s1 + $0x418] sm:$0xff]
  %v175 = vld [vmem:[%s1 + $0x420] sm:$0xff]
  %v176 = vld [vmem:[%s1 + $0x428] sm:$0xff]
  %v177 = vld [vmem:[%s1 + $0x430] sm:$0xff]
  %v178 = vld [vmem:[%s1 + $0x438] sm:$0xff]
  %v179 = vld [vmem:[%s1 + $0x440] sm:$0xff]
  %v180 = vld [vmem:[%s1 + $0x448] sm:$0xff]
  %v181 = vld [vmem:[%s1 + $0x450] sm:$0xff]
  %v182 = vld [vmem:[%s1 + $0x458] sm:$0xff]
  %v183 = vld [vmem:[%s1 + $0x460] sm:$0xff]
  %v184 = vld [vmem:[%s1 + $0x468] sm:$0xff]
  %v185 = vld [vmem:[%s1 + $0x470] sm:$0xff]
  %v186 = vld [vmem:[%s1 + $0x478] sm:$0xff]
  %v187 = vld [vmem:[%s1 + $0x480] sm:$0xff]
  %v188 = vld [vmem:[%s1 + $0x488] sm:$0xff]
  %v189 = vld [vmem:[%s1 + $0x490] sm:$0xff]
  %v190 = vld [vmem:[%s1 + $0x498] sm:$0xff]
  %v191 = vld [vmem:[%s1 + $0x4a0] sm:$0xff]
  %v192 = vld [vmem:[%s1 + $0x4a8] sm:$0xff]
  %v193 = vld [vmem:[%s1 + $0x4b0] sm:$0xff]
  %v194 = vld [vmem:[%s1 + $0x4b8] sm:$0xff]
  %v195 = vld [vmem:[%s1 + $0x4c0] sm:$0xff]
  %v196 = vld [vmem:[%s1 + $0x4c8] sm:$0xff]
  %v197 = vld [vmem:[%s1 + $0x4d0] sm:$0xff]
  %v198 = vld [vmem:[%s1 + $0x4d8] sm:$0xff]
  %v199 = vld [vmem:[%s1 + $0x4e0] sm:$0xff]
  %v200 = vld [vmem:[%s1 + $0x4e8] sm:$0xff]
  %v201 = vld [vmem:[%s1 + $0x4f0] sm:$0xff]
  %v202 = vld [vmem:[%s1 + $0x4f8] sm:$0xff]
  %v203 = vld [vmem:[%s1 + $0x500] sm:$0xff]
  %v204 = vld [vmem:[%s1 + $0x508] sm:$0xff]
  %v205 = vld [vmem:[%s1 + $0x510] sm:$0xff]
  %v206 = vld [vmem:[%s1 + $0x518] sm:$0xff]
  %v207 = vld [vmem:[%s1 + $0x520] sm:$0xff]
  %v208 = vld [vmem:[%s1 + $0x528] sm:$0xff]
  %v209 = vld [vmem:[%s1 + $0x530] sm:$0xff]
  %v210 = vld [vmem:[%s1 + $0x538] sm:$0xff]
  %v211 = vld [vmem:[%s1 + $0x540] sm:$0xff]
  %v212 = vld [vmem:[%s1 + $0x548] sm:$0xff]
  %v213 = vld [vmem:[%s1 + $0x550] sm:$0xff]
  %v214 = vld [vmem:[%s1 + $0x558] sm:$0xff]
  %v215 = vld [vmem:[%s1 + $0x560] sm:$0xff]
  %v216 = vld [vmem:[%s1 + $0x568] sm:$0xff]
  %v217 = vld [vmem:[%s1 + $0x570] sm:$0xff]
  %v218 = vld [vmem:[%s1 + $0x578] sm:$0xff]
  %v219 = vld [vmem:[%s1 + $0x580] sm:$0xff]
  %v220 = vld [vmem:[%s1 + $0x588] sm:$0xff]
  %v221 = vld [vmem:[%s1 + $0x590] sm:$0xff]
  %v222 = vld [vmem:[%s1 + $0x598] sm:$0xff]
  %v223 = vld [vmem:[%s1 + $0x5a0] sm:$0xff]
  %v224 = vld [vmem:[%s1 + $0x5a8] sm:$0xff]
  %v225 = vld [vmem:[%s1 + $0x5b0] sm:$0xff]
  %v226 = vld [vmem:[%s1 + $0x5b8] sm:$0xff]
  %v227 = vld [vmem:[%s1 + $0x5c0] sm:$0xff]
  %v228 = vld [vmem:[%s1 + $0x5c8] sm:$0xff]
  %v229 = vld [vmem:[%s1 + $0x5d0] sm:$0xff]
  %v230 = vld [vmem:[%s1 + $0x5d8] sm:$0xff]
  %v231 = vld [vmem:[%s1 + $0x5e0] sm:$0xff]
  %v232 = vld [vmem:[%s1 + $0x5e8] sm:$0xff]
  %v233 = vld [vmem:[%s1 + $0x5f0] sm:$0xff]
  %v234 = vld [vmem:[%s1 + $0x5f8] sm:$0xff]
  %v235 = vld [vmem:[%s1 + $0x600] sm:$0xff]
  %v236 = vld [vmem:[%s1 + $0x608] sm:$0xff]
  %v237 = vld [vmem:[%s1 + $0x610] sm:$0xff]
  %v238 = vld [vmem:[%s1 + $0x618] sm:$0xff]
  %v239 = vld [vmem:[%s1 + $0x620] sm:$0xff]
  %v240 = vld [vmem:[%s1 + $0x628] sm:$0xff]
  %v241 = vld [vmem:[%s1 + $0x630] sm:$0xff]
  %v242 = vld [vmem:[%s1 + $0x638] sm:$0xff]
  %v243 = vld [vmem:[%s1 + $0x640] sm:$0xff]
  %v244 = vld [vmem:[%s1 + $0x648] sm:$0xff]
  %v245 = vld [vmem:[%s1 + $0x650] sm:$0xff]
  %v246 = vld [vmem:[%s1 + $0x658] sm:$0xff]
  %v247 = vld [vmem:[%s1 + $0x660] sm:$0xff]
  %v248 = vld [vmem:[%s1 + $0x668] sm:$0xff]
  %v249 = vld [vmem:[%s1 + $0x670] sm:$0xff]
  %v250 = vld [vmem:[%s1 + $0x678] sm:$0xff]
  %v251 = vld [vmem:[%s1 + $0x680] sm:$0xff]
  %v252 = vld [vmem:[%s1 + $0x688] sm:$0xff]
  %v253 = vld [vmem:[%s1 + $0x690] sm:$0xff]
  %v254 = vld [vmem:[%s1 + $0x698] sm:$0xff]
  %v255 = vld [vmem:[%s1 + $0x6a0] sm:$0xff]
  %v256 = vld [vmem:[%s1 + $0x6a8] sm:$0xff]
  %v257 = vld [vmem:[%s1 + $0x6b0] sm:$0xff]
  %v258 = vld [vmem:[%s1 + $0x6b8] sm:$0xff]
  %v259 = vld [vmem:[%s1 + $0x6c0] sm:$0xff]
  %v260 = vld [vmem:[%s1 + $0x6c8] sm:$0xff]
  %v261 = vld [vmem:[%s1 + $0x6d0] sm:$0xff]
  %v262 = vld [vmem:[%s1 + $0x6d8] sm:$0xff]
  %v263 = vld [vmem:[%s1 + $0x6e0] sm:$0xff]
  %v264 = vld [vmem:[%s1 + $0x6e8] sm:$0xff]
  %v265 = vld [vmem:[%s1 + $0x6f0] sm:$0xff]
  %v266 = vld [vmem:[%s1 + $0x6f8] sm:$0xff]
  %v267 = vld [vmem:[%s1 + $0x700] sm:$0xff]
  %v268 = vld [vmem:[%s1 + $0x708] sm:$0xff]
  %v269 = vld [vmem:[%s1 + $0x710] sm:$0xff]
  %v270 = vld [vmem:[%s1 + $0x718] sm:$0xff]
  %v271 = vld [vmem:[%s1 + $0x720] sm:$0xff]
  %v272 = vld [vmem:[%s1 + $0x728] sm:$0xff]
  %v273 = vld [vmem:[%s1 + $0x730] sm:$0xff]
  %v274 = vld [vmem:[%s1 + $0x738] sm:$0xff]
  %v275 = vld [vmem:[%s1 + $0x740] sm:$0xff]
  %v276 = vld [vmem:[%s1 + $0x748] sm:$0xff]
  %v277 = vld [vmem:[%s1 + $0x750] sm:$0xff]
  %v278 = vld [vmem:[%s1 + $0x758] sm:$0xff]
  %v279 = vld [vmem:[%s1 + $0x760] sm:$0xff]
  %v280 = vld [vmem:[%s1 + $0x768] sm:$0xff]
  %v281 = vld [vmem:[%s1 + $0x770] sm:$0xff]
  %v282 = vld [vmem:[%s1 + $0x778] sm:$0xff]
  %v283 = vld [vmem:[%s1 + $0x780] sm:$0xff]
  %v284 = vld [vmem:[%s1 + $0x788] sm:$0xff]
  %v285 = vld [vmem:[%s1 + $0x790] sm:$0xff]
  %v286 = vld [vmem:[%s1 + $0x798] sm:$0xff]
  %v287 = vld [vmem:[%s1 + $0x7a0] sm:$0xff]
  %v288 = vld [vmem:[%s1 + $0x7a8] sm:$0xff]
  %v289 = vld [vmem:[%s1 + $0x7b0] sm:$0xff]
  %v290 = vld [vmem:[%s1 + $0x7b8] sm:$0xff]
  %v291 = vld [vmem:[%s1 + $0x7c0] sm:$0xff]
  %v292 = vld [vmem:[%s1 + $0x7c8] sm:$0xff]
  %v293 = vld [vmem:[%s1 + $0x7d0] sm:$0xff]
  %v294 = vld [vmem:[%s1 + $0x7d8] sm:$0xff]
  %v295 = vld [vmem:[%s1 + $0x7e0] sm:$0xff]
  %v296 = vld [vmem:[%s1 + $0x7e8] sm:$0xff]
  %v297 = vld [vmem:[%s1 + $0x7f0] sm:$0xff]
  %v298 = vld [vmem:[%s1 + $0x7f8] sm:$0xff]
  %v299 = vld [vmem:[%s1 + $0x800] sm:$0xff]
  %v300 = vld [vmem:[%s1 + $0x808] sm:$0xff]
  %v301 = vld [vmem:[%s1 + $0x810] sm:$0xff]
  %v302 = vld [vmem:[%s1 + $0x818] sm:$0xff]
  %v303 = vld [vmem:[%s1 + $0x820] sm:$0xff]
  %v304 = vld [vmem:[%s1 + $0x828] sm:$0xff]
  %v305 = vld [vmem:[%s1 + $0x830] sm:$0xff]
  %v306 = vld [vmem:[%s1 + $0x838] sm:$0xff]
  %v307 = vld [vmem:[%s1 + $0x840] sm:$0xff]
  %v308 = vld [vmem:[%s1 + $0x848] sm:$0xff]
  %v309 = vld [vmem:[%s1 + $0x850] sm:$0xff]
  %v310 = vld [vmem:[%s1 + $0x858] sm:$0xff]
  %v311 = vld [vmem:[%s1 + $0x860] sm:$0xff]
  %v312 = vld [vmem:[%s1 + $0x868] sm:$0xff]
  %v313 = vld [vmem:[%s1 + $0x870] sm:$0xff]
  %v314 = vld [vmem:[%s1 + $0x878] sm:$0xff]
  %v315 = vld [vmem:[%s1 + $0x880] sm:$0xff]
  %v316 = vld [vmem:[%s1 + $0x888] sm:$0xff]
  %v317 = vld [vmem:[%s1 + $0x890] sm:$0xff]
  %v318 = vld [vmem:[%s1 + $0x898] sm:$0xff]
  %v319 = vld [vmem:[%s1 + $0x8a0] sm:$0xff]
  %v320 = vld [vmem:[%s1 + $0x8a8] sm:$0xff]
  %v321 = vld [vmem:[%s1 + $0x8b0] sm:$0xff]
  %v322 = vld [vmem:[%s1 + $0x8b8] sm:$0xff]
  %v323 = vld [vmem:[%s1 + $0x8c0] sm:$0xff]
  %v324 = vld [vmem:[%s1 + $0x8c8] sm:$0xff]
  %v325 = vld [vmem:[%s1 + $0x8d0] sm:$0xff]
  %v326 = vld [vmem:[%s1 + $0x8d8] sm:$0xff]
  %v327 = vld [vmem:[%s1 + $0x8e0] sm:$0xff]
  %v328 = vld [vmem:[%s1 + $0x8e8] sm:$0xff]
  %v329 = vld [vmem:[%s1 + $0x8f0] sm:$0xff]
  %v330 = vld [vmem:[%s1 + $0x8f8] sm:$0xff]
  %v331 = vld [vmem:[%s1 + $0x900] sm:$0xff]
  %v332 = vld [vmem:[%s1 + $0x908] sm:$0xff]
  %v333 = vld [vmem:[%s1 + $0x910] sm:$0xff]
  %v334 = vld [vmem:[%s1 + $0x918] sm:$0xff]
  %v335 = vld [vmem:[%s1 + $0x920] sm:$0xff]
  %v336 = vld [vmem:[%s1 + $0x928] sm:$0xff]
  %v337 = vld [vmem:[%s1 + $0x930] sm:$0xff]
  %v338 = vld [vmem:[%s1 + $0x938] sm:$0xff]
  %v339 = vld [vmem:[%s1 + $0x940] sm:$0xff]
  %v340 = vld [vmem:[%s1 + $0x948] sm:$0xff]
  %v341 = vld [vmem:[%s1 + $0x950] sm:$0xff]
  %v342 = vld [vmem:[%s1 + $0x958] sm:$0xff]
  %v343 = vld [vmem:[%s1 + $0x960] sm:$0xff]
  %v344 = vld [vmem:[%s1 + $0x968] sm:$0xff]
  %v345 = vld [vmem:[%s1 + $0x970] sm:$0xff]
  %v346 = vld [vmem:[%s1 + $0x978] sm:$0xff]
  %v347 = vld [vmem:[%s1 + $0x980] sm:$0xff]
  %v348 = vld [vmem:[%s1 + $0x988] sm:$0xff]
  %v349 = vld [vmem:[%s1 + $0x990] sm:$0xff]
  %v350 = vld [vmem:[%s1 + $0x998] sm:$0xff]
  %v351 = vld [vmem:[%s1 + $0x9a0] sm:$0xff]
  %v352 = vld [vmem:[%s1 + $0x9a8] sm:$0xff]
  %v353 = vld [vmem:[%s1 + $0x9b0] sm:$0xff]
  %v354 = vld [vmem:[%s1 + $0x9b8] sm:$0xff]
  %v355 = vld [vmem:[%s1 + $0x9c0] sm:$0xff]
  %v356 = vld [vmem:[%s1 + $0x9c8] sm:$0xff]
  %v357 = vld [vmem:[%s1 + $0x9d0] sm:$0xff]
  %v358 = vld [vmem:[%s1 + $0x9d8] sm:$0xff]
  %v359 = vld [vmem:[%s1 + $0x9e0] sm:$0xff]
  %v360 = vld [vmem:[%s1 + $0x9e8] sm:$0xff]
  %v361 = vld [vmem:[%s1 + $0x9f0] sm:$0xff]
  %v362 = vld [vmem:[%s1 + $0x9f8] sm:$0xff]
  %v363 = vld [vmem:[%s1 + $0xa00] sm:$0xff]
  %v364 = vld [vmem:[%s1 + $0xa08] sm:$0xff]
  %v365 = vld [vmem:[%s1 + $0xa10] sm:$0xff]
  %v366 = vld [vmem:[%s1 + $0xa18] sm:$0xff]
  %v367 = vld [vmem:[%s1 + $0xa20] sm:$0xff]
  %v368 = vld [vmem:[%s1 + $0xa28] sm:$0xff]
  %v369 = vld [vmem:[%s1 + $0xa30] sm:$0xff]
  %v370 = vld [vmem:[%s1 + $0xa38] sm:$0xff]
  %v371 = vld [vmem:[%s1 + $0xa40] sm:$0xff]
  %v372 = vld [vmem:[%s1 + $0xa48] sm:$0xff]
  %v373 = vld [vmem:[%s1 + $0xa50] sm:$0xff]
  %v374 = vld [vmem:[%s1 + $0xa58] sm:$0xff]
  %v375 = vld [vmem:[%s1 + $0xa60] sm:$0xff]
  %v376 = vld [vmem:[%s1 + $0xa68] sm:$0xff]
  %v377 = vld [vmem:[%s1 + $0xa70] sm:$0xff]
  %v378 = vld [vmem:[%s1 + $0xa78] sm:$0xff]
  %v379 = vld [vmem:[%s1 + $0xa80] sm:$0xff]
  %v380 = vld [vmem:[%s1 + $0xa88] sm:$0xff]
  %v381 = vld [vmem:[%s1 + $0xa90] sm:$0xff]
  %v382 = vld [vmem:[%s1 + $0xa98] sm:$0xff]
  %v383 = vld [vmem:[%s1 + $0xaa0] sm:$0xff]
  %v384 = vld [vmem:[%s1 + $0xaa8] sm:$0xff]
  %v385 = vld [vmem:[%s1 + $0xab0] sm:$0xff]
  %v386 = vld [vmem:[%s1 + $0xab8] sm:$0xff]
  %v387 = vld [vmem:[%s1 + $0xac0] sm:$0xff]
  %v388 = vld [vmem:[%s1 + $0xac8] sm:$0xff]
  %v389 = vld [vmem:[%s1 + $0xad0] sm:$0xff]
  %v390 = vld [vmem:[%s1 + $0xad8] sm:$0xff]
  %v391 = vld [vmem:[%s1 + $0xae0] sm:$0xff]
  %v392 = vld [vmem:[%s1 + $0xae8] sm:$0xff]
  %v393 = vld [vmem:[%s1 + $0xaf0] sm:$0xff]
  %v394 = vld [vmem:[%s1 + $0xaf8] sm:$0xff]
  %v395 = vld [vmem:[%s1 + $0xb00] sm:$0xff]
  %v396 = vld [vmem:[%s1 + $0xb08] sm:$0xff]
  %v397 = vld [vmem:[%s1 + $0xb10] sm:$0xff]
  %v398 = vld [vmem:[%s1 + $0xb18] sm:$0xff]
  %v399 = vld [vmem:[%s1 + $0xb20] sm:$0xff]
  %v400 = vld [vmem:[%s1 + $0xb28] sm:$0xff]
  %v401 = vld [vmem:[%s1 + $0xb30] sm:$0xff]
  %v402 = vld [vmem:[%s1 + $0xb38] sm:$0xff]
  %v403 = vld [vmem:[%s1 + $0xb40] sm:$0xff]
  %v404 = vld [vmem:[%s1 + $0xb48] sm:$0xff]
  %v405 = vld [vmem:[%s1 + $0xb50] sm:$0xff]
  %v406 = vld [vmem:[%s1 + $0xb58] sm:$0xff]
  %v407 = vld [vmem:[%s1 + $0xb60] sm:$0xff]
  %v408 = vld [vmem:[%s1 + $0xb68] sm:$0xff]
  %v409 = vld [vmem:[%s1 + $0xb70] sm:$0xff]
  %v410 = vld [vmem:[%s1 + $0xb78] sm:$0xff]
  %v411 = vld [vmem:[%s1 + $0xb80] sm:$0xff]
  %v412 = vld [vmem:[%s1 + $0xb88] sm:$0xff]
  %v413 = vld [vmem:[%s1 + $0xb90] sm:$0xff]
  %v414 = vld [vmem:[%s1 + $0xb98] sm:$0xff]
  %v415 = vld [vmem:[%s1 + $0xba0] sm:$0xff]
  %v416 = vld [vmem:[%s1 + $0xba8] sm:$0xff]
  %v417 = vld [vmem:[%s1 + $0xbb0] sm:$0xff]
  %v418 = vld [vmem:[%s1 + $0xbb8] sm:$0xff]
  %v419 = vld [vmem:[%s1 + $0xbc0] sm:$0xff]
  %v420 = vld [vmem:[%s1 + $0xbc8] sm:$0xff]
  %v421 = vld [vmem:[%s1 + $0xbd0] sm:$0xff]
  %v422 = vld [vmem:[%s1 + $0xbd8] sm:$0xff]
  %v423 = vld [vmem:[%s1 + $0xbe0] sm:$0xff]
  %v424 = vld [vmem:[%s1 + $0xbe8] sm:$0xff]
  %v425 = vld [vmem:[%s1 + $0xbf0] sm:$0xff]
  %v426 = vld [vmem:[%s1 + $0xbf8] sm:$0xff]
  %v427 = vld [vmem:[%s1 + $0xc00] sm:$0xff]
  %v428 = vld [vmem:[%s1 + $0xc08] sm:$0xff]
  %v429 = vld [vmem:[%s1 + $0xc10] sm:$0xff]
  %v430 = vld [vmem:[%s1 + $0xc18] sm:$0xff]
  %v431 = vld [vmem:[%s1 + $0xc20] sm:$0xff]
  %v432 = vld [vmem:[%s1 + $0xc28] sm:$0xff]
  %v433 = vld [vmem:[%s1 + $0xc30] sm:$0xff]
  %v434 = vld [vmem:[%s1 + $0xc38] sm:$0xff]
  %v435 = vld [vmem:[%s1 + $0xc40] sm:$0xff]
  %v436 = vld [vmem:[%s1 + $0xc48] sm:$0xff]
  %v437 = vld [vmem:[%s1 + $0xc50] sm:$0xff]
  %v438 = vld [vmem:[%s1 + $0xc58] sm:$0xff]
  %v439 = vld [vmem:[%s1 + $0xc60] sm:$0xff]
  %v440 = vld [vmem:[%s1 + $0xc68] sm:$0xff]
  %v441 = vld [vmem:[%s1 + $0xc70] sm:$0xff]
  %v442 = vld [vmem:[%s1 + $0xc78] sm:$0xff]
  %v443 = vld [vmem:[%s1 + $0xc80] sm:$0xff]
  %v444 = vld [vmem:[%s1 + $0xc88] sm:$0xff]
  %v445 = vld [vmem:[%s1 + $0xc90] sm:$0xff]
  %v446 = vld [vmem:[%s1 + $0xc98] sm:$0xff]
  %v447 = vld [vmem:[%s1 + $0xca0] sm:$0xff]
  %v448 = vld [vmem:[%s1 + $0xca8] sm:$0xff]
  %v449 = vld [vmem:[%s1 + $0xcb0] sm:$0xff]
  %v450 = vld [vmem:[%s1 + $0xcb8] sm:$0xff]
  %v451 = vld [vmem:[%s1 + $0xcc0] sm:$0xff]
  %v452 = vld [vmem:[%s1 + $0xcc8] sm:$0xff]
  %v453 = vld [vmem:[%s1 + $0xcd0] sm:$0xff]
  %v454 = vld [vmem:[%s1 + $0xcd8] sm:$0xff]
  %v455 = vld [vmem:[%s1 + $0xce0] sm:$0xff]
  %v456 = vld [vmem:[%s1 + $0xce8] sm:$0xff]
  %v457 = vld [vmem:[%s1 + $0xcf0] sm:$0xff]
  %v458 = vld [vmem:[%s1 + $0xcf8] sm:$0xff]
  %v459 = vld [vmem:[%s1 + $0xd00] sm:$0xff]
  %v460 = vld [vmem:[%s1 + $0xd08] sm:$0xff]
  %v461 = vld [vmem:[%s1 + $0xd10] sm:$0xff]
  %v462 = vld [vmem:[%s1 + $0xd18] sm:$0xff]
  %v463 = vld [vmem:[%s1 + $0xd20] sm:$0xff]
  %v464 = vld [vmem:[%s1 + $0xd28] sm:$0xff]
  %v465 = vld [vmem:[%s1 + $0xd30] sm:$0xff]
  %v466 = vld [vmem:[%s1 + $0xd38] sm:$0xff]
  %v467 = vld [vmem:[%s1 + $0xd40] sm:$0xff]
  %v468 = vld [vmem:[%s1 + $0xd48] sm:$0xff]
  %v469 = vld [vmem:[%s1 + $0xd50] sm:$0xff]
  %v470 = vld [vmem:[%s1 + $0xd58] sm:$0xff]
  %v471 = vld [vmem:[%s1 + $0xd60] sm:$0xff]
  %v472 = vld [vmem:[%s1 + $0xd68] sm:$0xff]
  %v473 = vld [vmem:[%s1 + $0xd70] sm:$0xff]
  %v474 = vld [vmem:[%s1 + $0xd78] sm:$0xff]
  %v475 = vld [vmem:[%s2] sm:$0x3]
  %v477 = vlaneseq
  %v478 = vshrl.u32 %v477, 7
  %v479 = vsub.s32 0, %v478
  %v480 = vrot.slane %v475, %v479
  %v481 = vlaneseq
  %v482 = vshrl.u32 %v481, 7
  %v483 = vsub.s32 1, %v482
  %v484 = vrot.slane %v475, %v483
  %v515 = vunpack.c.l.b16 %v15
  %v516 = vunpack.c.h.b16 %v15
  %v517 = vunpack.c.l.b16 %v16
  %v518 = vunpack.c.h.b16 %v16
  %v519 = vunpack.c.l.b16 %v17
  %v520 = vunpack.c.h.b16 %v17
  %v521 = vunpack.c.l.b16 %v18
  %v522 = vunpack.c.h.b16 %v18
  %v523 = vunpack.c.l.b16 %v19
  %v524 = vunpack.c.h.b16 %v19
  %v525 = vunpack.c.l.b16 %v20
  %v526 = vunpack.c.h.b16 %v20
  %v527 = vunpack.c.l.b16 %v21
  %v528 = vunpack.c.h.b16 %v21
  %v529 = vunpack.c.l.b16 %v22
  %v530 = vunpack.c.h.b16 %v22
  %v531 = vunpack.c.l.b16 %v23
  %v532 = vunpack.c.h.b16 %v23
  %v533 = vunpack.c.l.b16 %v24
  %v534 = vunpack.c.h.b16 %v24
  %v535 = vunpack.c.l.b16 %v25
  %v536 = vunpack.c.h.b16 %v25
  %v537 = vunpack.c.l.b16 %v26
  %v538 = vunpack.c.h.b16 %v26
  %v539 = vunpack.c.l.b16 %v27
  %v540 = vunpack.c.h.b16 %v27
  %v541 = vunpack.c.l.b16 %v28
  %v542 = vunpack.c.l.b16 %v29
  %v543 = vunpack.c.h.b16 %v29
  %v544 = vunpack.c.l.b16 %v30
  %v545 = vunpack.c.h.b16 %v30
  %v546 = vunpack.c.l.b16 %v31
  %v547 = vunpack.c.h.b16 %v31
  %v548 = vunpack.c.l.b16 %v32
  %v549 = vunpack.c.h.b16 %v32
  %v550 = vunpack.c.l.b16 %v33
  %v551 = vunpack.c.h.b16 %v33
  %v552 = vunpack.c.l.b16 %v34
  %v553 = vunpack.c.h.b16 %v34
  %v554 = vunpack.c.l.b16 %v35
  %v555 = vunpack.c.h.b16 %v35
  %v556 = vunpack.c.l.b16 %v36
  %v557 = vunpack.c.h.b16 %v36
  %v558 = vunpack.c.l.b16 %v37
  %v559 = vunpack.c.h.b16 %v37
  %v560 = vunpack.c.l.b16 %v38
  %v561 = vunpack.c.h.b16 %v38
  %v562 = vunpack.c.l.b16 %v39
  %v563 = vunpack.c.h.b16 %v39
  %v564 = vunpack.c.l.b16 %v40
  %v565 = vunpack.c.h.b16 %v40
  %v566 = vunpack.c.l.b16 %v41
  %v567 = vunpack.c.h.b16 %v41
  %v568 = vunpack.c.l.b16 %v42
  %v569 = vpack.c.b16 %v542, %v515
  %v570 = vpack.c.b16 %v543, %v516
  %v571 = vpack.c.b16 %v544, %v517
  %v572 = vpack.c.b16 %v545, %v518
  %v573 = vpack.c.b16 %v546, %v519
  %v574 = vpack.c.b16 %v547, %v520
  %v575 = vpack.c.b16 %v548, %v521
  %v576 = vpack.c.b16 %v549, %v522
  %v577 = vpack.c.b16 %v550, %v523
  %v578 = vpack.c.b16 %v551, %v524
  %v579 = vpack.c.b16 %v552, %v525
  %v580 = vpack.c.b16 %v553, %v526
  %v581 = vpack.c.b16 %v554, %v527
  %v582 = vpack.c.b16 %v555, %v528
  %v583 = vpack.c.b16 %v556, %v529
  %v584 = vpack.c.b16 %v557, %v530
  %v585 = vpack.c.b16 %v558, %v531
  %v586 = vpack.c.b16 %v559, %v532
  %v587 = vpack.c.b16 %v560, %v533
  %v588 = vpack.c.b16 %v561, %v534
  %v589 = vpack.c.b16 %v562, %v535
  %v590 = vpack.c.b16 %v563, %v536
  %v591 = vpack.c.b16 %v564, %v537
  %v592 = vpack.c.b16 %v565, %v538
  %v593 = vpack.c.b16 %v566, %v539
  %v594 = vpack.c.b16 %v567, %v540
  %v595 = vpack.c.b16 %v568, %v541
  %v1055 = vunpack.c.l.b16 %v43
  %v1056 = vunpack.c.h.b16 %v43
  %v1057 = vunpack.c.l.b16 %v44
  %v1058 = vunpack.c.h.b16 %v44
  %v1059 = vunpack.c.l.b16 %v45
  %v1060 = vunpack.c.h.b16 %v45
  %v1061 = vunpack.c.l.b16 %v46
  %v1062 = vunpack.c.h.b16 %v46
  %v1063 = vunpack.c.l.b16 %v47
  %v1064 = vunpack.c.h.b16 %v47
  %v1065 = vunpack.c.l.b16 %v48
  %v1066 = vunpack.c.h.b16 %v48
  %v1067 = vunpack.c.l.b16 %v49
  %v1068 = vunpack.c.h.b16 %v49
  %v1069 = vunpack.c.l.b16 %v50
  %v1070 = vunpack.c.h.b16 %v50
  %v1071 = vunpack.c.l.b16 %v51
  %v1072 = vunpack.c.h.b16 %v51
  %v1073 = vunpack.c.l.b16 %v52
  %v1074 = vunpack.c.h.b16 %v52
  %v1075 = vunpack.c.l.b16 %v53
  %v1076 = vunpack.c.h.b16 %v53
  %v1077 = vunpack.c.l.b16 %v54
  %v1078 = vunpack.c.h.b16 %v54
  %v1079 = vunpack.c.l.b16 %v55
  %v1080 = vunpack.c.h.b16 %v55
  %v1081 = vunpack.c.l.b16 %v56
  %v1082 = vunpack.c.h.b16 %v56
  %v1083 = vunpack.c.l.b16 %v57
  %v1084 = vunpack.c.h.b16 %v57
  %v1085 = vunpack.c.l.b16 %v58
  %v1086 = vunpack.c.h.b16 %v58
  %v1087 = vunpack.c.l.b16 %v59
  %v1088 = vunpack.c.h.b16 %v59
  %v1089 = vunpack.c.l.b16 %v60
  %v1090 = vunpack.c.h.b16 %v60
  %v1091 = vunpack.c.l.b16 %v61
  %v1092 = vunpack.c.h.b16 %v61
  %v1093 = vunpack.c.l.b16 %v62
  %v1094 = vunpack.c.h.b16 %v62
  %v1095 = vunpack.c.l.b16 %v63
  %v1096 = vunpack.c.h.b16 %v63
  %v1097 = vunpack.c.l.b16 %v64
  %v1098 = vunpack.c.h.b16 %v64
  %v1099 = vunpack.c.l.b16 %v65
  %v1100 = vunpack.c.h.b16 %v65
  %v1101 = vunpack.c.l.b16 %v66
  %v1102 = vunpack.c.h.b16 %v66
  %v1103 = vunpack.c.l.b16 %v67
  %v1104 = vunpack.c.h.b16 %v67
  %v1105 = vunpack.c.l.b16 %v68
  %v1106 = vunpack.c.h.b16 %v68
  %v1107 = vunpack.c.l.b16 %v69
  %v1108 = vunpack.c.h.b16 %v69
  %v1109 = vunpack.c.l.b16 %v70
  %v1110 = vunpack.c.h.b16 %v70
  %v1111 = vunpack.c.l.b16 %v71
  %v1112 = vunpack.c.h.b16 %v71
  %v1113 = vunpack.c.l.b16 %v72
  %v1114 = vunpack.c.h.b16 %v72
  %v1115 = vunpack.c.l.b16 %v73
  %v1116 = vunpack.c.h.b16 %v73
  %v1117 = vunpack.c.l.b16 %v74
  %v1118 = vunpack.c.h.b16 %v74
  %v1119 = vunpack.c.l.b16 %v75
  %v1120 = vunpack.c.h.b16 %v75
  %v1121 = vunpack.c.l.b16 %v76
  %v1122 = vunpack.c.h.b16 %v76
  %v1123 = vunpack.c.l.b16 %v77
  %v1124 = vunpack.c.h.b16 %v77
  %v1125 = vunpack.c.l.b16 %v78
  %v1126 = vunpack.c.h.b16 %v78
  %v1127 = vunpack.c.l.b16 %v79
  %v1128 = vunpack.c.h.b16 %v79
  %v1129 = vunpack.c.l.b16 %v80
  %v1130 = vunpack.c.h.b16 %v80
  %v1131 = vunpack.c.l.b16 %v81
  %v1132 = vunpack.c.h.b16 %v81
  %v1133 = vunpack.c.l.b16 %v82
  %v1134 = vunpack.c.h.b16 %v82
  %v1135 = vunpack.c.l.b16 %v83
  %v1136 = vunpack.c.h.b16 %v83
  %v1137 = vunpack.c.l.b16 %v84
  %v1138 = vunpack.c.h.b16 %v84
  %v1139 = vunpack.c.l.b16 %v85
  %v1140 = vunpack.c.h.b16 %v85
  %v1141 = vunpack.c.l.b16 %v86
  %v1142 = vunpack.c.h.b16 %v86
  %v1143 = vunpack.c.l.b16 %v87
  %v1144 = vunpack.c.h.b16 %v87
  %v1145 = vunpack.c.l.b16 %v88
  %v1146 = vunpack.c.h.b16 %v88
  %v1147 = vunpack.c.l.b16 %v89
  %v1148 = vunpack.c.h.b16 %v89
  %v1149 = vunpack.c.l.b16 %v90
  %v1150 = vunpack.c.h.b16 %v90
  %v1151 = vunpack.c.l.b16 %v91
  %v1152 = vunpack.c.h.b16 %v91
  %v1153 = vunpack.c.l.b16 %v92
  %v1154 = vunpack.c.h.b16 %v92
  %v1155 = vunpack.c.l.b16 %v93
  %v1156 = vunpack.c.h.b16 %v93
  %v1157 = vunpack.c.l.b16 %v94
  %v1158 = vunpack.c.h.b16 %v94
  %v1159 = vunpack.c.l.b16 %v95
  %v1160 = vunpack.c.h.b16 %v95
  %v1161 = vunpack.c.l.b16 %v96
  %v1162 = vunpack.c.h.b16 %v96
  %v1163 = vunpack.c.l.b16 %v97
  %v1164 = vunpack.c.h.b16 %v97
  %v1165 = vunpack.c.l.b16 %v98
  %v1166 = vunpack.c.h.b16 %v98
  %v1167 = vunpack.c.l.b16 %v99
  %v1168 = vunpack.c.h.b16 %v99
  %v1169 = vunpack.c.l.b16 %v100
  %v1170 = vunpack.c.h.b16 %v100
  %v1171 = vunpack.c.l.b16 %v101
  %v1172 = vunpack.c.h.b16 %v101
  %v1173 = vunpack.c.l.b16 %v102
  %v1174 = vunpack.c.h.b16 %v102
  %v1175 = vunpack.c.l.b16 %v103
  %v1176 = vunpack.c.h.b16 %v103
  %v1177 = vunpack.c.l.b16 %v104
  %v1178 = vunpack.c.h.b16 %v104
  %v1179 = vunpack.c.l.b16 %v105
  %v1180 = vunpack.c.h.b16 %v105
  %v1181 = vunpack.c.l.b16 %v106
  %v1182 = vunpack.c.h.b16 %v106
  %v1183 = vunpack.c.l.b16 %v107
  %v1184 = vunpack.c.h.b16 %v107
  %v1185 = vunpack.c.l.b16 %v108
  %v1186 = vunpack.c.h.b16 %v108
  %v1187 = vunpack.c.l.b16 %v109
  %v1188 = vunpack.c.h.b16 %v109
  %v1189 = vunpack.c.l.b16 %v110
  %v1190 = vunpack.c.h.b16 %v110
  %v1191 = vunpack.c.l.b16 %v111
  %v1192 = vunpack.c.h.b16 %v111
  %v1193 = vunpack.c.l.b16 %v112
  %v1194 = vunpack.c.h.b16 %v112
  %v1195 = vunpack.c.l.b16 %v113
  %v1196 = vunpack.c.h.b16 %v113
  %v1197 = vunpack.c.l.b16 %v114
  %v1198 = vunpack.c.h.b16 %v114
  %v1199 = vunpack.c.l.b16 %v115
  %v1200 = vunpack.c.h.b16 %v115
  %v1201 = vunpack.c.l.b16 %v116
  %v1202 = vunpack.c.h.b16 %v116
  %v1203 = vunpack.c.l.b16 %v117
  %v1204 = vunpack.c.h.b16 %v117
  %v1205 = vunpack.c.l.b16 %v118
  %v1206 = vunpack.c.h.b16 %v118
  %v1207 = vunpack.c.l.b16 %v119
  %v1208 = vunpack.c.h.b16 %v119
  %v1209 = vunpack.c.l.b16 %v120
  %v1210 = vunpack.c.h.b16 %v120
  %v1211 = vunpack.c.l.b16 %v121
  %v1212 = vunpack.c.h.b16 %v121
  %v1213 = vunpack.c.l.b16 %v122
  %v1214 = vunpack.c.h.b16 %v122
  %v1215 = vunpack.c.l.b16 %v123
  %v1216 = vunpack.c.h.b16 %v123
  %v1217 = vunpack.c.l.b16 %v124
  %v1218 = vunpack.c.h.b16 %v124
  %v1219 = vunpack.c.l.b16 %v125
  %v1220 = vunpack.c.h.b16 %v125
  %v1221 = vunpack.c.l.b16 %v126
  %v1222 = vunpack.c.h.b16 %v126
  %v1223 = vunpack.c.l.b16 %v127
  %v1224 = vunpack.c.h.b16 %v127
  %v1225 = vunpack.c.l.b16 %v128
  %v1226 = vunpack.c.h.b16 %v128
  %v1227 = vunpack.c.l.b16 %v129
  %v1228 = vunpack.c.h.b16 %v129
  %v1229 = vunpack.c.l.b16 %v130
  %v1230 = vunpack.c.h.b16 %v130
  %v1231 = vunpack.c.l.b16 %v131
  %v1232 = vunpack.c.h.b16 %v131
  %v1233 = vunpack.c.l.b16 %v132
  %v1234 = vunpack.c.h.b16 %v132
  %v1235 = vunpack.c.l.b16 %v133
  %v1236 = vunpack.c.h.b16 %v133
  %v1237 = vunpack.c.l.b16 %v134
  %v1238 = vunpack.c.h.b16 %v134
  %v1239 = vunpack.c.l.b16 %v135
  %v1240 = vunpack.c.h.b16 %v135
  %v1241 = vunpack.c.l.b16 %v136
  %v1242 = vunpack.c.h.b16 %v136
  %v1243 = vunpack.c.l.b16 %v137
  %v1244 = vunpack.c.h.b16 %v137
  %v1245 = vunpack.c.l.b16 %v138
  %v1246 = vunpack.c.h.b16 %v138
  %v1247 = vunpack.c.l.b16 %v139
  %v1248 = vunpack.c.h.b16 %v139
  %v1249 = vunpack.c.l.b16 %v140
  %v1250 = vunpack.c.h.b16 %v140
  %v1251 = vunpack.c.l.b16 %v141
  %v1252 = vunpack.c.h.b16 %v141
  %v1253 = vunpack.c.l.b16 %v142
  %v1254 = vunpack.c.h.b16 %v142
  %v1255 = vunpack.c.l.b16 %v143
  %v1256 = vunpack.c.h.b16 %v143
  %v1257 = vunpack.c.l.b16 %v144
  %v1258 = vunpack.c.h.b16 %v144
  %v1259 = vunpack.c.l.b16 %v145
  %v1260 = vunpack.c.h.b16 %v145
  %v1261 = vunpack.c.l.b16 %v146
  %v1262 = vunpack.c.h.b16 %v146
  %v1263 = vunpack.c.l.b16 %v147
  %v1264 = vunpack.c.h.b16 %v147
  %v1265 = vunpack.c.l.b16 %v148
  %v1266 = vunpack.c.h.b16 %v148
  %v1267 = vunpack.c.l.b16 %v149
  %v1268 = vunpack.c.h.b16 %v149
  %v1269 = vunpack.c.l.b16 %v150
  %v1270 = vunpack.c.h.b16 %v150
  %v1271 = vunpack.c.l.b16 %v151
  %v1272 = vunpack.c.h.b16 %v151
  %v1273 = vunpack.c.l.b16 %v152
  %v1274 = vunpack.c.h.b16 %v152
  %v1275 = vunpack.c.l.b16 %v153
  %v1276 = vunpack.c.h.b16 %v153
  %v1277 = vunpack.c.l.b16 %v154
  %v1278 = vunpack.c.h.b16 %v154
  %v1279 = vunpack.c.l.b16 %v155
  %v1280 = vunpack.c.h.b16 %v155
  %v1281 = vunpack.c.l.b16 %v156
  %v1282 = vunpack.c.h.b16 %v156
  %v1283 = vunpack.c.l.b16 %v157
  %v1284 = vunpack.c.h.b16 %v157
  %v1285 = vunpack.c.l.b16 %v158
  %v1286 = vunpack.c.h.b16 %v158
  %v1287 = vunpack.c.l.b16 %v159
  %v1288 = vunpack.c.h.b16 %v159
  %v1289 = vunpack.c.l.b16 %v160
  %v1290 = vunpack.c.h.b16 %v160
  %v1291 = vunpack.c.l.b16 %v161
  %v1292 = vunpack.c.h.b16 %v161
  %v1293 = vunpack.c.l.b16 %v162
  %v1294 = vunpack.c.h.b16 %v162
  %v1295 = vunpack.c.l.b16 %v163
  %v1296 = vunpack.c.h.b16 %v163
  %v1297 = vunpack.c.l.b16 %v164
  %v1298 = vunpack.c.h.b16 %v164
  %v1299 = vunpack.c.l.b16 %v165
  %v1300 = vunpack.c.h.b16 %v165
  %v1301 = vunpack.c.l.b16 %v166
  %v1302 = vunpack.c.h.b16 %v166
  %v1303 = vunpack.c.l.b16 %v167
  %v1304 = vunpack.c.h.b16 %v167
  %v1305 = vunpack.c.l.b16 %v168
  %v1306 = vunpack.c.h.b16 %v168
  %v1307 = vunpack.c.l.b16 %v169
  %v1308 = vunpack.c.h.b16 %v169
  %v1309 = vunpack.c.l.b16 %v170
  %v1310 = vunpack.c.h.b16 %v170
  %v1311 = vunpack.c.l.b16 %v171
  %v1312 = vunpack.c.h.b16 %v171
  %v1313 = vunpack.c.l.b16 %v172
  %v1314 = vunpack.c.h.b16 %v172
  %v1315 = vunpack.c.l.b16 %v173
  %v1316 = vunpack.c.h.b16 %v173
  %v1317 = vunpack.c.l.b16 %v174
  %v1318 = vunpack.c.h.b16 %v174
  %v1319 = vunpack.c.l.b16 %v175
  %v1320 = vunpack.c.h.b16 %v175
  %v1321 = vunpack.c.l.b16 %v176
  %v1322 = vunpack.c.h.b16 %v176
  %v1323 = vunpack.c.l.b16 %v177
  %v1324 = vunpack.c.h.b16 %v177
  %v1325 = vunpack.c.l.b16 %v178
  %v1326 = vunpack.c.h.b16 %v178
  %v1327 = vunpack.c.l.b16 %v179
  %v1328 = vunpack.c.h.b16 %v179
  %v1329 = vunpack.c.l.b16 %v180
  %v1330 = vunpack.c.h.b16 %v180
  %v1331 = vunpack.c.l.b16 %v181
  %v1332 = vunpack.c.h.b16 %v181
  %v1333 = vunpack.c.l.b16 %v182
  %v1334 = vunpack.c.h.b16 %v182
  %v1335 = vunpack.c.l.b16 %v183
  %v1336 = vunpack.c.h.b16 %v183
  %v1337 = vunpack.c.l.b16 %v184
  %v1338 = vunpack.c.h.b16 %v184
  %v1339 = vunpack.c.l.b16 %v185
  %v1340 = vunpack.c.h.b16 %v185
  %v1341 = vunpack.c.l.b16 %v186
  %v1342 = vunpack.c.h.b16 %v186
  %v1343 = vunpack.c.l.b16 %v187
  %v1344 = vunpack.c.h.b16 %v187
  %v1345 = vunpack.c.l.b16 %v188
  %v1346 = vunpack.c.h.b16 %v188
  %v1347 = vunpack.c.l.b16 %v189
  %v1348 = vunpack.c.h.b16 %v189
  %v1349 = vunpack.c.l.b16 %v190
  %v1350 = vunpack.c.h.b16 %v190
  %v1351 = vunpack.c.l.b16 %v191
  %v1352 = vunpack.c.h.b16 %v191
  %v1353 = vunpack.c.l.b16 %v192
  %v1354 = vunpack.c.h.b16 %v192
  %v1355 = vunpack.c.l.b16 %v193
  %v1356 = vunpack.c.h.b16 %v193
  %v1357 = vunpack.c.l.b16 %v194
  %v1358 = vunpack.c.h.b16 %v194
  %v1359 = vunpack.c.l.b16 %v195
  %v1360 = vunpack.c.h.b16 %v195
  %v1361 = vunpack.c.l.b16 %v196
  %v1362 = vunpack.c.h.b16 %v196
  %v1363 = vunpack.c.l.b16 %v197
  %v1364 = vunpack.c.h.b16 %v197
  %v1365 = vunpack.c.l.b16 %v198
  %v1366 = vunpack.c.h.b16 %v198
  %v1367 = vunpack.c.l.b16 %v199
  %v1368 = vunpack.c.h.b16 %v199
  %v1369 = vunpack.c.l.b16 %v200
  %v1370 = vunpack.c.h.b16 %v200
  %v1371 = vunpack.c.l.b16 %v201
  %v1372 = vunpack.c.h.b16 %v201
  %v1373 = vunpack.c.l.b16 %v202
  %v1374 = vunpack.c.h.b16 %v202
  %v1375 = vunpack.c.l.b16 %v203
  %v1376 = vunpack.c.h.b16 %v203
  %v1377 = vunpack.c.l.b16 %v204
  %v1378 = vunpack.c.h.b16 %v204
  %v1379 = vunpack.c.l.b16 %v205
  %v1380 = vunpack.c.h.b16 %v205
  %v1381 = vunpack.c.l.b16 %v206
  %v1382 = vunpack.c.h.b16 %v206
  %v1383 = vunpack.c.l.b16 %v207
  %v1384 = vunpack.c.h.b16 %v207
  %v1385 = vunpack.c.l.b16 %v208
  %v1386 = vunpack.c.h.b16 %v208
  %v1387 = vunpack.c.l.b16 %v209
  %v1388 = vunpack.c.h.b16 %v209
  %v1389 = vunpack.c.l.b16 %v210
  %v1390 = vunpack.c.h.b16 %v210
  %v1391 = vunpack.c.l.b16 %v211
  %v1392 = vunpack.c.h.b16 %v211
  %v1393 = vunpack.c.l.b16 %v212
  %v1394 = vunpack.c.h.b16 %v212
  %v1395 = vunpack.c.l.b16 %v213
  %v1396 = vunpack.c.h.b16 %v213
  %v1397 = vunpack.c.l.b16 %v214
  %v1398 = vunpack.c.h.b16 %v214
  %v1399 = vunpack.c.l.b16 %v215
  %v1400 = vunpack.c.h.b16 %v215
  %v1401 = vunpack.c.l.b16 %v216
  %v1402 = vunpack.c.h.b16 %v216
  %v1403 = vunpack.c.l.b16 %v217
  %v1404 = vunpack.c.h.b16 %v217
  %v1405 = vunpack.c.l.b16 %v218
  %v1406 = vunpack.c.h.b16 %v218
  %v1407 = vunpack.c.l.b16 %v219
  %v1408 = vunpack.c.h.b16 %v219
  %v1409 = vunpack.c.l.b16 %v220
  %v1410 = vunpack.c.h.b16 %v220
  %v1411 = vunpack.c.l.b16 %v221
  %v1412 = vunpack.c.h.b16 %v221
  %v1413 = vunpack.c.l.b16 %v222
  %v1414 = vunpack.c.h.b16 %v222
  %v1415 = vunpack.c.l.b16 %v223
  %v1416 = vunpack.c.h.b16 %v223
  %v1417 = vunpack.c.l.b16 %v224
  %v1418 = vunpack.c.h.b16 %v224
  %v1419 = vunpack.c.l.b16 %v225
  %v1420 = vunpack.c.h.b16 %v225
  %v1421 = vunpack.c.l.b16 %v226
  %v1422 = vunpack.c.h.b16 %v226
  %v1423 = vunpack.c.l.b16 %v227
  %v1424 = vunpack.c.h.b16 %v227
  %v1425 = vunpack.c.l.b16 %v228
  %v1426 = vunpack.c.h.b16 %v228
  %v1427 = vunpack.c.l.b16 %v229
  %v1428 = vunpack.c.h.b16 %v229
  %v1429 = vunpack.c.l.b16 %v230
  %v1430 = vunpack.c.h.b16 %v230
  %v1431 = vunpack.c.l.b16 %v231
  %v1432 = vunpack.c.h.b16 %v231
  %v1433 = vunpack.c.l.b16 %v232
  %v1434 = vunpack.c.h.b16 %v232
  %v1435 = vunpack.c.l.b16 %v233
  %v1436 = vunpack.c.h.b16 %v233
  %v1437 = vunpack.c.l.b16 %v234
  %v1438 = vunpack.c.h.b16 %v234
  %v1439 = vunpack.c.l.b16 %v235
  %v1440 = vunpack.c.h.b16 %v235
  %v1441 = vunpack.c.l.b16 %v236
  %v1442 = vunpack.c.h.b16 %v236
  %v1443 = vunpack.c.l.b16 %v237
  %v1444 = vunpack.c.h.b16 %v237
  %v1445 = vunpack.c.l.b16 %v238
  %v1446 = vunpack.c.h.b16 %v238
  %v1447 = vunpack.c.l.b16 %v239
  %v1448 = vunpack.c.h.b16 %v239
  %v1449 = vunpack.c.l.b16 %v240
  %v1450 = vunpack.c.h.b16 %v240
  %v1451 = vunpack.c.l.b16 %v241
  %v1452 = vunpack.c.h.b16 %v241
  %v1453 = vunpack.c.l.b16 %v242
  %v1454 = vunpack.c.h.b16 %v242
  %v1455 = vunpack.c.l.b16 %v243
  %v1456 = vunpack.c.h.b16 %v243
  %v1457 = vunpack.c.l.b16 %v244
  %v1458 = vunpack.c.h.b16 %v244
  %v1459 = vunpack.c.l.b16 %v245
  %v1460 = vunpack.c.h.b16 %v245
  %v1461 = vunpack.c.l.b16 %v246
  %v1462 = vunpack.c.h.b16 %v246
  %v1463 = vunpack.c.l.b16 %v247
  %v1464 = vunpack.c.h.b16 %v247
  %v1465 = vunpack.c.l.b16 %v248
  %v1466 = vunpack.c.h.b16 %v248
  %v1467 = vunpack.c.l.b16 %v249
  %v1468 = vunpack.c.h.b16 %v249
  %v1469 = vunpack.c.l.b16 %v250
  %v1470 = vunpack.c.h.b16 %v250
  %v1471 = vunpack.c.l.b16 %v251
  %v1472 = vunpack.c.h.b16 %v251
  %v1473 = vunpack.c.l.b16 %v252
  %v1474 = vunpack.c.h.b16 %v252
  %v1475 = vunpack.c.l.b16 %v253
  %v1476 = vunpack.c.h.b16 %v253
  %v1477 = vunpack.c.l.b16 %v254
  %v1478 = vunpack.c.h.b16 %v254
  %v1479 = vunpack.c.l.b16 %v255
  %v1480 = vunpack.c.h.b16 %v255
  %v1481 = vunpack.c.l.b16 %v256
  %v1482 = vunpack.c.h.b16 %v256
  %v1483 = vunpack.c.l.b16 %v257
  %v1484 = vunpack.c.h.b16 %v257
  %v1485 = vunpack.c.l.b16 %v258
  %v1486 = vunpack.c.h.b16 %v258
  %v1487 = vunpack.c.l.b16 %v259
  %v1488 = vunpack.c.h.b16 %v259
  %v1489 = vunpack.c.l.b16 %v260
  %v1490 = vunpack.c.h.b16 %v260
  %v1491 = vunpack.c.l.b16 %v261
  %v1492 = vunpack.c.h.b16 %v261
  %v1493 = vunpack.c.l.b16 %v262
  %v1494 = vunpack.c.h.b16 %v262
  %v1495 = vunpack.c.l.b16 %v263
  %v1496 = vunpack.c.h.b16 %v263
  %v1497 = vunpack.c.l.b16 %v264
  %v1498 = vunpack.c.h.b16 %v264
  %v1499 = vunpack.c.l.b16 %v265
  %v1500 = vunpack.c.h.b16 %v265
  %v1501 = vunpack.c.l.b16 %v266
  %v1502 = vunpack.c.h.b16 %v266
  %v1503 = vunpack.c.l.b16 %v267
  %v1504 = vunpack.c.h.b16 %v267
  %v1505 = vunpack.c.l.b16 %v268
  %v1506 = vunpack.c.h.b16 %v268
  %v1507 = vunpack.c.l.b16 %v269
  %v1508 = vunpack.c.h.b16 %v269
  %v1509 = vunpack.c.l.b16 %v270
  %v1510 = vunpack.c.h.b16 %v270
  %v1511 = vunpack.c.l.b16 %v271
  %v1512 = vunpack.c.h.b16 %v271
  %v1513 = vunpack.c.l.b16 %v272
  %v1514 = vunpack.c.h.b16 %v272
  %v1515 = vunpack.c.l.b16 %v273
  %v1516 = vunpack.c.h.b16 %v273
  %v1517 = vunpack.c.l.b16 %v274
  %v1518 = vunpack.c.h.b16 %v274
  %v1519 = vunpack.c.l.b16 %v275
  %v1520 = vunpack.c.h.b16 %v275
  %v1521 = vunpack.c.l.b16 %v276
  %v1522 = vunpack.c.h.b16 %v276
  %v1523 = vunpack.c.l.b16 %v277
  %v1524 = vunpack.c.h.b16 %v277
  %v1525 = vunpack.c.l.b16 %v278
  %v1526 = vunpack.c.h.b16 %v278
  %v1527 = vunpack.c.l.b16 %v279
  %v1528 = vunpack.c.h.b16 %v279
  %v1529 = vunpack.c.l.b16 %v280
  %v1530 = vunpack.c.h.b16 %v280
  %v1531 = vunpack.c.l.b16 %v281
  %v1532 = vunpack.c.h.b16 %v281
  %v1533 = vunpack.c.l.b16 %v282
  %v1534 = vunpack.c.h.b16 %v282
  %v1535 = vunpack.c.l.b16 %v283
  %v1536 = vunpack.c.h.b16 %v283
  %v1537 = vunpack.c.l.b16 %v284
  %v1538 = vunpack.c.h.b16 %v284
  %v1539 = vunpack.c.l.b16 %v285
  %v1540 = vunpack.c.h.b16 %v285
  %v1541 = vunpack.c.l.b16 %v286
  %v1542 = vunpack.c.h.b16 %v286
  %v1543 = vunpack.c.l.b16 %v287
  %v1544 = vunpack.c.h.b16 %v287
  %v1545 = vunpack.c.l.b16 %v288
  %v1546 = vunpack.c.h.b16 %v288
  %v1547 = vunpack.c.l.b16 %v289
  %v1548 = vunpack.c.h.b16 %v289
  %v1549 = vunpack.c.l.b16 %v290
  %v1550 = vunpack.c.h.b16 %v290
  %v1551 = vunpack.c.l.b16 %v291
  %v1552 = vunpack.c.h.b16 %v291
  %v1553 = vunpack.c.l.b16 %v292
  %v1554 = vunpack.c.h.b16 %v292
  %v1555 = vunpack.c.l.b16 %v293
  %v1556 = vunpack.c.h.b16 %v293
  %v1557 = vunpack.c.l.b16 %v294
  %v1558 = vunpack.c.h.b16 %v294
  %v1559 = vunpack.c.l.b16 %v295
  %v1560 = vunpack.c.h.b16 %v295
  %v1561 = vunpack.c.l.b16 %v296
  %v1562 = vunpack.c.h.b16 %v296
  %v1563 = vunpack.c.l.b16 %v297
  %v1564 = vunpack.c.h.b16 %v297
  %v1565 = vunpack.c.l.b16 %v298
  %v1566 = vunpack.c.h.b16 %v298
  %v1567 = vunpack.c.l.b16 %v299
  %v1568 = vunpack.c.h.b16 %v299
  %v1569 = vunpack.c.l.b16 %v300
  %v1570 = vunpack.c.h.b16 %v300
  %v1571 = vunpack.c.l.b16 %v301
  %v1572 = vunpack.c.h.b16 %v301
  %v1573 = vunpack.c.l.b16 %v302
  %v1574 = vunpack.c.h.b16 %v302
  %v1575 = vunpack.c.l.b16 %v303
  %v1576 = vunpack.c.h.b16 %v303
  %v1577 = vunpack.c.l.b16 %v304
  %v1578 = vunpack.c.h.b16 %v304
  %v1579 = vunpack.c.l.b16 %v305
  %v1580 = vunpack.c.h.b16 %v305
  %v1581 = vunpack.c.l.b16 %v306
  %v1582 = vunpack.c.h.b16 %v306
  %v1583 = vunpack.c.l.b16 %v307
  %v1584 = vunpack.c.h.b16 %v307
  %v1585 = vunpack.c.l.b16 %v308
  %v1586 = vunpack.c.h.b16 %v308
  %v1587 = vunpack.c.l.b16 %v309
  %v1588 = vunpack.c.h.b16 %v309
  %v1589 = vunpack.c.l.b16 %v310
  %v1590 = vunpack.c.h.b16 %v310
  %v1591 = vunpack.c.l.b16 %v311
  %v1592 = vunpack.c.h.b16 %v311
  %v1593 = vunpack.c.l.b16 %v312
  %v1594 = vunpack.c.h.b16 %v312
  %v1595 = vunpack.c.l.b16 %v313
  %v1596 = vunpack.c.h.b16 %v313
  %v1597 = vunpack.c.l.b16 %v314
  %v1598 = vunpack.c.h.b16 %v314
  %v1599 = vunpack.c.l.b16 %v315
  %v1600 = vunpack.c.h.b16 %v315
  %v1601 = vunpack.c.l.b16 %v316
  %v1602 = vunpack.c.h.b16 %v316
  %v1603 = vunpack.c.l.b16 %v317
  %v1604 = vunpack.c.h.b16 %v317
  %v1605 = vunpack.c.l.b16 %v318
  %v1606 = vunpack.c.h.b16 %v318
  %v1607 = vunpack.c.l.b16 %v319
  %v1608 = vunpack.c.h.b16 %v319
  %v1609 = vunpack.c.l.b16 %v320
  %v1610 = vunpack.c.h.b16 %v320
  %v1611 = vunpack.c.l.b16 %v321
  %v1612 = vunpack.c.h.b16 %v321
  %v1613 = vunpack.c.l.b16 %v322
  %v1614 = vunpack.c.h.b16 %v322
  %v1615 = vunpack.c.l.b16 %v323
  %v1616 = vunpack.c.h.b16 %v323
  %v1617 = vunpack.c.l.b16 %v324
  %v1618 = vunpack.c.h.b16 %v324
  %v1619 = vunpack.c.l.b16 %v325
  %v1620 = vunpack.c.h.b16 %v325
  %v1621 = vunpack.c.l.b16 %v326
  %v1622 = vunpack.c.h.b16 %v326
  %v1623 = vunpack.c.l.b16 %v327
  %v1624 = vunpack.c.h.b16 %v327
  %v1625 = vunpack.c.l.b16 %v328
  %v1626 = vunpack.c.h.b16 %v328
  %v1627 = vunpack.c.l.b16 %v329
  %v1628 = vunpack.c.h.b16 %v329
  %v1629 = vunpack.c.l.b16 %v330
  %v1630 = vunpack.c.h.b16 %v330
  %v1631 = vunpack.c.l.b16 %v331
  %v1632 = vunpack.c.h.b16 %v331
  %v1633 = vunpack.c.l.b16 %v332
  %v1634 = vunpack.c.h.b16 %v332
  %v1635 = vunpack.c.l.b16 %v333
  %v1636 = vunpack.c.h.b16 %v333
  %v1637 = vunpack.c.l.b16 %v334
  %v1638 = vunpack.c.h.b16 %v334
  %v1639 = vunpack.c.l.b16 %v335
  %v1640 = vunpack.c.h.b16 %v335
  %v1641 = vunpack.c.l.b16 %v336
  %v1642 = vunpack.c.h.b16 %v336
  %v1643 = vunpack.c.l.b16 %v337
  %v1644 = vunpack.c.h.b16 %v337
  %v1645 = vunpack.c.l.b16 %v338
  %v1646 = vunpack.c.h.b16 %v338
  %v1647 = vunpack.c.l.b16 %v339
  %v1648 = vunpack.c.h.b16 %v339
  %v1649 = vunpack.c.l.b16 %v340
  %v1650 = vunpack.c.h.b16 %v340
  %v1651 = vunpack.c.l.b16 %v341
  %v1652 = vunpack.c.h.b16 %v341
  %v1653 = vunpack.c.l.b16 %v342
  %v1654 = vunpack.c.h.b16 %v342
  %v1655 = vunpack.c.l.b16 %v343
  %v1656 = vunpack.c.h.b16 %v343
  %v1657 = vunpack.c.l.b16 %v344
  %v1658 = vunpack.c.h.b16 %v344
  %v1659 = vunpack.c.l.b16 %v345
  %v1660 = vunpack.c.h.b16 %v345
  %v1661 = vunpack.c.l.b16 %v346
  %v1662 = vunpack.c.h.b16 %v346
  %v1663 = vunpack.c.l.b16 %v347
  %v1664 = vunpack.c.h.b16 %v347
  %v1665 = vunpack.c.l.b16 %v348
  %v1666 = vunpack.c.h.b16 %v348
  %v1667 = vunpack.c.l.b16 %v349
  %v1668 = vunpack.c.h.b16 %v349
  %v1669 = vunpack.c.l.b16 %v350
  %v1670 = vunpack.c.h.b16 %v350
  %v1671 = vunpack.c.l.b16 %v351
  %v1672 = vunpack.c.h.b16 %v351
  %v1673 = vunpack.c.l.b16 %v352
  %v1674 = vunpack.c.h.b16 %v352
  %v1675 = vunpack.c.l.b16 %v353
  %v1676 = vunpack.c.h.b16 %v353
  %v1677 = vunpack.c.l.b16 %v354
  %v1678 = vunpack.c.h.b16 %v354
  %v1679 = vunpack.c.l.b16 %v355
  %v1680 = vunpack.c.h.b16 %v355
  %v1681 = vunpack.c.l.b16 %v356
  %v1682 = vunpack.c.h.b16 %v356
  %v1683 = vunpack.c.l.b16 %v357
  %v1684 = vunpack.c.h.b16 %v357
  %v1685 = vunpack.c.l.b16 %v358
  %v1686 = vunpack.c.h.b16 %v358
  %v1687 = vunpack.c.l.b16 %v359
  %v1688 = vunpack.c.h.b16 %v359
  %v1689 = vunpack.c.l.b16 %v360
  %v1690 = vunpack.c.h.b16 %v360
  %v1691 = vunpack.c.l.b16 %v361
  %v1692 = vunpack.c.h.b16 %v361
  %v1693 = vunpack.c.l.b16 %v362
  %v1694 = vunpack.c.h.b16 %v362
  %v1695 = vunpack.c.l.b16 %v363
  %v1696 = vunpack.c.h.b16 %v363
  %v1697 = vunpack.c.l.b16 %v364
  %v1698 = vunpack.c.h.b16 %v364
  %v1699 = vunpack.c.l.b16 %v365
  %v1700 = vunpack.c.h.b16 %v365
  %v1701 = vunpack.c.l.b16 %v366
  %v1702 = vunpack.c.h.b16 %v366
  %v1703 = vunpack.c.l.b16 %v367
  %v1704 = vunpack.c.h.b16 %v367
  %v1705 = vunpack.c.l.b16 %v368
  %v1706 = vunpack.c.h.b16 %v368
  %v1707 = vunpack.c.l.b16 %v369
  %v1708 = vunpack.c.h.b16 %v369
  %v1709 = vunpack.c.l.b16 %v370
  %v1710 = vunpack.c.h.b16 %v370
  %v1711 = vunpack.c.l.b16 %v371
  %v1712 = vunpack.c.h.b16 %v371
  %v1713 = vunpack.c.l.b16 %v372
  %v1714 = vunpack.c.h.b16 %v372
  %v1715 = vunpack.c.l.b16 %v373
  %v1716 = vunpack.c.h.b16 %v373
  %v1717 = vunpack.c.l.b16 %v374
  %v1718 = vunpack.c.h.b16 %v374
  %v1719 = vunpack.c.l.b16 %v375
  %v1720 = vunpack.c.h.b16 %v375
  %v1721 = vunpack.c.l.b16 %v376
  %v1722 = vunpack.c.h.b16 %v376
  %v1723 = vunpack.c.l.b16 %v377
  %v1724 = vunpack.c.h.b16 %v377
  %v1725 = vunpack.c.l.b16 %v378
  %v1726 = vunpack.c.h.b16 %v378
  %v1727 = vunpack.c.l.b16 %v379
  %v1728 = vunpack.c.h.b16 %v379
  %v1729 = vunpack.c.l.b16 %v380
  %v1730 = vunpack.c.h.b16 %v380
  %v1731 = vunpack.c.l.b16 %v381
  %v1732 = vunpack.c.h.b16 %v381
  %v1733 = vunpack.c.l.b16 %v382
  %v1734 = vunpack.c.h.b16 %v382
  %v1735 = vunpack.c.l.b16 %v383
  %v1736 = vunpack.c.h.b16 %v383
  %v1737 = vunpack.c.l.b16 %v384
  %v1738 = vunpack.c.h.b16 %v384
  %v1739 = vunpack.c.l.b16 %v385
  %v1740 = vunpack.c.h.b16 %v385
  %v1741 = vunpack.c.l.b16 %v386
  %v1742 = vunpack.c.h.b16 %v386
  %v1743 = vunpack.c.l.b16 %v387
  %v1744 = vunpack.c.h.b16 %v387
  %v1745 = vunpack.c.l.b16 %v388
  %v1746 = vunpack.c.h.b16 %v388
  %v1747 = vunpack.c.l.b16 %v389
  %v1748 = vunpack.c.h.b16 %v389
  %v1749 = vunpack.c.l.b16 %v390
  %v1750 = vunpack.c.h.b16 %v390
  %v1751 = vunpack.c.l.b16 %v391
  %v1752 = vunpack.c.h.b16 %v391
  %v1753 = vunpack.c.l.b16 %v392
  %v1754 = vunpack.c.h.b16 %v392
  %v1755 = vunpack.c.l.b16 %v393
  %v1756 = vunpack.c.h.b16 %v393
  %v1757 = vunpack.c.l.b16 %v394
  %v1758 = vunpack.c.h.b16 %v394
  %v1759 = vunpack.c.l.b16 %v395
  %v1760 = vunpack.c.h.b16 %v395
  %v1761 = vunpack.c.l.b16 %v396
  %v1762 = vunpack.c.h.b16 %v396
  %v1763 = vunpack.c.l.b16 %v397
  %v1764 = vunpack.c.h.b16 %v397
  %v1765 = vunpack.c.l.b16 %v398
  %v1766 = vunpack.c.h.b16 %v398
  %v1767 = vunpack.c.l.b16 %v399
  %v1768 = vunpack.c.h.b16 %v399
  %v1769 = vunpack.c.l.b16 %v400
  %v1770 = vunpack.c.h.b16 %v400
  %v1771 = vunpack.c.l.b16 %v401
  %v1772 = vunpack.c.h.b16 %v401
  %v1773 = vunpack.c.l.b16 %v402
  %v1774 = vunpack.c.h.b16 %v402
  %v1775 = vunpack.c.l.b16 %v403
  %v1776 = vunpack.c.h.b16 %v403
  %v1777 = vunpack.c.l.b16 %v404
  %v1778 = vunpack.c.h.b16 %v404
  %v1779 = vunpack.c.l.b16 %v405
  %v1780 = vunpack.c.h.b16 %v405
  %v1781 = vunpack.c.l.b16 %v406
  %v1782 = vunpack.c.h.b16 %v406
  %v1783 = vunpack.c.l.b16 %v407
  %v1784 = vunpack.c.h.b16 %v407
  %v1785 = vunpack.c.l.b16 %v408
  %v1786 = vunpack.c.h.b16 %v408
  %v1787 = vunpack.c.l.b16 %v409
  %v1788 = vunpack.c.h.b16 %v409
  %v1789 = vunpack.c.l.b16 %v410
  %v1790 = vunpack.c.h.b16 %v410
  %v1791 = vunpack.c.l.b16 %v411
  %v1792 = vunpack.c.h.b16 %v411
  %v1793 = vunpack.c.l.b16 %v412
  %v1794 = vunpack.c.h.b16 %v412
  %v1795 = vunpack.c.l.b16 %v413
  %v1796 = vunpack.c.h.b16 %v413
  %v1797 = vunpack.c.l.b16 %v414
  %v1798 = vunpack.c.h.b16 %v414
  %v1799 = vunpack.c.l.b16 %v415
  %v1800 = vunpack.c.h.b16 %v415
  %v1801 = vunpack.c.l.b16 %v416
  %v1802 = vunpack.c.h.b16 %v416
  %v1803 = vunpack.c.l.b16 %v417
  %v1804 = vunpack.c.h.b16 %v417
  %v1805 = vunpack.c.l.b16 %v418
  %v1806 = vunpack.c.h.b16 %v418
  %v1807 = vunpack.c.l.b16 %v419
  %v1808 = vunpack.c.h.b16 %v419
  %v1809 = vunpack.c.l.b16 %v420
  %v1810 = vunpack.c.h.b16 %v420
  %v1811 = vunpack.c.l.b16 %v421
  %v1812 = vunpack.c.h.b16 %v421
  %v1813 = vunpack.c.l.b16 %v422
  %v1814 = vunpack.c.h.b16 %v422
  %v1815 = vunpack.c.l.b16 %v423
  %v1816 = vunpack.c.h.b16 %v423
  %v1817 = vunpack.c.l.b16 %v424
  %v1818 = vunpack.c.h.b16 %v424
  %v1819 = vunpack.c.l.b16 %v425
  %v1820 = vunpack.c.h.b16 %v425
  %v1821 = vunpack.c.l.b16 %v426
  %v1822 = vunpack.c.h.b16 %v426
  %v1823 = vunpack.c.l.b16 %v427
  %v1824 = vunpack.c.h.b16 %v427
  %v1825 = vunpack.c.l.b16 %v428
  %v1826 = vunpack.c.h.b16 %v428
  %v1827 = vunpack.c.l.b16 %v429
  %v1828 = vunpack.c.h.b16 %v429
  %v1829 = vunpack.c.l.b16 %v430
  %v1830 = vunpack.c.h.b16 %v430
  %v1831 = vunpack.c.l.b16 %v431
  %v1832 = vunpack.c.h.b16 %v431
  %v1833 = vunpack.c.l.b16 %v432
  %v1834 = vunpack.c.h.b16 %v432
  %v1835 = vunpack.c.l.b16 %v433
  %v1836 = vunpack.c.h.b16 %v433
  %v1837 = vunpack.c.l.b16 %v434
  %v1838 = vunpack.c.h.b16 %v434
  %v1839 = vunpack.c.l.b16 %v435
  %v1840 = vunpack.c.h.b16 %v435
  %v1841 = vunpack.c.l.b16 %v436
  %v1842 = vunpack.c.h.b16 %v436
  %v1843 = vunpack.c.l.b16 %v437
  %v1844 = vunpack.c.h.b16 %v437
  %v1845 = vunpack.c.l.b16 %v438
  %v1846 = vunpack.c.h.b16 %v438
  %v1847 = vunpack.c.l.b16 %v439
  %v1848 = vunpack.c.h.b16 %v439
  %v1849 = vunpack.c.l.b16 %v440
  %v1850 = vunpack.c.h.b16 %v440
  %v1851 = vunpack.c.l.b16 %v441
  %v1852 = vunpack.c.h.b16 %v441
  %v1853 = vunpack.c.l.b16 %v442
  %v1854 = vunpack.c.h.b16 %v442
  %v1855 = vunpack.c.l.b16 %v443
  %v1856 = vunpack.c.h.b16 %v443
  %v1857 = vunpack.c.l.b16 %v444
  %v1858 = vunpack.c.h.b16 %v444
  %v1859 = vunpack.c.l.b16 %v445
  %v1860 = vunpack.c.h.b16 %v445
  %v1861 = vunpack.c.l.b16 %v446
  %v1862 = vunpack.c.h.b16 %v446
  %v1863 = vunpack.c.l.b16 %v447
  %v1864 = vunpack.c.h.b16 %v447
  %v1865 = vunpack.c.l.b16 %v448
  %v1866 = vunpack.c.h.b16 %v448
  %v1867 = vunpack.c.l.b16 %v449
  %v1868 = vunpack.c.h.b16 %v449
  %v1869 = vunpack.c.l.b16 %v450
  %v1870 = vunpack.c.h.b16 %v450
  %v1871 = vunpack.c.l.b16 %v451
  %v1872 = vunpack.c.h.b16 %v451
  %v1873 = vunpack.c.l.b16 %v452
  %v1874 = vunpack.c.h.b16 %v452
  %v1875 = vunpack.c.l.b16 %v453
  %v1876 = vunpack.c.h.b16 %v453
  %v1877 = vunpack.c.l.b16 %v454
  %v1878 = vunpack.c.h.b16 %v454
  %v1879 = vunpack.c.l.b16 %v455
  %v1880 = vunpack.c.h.b16 %v455
  %v1881 = vunpack.c.l.b16 %v456
  %v1882 = vunpack.c.h.b16 %v456
  %v1883 = vunpack.c.l.b16 %v457
  %v1884 = vunpack.c.h.b16 %v457
  %v1885 = vunpack.c.l.b16 %v458
  %v1886 = vunpack.c.h.b16 %v458
  %v1887 = vunpack.c.l.b16 %v459
  %v1888 = vunpack.c.h.b16 %v459
  %v1889 = vunpack.c.l.b16 %v460
  %v1890 = vunpack.c.h.b16 %v460
  %v1891 = vunpack.c.l.b16 %v461
  %v1892 = vunpack.c.h.b16 %v461
  %v1893 = vunpack.c.l.b16 %v462
  %v1894 = vunpack.c.h.b16 %v462
  %v1895 = vunpack.c.l.b16 %v463
  %v1896 = vunpack.c.h.b16 %v463
  %v1897 = vunpack.c.l.b16 %v464
  %v1898 = vunpack.c.h.b16 %v464
  %v1899 = vunpack.c.l.b16 %v465
  %v1900 = vunpack.c.h.b16 %v465
  %v1901 = vunpack.c.l.b16 %v466
  %v1902 = vunpack.c.h.b16 %v466
  %v1903 = vunpack.c.l.b16 %v467
  %v1904 = vunpack.c.h.b16 %v467
  %v1905 = vunpack.c.l.b16 %v468
  %v1906 = vunpack.c.h.b16 %v468
  %v1907 = vunpack.c.l.b16 %v469
  %v1908 = vunpack.c.h.b16 %v469
  %v1909 = vunpack.c.l.b16 %v470
  %v1910 = vunpack.c.h.b16 %v470
  %v1911 = vunpack.c.l.b16 %v471
  %v1912 = vunpack.c.h.b16 %v471
  %v1913 = vunpack.c.l.b16 %v472
  %v1914 = vunpack.c.h.b16 %v472
  %v1915 = vunpack.c.l.b16 %v473
  %v1916 = vunpack.c.h.b16 %v473
  %v1917 = vunpack.c.l.b16 %v474
  %v1918 = vunpack.c.h.b16 %v474
  %v1919 = vpack.c.b16 %v1057, %v1055
  %v1920 = vpack.c.b16 %v1058, %v1056
  %v1921 = vpack.c.b16 %v1061, %v1059
  %v1922 = vpack.c.b16 %v1062, %v1060
  %v1923 = vpack.c.b16 %v1065, %v1063
  %v1924 = vpack.c.b16 %v1066, %v1064
  %v1925 = vpack.c.b16 %v1069, %v1067
  %v1926 = vpack.c.b16 %v1070, %v1068
  %v1927 = vpack.c.b16 %v1073, %v1071
  %v1928 = vpack.c.b16 %v1074, %v1072
  %v1929 = vpack.c.b16 %v1077, %v1075
  %v1930 = vpack.c.b16 %v1078, %v1076
  %v1931 = vpack.c.b16 %v1081, %v1079
  %v1932 = vpack.c.b16 %v1082, %v1080
  %v1933 = vpack.c.b16 %v1085, %v1083
  %v1934 = vpack.c.b16 %v1086, %v1084
  %v1935 = vpack.c.b16 %v1089, %v1087
  %v1936 = vpack.c.b16 %v1090, %v1088
  %v1937 = vpack.c.b16 %v1093, %v1091
  %v1938 = vpack.c.b16 %v1094, %v1092
  %v1939 = vpack.c.b16 %v1097, %v1095
  %v1940 = vpack.c.b16 %v1098, %v1096
  %v1941 = vpack.c.b16 %v1101, %v1099
  %v1942 = vpack.c.b16 %v1102, %v1100
  %v1943 = vpack.c.b16 %v1105, %v1103
  %v1944 = vpack.c.b16 %v1106, %v1104
  %v1945 = vpack.c.b16 %v1109, %v1107
  %v1946 = vpack.c.b16 %v1110, %v1108
  %v1947 = vpack.c.b16 %v1113, %v1111
  %v1948 = vpack.c.b16 %v1114, %v1112
  %v1949 = vpack.c.b16 %v1117, %v1115
  %v1950 = vpack.c.b16 %v1118, %v1116
  %v1951 = vpack.c.b16 %v1121, %v1119
  %v1952 = vpack.c.b16 %v1122, %v1120
  %v1953 = vpack.c.b16 %v1125, %v1123
  %v1954 = vpack.c.b16 %v1126, %v1124
  %v1955 = vpack.c.b16 %v1129, %v1127
  %v1956 = vpack.c.b16 %v1130, %v1128
  %v1957 = vpack.c.b16 %v1133, %v1131
  %v1958 = vpack.c.b16 %v1134, %v1132
  %v1959 = vpack.c.b16 %v1137, %v1135
  %v1960 = vpack.c.b16 %v1138, %v1136
  %v1961 = vpack.c.b16 %v1141, %v1139
  %v1962 = vpack.c.b16 %v1142, %v1140
  %v1963 = vpack.c.b16 %v1145, %v1143
  %v1964 = vpack.c.b16 %v1146, %v1144
  %v1965 = vpack.c.b16 %v1149, %v1147
  %v1966 = vpack.c.b16 %v1150, %v1148
  %v1967 = vpack.c.b16 %v1153, %v1151
  %v1968 = vpack.c.b16 %v1154, %v1152
  %v1969 = vpack.c.b16 %v1157, %v1155
  %v1970 = vpack.c.b16 %v1158, %v1156
  %v1971 = vpack.c.b16 %v1161, %v1159
  %v1972 = vpack.c.b16 %v1162, %v1160
  %v1973 = vpack.c.b16 %v1165, %v1163
  %v1974 = vpack.c.b16 %v1166, %v1164
  %v1975 = vpack.c.b16 %v1169, %v1167
  %v1976 = vpack.c.b16 %v1170, %v1168
  %v1977 = vpack.c.b16 %v1173, %v1171
  %v1978 = vpack.c.b16 %v1174, %v1172
  %v1979 = vpack.c.b16 %v1177, %v1175
  %v1980 = vpack.c.b16 %v1178, %v1176
  %v1981 = vpack.c.b16 %v1181, %v1179
  %v1982 = vpack.c.b16 %v1182, %v1180
  %v1983 = vpack.c.b16 %v1185, %v1183
  %v1984 = vpack.c.b16 %v1186, %v1184
  %v1985 = vpack.c.b16 %v1189, %v1187
  %v1986 = vpack.c.b16 %v1190, %v1188
  %v1987 = vpack.c.b16 %v1193, %v1191
  %v1988 = vpack.c.b16 %v1194, %v1192
  %v1989 = vpack.c.b16 %v1197, %v1195
  %v1990 = vpack.c.b16 %v1198, %v1196
  %v1991 = vpack.c.b16 %v1201, %v1199
  %v1992 = vpack.c.b16 %v1202, %v1200
  %v1993 = vpack.c.b16 %v1205, %v1203
  %v1994 = vpack.c.b16 %v1206, %v1204
  %v1995 = vpack.c.b16 %v1209, %v1207
  %v1996 = vpack.c.b16 %v1210, %v1208
  %v1997 = vpack.c.b16 %v1213, %v1211
  %v1998 = vpack.c.b16 %v1214, %v1212
  %v1999 = vpack.c.b16 %v1217, %v1215
  %v2000 = vpack.c.b16 %v1218, %v1216
  %v2001 = vpack.c.b16 %v1221, %v1219
  %v2002 = vpack.c.b16 %v1222, %v1220
  %v2003 = vpack.c.b16 %v1225, %v1223
  %v2004 = vpack.c.b16 %v1226, %v1224
  %v2005 = vpack.c.b16 %v1229, %v1227
  %v2006 = vpack.c.b16 %v1230, %v1228
  %v2007 = vpack.c.b16 %v1233, %v1231
  %v2008 = vpack.c.b16 %v1234, %v1232
  %v2009 = vpack.c.b16 %v1237, %v1235
  %v2010 = vpack.c.b16 %v1238, %v1236
  %v2011 = vpack.c.b16 %v1241, %v1239
  %v2012 = vpack.c.b16 %v1242, %v1240
  %v2013 = vpack.c.b16 %v1245, %v1243
  %v2014 = vpack.c.b16 %v1246, %v1244
  %v2015 = vpack.c.b16 %v1249, %v1247
  %v2016 = vpack.c.b16 %v1250, %v1248
  %v2017 = vpack.c.b16 %v1253, %v1251
  %v2018 = vpack.c.b16 %v1254, %v1252
  %v2019 = vpack.c.b16 %v1257, %v1255
  %v2020 = vpack.c.b16 %v1258, %v1256
  %v2021 = vpack.c.b16 %v1261, %v1259
  %v2022 = vpack.c.b16 %v1262, %v1260
  %v2023 = vpack.c.b16 %v1265, %v1263
  %v2024 = vpack.c.b16 %v1266, %v1264
  %v2025 = vpack.c.b16 %v1269, %v1267
  %v2026 = vpack.c.b16 %v1270, %v1268
  %v2027 = vpack.c.b16 %v1273, %v1271
  %v2028 = vpack.c.b16 %v1274, %v1272
  %v2029 = vpack.c.b16 %v1277, %v1275
  %v2030 = vpack.c.b16 %v1278, %v1276
  %v2031 = vpack.c.b16 %v1281, %v1279
  %v2032 = vpack.c.b16 %v1282, %v1280
  %v2033 = vpack.c.b16 %v1285, %v1283
  %v2034 = vpack.c.b16 %v1286, %v1284
  %v2035 = vpack.c.b16 %v1289, %v1287
  %v2036 = vpack.c.b16 %v1290, %v1288
  %v2037 = vpack.c.b16 %v1293, %v1291
  %v2038 = vpack.c.b16 %v1294, %v1292
  %v2039 = vpack.c.b16 %v1297, %v1295
  %v2040 = vpack.c.b16 %v1298, %v1296
  %v2041 = vpack.c.b16 %v1301, %v1299
  %v2042 = vpack.c.b16 %v1302, %v1300
  %v2043 = vpack.c.b16 %v1305, %v1303
  %v2044 = vpack.c.b16 %v1306, %v1304
  %v2045 = vpack.c.b16 %v1309, %v1307
  %v2046 = vpack.c.b16 %v1310, %v1308
  %v2047 = vpack.c.b16 %v1313, %v1311
  %v2048 = vpack.c.b16 %v1314, %v1312
  %v2049 = vpack.c.b16 %v1317, %v1315
  %v2050 = vpack.c.b16 %v1318, %v1316
  %v2051 = vpack.c.b16 %v1321, %v1319
  %v2052 = vpack.c.b16 %v1322, %v1320
  %v2053 = vpack.c.b16 %v1325, %v1323
  %v2054 = vpack.c.b16 %v1326, %v1324
  %v2055 = vpack.c.b16 %v1329, %v1327
  %v2056 = vpack.c.b16 %v1330, %v1328
  %v2057 = vpack.c.b16 %v1333, %v1331
  %v2058 = vpack.c.b16 %v1334, %v1332
  %v2059 = vpack.c.b16 %v1337, %v1335
  %v2060 = vpack.c.b16 %v1338, %v1336
  %v2061 = vpack.c.b16 %v1341, %v1339
  %v2062 = vpack.c.b16 %v1342, %v1340
  %v2063 = vpack.c.b16 %v1345, %v1343
  %v2064 = vpack.c.b16 %v1346, %v1344
  %v2065 = vpack.c.b16 %v1349, %v1347
  %v2066 = vpack.c.b16 %v1350, %v1348
  %v2067 = vpack.c.b16 %v1353, %v1351
  %v2068 = vpack.c.b16 %v1354, %v1352
  %v2069 = vpack.c.b16 %v1357, %v1355
  %v2070 = vpack.c.b16 %v1358, %v1356
  %v2071 = vpack.c.b16 %v1361, %v1359
  %v2072 = vpack.c.b16 %v1362, %v1360
  %v2073 = vpack.c.b16 %v1365, %v1363
  %v2074 = vpack.c.b16 %v1366, %v1364
  %v2075 = vpack.c.b16 %v1369, %v1367
  %v2076 = vpack.c.b16 %v1370, %v1368
  %v2077 = vpack.c.b16 %v1373, %v1371
  %v2078 = vpack.c.b16 %v1374, %v1372
  %v2079 = vpack.c.b16 %v1377, %v1375
  %v2080 = vpack.c.b16 %v1378, %v1376
  %v2081 = vpack.c.b16 %v1381, %v1379
  %v2082 = vpack.c.b16 %v1382, %v1380
  %v2083 = vpack.c.b16 %v1385, %v1383
  %v2084 = vpack.c.b16 %v1386, %v1384
  %v2085 = vpack.c.b16 %v1389, %v1387
  %v2086 = vpack.c.b16 %v1390, %v1388
  %v2087 = vpack.c.b16 %v1393, %v1391
  %v2088 = vpack.c.b16 %v1394, %v1392
  %v2089 = vpack.c.b16 %v1397, %v1395
  %v2090 = vpack.c.b16 %v1398, %v1396
  %v2091 = vpack.c.b16 %v1401, %v1399
  %v2092 = vpack.c.b16 %v1402, %v1400
  %v2093 = vpack.c.b16 %v1405, %v1403
  %v2094 = vpack.c.b16 %v1406, %v1404
  %v2095 = vpack.c.b16 %v1409, %v1407
  %v2096 = vpack.c.b16 %v1410, %v1408
  %v2097 = vpack.c.b16 %v1413, %v1411
  %v2098 = vpack.c.b16 %v1414, %v1412
  %v2099 = vpack.c.b16 %v1417, %v1415
  %v2100 = vpack.c.b16 %v1418, %v1416
  %v2101 = vpack.c.b16 %v1421, %v1419
  %v2102 = vpack.c.b16 %v1422, %v1420
  %v2103 = vpack.c.b16 %v1425, %v1423
  %v2104 = vpack.c.b16 %v1426, %v1424
  %v2105 = vpack.c.b16 %v1429, %v1427
  %v2106 = vpack.c.b16 %v1430, %v1428
  %v2107 = vpack.c.b16 %v1433, %v1431
  %v2108 = vpack.c.b16 %v1434, %v1432
  %v2109 = vpack.c.b16 %v1437, %v1435
  %v2110 = vpack.c.b16 %v1438, %v1436
  %v2111 = vpack.c.b16 %v1441, %v1439
  %v2112 = vpack.c.b16 %v1442, %v1440
  %v2113 = vpack.c.b16 %v1445, %v1443
  %v2114 = vpack.c.b16 %v1446, %v1444
  %v2115 = vpack.c.b16 %v1449, %v1447
  %v2116 = vpack.c.b16 %v1450, %v1448
  %v2117 = vpack.c.b16 %v1453, %v1451
  %v2118 = vpack.c.b16 %v1454, %v1452
  %v2119 = vpack.c.b16 %v1457, %v1455
  %v2120 = vpack.c.b16 %v1458, %v1456
  %v2121 = vpack.c.b16 %v1461, %v1459
  %v2122 = vpack.c.b16 %v1462, %v1460
  %v2123 = vpack.c.b16 %v1465, %v1463
  %v2124 = vpack.c.b16 %v1466, %v1464
  %v2125 = vpack.c.b16 %v1469, %v1467
  %v2126 = vpack.c.b16 %v1470, %v1468
  %v2127 = vpack.c.b16 %v1473, %v1471
  %v2128 = vpack.c.b16 %v1474, %v1472
  %v2129 = vpack.c.b16 %v1477, %v1475
  %v2130 = vpack.c.b16 %v1478, %v1476
  %v2131 = vpack.c.b16 %v1481, %v1479
  %v2132 = vpack.c.b16 %v1482, %v1480
  %v2133 = vpack.c.b16 %v1485, %v1483
  %v2134 = vpack.c.b16 %v1486, %v1484
  %v2135 = vpack.c.b16 %v1489, %v1487
  %v2136 = vpack.c.b16 %v1490, %v1488
  %v2137 = vpack.c.b16 %v1493, %v1491
  %v2138 = vpack.c.b16 %v1494, %v1492
  %v2139 = vpack.c.b16 %v1497, %v1495
  %v2140 = vpack.c.b16 %v1498, %v1496
  %v2141 = vpack.c.b16 %v1501, %v1499
  %v2142 = vpack.c.b16 %v1502, %v1500
  %v2143 = vpack.c.b16 %v1505, %v1503
  %v2144 = vpack.c.b16 %v1506, %v1504
  %v2145 = vpack.c.b16 %v1509, %v1507
  %v2146 = vpack.c.b16 %v1510, %v1508
  %v2147 = vpack.c.b16 %v1513, %v1511
  %v2148 = vpack.c.b16 %v1514, %v1512
  %v2149 = vpack.c.b16 %v1517, %v1515
  %v2150 = vpack.c.b16 %v1518, %v1516
  %v2151 = vpack.c.b16 %v1521, %v1519
  %v2152 = vpack.c.b16 %v1522, %v1520
  %v2153 = vpack.c.b16 %v1525, %v1523
  %v2154 = vpack.c.b16 %v1526, %v1524
  %v2155 = vpack.c.b16 %v1529, %v1527
  %v2156 = vpack.c.b16 %v1530, %v1528
  %v2157 = vpack.c.b16 %v1533, %v1531
  %v2158 = vpack.c.b16 %v1534, %v1532
  %v2159 = vpack.c.b16 %v1537, %v1535
  %v2160 = vpack.c.b16 %v1538, %v1536
  %v2161 = vpack.c.b16 %v1541, %v1539
  %v2162 = vpack.c.b16 %v1542, %v1540
  %v2163 = vpack.c.b16 %v1545, %v1543
  %v2164 = vpack.c.b16 %v1546, %v1544
  %v2165 = vpack.c.b16 %v1549, %v1547
  %v2166 = vpack.c.b16 %v1550, %v1548
  %v2167 = vpack.c.b16 %v1553, %v1551
  %v2168 = vpack.c.b16 %v1554, %v1552
  %v2169 = vpack.c.b16 %v1557, %v1555
  %v2170 = vpack.c.b16 %v1558, %v1556
  %v2171 = vpack.c.b16 %v1561, %v1559
  %v2172 = vpack.c.b16 %v1562, %v1560
  %v2173 = vpack.c.b16 %v1565, %v1563
  %v2174 = vpack.c.b16 %v1566, %v1564
  %v2175 = vpack.c.b16 %v1569, %v1567
  %v2176 = vpack.c.b16 %v1570, %v1568
  %v2177 = vpack.c.b16 %v1573, %v1571
  %v2178 = vpack.c.b16 %v1574, %v1572
  %v2179 = vpack.c.b16 %v1577, %v1575
  %v2180 = vpack.c.b16 %v1578, %v1576
  %v2181 = vpack.c.b16 %v1581, %v1579
  %v2182 = vpack.c.b16 %v1582, %v1580
  %v2183 = vpack.c.b16 %v1585, %v1583
  %v2184 = vpack.c.b16 %v1586, %v1584
  %v2185 = vpack.c.b16 %v1589, %v1587
  %v2186 = vpack.c.b16 %v1590, %v1588
  %v2187 = vpack.c.b16 %v1593, %v1591
  %v2188 = vpack.c.b16 %v1594, %v1592
  %v2189 = vpack.c.b16 %v1597, %v1595
  %v2190 = vpack.c.b16 %v1598, %v1596
  %v2191 = vpack.c.b16 %v1601, %v1599
  %v2192 = vpack.c.b16 %v1602, %v1600
  %v2193 = vpack.c.b16 %v1605, %v1603
  %v2194 = vpack.c.b16 %v1606, %v1604
  %v2195 = vpack.c.b16 %v1609, %v1607
  %v2196 = vpack.c.b16 %v1610, %v1608
  %v2197 = vpack.c.b16 %v1613, %v1611
  %v2198 = vpack.c.b16 %v1614, %v1612
  %v2199 = vpack.c.b16 %v1617, %v1615
  %v2200 = vpack.c.b16 %v1618, %v1616
  %v2201 = vpack.c.b16 %v1621, %v1619
  %v2202 = vpack.c.b16 %v1622, %v1620
  %v2203 = vpack.c.b16 %v1625, %v1623
  %v2204 = vpack.c.b16 %v1626, %v1624
  %v2205 = vpack.c.b16 %v1629, %v1627
  %v2206 = vpack.c.b16 %v1630, %v1628
  %v2207 = vpack.c.b16 %v1633, %v1631
  %v2208 = vpack.c.b16 %v1634, %v1632
  %v2209 = vpack.c.b16 %v1637, %v1635
  %v2210 = vpack.c.b16 %v1638, %v1636
  %v2211 = vpack.c.b16 %v1641, %v1639
  %v2212 = vpack.c.b16 %v1642, %v1640
  %v2213 = vpack.c.b16 %v1645, %v1643
  %v2214 = vpack.c.b16 %v1646, %v1644
  %v2215 = vpack.c.b16 %v1649, %v1647
  %v2216 = vpack.c.b16 %v1650, %v1648
  %v2217 = vpack.c.b16 %v1653, %v1651
  %v2218 = vpack.c.b16 %v1654, %v1652
  %v2219 = vpack.c.b16 %v1657, %v1655
  %v2220 = vpack.c.b16 %v1658, %v1656
  %v2221 = vpack.c.b16 %v1661, %v1659
  %v2222 = vpack.c.b16 %v1662, %v1660
  %v2223 = vpack.c.b16 %v1665, %v1663
  %v2224 = vpack.c.b16 %v1666, %v1664
  %v2225 = vpack.c.b16 %v1669, %v1667
  %v2226 = vpack.c.b16 %v1670, %v1668
  %v2227 = vpack.c.b16 %v1673, %v1671
  %v2228 = vpack.c.b16 %v1674, %v1672
  %v2229 = vpack.c.b16 %v1677, %v1675
  %v2230 = vpack.c.b16 %v1678, %v1676
  %v2231 = vpack.c.b16 %v1681, %v1679
  %v2232 = vpack.c.b16 %v1682, %v1680
  %v2233 = vpack.c.b16 %v1685, %v1683
  %v2234 = vpack.c.b16 %v1686, %v1684
  %v2235 = vpack.c.b16 %v1689, %v1687
  %v2236 = vpack.c.b16 %v1690, %v1688
  %v2237 = vpack.c.b16 %v1693, %v1691
  %v2238 = vpack.c.b16 %v1694, %v1692
  %v2239 = vpack.c.b16 %v1697, %v1695
  %v2240 = vpack.c.b16 %v1698, %v1696
  %v2241 = vpack.c.b16 %v1701, %v1699
  %v2242 = vpack.c.b16 %v1702, %v1700
  %v2243 = vpack.c.b16 %v1705, %v1703
  %v2244 = vpack.c.b16 %v1706, %v1704
  %v2245 = vpack.c.b16 %v1709, %v1707
  %v2246 = vpack.c.b16 %v1710, %v1708
  %v2247 = vpack.c.b16 %v1713, %v1711
  %v2248 = vpack.c.b16 %v1714, %v1712
  %v2249 = vpack.c.b16 %v1717, %v1715
  %v2250 = vpack.c.b16 %v1718, %v1716
  %v2251 = vpack.c.b16 %v1721, %v1719
  %v2252 = vpack.c.b16 %v1722, %v1720
  %v2253 = vpack.c.b16 %v1725, %v1723
  %v2254 = vpack.c.b16 %v1726, %v1724
  %v2255 = vpack.c.b16 %v1729, %v1727
  %v2256 = vpack.c.b16 %v1730, %v1728
  %v2257 = vpack.c.b16 %v1733, %v1731
  %v2258 = vpack.c.b16 %v1734, %v1732
  %v2259 = vpack.c.b16 %v1737, %v1735
  %v2260 = vpack.c.b16 %v1738, %v1736
  %v2261 = vpack.c.b16 %v1741, %v1739
  %v2262 = vpack.c.b16 %v1742, %v1740
  %v2263 = vpack.c.b16 %v1745, %v1743
  %v2264 = vpack.c.b16 %v1746, %v1744
  %v2265 = vpack.c.b16 %v1749, %v1747
  %v2266 = vpack.c.b16 %v1750, %v1748
  %v2267 = vpack.c.b16 %v1753, %v1751
  %v2268 = vpack.c.b16 %v1754, %v1752
  %v2269 = vpack.c.b16 %v1757, %v1755
  %v2270 = vpack.c.b16 %v1758, %v1756
  %v2271 = vpack.c.b16 %v1761, %v1759
  %v2272 = vpack.c.b16 %v1762, %v1760
  %v2273 = vpack.c.b16 %v1765, %v1763
  %v2274 = vpack.c.b16 %v1766, %v1764
  %v2275 = vpack.c.b16 %v1769, %v1767
  %v2276 = vpack.c.b16 %v1770, %v1768
  %v2277 = vpack.c.b16 %v1773, %v1771
  %v2278 = vpack.c.b16 %v1774, %v1772
  %v2279 = vpack.c.b16 %v1777, %v1775
  %v2280 = vpack.c.b16 %v1778, %v1776
  %v2281 = vpack.c.b16 %v1781, %v1779
  %v2282 = vpack.c.b16 %v1782, %v1780
  %v2283 = vpack.c.b16 %v1785, %v1783
  %v2284 = vpack.c.b16 %v1786, %v1784
  %v2285 = vpack.c.b16 %v1789, %v1787
  %v2286 = vpack.c.b16 %v1790, %v1788
  %v2287 = vpack.c.b16 %v1793, %v1791
  %v2288 = vpack.c.b16 %v1794, %v1792
  %v2289 = vpack.c.b16 %v1797, %v1795
  %v2290 = vpack.c.b16 %v1798, %v1796
  %v2291 = vpack.c.b16 %v1801, %v1799
  %v2292 = vpack.c.b16 %v1802, %v1800
  %v2293 = vpack.c.b16 %v1805, %v1803
  %v2294 = vpack.c.b16 %v1806, %v1804
  %v2295 = vpack.c.b16 %v1809, %v1807
  %v2296 = vpack.c.b16 %v1810, %v1808
  %v2297 = vpack.c.b16 %v1813, %v1811
  %v2298 = vpack.c.b16 %v1814, %v1812
  %v2299 = vpack.c.b16 %v1817, %v1815
  %v2300 = vpack.c.b16 %v1818, %v1816
  %v2301 = vpack.c.b16 %v1821, %v1819
  %v2302 = vpack.c.b16 %v1822, %v1820
  %v2303 = vpack.c.b16 %v1825, %v1823
  %v2304 = vpack.c.b16 %v1826, %v1824
  %v2305 = vpack.c.b16 %v1829, %v1827
  %v2306 = vpack.c.b16 %v1830, %v1828
  %v2307 = vpack.c.b16 %v1833, %v1831
  %v2308 = vpack.c.b16 %v1834, %v1832
  %v2309 = vpack.c.b16 %v1837, %v1835
  %v2310 = vpack.c.b16 %v1838, %v1836
  %v2311 = vpack.c.b16 %v1841, %v1839
  %v2312 = vpack.c.b16 %v1842, %v1840
  %v2313 = vpack.c.b16 %v1845, %v1843
  %v2314 = vpack.c.b16 %v1846, %v1844
  %v2315 = vpack.c.b16 %v1849, %v1847
  %v2316 = vpack.c.b16 %v1850, %v1848
  %v2317 = vpack.c.b16 %v1853, %v1851
  %v2318 = vpack.c.b16 %v1854, %v1852
  %v2319 = vpack.c.b16 %v1857, %v1855
  %v2320 = vpack.c.b16 %v1858, %v1856
  %v2321 = vpack.c.b16 %v1861, %v1859
  %v2322 = vpack.c.b16 %v1862, %v1860
  %v2323 = vpack.c.b16 %v1865, %v1863
  %v2324 = vpack.c.b16 %v1866, %v1864
  %v2325 = vpack.c.b16 %v1869, %v1867
  %v2326 = vpack.c.b16 %v1870, %v1868
  %v2327 = vpack.c.b16 %v1873, %v1871
  %v2328 = vpack.c.b16 %v1874, %v1872
  %v2329 = vpack.c.b16 %v1877, %v1875
  %v2330 = vpack.c.b16 %v1878, %v1876
  %v2331 = vpack.c.b16 %v1881, %v1879
  %v2332 = vpack.c.b16 %v1882, %v1880
  %v2333 = vpack.c.b16 %v1885, %v1883
  %v2334 = vpack.c.b16 %v1886, %v1884
  %v2335 = vpack.c.b16 %v1889, %v1887
  %v2336 = vpack.c.b16 %v1890, %v1888
  %v2337 = vpack.c.b16 %v1893, %v1891
  %v2338 = vpack.c.b16 %v1894, %v1892
  %v2339 = vpack.c.b16 %v1897, %v1895
  %v2340 = vpack.c.b16 %v1898, %v1896
  %v2341 = vpack.c.b16 %v1901, %v1899
  %v2342 = vpack.c.b16 %v1902, %v1900
  %v2343 = vpack.c.b16 %v1905, %v1903
  %v2344 = vpack.c.b16 %v1906, %v1904
  %v2345 = vpack.c.b16 %v1909, %v1907
  %v2346 = vpack.c.b16 %v1910, %v1908
  %v2347 = vpack.c.b16 %v1913, %v1911
  %v2348 = vpack.c.b16 %v1914, %v1912
  %v2349 = vpack.c.b16 %v1917, %v1915
  %v2350 = vpack.c.b16 %v1918, %v1916
  %2783 = vmatprep.subr.bf16.mxu0 %v1934
  %2784 = vmatpush1.bf16.msra.mxu0 %v1933
  %2785 = vmatprep.subr.bf16.mxu0 %v1932
  %2786 = vmatpush1.bf16.msra.mxu0 %v1931
  %2787 = vmatprep.subr.bf16.mxu0 %v1930
  %2788 = vmatpush1.bf16.msra.mxu0 %v1929
  %2789 = vmatprep.subr.bf16.mxu0 %v1928
  %2790 = vmatpush1.bf16.msra.mxu0 %v1927
  %2791 = vmatprep.subr.bf16.mxu0 %v1926
  %2792 = vmatpush1.bf16.msra.mxu0 %v1925
  %2793 = vmatprep.subr.bf16.mxu0 %v1924
  %2794 = vmatpush1.bf16.msra.mxu0 %v1923
  %2795 = vmatprep.subr.bf16.mxu0 %v1922
  %2796 = vmatpush1.bf16.msra.mxu0 %v1921
  %2797 = vmatprep.subr.bf16.mxu0 %v1920
  %2798 = vmatpush1.bf16.msra.mxu0 %v1919
  %2799 = vmatprep.subr.bf16.mxu0 %v1950
  %2800 = vmatpush2.bf16.msra.mxu0 %v1949
  %2801 = vmatprep.subr.bf16.mxu0 %v1948
  %2802 = vmatpush2.bf16.msra.mxu0 %v1947
  %2803 = vmatprep.subr.bf16.mxu0 %v1946
  %2804 = vmatpush2.bf16.msra.mxu0 %v1945
  %2805 = vmatprep.subr.bf16.mxu0 %v1944
  %2806 = vmatpush2.bf16.msra.mxu0 %v1943
  %2807 = vmatprep.subr.bf16.mxu0 %v1942
  %2808 = vmatpush2.bf16.msra.mxu0 %v1941
  %2809 = vmatprep.subr.bf16.mxu0 %v1940
  %2810 = vmatpush2.bf16.msra.mxu0 %v1939
  %2811 = vmatprep.subr.bf16.mxu0 %v1938
  %2812 = vmatpush2.bf16.msra.mxu0 %v1937
  %2813 = vmatprep.subr.bf16.mxu0 %v1936
  %2814 = vmatpush2.bf16.msra.mxu0 %v1935
  %2815 = vmatprep.mubr.bf16.mxu0 %v570
  %2816 = vmatmul.mubr.bf16.gmra.mxu0 %v569
  %v2817 = vpop.f32.mrf.mxu0
  %v2818 = vadd.f32 %v480, %v2817
  %v2819 = vpop.f32.mrf.mxu0
  %v2820 = vadd.f32 %v484, %v2819
  %v2821 = vpop.f32.mrf.mxu0
  %v2822 = vadd.f32 %v480, %v2821
  %v2823 = vpop.f32.mrf.mxu0
  %v2824 = vadd.f32 %v484, %v2823
  %2825 = vdwg.mxu0
  %2826 = vmatprep.subr.bf16.mxu0 %v1966
  %2827 = vmatpush1.bf16.msra.mxu0 %v1965
  %2828 = vmatprep.subr.bf16.mxu0 %v1964
  %2829 = vmatpush1.bf16.msra.mxu0 %v1963
  %2830 = vmatprep.subr.bf16.mxu0 %v1962
  %2831 = vmatpush1.bf16.msra.mxu0 %v1961
  %2832 = vmatprep.subr.bf16.mxu0 %v1960
  %2833 = vmatpush1.bf16.msra.mxu0 %v1959
  %2834 = vmatprep.subr.bf16.mxu0 %v1958
  %2835 = vmatpush1.bf16.msra.mxu0 %v1957
  %2836 = vmatprep.subr.bf16.mxu0 %v1956
  %2837 = vmatpush1.bf16.msra.mxu0 %v1955
  %2838 = vmatprep.subr.bf16.mxu0 %v1954
  %2839 = vmatpush1.bf16.msra.mxu0 %v1953
  %2840 = vmatprep.subr.bf16.mxu0 %v1952
  %2841 = vmatpush1.bf16.msra.mxu0 %v1951
  %2842 = vmatprep.subr.bf16.mxu0 %v1982
  %2843 = vmatpush2.bf16.msra.mxu0 %v1981
  %2844 = vmatprep.subr.bf16.mxu0 %v1980
  %2845 = vmatpush2.bf16.msra.mxu0 %v1979
  %2846 = vmatprep.subr.bf16.mxu0 %v1978
  %2847 = vmatpush2.bf16.msra.mxu0 %v1977
  %2848 = vmatprep.subr.bf16.mxu0 %v1976
  %2849 = vmatpush2.bf16.msra.mxu0 %v1975
  %2850 = vmatprep.subr.bf16.mxu0 %v1974
  %2851 = vmatpush2.bf16.msra.mxu0 %v1973
  %2852 = vmatprep.subr.bf16.mxu0 %v1972
  %2853 = vmatpush2.bf16.msra.mxu0 %v1971
  %2854 = vmatprep.subr.bf16.mxu0 %v1970
  %2855 = vmatpush2.bf16.msra.mxu0 %v1969
  %2856 = vmatprep.subr.bf16.mxu0 %v1968
  %2857 = vmatpush2.bf16.msra.mxu0 %v1967
  %2858 = vmatprep.mubr.bf16.mxu0 %v572
  %2859 = vmatmul.mubr.bf16.gmra.mxu0 %v571
  %v2860 = vpop.f32.mrf.mxu0
  %v2861 = vadd.f32 %v2818, %v2860
  %v2862 = vpop.f32.mrf.mxu0
  %v2863 = vadd.f32 %v2820, %v2862
  %v2864 = vpop.f32.mrf.mxu0
  %v2865 = vadd.f32 %v2822, %v2864
  %v2866 = vpop.f32.mrf.mxu0
  %v2867 = vadd.f32 %v2824, %v2866
  %2868 = vdwg.mxu0
  %2869 = vmatprep.subr.bf16.mxu0 %v1998
  %2870 = vmatpush1.bf16.msra.mxu0 %v1997
  %2871 = vmatprep.subr.bf16.mxu0 %v1996
  %2872 = vmatpush1.bf16.msra.mxu0 %v1995
  %2873 = vmatprep.subr.bf16.mxu0 %v1994
  %2874 = vmatpush1.bf16.msra.mxu0 %v1993
  %2875 = vmatprep.subr.bf16.mxu0 %v1992
  %2876 = vmatpush1.bf16.msra.mxu0 %v1991
  %2877 = vmatprep.subr.bf16.mxu0 %v1990
  %2878 = vmatpush1.bf16.msra.mxu0 %v1989
  %2879 = vmatprep.subr.bf16.mxu0 %v1988
  %2880 = vmatpush1.bf16.msra.mxu0 %v1987
  %2881 = vmatprep.subr.bf16.mxu0 %v1986
  %2882 = vmatpush1.bf16.msra.mxu0 %v1985
  %2883 = vmatprep.subr.bf16.mxu0 %v1984
  %2884 = vmatpush1.bf16.msra.mxu0 %v1983
  %2885 = vmatprep.subr.bf16.mxu0 %v2014
  %2886 = vmatpush2.bf16.msra.mxu0 %v2013
  %2887 = vmatprep.subr.bf16.mxu0 %v2012
  %2888 = vmatpush2.bf16.msra.mxu0 %v2011
  %2889 = vmatprep.subr.bf16.mxu0 %v2010
  %2890 = vmatpush2.bf16.msra.mxu0 %v2009
  %2891 = vmatprep.subr.bf16.mxu0 %v2008
  %2892 = vmatpush2.bf16.msra.mxu0 %v2007
  %2893 = vmatprep.subr.bf16.mxu0 %v2006
  %2894 = vmatpush2.bf16.msra.mxu0 %v2005
  %2895 = vmatprep.subr.bf16.mxu0 %v2004
  %2896 = vmatpush2.bf16.msra.mxu0 %v2003
  %2897 = vmatprep.subr.bf16.mxu0 %v2002
  %2898 = vmatpush2.bf16.msra.mxu0 %v2001
  %2899 = vmatprep.subr.bf16.mxu0 %v2000
  %2900 = vmatpush2.bf16.msra.mxu0 %v1999
  %2901 = vmatprep.mubr.bf16.mxu0 %v574
  %2902 = vmatmul.mubr.bf16.gmra.mxu0 %v573
  %v2903 = vpop.f32.mrf.mxu0
  %v2904 = vadd.f32 %v2861, %v2903
  %v2905 = vpop.f32.mrf.mxu0
  %v2906 = vadd.f32 %v2863, %v2905
  %v2907 = vpop.f32.mrf.mxu0
  %v2908 = vadd.f32 %v2865, %v2907
  %v2909 = vpop.f32.mrf.mxu0
  %v2910 = vadd.f32 %v2867, %v2909
  %2911 = vdwg.mxu0
  %2912 = vmatprep.subr.bf16.mxu0 %v2030
  %2913 = vmatpush1.bf16.msra.mxu0 %v2029
  %2914 = vmatprep.subr.bf16.mxu0 %v2028
  %2915 = vmatpush1.bf16.msra.mxu0 %v2027
  %2916 = vmatprep.subr.bf16.mxu0 %v2026
  %2917 = vmatpush1.bf16.msra.mxu0 %v2025
  %2918 = vmatprep.subr.bf16.mxu0 %v2024
  %2919 = vmatpush1.bf16.msra.mxu0 %v2023
  %2920 = vmatprep.subr.bf16.mxu0 %v2022
  %2921 = vmatpush1.bf16.msra.mxu0 %v2021
  %2922 = vmatprep.subr.bf16.mxu0 %v2020
  %2923 = vmatpush1.bf16.msra.mxu0 %v2019
  %2924 = vmatprep.subr.bf16.mxu0 %v2018
  %2925 = vmatpush1.bf16.msra.mxu0 %v2017
  %2926 = vmatprep.subr.bf16.mxu0 %v2016
  %2927 = vmatpush1.bf16.msra.mxu0 %v2015
  %2928 = vmatprep.subr.bf16.mxu0 %v2046
  %2929 = vmatpush2.bf16.msra.mxu0 %v2045
  %2930 = vmatprep.subr.bf16.mxu0 %v2044
  %2931 = vmatpush2.bf16.msra.mxu0 %v2043
  %2932 = vmatprep.subr.bf16.mxu0 %v2042
  %2933 = vmatpush2.bf16.msra.mxu0 %v2041
  %2934 = vmatprep.subr.bf16.mxu0 %v2040
  %2935 = vmatpush2.bf16.msra.mxu0 %v2039
  %2936 = vmatprep.subr.bf16.mxu0 %v2038
  %2937 = vmatpush2.bf16.msra.mxu0 %v2037
  %2938 = vmatprep.subr.bf16.mxu0 %v2036
  %2939 = vmatpush2.bf16.msra.mxu0 %v2035
  %2940 = vmatprep.subr.bf16.mxu0 %v2034
  %2941 = vmatpush2.bf16.msra.mxu0 %v2033
  %2942 = vmatprep.subr.bf16.mxu0 %v2032
  %2943 = vmatpush2.bf16.msra.mxu0 %v2031
  %2944 = vmatprep.mubr.bf16.mxu0 %v576
  %2945 = vmatmul.mubr.bf16.gmra.mxu0 %v575
  %v2946 = vpop.f32.mrf.mxu0
  %v2947 = vadd.f32 %v2904, %v2946
  %v2948 = vpop.f32.mrf.mxu0
  %v2949 = vadd.f32 %v2906, %v2948
  %v2950 = vpop.f32.mrf.mxu0
  %v2951 = vadd.f32 %v2908, %v2950
  %v2952 = vpop.f32.mrf.mxu0
  %v2953 = vadd.f32 %v2910, %v2952
  %2954 = vdwg.mxu0
  %2955 = vmatprep.subr.bf16.mxu0 %v2062
  %2956 = vmatpush1.bf16.msra.mxu0 %v2061
  %2957 = vmatprep.subr.bf16.mxu0 %v2060
  %2958 = vmatpush1.bf16.msra.mxu0 %v2059
  %2959 = vmatprep.subr.bf16.mxu0 %v2058
  %2960 = vmatpush1.bf16.msra.mxu0 %v2057
  %2961 = vmatprep.subr.bf16.mxu0 %v2056
  %2962 = vmatpush1.bf16.msra.mxu0 %v2055
  %2963 = vmatprep.subr.bf16.mxu0 %v2054
  %2964 = vmatpush1.bf16.msra.mxu0 %v2053
  %2965 = vmatprep.subr.bf16.mxu0 %v2052
  %2966 = vmatpush1.bf16.msra.mxu0 %v2051
  %2967 = vmatprep.subr.bf16.mxu0 %v2050
  %2968 = vmatpush1.bf16.msra.mxu0 %v2049
  %2969 = vmatprep.subr.bf16.mxu0 %v2048
  %2970 = vmatpush1.bf16.msra.mxu0 %v2047
  %2971 = vmatprep.subr.bf16.mxu0 %v2078
  %2972 = vmatpush2.bf16.msra.mxu0 %v2077
  %2973 = vmatprep.subr.bf16.mxu0 %v2076
  %2974 = vmatpush2.bf16.msra.mxu0 %v2075
  %2975 = vmatprep.subr.bf16.mxu0 %v2074
  %2976 = vmatpush2.bf16.msra.mxu0 %v2073
  %2977 = vmatprep.subr.bf16.mxu0 %v2072
  %2978 = vmatpush2.bf16.msra.mxu0 %v2071
  %2979 = vmatprep.subr.bf16.mxu0 %v2070
  %2980 = vmatpush2.bf16.msra.mxu0 %v2069
  %2981 = vmatprep.subr.bf16.mxu0 %v2068
  %2982 = vmatpush2.bf16.msra.mxu0 %v2067
  %2983 = vmatprep.subr.bf16.mxu0 %v2066
  %2984 = vmatpush2.bf16.msra.mxu0 %v2065
  %2985 = vmatprep.subr.bf16.mxu0 %v2064
  %2986 = vmatpush2.bf16.msra.mxu0 %v2063
  %2987 = vmatprep.mubr.bf16.mxu0 %v578
  %2988 = vmatmul.mubr.bf16.gmra.mxu0 %v577
  %v2989 = vpop.f32.mrf.mxu0
  %v2990 = vadd.f32 %v2947, %v2989
  %v2991 = vpop.f32.mrf.mxu0
  %v2992 = vadd.f32 %v2949, %v2991
  %v2993 = vpop.f32.mrf.mxu0
  %v2994 = vadd.f32 %v2951, %v2993
  %v2995 = vpop.f32.mrf.mxu0
  %v2996 = vadd.f32 %v2953, %v2995
  %2997 = vdwg.mxu0
  %2998 = vmatprep.subr.bf16.mxu0 %v2094
  %2999 = vmatpush1.bf16.msra.mxu0 %v2093
  %3000 = vmatprep.subr.bf16.mxu0 %v2092
  %3001 = vmatpush1.bf16.msra.mxu0 %v2091
  %3002 = vmatprep.subr.bf16.mxu0 %v2090
  %3003 = vmatpush1.bf16.msra.mxu0 %v2089
  %3004 = vmatprep.subr.bf16.mxu0 %v2088
  %3005 = vmatpush1.bf16.msra.mxu0 %v2087
  %3006 = vmatprep.subr.bf16.mxu0 %v2086
  %3007 = vmatpush1.bf16.msra.mxu0 %v2085
  %3008 = vmatprep.subr.bf16.mxu0 %v2084
  %3009 = vmatpush1.bf16.msra.mxu0 %v2083
  %3010 = vmatprep.subr.bf16.mxu0 %v2082
  %3011 = vmatpush1.bf16.msra.mxu0 %v2081
  %3012 = vmatprep.subr.bf16.mxu0 %v2080
  %3013 = vmatpush1.bf16.msra.mxu0 %v2079
  %3014 = vmatprep.subr.bf16.mxu0 %v2110
  %3015 = vmatpush2.bf16.msra.mxu0 %v2109
  %3016 = vmatprep.subr.bf16.mxu0 %v2108
  %3017 = vmatpush2.bf16.msra.mxu0 %v2107
  %3018 = vmatprep.subr.bf16.mxu0 %v2106
  %3019 = vmatpush2.bf16.msra.mxu0 %v2105
  %3020 = vmatprep.subr.bf16.mxu0 %v2104
  %3021 = vmatpush2.bf16.msra.mxu0 %v2103
  %3022 = vmatprep.subr.bf16.mxu0 %v2102
  %3023 = vmatpush2.bf16.msra.mxu0 %v2101
  %3024 = vmatprep.subr.bf16.mxu0 %v2100
  %3025 = vmatpush2.bf16.msra.mxu0 %v2099
  %3026 = vmatprep.subr.bf16.mxu0 %v2098
  %3027 = vmatpush2.bf16.msra.mxu0 %v2097
  %3028 = vmatprep.subr.bf16.mxu0 %v2096
  %3029 = vmatpush2.bf16.msra.mxu0 %v2095
  %3030 = vmatprep.mubr.bf16.mxu0 %v580
  %3031 = vmatmul.mubr.bf16.gmra.mxu0 %v579
  %v3032 = vpop.f32.mrf.mxu0
  %v3033 = vadd.f32 %v2990, %v3032
  %v3034 = vpop.f32.mrf.mxu0
  %v3035 = vadd.f32 %v2992, %v3034
  %v3036 = vpop.f32.mrf.mxu0
  %v3037 = vadd.f32 %v2994, %v3036
  %v3038 = vpop.f32.mrf.mxu0
  %v3039 = vadd.f32 %v2996, %v3038
  %3040 = vdwg.mxu0
  %3041 = vmatprep.subr.bf16.mxu0 %v2126
  %3042 = vmatpush1.bf16.msra.mxu0 %v2125
  %3043 = vmatprep.subr.bf16.mxu0 %v2124
  %3044 = vmatpush1.bf16.msra.mxu0 %v2123
  %3045 = vmatprep.subr.bf16.mxu0 %v2122
  %3046 = vmatpush1.bf16.msra.mxu0 %v2121
  %3047 = vmatprep.subr.bf16.mxu0 %v2120
  %3048 = vmatpush1.bf16.msra.mxu0 %v2119
  %3049 = vmatprep.subr.bf16.mxu0 %v2118
  %3050 = vmatpush1.bf16.msra.mxu0 %v2117
  %3051 = vmatprep.subr.bf16.mxu0 %v2116
  %3052 = vmatpush1.bf16.msra.mxu0 %v2115
  %3053 = vmatprep.subr.bf16.mxu0 %v2114
  %3054 = vmatpush1.bf16.msra.mxu0 %v2113
  %3055 = vmatprep.subr.bf16.mxu0 %v2112
  %3056 = vmatpush1.bf16.msra.mxu0 %v2111
  %3057 = vmatprep.subr.bf16.mxu0 %v2142
  %3058 = vmatpush2.bf16.msra.mxu0 %v2141
  %3059 = vmatprep.subr.bf16.mxu0 %v2140
  %3060 = vmatpush2.bf16.msra.mxu0 %v2139
  %3061 = vmatprep.subr.bf16.mxu0 %v2138
  %3062 = vmatpush2.bf16.msra.mxu0 %v2137
  %3063 = vmatprep.subr.bf16.mxu0 %v2136
  %3064 = vmatpush2.bf16.msra.mxu0 %v2135
  %3065 = vmatprep.subr.bf16.mxu0 %v2134
  %3066 = vmatpush2.bf16.msra.mxu0 %v2133
  %3067 = vmatprep.subr.bf16.mxu0 %v2132
  %3068 = vmatpush2.bf16.msra.mxu0 %v2131
  %3069 = vmatprep.subr.bf16.mxu0 %v2130
  %3070 = vmatpush2.bf16.msra.mxu0 %v2129
  %3071 = vmatprep.subr.bf16.mxu0 %v2128
  %3072 = vmatpush2.bf16.msra.mxu0 %v2127
  %3073 = vmatprep.mubr.bf16.mxu0 %v582
  %3074 = vmatmul.mubr.bf16.gmra.mxu0 %v581
  %v3075 = vpop.f32.mrf.mxu0
  %v3076 = vadd.f32 %v3033, %v3075
  %v3077 = vpop.f32.mrf.mxu0
  %v3078 = vadd.f32 %v3035, %v3077
  %v3079 = vpop.f32.mrf.mxu0
  %v3080 = vadd.f32 %v3037, %v3079
  %v3081 = vpop.f32.mrf.mxu0
  %v3082 = vadd.f32 %v3039, %v3081
  %3083 = vdwg.mxu0
  %3084 = vmatprep.subr.bf16.mxu0 %v2158
  %3085 = vmatpush1.bf16.msra.mxu0 %v2157
  %3086 = vmatprep.subr.bf16.mxu0 %v2156
  %3087 = vmatpush1.bf16.msra.mxu0 %v2155
  %3088 = vmatprep.subr.bf16.mxu0 %v2154
  %3089 = vmatpush1.bf16.msra.mxu0 %v2153
  %3090 = vmatprep.subr.bf16.mxu0 %v2152
  %3091 = vmatpush1.bf16.msra.mxu0 %v2151
  %3092 = vmatprep.subr.bf16.mxu0 %v2150
  %3093 = vmatpush1.bf16.msra.mxu0 %v2149
  %3094 = vmatprep.subr.bf16.mxu0 %v2148
  %3095 = vmatpush1.bf16.msra.mxu0 %v2147
  %3096 = vmatprep.subr.bf16.mxu0 %v2146
  %3097 = vmatpush1.bf16.msra.mxu0 %v2145
  %3098 = vmatprep.subr.bf16.mxu0 %v2144
  %3099 = vmatpush1.bf16.msra.mxu0 %v2143
  %3100 = vmatprep.subr.bf16.mxu0 %v2174
  %3101 = vmatpush2.bf16.msra.mxu0 %v2173
  %3102 = vmatprep.subr.bf16.mxu0 %v2172
  %3103 = vmatpush2.bf16.msra.mxu0 %v2171
  %3104 = vmatprep.subr.bf16.mxu0 %v2170
  %3105 = vmatpush2.bf16.msra.mxu0 %v2169
  %3106 = vmatprep.subr.bf16.mxu0 %v2168
  %3107 = vmatpush2.bf16.msra.mxu0 %v2167
  %3108 = vmatprep.subr.bf16.mxu0 %v2166
  %3109 = vmatpush2.bf16.msra.mxu0 %v2165
  %3110 = vmatprep.subr.bf16.mxu0 %v2164
  %3111 = vmatpush2.bf16.msra.mxu0 %v2163
  %3112 = vmatprep.subr.bf16.mxu0 %v2162
  %3113 = vmatpush2.bf16.msra.mxu0 %v2161
  %3114 = vmatprep.subr.bf16.mxu0 %v2160
  %3115 = vmatpush2.bf16.msra.mxu0 %v2159
  %3116 = vmatprep.mubr.bf16.mxu0 %v584
  %3117 = vmatmul.mubr.bf16.gmra.mxu0 %v583
  %v3118 = vpop.f32.mrf.mxu0
  %v3119 = vadd.f32 %v3076, %v3118
  %v3120 = vpop.f32.mrf.mxu0
  %v3121 = vadd.f32 %v3078, %v3120
  %v3122 = vpop.f32.mrf.mxu0
  %v3123 = vadd.f32 %v3080, %v3122
  %v3124 = vpop.f32.mrf.mxu0
  %v3125 = vadd.f32 %v3082, %v3124
  %3126 = vdwg.mxu0
  %3127 = vmatprep.subr.bf16.mxu0 %v2190
  %3128 = vmatpush1.bf16.msra.mxu0 %v2189
  %3129 = vmatprep.subr.bf16.mxu0 %v2188
  %3130 = vmatpush1.bf16.msra.mxu0 %v2187
  %3131 = vmatprep.subr.bf16.mxu0 %v2186
  %3132 = vmatpush1.bf16.msra.mxu0 %v2185
  %3133 = vmatprep.subr.bf16.mxu0 %v2184
  %3134 = vmatpush1.bf16.msra.mxu0 %v2183
  %3135 = vmatprep.subr.bf16.mxu0 %v2182
  %3136 = vmatpush1.bf16.msra.mxu0 %v2181
  %3137 = vmatprep.subr.bf16.mxu0 %v2180
  %3138 = vmatpush1.bf16.msra.mxu0 %v2179
  %3139 = vmatprep.subr.bf16.mxu0 %v2178
  %3140 = vmatpush1.bf16.msra.mxu0 %v2177
  %3141 = vmatprep.subr.bf16.mxu0 %v2176
  %3142 = vmatpush1.bf16.msra.mxu0 %v2175
  %3143 = vmatprep.subr.bf16.mxu0 %v2206
  %3144 = vmatpush2.bf16.msra.mxu0 %v2205
  %3145 = vmatprep.subr.bf16.mxu0 %v2204
  %3146 = vmatpush2.bf16.msra.mxu0 %v2203
  %3147 = vmatprep.subr.bf16.mxu0 %v2202
  %3148 = vmatpush2.bf16.msra.mxu0 %v2201
  %3149 = vmatprep.subr.bf16.mxu0 %v2200
  %3150 = vmatpush2.bf16.msra.mxu0 %v2199
  %3151 = vmatprep.subr.bf16.mxu0 %v2198
  %3152 = vmatpush2.bf16.msra.mxu0 %v2197
  %3153 = vmatprep.subr.bf16.mxu0 %v2196
  %3154 = vmatpush2.bf16.msra.mxu0 %v2195
  %3155 = vmatprep.subr.bf16.mxu0 %v2194
  %3156 = vmatpush2.bf16.msra.mxu0 %v2193
  %3157 = vmatprep.subr.bf16.mxu0 %v2192
  %3158 = vmatpush2.bf16.msra.mxu0 %v2191
  %3159 = vmatprep.mubr.bf16.mxu0 %v586
  %3160 = vmatmul.mubr.bf16.gmra.mxu0 %v585
  %v3161 = vpop.f32.mrf.mxu0
  %v3162 = vadd.f32 %v3119, %v3161
  %v3163 = vpop.f32.mrf.mxu0
  %v3164 = vadd.f32 %v3121, %v3163
  %v3165 = vpop.f32.mrf.mxu0
  %v3166 = vadd.f32 %v3123, %v3165
  %v3167 = vpop.f32.mrf.mxu0
  %v3168 = vadd.f32 %v3125, %v3167
  %3169 = vdwg.mxu0
  %3170 = vmatprep.subr.bf16.mxu0 %v2222
  %3171 = vmatpush1.bf16.msra.mxu0 %v2221
  %3172 = vmatprep.subr.bf16.mxu0 %v2220
  %3173 = vmatpush1.bf16.msra.mxu0 %v2219
  %3174 = vmatprep.subr.bf16.mxu0 %v2218
  %3175 = vmatpush1.bf16.msra.mxu0 %v2217
  %3176 = vmatprep.subr.bf16.mxu0 %v2216
  %3177 = vmatpush1.bf16.msra.mxu0 %v2215
  %3178 = vmatprep.subr.bf16.mxu0 %v2214
  %3179 = vmatpush1.bf16.msra.mxu0 %v2213
  %3180 = vmatprep.subr.bf16.mxu0 %v2212
  %3181 = vmatpush1.bf16.msra.mxu0 %v2211
  %3182 = vmatprep.subr.bf16.mxu0 %v2210
  %3183 = vmatpush1.bf16.msra.mxu0 %v2209
  %3184 = vmatprep.subr.bf16.mxu0 %v2208
  %3185 = vmatpush1.bf16.msra.mxu0 %v2207
  %3186 = vmatprep.subr.bf16.mxu0 %v2238
  %3187 = vmatpush2.bf16.msra.mxu0 %v2237
  %3188 = vmatprep.subr.bf16.mxu0 %v2236
  %3189 = vmatpush2.bf16.msra.mxu0 %v2235
  %3190 = vmatprep.subr.bf16.mxu0 %v2234
  %3191 = vmatpush2.bf16.msra.mxu0 %v2233
  %3192 = vmatprep.subr.bf16.mxu0 %v2232
  %3193 = vmatpush2.bf16.msra.mxu0 %v2231
  %3194 = vmatprep.subr.bf16.mxu0 %v2230
  %3195 = vmatpush2.bf16.msra.mxu0 %v2229
  %3196 = vmatprep.subr.bf16.mxu0 %v2228
  %3197 = vmatpush2.bf16.msra.mxu0 %v2227
  %3198 = vmatprep.subr.bf16.mxu0 %v2226
  %3199 = vmatpush2.bf16.msra.mxu0 %v2225
  %3200 = vmatprep.subr.bf16.mxu0 %v2224
  %3201 = vmatpush2.bf16.msra.mxu0 %v2223
  %3202 = vmatprep.mubr.bf16.mxu0 %v588
  %3203 = vmatmul.mubr.bf16.gmra.mxu0 %v587
  %v3204 = vpop.f32.mrf.mxu0
  %v3205 = vadd.f32 %v3162, %v3204
  %v3206 = vpop.f32.mrf.mxu0
  %v3207 = vadd.f32 %v3164, %v3206
  %v3208 = vpop.f32.mrf.mxu0
  %v3209 = vadd.f32 %v3166, %v3208
  %v3210 = vpop.f32.mrf.mxu0
  %v3211 = vadd.f32 %v3168, %v3210
  %3212 = vdwg.mxu0
  %3213 = vmatprep.subr.bf16.mxu0 %v2254
  %3214 = vmatpush1.bf16.msra.mxu0 %v2253
  %3215 = vmatprep.subr.bf16.mxu0 %v2252
  %3216 = vmatpush1.bf16.msra.mxu0 %v2251
  %3217 = vmatprep.subr.bf16.mxu0 %v2250
  %3218 = vmatpush1.bf16.msra.mxu0 %v2249
  %3219 = vmatprep.subr.bf16.mxu0 %v2248
  %3220 = vmatpush1.bf16.msra.mxu0 %v2247
  %3221 = vmatprep.subr.bf16.mxu0 %v2246
  %3222 = vmatpush1.bf16.msra.mxu0 %v2245
  %3223 = vmatprep.subr.bf16.mxu0 %v2244
  %3224 = vmatpush1.bf16.msra.mxu0 %v2243
  %3225 = vmatprep.subr.bf16.mxu0 %v2242
  %3226 = vmatpush1.bf16.msra.mxu0 %v2241
  %3227 = vmatprep.subr.bf16.mxu0 %v2240
  %3228 = vmatpush1.bf16.msra.mxu0 %v2239
  %3229 = vmatprep.subr.bf16.mxu0 %v2270
  %3230 = vmatpush2.bf16.msra.mxu0 %v2269
  %3231 = vmatprep.subr.bf16.mxu0 %v2268
  %3232 = vmatpush2.bf16.msra.mxu0 %v2267
  %3233 = vmatprep.subr.bf16.mxu0 %v2266
  %3234 = vmatpush2.bf16.msra.mxu0 %v2265
  %3235 = vmatprep.subr.bf16.mxu0 %v2264
  %3236 = vmatpush2.bf16.msra.mxu0 %v2263
  %3237 = vmatprep.subr.bf16.mxu0 %v2262
  %3238 = vmatpush2.bf16.msra.mxu0 %v2261
  %3239 = vmatprep.subr.bf16.mxu0 %v2260
  %3240 = vmatpush2.bf16.msra.mxu0 %v2259
  %3241 = vmatprep.subr.bf16.mxu0 %v2258
  %3242 = vmatpush2.bf16.msra.mxu0 %v2257
  %3243 = vmatprep.subr.bf16.mxu0 %v2256
  %3244 = vmatpush2.bf16.msra.mxu0 %v2255
  %3245 = vmatprep.mubr.bf16.mxu0 %v590
  %3246 = vmatmul.mubr.bf16.gmra.mxu0 %v589
  %v3247 = vpop.f32.mrf.mxu0
  %v3248 = vadd.f32 %v3205, %v3247
  %v3249 = vpop.f32.mrf.mxu0
  %v3250 = vadd.f32 %v3207, %v3249
  %v3251 = vpop.f32.mrf.mxu0
  %v3252 = vadd.f32 %v3209, %v3251
  %v3253 = vpop.f32.mrf.mxu0
  %v3254 = vadd.f32 %v3211, %v3253
  %3255 = vdwg.mxu0
  %3256 = vmatprep.subr.bf16.mxu0 %v2286
  %3257 = vmatpush1.bf16.msra.mxu0 %v2285
  %3258 = vmatprep.subr.bf16.mxu0 %v2284
  %3259 = vmatpush1.bf16.msra.mxu0 %v2283
  %3260 = vmatprep.subr.bf16.mxu0 %v2282
  %3261 = vmatpush1.bf16.msra.mxu0 %v2281
  %3262 = vmatprep.subr.bf16.mxu0 %v2280
  %3263 = vmatpush1.bf16.msra.mxu0 %v2279
  %3264 = vmatprep.subr.bf16.mxu0 %v2278
  %3265 = vmatpush1.bf16.msra.mxu0 %v2277
  %3266 = vmatprep.subr.bf16.mxu0 %v2276
  %3267 = vmatpush1.bf16.msra.mxu0 %v2275
  %3268 = vmatprep.subr.bf16.mxu0 %v2274
  %3269 = vmatpush1.bf16.msra.mxu0 %v2273
  %3270 = vmatprep.subr.bf16.mxu0 %v2272
  %3271 = vmatpush1.bf16.msra.mxu0 %v2271
  %3272 = vmatprep.subr.bf16.mxu0 %v2302
  %3273 = vmatpush2.bf16.msra.mxu0 %v2301
  %3274 = vmatprep.subr.bf16.mxu0 %v2300
  %3275 = vmatpush2.bf16.msra.mxu0 %v2299
  %3276 = vmatprep.subr.bf16.mxu0 %v2298
  %3277 = vmatpush2.bf16.msra.mxu0 %v2297
  %3278 = vmatprep.subr.bf16.mxu0 %v2296
  %3279 = vmatpush2.bf16.msra.mxu0 %v2295
  %3280 = vmatprep.subr.bf16.mxu0 %v2294
  %3281 = vmatpush2.bf16.msra.mxu0 %v2293
  %3282 = vmatprep.subr.bf16.mxu0 %v2292
  %3283 = vmatpush2.bf16.msra.mxu0 %v2291
  %3284 = vmatprep.subr.bf16.mxu0 %v2290
  %3285 = vmatpush2.bf16.msra.mxu0 %v2289
  %3286 = vmatprep.subr.bf16.mxu0 %v2288
  %3287 = vmatpush2.bf16.msra.mxu0 %v2287
  %3288 = vmatprep.mubr.bf16.mxu0 %v592
  %3289 = vmatmul.mubr.bf16.gmra.mxu0 %v591
  %v3290 = vpop.f32.mrf.mxu0
  %v3291 = vadd.f32 %v3248, %v3290
  %v3292 = vpop.f32.mrf.mxu0
  %v3293 = vadd.f32 %v3250, %v3292
  %v3294 = vpop.f32.mrf.mxu0
  %v3295 = vadd.f32 %v3252, %v3294
  %v3296 = vpop.f32.mrf.mxu0
  %v3297 = vadd.f32 %v3254, %v3296
  %3298 = vdwg.mxu0
  %3299 = vmatprep.subr.bf16.mxu0 %v2318
  %3300 = vmatpush1.bf16.msra.mxu0 %v2317
  %3301 = vmatprep.subr.bf16.mxu0 %v2316
  %3302 = vmatpush1.bf16.msra.mxu0 %v2315
  %3303 = vmatprep.subr.bf16.mxu0 %v2314
  %3304 = vmatpush1.bf16.msra.mxu0 %v2313
  %3305 = vmatprep.subr.bf16.mxu0 %v2312
  %3306 = vmatpush1.bf16.msra.mxu0 %v2311
  %3307 = vmatprep.subr.bf16.mxu0 %v2310
  %3308 = vmatpush1.bf16.msra.mxu0 %v2309
  %3309 = vmatprep.subr.bf16.mxu0 %v2308
  %3310 = vmatpush1.bf16.msra.mxu0 %v2307
  %3311 = vmatprep.subr.bf16.mxu0 %v2306
  %3312 = vmatpush1.bf16.msra.mxu0 %v2305
  %3313 = vmatprep.subr.bf16.mxu0 %v2304
  %3314 = vmatpush1.bf16.msra.mxu0 %v2303
  %3315 = vmatprep.subr.bf16.mxu0 %v2334
  %3316 = vmatpush2.bf16.msra.mxu0 %v2333
  %3317 = vmatprep.subr.bf16.mxu0 %v2332
  %3318 = vmatpush2.bf16.msra.mxu0 %v2331
  %3319 = vmatprep.subr.bf16.mxu0 %v2330
  %3320 = vmatpush2.bf16.msra.mxu0 %v2329
  %3321 = vmatprep.subr.bf16.mxu0 %v2328
  %3322 = vmatpush2.bf16.msra.mxu0 %v2327
  %3323 = vmatprep.subr.bf16.mxu0 %v2326
  %3324 = vmatpush2.bf16.msra.mxu0 %v2325
  %3325 = vmatprep.subr.bf16.mxu0 %v2324
  %3326 = vmatpush2.bf16.msra.mxu0 %v2323
  %3327 = vmatprep.subr.bf16.mxu0 %v2322
  %3328 = vmatpush2.bf16.msra.mxu0 %v2321
  %3329 = vmatprep.subr.bf16.mxu0 %v2320
  %3330 = vmatpush2.bf16.msra.mxu0 %v2319
  %3331 = vmatprep.mubr.bf16.mxu0 %v594
  %3332 = vmatmul.mubr.bf16.gmra.mxu0 %v593
  %v3333 = vpop.f32.mrf.mxu0
  %v3334 = vadd.f32 %v3291, %v3333
  %v3335 = vpop.f32.mrf.mxu0
  %v3336 = vadd.f32 %v3293, %v3335
  %v3337 = vpop.f32.mrf.mxu0
  %v3338 = vadd.f32 %v3295, %v3337
  %v3339 = vpop.f32.mrf.mxu0
  %v3340 = vadd.f32 %v3297, %v3339
  %3341 = vdwg.mxu0
  %3342 = vmatprep.subr.bf16.mxu0 %v2350
  %3343 = vmatpush1.bf16.msra.mxu0 %v2349
  %3344 = vmatprep.subr.bf16.mxu0 %v2348
  %3345 = vmatpush1.bf16.msra.mxu0 %v2347
  %3346 = vmatprep.subr.bf16.mxu0 %v2346
  %3347 = vmatpush1.bf16.msra.mxu0 %v2345
  %3348 = vmatprep.subr.bf16.mxu0 %v2344
  %3349 = vmatpush1.bf16.msra.mxu0 %v2343
  %3350 = vmatprep.subr.bf16.mxu0 %v2342
  %3351 = vmatpush1.bf16.msra.mxu0 %v2341
  %3352 = vmatprep.subr.bf16.mxu0 %v2340
  %3353 = vmatpush1.bf16.msra.mxu0 %v2339
  %3354 = vmatprep.subr.bf16.mxu0 %v2338
  %3355 = vmatpush1.bf16.msra.mxu0 %v2337
  %3356 = vmatprep.subr.bf16.mxu0 %v2336
  %3357 = vmatpush1.bf16.msra.mxu0 %v2335
  %3358 = vmatprep.subr.bf16.mxu0 0
  %3359 = vmatpush2.bf16.msra.mxu0 0
  %3360 = vmatprep.subr.bf16.mxu0 0
  %3361 = vmatpush2.bf16.msra.mxu0 0
  %3362 = vmatprep.subr.bf16.mxu0 0
  %3363 = vmatpush2.bf16.msra.mxu0 0
  %3364 = vmatprep.subr.bf16.mxu0 0
  %3365 = vmatpush2.bf16.msra.mxu0 0
  %3366 = vmatprep.subr.bf16.mxu0 0
  %3367 = vmatpush2.bf16.msra.mxu0 0
  %3368 = vmatprep.subr.bf16.mxu0 0
  %3369 = vmatpush2.bf16.msra.mxu0 0
  %3370 = vmatprep.subr.bf16.mxu0 0
  %3371 = vmatpush2.bf16.msra.mxu0 0
  %3372 = vmatprep.subr.bf16.mxu0 0
  %3373 = vmatpush2.bf16.msra.mxu0 0
  %3374 = vmatprep.mubr.bf16.mxu0 0
  %3375 = vmatmul.mubr.bf16.gmra.mxu0 %v595
  %v3376 = vpop.f32.mrf.mxu0
  %v3377 = vadd.f32 %v3334, %v3376
  %v3378 = vpop.f32.mrf.mxu0
  %v3379 = vadd.f32 %v3336, %v3378
  %v3380 = vpop.f32.mrf.mxu0
  %v3381 = vadd.f32 %v3338, %v3380
  %v3382 = vpop.f32.mrf.mxu0
  %v3383 = vadd.f32 %v3340, %v3382
  %3384 = vdwg.mxu0
  %v3385 = vmax.f32 %v3377, 0.0
  %v3386 = vmax.f32 %v3379, 0.0
  %v3387 = vmax.f32 %v3381, 0.0
  %v3388 = vmax.f32 %v3383, 0.0
  %v3389 = vpack.c.bf16 %v3387, %v3385
  %v3390 = vpack.c.bf16 %v3388, %v3386
  %v3393 = vunpack.c.l.b16 %v3389
  %v3394 = vunpack.c.l.b16 %v3390
  %v3395 = vunpack.c.h.b16 %v3389
  %v3396 = vunpack.c.h.b16 %v3390
  %v3397 = vpack.c.b16 %v3394, %v3393
  %v3398 = vpack.c.b16 %v3396, %v3395
  %3401 = vst [vmem:[%s3] sm:$0xff] %v3397
  %3402 = vst [vmem:[%s3 + $0x8] sm:$0xff] %v3398
  // Predicated region
  $region14: #{lpips_loss.20} parent=0 // pred_check
    _
  $region15: #{lpips_loss.20} parent=0 // pred_check_branch
    %3404 = sbr.rel (0) target = $region17
  $region16: #{lpips_loss.20} parent=0 // pred_region
    _
  $region17: #{lpips_loss.20} parent=0 // pred_fallthru
    _
  // Predicated region
  $region18: #{lpips_loss.20} parent=0 // pred_check
    _
  $region19: #{lpips_loss.20} parent=0 // pred_check_branch
    %3406 = sbr.rel (0) target = $region21
  $region20: #{lpips_loss.20} parent=0 // pred_region
    _
  $region21: #{lpips_loss.20} parent=0 // pred_fallthru
    _

// kernel: lpips_loss.21
$region0: #{lpips_loss.21}
  #allocation0 [shape = 'u32[]', space=smem, size = 0x4, offset = 0x4, fixed_abs, tag = 'smem constant byte address 0x4 - core index']
  #allocation1 [shape = 'u32[144,128]{1,0:T(1,128)}', space=vmem, size = 0x12000, scoped, tag = 'internal scratch']
  %s0 = inlined_call_operand.vmem [shape: bf16[16,2304], index: 0, kind: input, shape index: {}]
  %s1 = inlined_call_operand.vmem [shape: bf16[2304,256], index: 1, kind: input, shape index: {}]
  %s2 = inlined_call_operand.vmem [shape: f32[1,256], index: 2, kind: input, shape index: {}]
  %s3 = inlined_call_operand.vmem [shape: bf16[16,256], index: 3, kind: output, shape index: {}]
  %s4 = sld [smem:[#allocation0]]
  $region22: #{lpips_loss.21} parent=0
    _
  %s6 = ssub.s32 1, %s4
  %s7 = scalar_select 0, %s6, %s4
  // Predicated region
  $region2: #{lpips_loss.21} parent=0 // pred_check
    _
  $region3: #{lpips_loss.21} parent=0 // pred_check_branch
    %9 = sbr.rel (0) target = $region5
  $region4: #{lpips_loss.21} parent=0 // pred_region
    _
  $region5: #{lpips_loss.21} parent=0 // pred_fallthru
    _
  // Predicated region
  $region6: #{lpips_loss.21} parent=0 // pred_check
    _
  $region7: #{lpips_loss.21} parent=0 // pred_check_branch
    %11 = sbr.rel (0) target = $region9
  $region8: #{lpips_loss.21} parent=0 // pred_region
    _
  $region9: #{lpips_loss.21} parent=0 // pred_fallthru
    _
  // Predicated region
  $region10: #{lpips_loss.21} parent=0 // pred_check
    _
  $region11: #{lpips_loss.21} parent=0 // pred_check_branch
    %13 = sbr.rel (0) target = $region13
  $region12: #{lpips_loss.21} parent=0 // pred_region
    _
  $region13: #{lpips_loss.21} parent=0 // pred_fallthru
    _
  %v14 = vld [vmem:[%s0] sm:$0xff]
  %v15 = vld [vmem:[%s0 + $0x8] sm:$0xff]
  %v16 = vld [vmem:[%s0 + $0x10] sm:$0xff]
  %v17 = vld [vmem:[%s0 + $0x18] sm:$0xff]
  %v18 = vld [vmem:[%s0 + $0x20] sm:$0xff]
  %v19 = vld [vmem:[%s0 + $0x28] sm:$0xff]
  %v20 = vld [vmem:[%s0 + $0x30] sm:$0xff]
  %v21 = vld [vmem:[%s0 + $0x38] sm:$0xff]
  %v22 = vld [vmem:[%s0 + $0x40] sm:$0xff]
  %v23 = vld [vmem:[%s0 + $0x48] sm:$0xff]
  %v24 = vld [vmem:[%s0 + $0x50] sm:$0xff]
  %v25 = vld [vmem:[%s0 + $0x58] sm:$0xff]
  %v26 = vld [vmem:[%s0 + $0x60] sm:$0xff]
  %v27 = vld [vmem:[%s0 + $0x68] sm:$0xff]
  %v28 = vld [vmem:[%s0 + $0x70] sm:$0xff]
  %v29 = vld [vmem:[%s0 + $0x78] sm:$0xff]
  %v30 = vld [vmem:[%s0 + $0x80] sm:$0xff]
  %v31 = vld [vmem:[%s0 + $0x88] sm:$0xff]
  %v32 = vld [vmem:[%s1] sm:$0xff]
  %v33 = vld [vmem:[%s1 + $0x8] sm:$0xff]
  %v34 = vld [vmem:[%s1 + $0x10] sm:$0xff]
  %v35 = vld [vmem:[%s1 + $0x18] sm:$0xff]
  %v36 = vld [vmem:[%s1 + $0x20] sm:$0xff]
  %v37 = vld [vmem:[%s1 + $0x28] sm:$0xff]
  %v38 = vld [vmem:[%s1 + $0x30] sm:$0xff]
  %v39 = vld [vmem:[%s1 + $0x38] sm:$0xff]
  %v40 = vld [vmem:[%s1 + $0x40] sm:$0xff]
  %v41 = vld [vmem:[%s1 + $0x48] sm:$0xff]
  %v42 = vld [vmem:[%s1 + $0x50] sm:$0xff]
  %v43 = vld [vmem:[%s1 + $0x58] sm:$0xff]
  %v44 = vld [vmem:[%s1 + $0x60] sm:$0xff]
  %v45 = vld [vmem:[%s1 + $0x68] sm:$0xff]
  %v46 = vld [vmem:[%s1 + $0x70] sm:$0xff]
  %v47 = vld [vmem:[%s1 + $0x78] sm:$0xff]
  %v48 = vld [vmem:[%s1 + $0x80] sm:$0xff]
  %v49 = vld [vmem:[%s1 + $0x88] sm:$0xff]
  %v50 = vld [vmem:[%s1 + $0x90] sm:$0xff]
  %v51 = vld [vmem:[%s1 + $0x98] sm:$0xff]
  %v52 = vld [vmem:[%s1 + $0xa0] sm:$0xff]
  %v53 = vld [vmem:[%s1 + $0xa8] sm:$0xff]
  %v54 = vld [vmem:[%s1 + $0xb0] sm:$0xff]
  %v55 = vld [vmem:[%s1 + $0xb8] sm:$0xff]
  %v56 = vld [vmem:[%s1 + $0xc0] sm:$0xff]
  %v57 = vld [vmem:[%s1 + $0xc8] sm:$0xff]
  %v58 = vld [vmem:[%s1 + $0xd0] sm:$0xff]
  %v59 = vld [vmem:[%s1 + $0xd8] sm:$0xff]
  %v60 = vld [vmem:[%s1 + $0xe0] sm:$0xff]
  %v61 = vld [vmem:[%s1 + $0xe8] sm:$0xff]
  %v62 = vld [vmem:[%s1 + $0xf0] sm:$0xff]
  %v63 = vld [vmem:[%s1 + $0xf8] sm:$0xff]
  %v64 = vld [vmem:[%s1 + $0x100] sm:$0xff]
  %v65 = vld [vmem:[%s1 + $0x108] sm:$0xff]
  %v66 = vld [vmem:[%s1 + $0x110] sm:$0xff]
  %v67 = vld [vmem:[%s1 + $0x118] sm:$0xff]
  %v68 = vld [vmem:[%s1 + $0x120] sm:$0xff]
  %v69 = vld [vmem:[%s1 + $0x128] sm:$0xff]
  %v70 = vld [vmem:[%s1 + $0x130] sm:$0xff]
  %v71 = vld [vmem:[%s1 + $0x138] sm:$0xff]
  %v72 = vld [vmem:[%s1 + $0x140] sm:$0xff]
  %v73 = vld [vmem:[%s1 + $0x148] sm:$0xff]
  %v74 = vld [vmem:[%s1 + $0x150] sm:$0xff]
  %v75 = vld [vmem:[%s1 + $0x158] sm:$0xff]
  %v76 = vld [vmem:[%s1 + $0x160] sm:$0xff]
  %v77 = vld [vmem:[%s1 + $0x168] sm:$0xff]
  %v78 = vld [vmem:[%s1 + $0x170] sm:$0xff]
  %v79 = vld [vmem:[%s1 + $0x178] sm:$0xff]
  %v80 = vld [vmem:[%s1 + $0x180] sm:$0xff]
  %v81 = vld [vmem:[%s1 + $0x188] sm:$0xff]
  %v82 = vld [vmem:[%s1 + $0x190] sm:$0xff]
  %v83 = vld [vmem:[%s1 + $0x198] sm:$0xff]
  %v84 = vld [vmem:[%s1 + $0x1a0] sm:$0xff]
  %v85 = vld [vmem:[%s1 + $0x1a8] sm:$0xff]
  %v86 = vld [vmem:[%s1 + $0x1b0] sm:$0xff]
  %v87 = vld [vmem:[%s1 + $0x1b8] sm:$0xff]
  %v88 = vld [vmem:[%s1 + $0x1c0] sm:$0xff]
  %v89 = vld [vmem:[%s1 + $0x1c8] sm:$0xff]
  %v90 = vld [vmem:[%s1 + $0x1d0] sm:$0xff]
  %v91 = vld [vmem:[%s1 + $0x1d8] sm:$0xff]
  %v92 = vld [vmem:[%s1 + $0x1e0] sm:$0xff]
  %v93 = vld [vmem:[%s1 + $0x1e8] sm:$0xff]
  %v94 = vld [vmem:[%s1 + $0x1f0] sm:$0xff]
  %v95 = vld [vmem:[%s1 + $0x1f8] sm:$0xff]
  %v96 = vld [vmem:[%s1 + $0x200] sm:$0xff]
  %v97 = vld [vmem:[%s1 + $0x208] sm:$0xff]
  %v98 = vld [vmem:[%s1 + $0x210] sm:$0xff]
  %v99 = vld [vmem:[%s1 + $0x218] sm:$0xff]
  %v100 = vld [vmem:[%s1 + $0x220] sm:$0xff]
  %v101 = vld [vmem:[%s1 + $0x228] sm:$0xff]
  %v102 = vld [vmem:[%s1 + $0x230] sm:$0xff]
  %v103 = vld [vmem:[%s1 + $0x238] sm:$0xff]
  %v104 = vld [vmem:[%s1 + $0x240] sm:$0xff]
  %v105 = vld [vmem:[%s1 + $0x248] sm:$0xff]
  %v106 = vld [vmem:[%s1 + $0x250] sm:$0xff]
  %v107 = vld [vmem:[%s1 + $0x258] sm:$0xff]
  %v108 = vld [vmem:[%s1 + $0x260] sm:$0xff]
  %v109 = vld [vmem:[%s1 + $0x268] sm:$0xff]
  %v110 = vld [vmem:[%s1 + $0x270] sm:$0xff]
  %v111 = vld [vmem:[%s1 + $0x278] sm:$0xff]
  %v112 = vld [vmem:[%s1 + $0x280] sm:$0xff]
  %v113 = vld [vmem:[%s1 + $0x288] sm:$0xff]
  %v114 = vld [vmem:[%s1 + $0x290] sm:$0xff]
  %v115 = vld [vmem:[%s1 + $0x298] sm:$0xff]
  %v116 = vld [vmem:[%s1 + $0x2a0] sm:$0xff]
  %v117 = vld [vmem:[%s1 + $0x2a8] sm:$0xff]
  %v118 = vld [vmem:[%s1 + $0x2b0] sm:$0xff]
  %v119 = vld [vmem:[%s1 + $0x2b8] sm:$0xff]
  %v120 = vld [vmem:[%s1 + $0x2c0] sm:$0xff]
  %v121 = vld [vmem:[%s1 + $0x2c8] sm:$0xff]
  %v122 = vld [vmem:[%s1 + $0x2d0] sm:$0xff]
  %v123 = vld [vmem:[%s1 + $0x2d8] sm:$0xff]
  %v124 = vld [vmem:[%s1 + $0x2e0] sm:$0xff]
  %v125 = vld [vmem:[%s1 + $0x2e8] sm:$0xff]
  %v126 = vld [vmem:[%s1 + $0x2f0] sm:$0xff]
  %v127 = vld [vmem:[%s1 + $0x2f8] sm:$0xff]
  %v128 = vld [vmem:[%s1 + $0x300] sm:$0xff]
  %v129 = vld [vmem:[%s1 + $0x308] sm:$0xff]
  %v130 = vld [vmem:[%s1 + $0x310] sm:$0xff]
  %v131 = vld [vmem:[%s1 + $0x318] sm:$0xff]
  %v132 = vld [vmem:[%s1 + $0x320] sm:$0xff]
  %v133 = vld [vmem:[%s1 + $0x328] sm:$0xff]
  %v134 = vld [vmem:[%s1 + $0x330] sm:$0xff]
  %v135 = vld [vmem:[%s1 + $0x338] sm:$0xff]
  %v136 = vld [vmem:[%s1 + $0x340] sm:$0xff]
  %v137 = vld [vmem:[%s1 + $0x348] sm:$0xff]
  %v138 = vld [vmem:[%s1 + $0x350] sm:$0xff]
  %v139 = vld [vmem:[%s1 + $0x358] sm:$0xff]
  %v140 = vld [vmem:[%s1 + $0x360] sm:$0xff]
  %v141 = vld [vmem:[%s1 + $0x368] sm:$0xff]
  %v142 = vld [vmem:[%s1 + $0x370] sm:$0xff]
  %v143 = vld [vmem:[%s1 + $0x378] sm:$0xff]
  %v144 = vld [vmem:[%s1 + $0x380] sm:$0xff]
  %v145 = vld [vmem:[%s1 + $0x388] sm:$0xff]
  %v146 = vld [vmem:[%s1 + $0x390] sm:$0xff]
  %v147 = vld [vmem:[%s1 + $0x398] sm:$0xff]
  %v148 = vld [vmem:[%s1 + $0x3a0] sm:$0xff]
  %v149 = vld [vmem:[%s1 + $0x3a8] sm:$0xff]
  %v150 = vld [vmem:[%s1 + $0x3b0] sm:$0xff]
  %v151 = vld [vmem:[%s1 + $0x3b8] sm:$0xff]
  %v152 = vld [vmem:[%s1 + $0x3c0] sm:$0xff]
  %v153 = vld [vmem:[%s1 + $0x3c8] sm:$0xff]
  %v154 = vld [vmem:[%s1 + $0x3d0] sm:$0xff]
  %v155 = vld [vmem:[%s1 + $0x3d8] sm:$0xff]
  %v156 = vld [vmem:[%s1 + $0x3e0] sm:$0xff]
  %v157 = vld [vmem:[%s1 + $0x3e8] sm:$0xff]
  %v158 = vld [vmem:[%s1 + $0x3f0] sm:$0xff]
  %v159 = vld [vmem:[%s1 + $0x3f8] sm:$0xff]
  %v160 = vld [vmem:[%s1 + $0x400] sm:$0xff]
  %v161 = vld [vmem:[%s1 + $0x408] sm:$0xff]
  %v162 = vld [vmem:[%s1 + $0x410] sm:$0xff]
  %v163 = vld [vmem:[%s1 + $0x418] sm:$0xff]
  %v164 = vld [vmem:[%s1 + $0x420] sm:$0xff]
  %v165 = vld [vmem:[%s1 + $0x428] sm:$0xff]
  %v166 = vld [vmem:[%s1 + $0x430] sm:$0xff]
  %v167 = vld [vmem:[%s1 + $0x438] sm:$0xff]
  %v168 = vld [vmem:[%s1 + $0x440] sm:$0xff]
  %v169 = vld [vmem:[%s1 + $0x448] sm:$0xff]
  %v170 = vld [vmem:[%s1 + $0x450] sm:$0xff]
  %v171 = vld [vmem:[%s1 + $0x458] sm:$0xff]
  %v172 = vld [vmem:[%s1 + $0x460] sm:$0xff]
  %v173 = vld [vmem:[%s1 + $0x468] sm:$0xff]
  %v174 = vld [vmem:[%s1 + $0x470] sm:$0xff]
  %v175 = vld [vmem:[%s1 + $0x478] sm:$0xff]
  %v176 = vld [vmem:[%s1 + $0x480] sm:$0xff]
  %v177 = vld [vmem:[%s1 + $0x488] sm:$0xff]
  %v178 = vld [vmem:[%s1 + $0x490] sm:$0xff]
  %v179 = vld [vmem:[%s1 + $0x498] sm:$0xff]
  %v180 = vld [vmem:[%s1 + $0x4a0] sm:$0xff]
  %v181 = vld [vmem:[%s1 + $0x4a8] sm:$0xff]
  %v182 = vld [vmem:[%s1 + $0x4b0] sm:$0xff]
  %v183 = vld [vmem:[%s1 + $0x4b8] sm:$0xff]
  %v184 = vld [vmem:[%s1 + $0x4c0] sm:$0xff]
  %v185 = vld [vmem:[%s1 + $0x4c8] sm:$0xff]
  %v186 = vld [vmem:[%s1 + $0x4d0] sm:$0xff]
  %v187 = vld [vmem:[%s1 + $0x4d8] sm:$0xff]
  %v188 = vld [vmem:[%s1 + $0x4e0] sm:$0xff]
  %v189 = vld [vmem:[%s1 + $0x4e8] sm:$0xff]
  %v190 = vld [vmem:[%s1 + $0x4f0] sm:$0xff]
  %v191 = vld [vmem:[%s1 + $0x4f8] sm:$0xff]
  %v192 = vld [vmem:[%s1 + $0x500] sm:$0xff]
  %v193 = vld [vmem:[%s1 + $0x508] sm:$0xff]
  %v194 = vld [vmem:[%s1 + $0x510] sm:$0xff]
  %v195 = vld [vmem:[%s1 + $0x518] sm:$0xff]
  %v196 = vld [vmem:[%s1 + $0x520] sm:$0xff]
  %v197 = vld [vmem:[%s1 + $0x528] sm:$0xff]
  %v198 = vld [vmem:[%s1 + $0x530] sm:$0xff]
  %v199 = vld [vmem:[%s1 + $0x538] sm:$0xff]
  %v200 = vld [vmem:[%s1 + $0x540] sm:$0xff]
  %v201 = vld [vmem:[%s1 + $0x548] sm:$0xff]
  %v202 = vld [vmem:[%s1 + $0x550] sm:$0xff]
  %v203 = vld [vmem:[%s1 + $0x558] sm:$0xff]
  %v204 = vld [vmem:[%s1 + $0x560] sm:$0xff]
  %v205 = vld [vmem:[%s1 + $0x568] sm:$0xff]
  %v206 = vld [vmem:[%s1 + $0x570] sm:$0xff]
  %v207 = vld [vmem:[%s1 + $0x578] sm:$0xff]
  %v208 = vld [vmem:[%s1 + $0x580] sm:$0xff]
  %v209 = vld [vmem:[%s1 + $0x588] sm:$0xff]
  %v210 = vld [vmem:[%s1 + $0x590] sm:$0xff]
  %v211 = vld [vmem:[%s1 + $0x598] sm:$0xff]
  %v212 = vld [vmem:[%s1 + $0x5a0] sm:$0xff]
  %v213 = vld [vmem:[%s1 + $0x5a8] sm:$0xff]
  %v214 = vld [vmem:[%s1 + $0x5b0] sm:$0xff]
  %v215 = vld [vmem:[%s1 + $0x5b8] sm:$0xff]
  %v216 = vld [vmem:[%s1 + $0x5c0] sm:$0xff]
  %v217 = vld [vmem:[%s1 + $0x5c8] sm:$0xff]
  %v218 = vld [vmem:[%s1 + $0x5d0] sm:$0xff]
  %v219 = vld [vmem:[%s1 + $0x5d8] sm:$0xff]
  %v220 = vld [vmem:[%s1 + $0x5e0] sm:$0xff]
  %v221 = vld [vmem:[%s1 + $0x5e8] sm:$0xff]
  %v222 = vld [vmem:[%s1 + $0x5f0] sm:$0xff]
  %v223 = vld [vmem:[%s1 + $0x5f8] sm:$0xff]
  %v224 = vld [vmem:[%s1 + $0x600] sm:$0xff]
  %v225 = vld [vmem:[%s1 + $0x608] sm:$0xff]
  %v226 = vld [vmem:[%s1 + $0x610] sm:$0xff]
  %v227 = vld [vmem:[%s1 + $0x618] sm:$0xff]
  %v228 = vld [vmem:[%s1 + $0x620] sm:$0xff]
  %v229 = vld [vmem:[%s1 + $0x628] sm:$0xff]
  %v230 = vld [vmem:[%s1 + $0x630] sm:$0xff]
  %v231 = vld [vmem:[%s1 + $0x638] sm:$0xff]
  %v232 = vld [vmem:[%s1 + $0x640] sm:$0xff]
  %v233 = vld [vmem:[%s1 + $0x648] sm:$0xff]
  %v234 = vld [vmem:[%s1 + $0x650] sm:$0xff]
  %v235 = vld [vmem:[%s1 + $0x658] sm:$0xff]
  %v236 = vld [vmem:[%s1 + $0x660] sm:$0xff]
  %v237 = vld [vmem:[%s1 + $0x668] sm:$0xff]
  %v238 = vld [vmem:[%s1 + $0x670] sm:$0xff]
  %v239 = vld [vmem:[%s1 + $0x678] sm:$0xff]
  %v240 = vld [vmem:[%s1 + $0x680] sm:$0xff]
  %v241 = vld [vmem:[%s1 + $0x688] sm:$0xff]
  %v242 = vld [vmem:[%s1 + $0x690] sm:$0xff]
  %v243 = vld [vmem:[%s1 + $0x698] sm:$0xff]
  %v244 = vld [vmem:[%s1 + $0x6a0] sm:$0xff]
  %v245 = vld [vmem:[%s1 + $0x6a8] sm:$0xff]
  %v246 = vld [vmem:[%s1 + $0x6b0] sm:$0xff]
  %v247 = vld [vmem:[%s1 + $0x6b8] sm:$0xff]
  %v248 = vld [vmem:[%s1 + $0x6c0] sm:$0xff]
  %v249 = vld [vmem:[%s1 + $0x6c8] sm:$0xff]
  %v250 = vld [vmem:[%s1 + $0x6d0] sm:$0xff]
  %v251 = vld [vmem:[%s1 + $0x6d8] sm:$0xff]
  %v252 = vld [vmem:[%s1 + $0x6e0] sm:$0xff]
  %v253 = vld [vmem:[%s1 + $0x6e8] sm:$0xff]
  %v254 = vld [vmem:[%s1 + $0x6f0] sm:$0xff]
  %v255 = vld [vmem:[%s1 + $0x6f8] sm:$0xff]
  %v256 = vld [vmem:[%s1 + $0x700] sm:$0xff]
  %v257 = vld [vmem:[%s1 + $0x708] sm:$0xff]
  %v258 = vld [vmem:[%s1 + $0x710] sm:$0xff]
  %v259 = vld [vmem:[%s1 + $0x718] sm:$0xff]
  %v260 = vld [vmem:[%s1 + $0x720] sm:$0xff]
  %v261 = vld [vmem:[%s1 + $0x728] sm:$0xff]
  %v262 = vld [vmem:[%s1 + $0x730] sm:$0xff]
  %v263 = vld [vmem:[%s1 + $0x738] sm:$0xff]
  %v264 = vld [vmem:[%s1 + $0x740] sm:$0xff]
  %v265 = vld [vmem:[%s1 + $0x748] sm:$0xff]
  %v266 = vld [vmem:[%s1 + $0x750] sm:$0xff]
  %v267 = vld [vmem:[%s1 + $0x758] sm:$0xff]
  %v268 = vld [vmem:[%s1 + $0x760] sm:$0xff]
  %v269 = vld [vmem:[%s1 + $0x768] sm:$0xff]
  %v270 = vld [vmem:[%s1 + $0x770] sm:$0xff]
  %v271 = vld [vmem:[%s1 + $0x778] sm:$0xff]
  %v272 = vld [vmem:[%s1 + $0x780] sm:$0xff]
  %v273 = vld [vmem:[%s1 + $0x788] sm:$0xff]
  %v274 = vld [vmem:[%s1 + $0x790] sm:$0xff]
  %v275 = vld [vmem:[%s1 + $0x798] sm:$0xff]
  %v276 = vld [vmem:[%s1 + $0x7a0] sm:$0xff]
  %v277 = vld [vmem:[%s1 + $0x7a8] sm:$0xff]
  %v278 = vld [vmem:[%s1 + $0x7b0] sm:$0xff]
  %v279 = vld [vmem:[%s1 + $0x7b8] sm:$0xff]
  %v280 = vld [vmem:[%s1 + $0x7c0] sm:$0xff]
  %v281 = vld [vmem:[%s1 + $0x7c8] sm:$0xff]
  %v282 = vld [vmem:[%s1 + $0x7d0] sm:$0xff]
  %v283 = vld [vmem:[%s1 + $0x7d8] sm:$0xff]
  %v284 = vld [vmem:[%s1 + $0x7e0] sm:$0xff]
  %v285 = vld [vmem:[%s1 + $0x7e8] sm:$0xff]
  %v286 = vld [vmem:[%s1 + $0x7f0] sm:$0xff]
  %v287 = vld [vmem:[%s1 + $0x7f8] sm:$0xff]
  %v288 = vld [vmem:[%s1 + $0x800] sm:$0xff]
  %v289 = vld [vmem:[%s1 + $0x808] sm:$0xff]
  %v290 = vld [vmem:[%s1 + $0x810] sm:$0xff]
  %v291 = vld [vmem:[%s1 + $0x818] sm:$0xff]
  %v292 = vld [vmem:[%s1 + $0x820] sm:$0xff]
  %v293 = vld [vmem:[%s1 + $0x828] sm:$0xff]
  %v294 = vld [vmem:[%s1 + $0x830] sm:$0xff]
  %v295 = vld [vmem:[%s1 + $0x838] sm:$0xff]
  %v296 = vld [vmem:[%s1 + $0x840] sm:$0xff]
  %v297 = vld [vmem:[%s1 + $0x848] sm:$0xff]
  %v298 = vld [vmem:[%s1 + $0x850] sm:$0xff]
  %v299 = vld [vmem:[%s1 + $0x858] sm:$0xff]
  %v300 = vld [vmem:[%s1 + $0x860] sm:$0xff]
  %v301 = vld [vmem:[%s1 + $0x868] sm:$0xff]
  %v302 = vld [vmem:[%s1 + $0x870] sm:$0xff]
  %v303 = vld [vmem:[%s1 + $0x878] sm:$0xff]
  %v304 = vld [vmem:[%s1 + $0x880] sm:$0xff]
  %v305 = vld [vmem:[%s1 + $0x888] sm:$0xff]
  %v306 = vld [vmem:[%s1 + $0x890] sm:$0xff]
  %v307 = vld [vmem:[%s1 + $0x898] sm:$0xff]
  %v308 = vld [vmem:[%s1 + $0x8a0] sm:$0xff]
  %v309 = vld [vmem:[%s1 + $0x8a8] sm:$0xff]
  %v310 = vld [vmem:[%s1 + $0x8b0] sm:$0xff]
  %v311 = vld [vmem:[%s1 + $0x8b8] sm:$0xff]
  %v312 = vld [vmem:[%s1 + $0x8c0] sm:$0xff]
  %v313 = vld [vmem:[%s1 + $0x8c8] sm:$0xff]
  %v314 = vld [vmem:[%s1 + $0x8d0] sm:$0xff]
  %v315 = vld [vmem:[%s1 + $0x8d8] sm:$0xff]
  %v316 = vld [vmem:[%s1 + $0x8e0] sm:$0xff]
  %v317 = vld [vmem:[%s1 + $0x8e8] sm:$0xff]
  %v318 = vld [vmem:[%s1 + $0x8f0] sm:$0xff]
  %v319 = vld [vmem:[%s1 + $0x8f8] sm:$0xff]
  %v320 = vld [vmem:[%s2] sm:$0x3]
  %v322 = vlaneseq
  %v323 = vshrl.u32 %v322, 7
  %v324 = vsub.s32 0, %v323
  %v325 = vrot.slane %v320, %v324
  %v326 = vlaneseq
  %v327 = vshrl.u32 %v326, 7
  %v328 = vsub.s32 1, %v327
  %v329 = vrot.slane %v320, %v328
  %v350 = vunpack.c.l.b16 %v14
  %v351 = vunpack.c.h.b16 %v14
  %v352 = vunpack.c.l.b16 %v15
  %v353 = vunpack.c.h.b16 %v15
  %v354 = vunpack.c.l.b16 %v16
  %v355 = vunpack.c.h.b16 %v16
  %v356 = vunpack.c.l.b16 %v17
  %v357 = vunpack.c.h.b16 %v17
  %v358 = vunpack.c.l.b16 %v18
  %v359 = vunpack.c.h.b16 %v18
  %v360 = vunpack.c.l.b16 %v19
  %v361 = vunpack.c.h.b16 %v19
  %v362 = vunpack.c.l.b16 %v20
  %v363 = vunpack.c.h.b16 %v20
  %v364 = vunpack.c.l.b16 %v21
  %v365 = vunpack.c.h.b16 %v21
  %v366 = vunpack.c.l.b16 %v22
  %v367 = vunpack.c.h.b16 %v22
  %v368 = vunpack.c.l.b16 %v23
  %v369 = vunpack.c.h.b16 %v23
  %v370 = vunpack.c.l.b16 %v24
  %v371 = vunpack.c.h.b16 %v24
  %v372 = vunpack.c.l.b16 %v25
  %v373 = vunpack.c.h.b16 %v25
  %v374 = vunpack.c.l.b16 %v26
  %v375 = vunpack.c.h.b16 %v26
  %v376 = vunpack.c.l.b16 %v27
  %v377 = vunpack.c.h.b16 %v27
  %v378 = vunpack.c.l.b16 %v28
  %v379 = vunpack.c.h.b16 %v28
  %v380 = vunpack.c.l.b16 %v29
  %v381 = vunpack.c.h.b16 %v29
  %v382 = vunpack.c.l.b16 %v30
  %v383 = vunpack.c.h.b16 %v30
  %v384 = vunpack.c.l.b16 %v31
  %v385 = vunpack.c.h.b16 %v31
  %v386 = vpack.c.b16 %v368, %v350
  %v387 = vpack.c.b16 %v369, %v351
  %v388 = vpack.c.b16 %v370, %v352
  %v389 = vpack.c.b16 %v371, %v353
  %v390 = vpack.c.b16 %v372, %v354
  %v391 = vpack.c.b16 %v373, %v355
  %v392 = vpack.c.b16 %v374, %v356
  %v393 = vpack.c.b16 %v375, %v357
  %v394 = vpack.c.b16 %v376, %v358
  %v395 = vpack.c.b16 %v377, %v359
  %v396 = vpack.c.b16 %v378, %v360
  %v397 = vpack.c.b16 %v379, %v361
  %v398 = vpack.c.b16 %v380, %v362
  %v399 = vpack.c.b16 %v381, %v363
  %v400 = vpack.c.b16 %v382, %v364
  %v401 = vpack.c.b16 %v383, %v365
  %v402 = vpack.c.b16 %v384, %v366
  %v403 = vpack.c.b16 %v385, %v367
  %v710 = vunpack.c.l.b16 %v32
  %v711 = vunpack.c.h.b16 %v32
  %v712 = vunpack.c.l.b16 %v33
  %v713 = vunpack.c.h.b16 %v33
  %v714 = vunpack.c.l.b16 %v34
  %v715 = vunpack.c.h.b16 %v34
  %v716 = vunpack.c.l.b16 %v35
  %v717 = vunpack.c.h.b16 %v35
  %v718 = vunpack.c.l.b16 %v36
  %v719 = vunpack.c.h.b16 %v36
  %v720 = vunpack.c.l.b16 %v37
  %v721 = vunpack.c.h.b16 %v37
  %v722 = vunpack.c.l.b16 %v38
  %v723 = vunpack.c.h.b16 %v38
  %v724 = vunpack.c.l.b16 %v39
  %v725 = vunpack.c.h.b16 %v39
  %v726 = vunpack.c.l.b16 %v40
  %v727 = vunpack.c.h.b16 %v40
  %v728 = vunpack.c.l.b16 %v41
  %v729 = vunpack.c.h.b16 %v41
  %v730 = vunpack.c.l.b16 %v42
  %v731 = vunpack.c.h.b16 %v42
  %v732 = vunpack.c.l.b16 %v43
  %v733 = vunpack.c.h.b16 %v43
  %v734 = vunpack.c.l.b16 %v44
  %v735 = vunpack.c.h.b16 %v44
  %v736 = vunpack.c.l.b16 %v45
  %v737 = vunpack.c.h.b16 %v45
  %v738 = vunpack.c.l.b16 %v46
  %v739 = vunpack.c.h.b16 %v46
  %v740 = vunpack.c.l.b16 %v47
  %v741 = vunpack.c.h.b16 %v47
  %v742 = vunpack.c.l.b16 %v48
  %v743 = vunpack.c.h.b16 %v48
  %v744 = vunpack.c.l.b16 %v49
  %v745 = vunpack.c.h.b16 %v49
  %v746 = vunpack.c.l.b16 %v50
  %v747 = vunpack.c.h.b16 %v50
  %v748 = vunpack.c.l.b16 %v51
  %v749 = vunpack.c.h.b16 %v51
  %v750 = vunpack.c.l.b16 %v52
  %v751 = vunpack.c.h.b16 %v52
  %v752 = vunpack.c.l.b16 %v53
  %v753 = vunpack.c.h.b16 %v53
  %v754 = vunpack.c.l.b16 %v54
  %v755 = vunpack.c.h.b16 %v54
  %v756 = vunpack.c.l.b16 %v55
  %v757 = vunpack.c.h.b16 %v55
  %v758 = vunpack.c.l.b16 %v56
  %v759 = vunpack.c.h.b16 %v56
  %v760 = vunpack.c.l.b16 %v57
  %v761 = vunpack.c.h.b16 %v57
  %v762 = vunpack.c.l.b16 %v58
  %v763 = vunpack.c.h.b16 %v58
  %v764 = vunpack.c.l.b16 %v59
  %v765 = vunpack.c.h.b16 %v59
  %v766 = vunpack.c.l.b16 %v60
  %v767 = vunpack.c.h.b16 %v60
  %v768 = vunpack.c.l.b16 %v61
  %v769 = vunpack.c.h.b16 %v61
  %v770 = vunpack.c.l.b16 %v62
  %v771 = vunpack.c.h.b16 %v62
  %v772 = vunpack.c.l.b16 %v63
  %v773 = vunpack.c.h.b16 %v63
  %v774 = vunpack.c.l.b16 %v64
  %v775 = vunpack.c.h.b16 %v64
  %v776 = vunpack.c.l.b16 %v65
  %v777 = vunpack.c.h.b16 %v65
  %v778 = vunpack.c.l.b16 %v66
  %v779 = vunpack.c.h.b16 %v66
  %v780 = vunpack.c.l.b16 %v67
  %v781 = vunpack.c.h.b16 %v67
  %v782 = vunpack.c.l.b16 %v68
  %v783 = vunpack.c.h.b16 %v68
  %v784 = vunpack.c.l.b16 %v69
  %v785 = vunpack.c.h.b16 %v69
  %v786 = vunpack.c.l.b16 %v70
  %v787 = vunpack.c.h.b16 %v70
  %v788 = vunpack.c.l.b16 %v71
  %v789 = vunpack.c.h.b16 %v71
  %v790 = vunpack.c.l.b16 %v72
  %v791 = vunpack.c.h.b16 %v72
  %v792 = vunpack.c.l.b16 %v73
  %v793 = vunpack.c.h.b16 %v73
  %v794 = vunpack.c.l.b16 %v74
  %v795 = vunpack.c.h.b16 %v74
  %v796 = vunpack.c.l.b16 %v75
  %v797 = vunpack.c.h.b16 %v75
  %v798 = vunpack.c.l.b16 %v76
  %v799 = vunpack.c.h.b16 %v76
  %v800 = vunpack.c.l.b16 %v77
  %v801 = vunpack.c.h.b16 %v77
  %v802 = vunpack.c.l.b16 %v78
  %v803 = vunpack.c.h.b16 %v78
  %v804 = vunpack.c.l.b16 %v79
  %v805 = vunpack.c.h.b16 %v79
  %v806 = vunpack.c.l.b16 %v80
  %v807 = vunpack.c.h.b16 %v80
  %v808 = vunpack.c.l.b16 %v81
  %v809 = vunpack.c.h.b16 %v81
  %v810 = vunpack.c.l.b16 %v82
  %v811 = vunpack.c.h.b16 %v82
  %v812 = vunpack.c.l.b16 %v83
  %v813 = vunpack.c.h.b16 %v83
  %v814 = vunpack.c.l.b16 %v84
  %v815 = vunpack.c.h.b16 %v84
  %v816 = vunpack.c.l.b16 %v85
  %v817 = vunpack.c.h.b16 %v85
  %v818 = vunpack.c.l.b16 %v86
  %v819 = vunpack.c.h.b16 %v86
  %v820 = vunpack.c.l.b16 %v87
  %v821 = vunpack.c.h.b16 %v87
  %v822 = vunpack.c.l.b16 %v88
  %v823 = vunpack.c.h.b16 %v88
  %v824 = vunpack.c.l.b16 %v89
  %v825 = vunpack.c.h.b16 %v89
  %v826 = vunpack.c.l.b16 %v90
  %v827 = vunpack.c.h.b16 %v90
  %v828 = vunpack.c.l.b16 %v91
  %v829 = vunpack.c.h.b16 %v91
  %v830 = vunpack.c.l.b16 %v92
  %v831 = vunpack.c.h.b16 %v92
  %v832 = vunpack.c.l.b16 %v93
  %v833 = vunpack.c.h.b16 %v93
  %v834 = vunpack.c.l.b16 %v94
  %v835 = vunpack.c.h.b16 %v94
  %v836 = vunpack.c.l.b16 %v95
  %v837 = vunpack.c.h.b16 %v95
  %v838 = vunpack.c.l.b16 %v96
  %v839 = vunpack.c.h.b16 %v96
  %v840 = vunpack.c.l.b16 %v97
  %v841 = vunpack.c.h.b16 %v97
  %v842 = vunpack.c.l.b16 %v98
  %v843 = vunpack.c.h.b16 %v98
  %v844 = vunpack.c.l.b16 %v99
  %v845 = vunpack.c.h.b16 %v99
  %v846 = vunpack.c.l.b16 %v100
  %v847 = vunpack.c.h.b16 %v100
  %v848 = vunpack.c.l.b16 %v101
  %v849 = vunpack.c.h.b16 %v101
  %v850 = vunpack.c.l.b16 %v102
  %v851 = vunpack.c.h.b16 %v102
  %v852 = vunpack.c.l.b16 %v103
  %v853 = vunpack.c.h.b16 %v103
  %v854 = vunpack.c.l.b16 %v104
  %v855 = vunpack.c.h.b16 %v104
  %v856 = vunpack.c.l.b16 %v105
  %v857 = vunpack.c.h.b16 %v105
  %v858 = vunpack.c.l.b16 %v106
  %v859 = vunpack.c.h.b16 %v106
  %v860 = vunpack.c.l.b16 %v107
  %v861 = vunpack.c.h.b16 %v107
  %v862 = vunpack.c.l.b16 %v108
  %v863 = vunpack.c.h.b16 %v108
  %v864 = vunpack.c.l.b16 %v109
  %v865 = vunpack.c.h.b16 %v109
  %v866 = vunpack.c.l.b16 %v110
  %v867 = vunpack.c.h.b16 %v110
  %v868 = vunpack.c.l.b16 %v111
  %v869 = vunpack.c.h.b16 %v111
  %v870 = vunpack.c.l.b16 %v112
  %v871 = vunpack.c.h.b16 %v112
  %v872 = vunpack.c.l.b16 %v113
  %v873 = vunpack.c.h.b16 %v113
  %v874 = vunpack.c.l.b16 %v114
  %v875 = vunpack.c.h.b16 %v114
  %v876 = vunpack.c.l.b16 %v115
  %v877 = vunpack.c.h.b16 %v115
  %v878 = vunpack.c.l.b16 %v116
  %v879 = vunpack.c.h.b16 %v116
  %v880 = vunpack.c.l.b16 %v117
  %v881 = vunpack.c.h.b16 %v117
  %v882 = vunpack.c.l.b16 %v118
  %v883 = vunpack.c.h.b16 %v118
  %v884 = vunpack.c.l.b16 %v119
  %v885 = vunpack.c.h.b16 %v119
  %v886 = vunpack.c.l.b16 %v120
  %v887 = vunpack.c.h.b16 %v120
  %v888 = vunpack.c.l.b16 %v121
  %v889 = vunpack.c.h.b16 %v121
  %v890 = vunpack.c.l.b16 %v122
  %v891 = vunpack.c.h.b16 %v122
  %v892 = vunpack.c.l.b16 %v123
  %v893 = vunpack.c.h.b16 %v123
  %v894 = vunpack.c.l.b16 %v124
  %v895 = vunpack.c.h.b16 %v124
  %v896 = vunpack.c.l.b16 %v125
  %v897 = vunpack.c.h.b16 %v125
  %v898 = vunpack.c.l.b16 %v126
  %v899 = vunpack.c.h.b16 %v126
  %v900 = vunpack.c.l.b16 %v127
  %v901 = vunpack.c.h.b16 %v127
  %v902 = vunpack.c.l.b16 %v128
  %v903 = vunpack.c.h.b16 %v128
  %v904 = vunpack.c.l.b16 %v129
  %v905 = vunpack.c.h.b16 %v129
  %v906 = vunpack.c.l.b16 %v130
  %v907 = vunpack.c.h.b16 %v130
  %v908 = vunpack.c.l.b16 %v131
  %v909 = vunpack.c.h.b16 %v131
  %v910 = vunpack.c.l.b16 %v132
  %v911 = vunpack.c.h.b16 %v132
  %v912 = vunpack.c.l.b16 %v133
  %v913 = vunpack.c.h.b16 %v133
  %v914 = vunpack.c.l.b16 %v134
  %v915 = vunpack.c.h.b16 %v134
  %v916 = vunpack.c.l.b16 %v135
  %v917 = vunpack.c.h.b16 %v135
  %v918 = vunpack.c.l.b16 %v136
  %v919 = vunpack.c.h.b16 %v136
  %v920 = vunpack.c.l.b16 %v137
  %v921 = vunpack.c.h.b16 %v137
  %v922 = vunpack.c.l.b16 %v138
  %v923 = vunpack.c.h.b16 %v138
  %v924 = vunpack.c.l.b16 %v139
  %v925 = vunpack.c.h.b16 %v139
  %v926 = vunpack.c.l.b16 %v140
  %v927 = vunpack.c.h.b16 %v140
  %v928 = vunpack.c.l.b16 %v141
  %v929 = vunpack.c.h.b16 %v141
  %v930 = vunpack.c.l.b16 %v142
  %v931 = vunpack.c.h.b16 %v142
  %v932 = vunpack.c.l.b16 %v143
  %v933 = vunpack.c.h.b16 %v143
  %v934 = vunpack.c.l.b16 %v144
  %v935 = vunpack.c.h.b16 %v144
  %v936 = vunpack.c.l.b16 %v145
  %v937 = vunpack.c.h.b16 %v145
  %v938 = vunpack.c.l.b16 %v146
  %v939 = vunpack.c.h.b16 %v146
  %v940 = vunpack.c.l.b16 %v147
  %v941 = vunpack.c.h.b16 %v147
  %v942 = vunpack.c.l.b16 %v148
  %v943 = vunpack.c.h.b16 %v148
  %v944 = vunpack.c.l.b16 %v149
  %v945 = vunpack.c.h.b16 %v149
  %v946 = vunpack.c.l.b16 %v150
  %v947 = vunpack.c.h.b16 %v150
  %v948 = vunpack.c.l.b16 %v151
  %v949 = vunpack.c.h.b16 %v151
  %v950 = vunpack.c.l.b16 %v152
  %v951 = vunpack.c.h.b16 %v152
  %v952 = vunpack.c.l.b16 %v153
  %v953 = vunpack.c.h.b16 %v153
  %v954 = vunpack.c.l.b16 %v154
  %v955 = vunpack.c.h.b16 %v154
  %v956 = vunpack.c.l.b16 %v155
  %v957 = vunpack.c.h.b16 %v155
  %v958 = vunpack.c.l.b16 %v156
  %v959 = vunpack.c.h.b16 %v156
  %v960 = vunpack.c.l.b16 %v157
  %v961 = vunpack.c.h.b16 %v157
  %v962 = vunpack.c.l.b16 %v158
  %v963 = vunpack.c.h.b16 %v158
  %v964 = vunpack.c.l.b16 %v159
  %v965 = vunpack.c.h.b16 %v159
  %v966 = vunpack.c.l.b16 %v160
  %v967 = vunpack.c.h.b16 %v160
  %v968 = vunpack.c.l.b16 %v161
  %v969 = vunpack.c.h.b16 %v161
  %v970 = vunpack.c.l.b16 %v162
  %v971 = vunpack.c.h.b16 %v162
  %v972 = vunpack.c.l.b16 %v163
  %v973 = vunpack.c.h.b16 %v163
  %v974 = vunpack.c.l.b16 %v164
  %v975 = vunpack.c.h.b16 %v164
  %v976 = vunpack.c.l.b16 %v165
  %v977 = vunpack.c.h.b16 %v165
  %v978 = vunpack.c.l.b16 %v166
  %v979 = vunpack.c.h.b16 %v166
  %v980 = vunpack.c.l.b16 %v167
  %v981 = vunpack.c.h.b16 %v167
  %v982 = vunpack.c.l.b16 %v168
  %v983 = vunpack.c.h.b16 %v168
  %v984 = vunpack.c.l.b16 %v169
  %v985 = vunpack.c.h.b16 %v169
  %v986 = vunpack.c.l.b16 %v170
  %v987 = vunpack.c.h.b16 %v170
  %v988 = vunpack.c.l.b16 %v171
  %v989 = vunpack.c.h.b16 %v171
  %v990 = vunpack.c.l.b16 %v172
  %v991 = vunpack.c.h.b16 %v172
  %v992 = vunpack.c.l.b16 %v173
  %v993 = vunpack.c.h.b16 %v173
  %v994 = vunpack.c.l.b16 %v174
  %v995 = vunpack.c.h.b16 %v174
  %v996 = vunpack.c.l.b16 %v175
  %v997 = vunpack.c.h.b16 %v175
  %v998 = vunpack.c.l.b16 %v176
  %v999 = vunpack.c.h.b16 %v176
  %v1000 = vunpack.c.l.b16 %v177
  %v1001 = vunpack.c.h.b16 %v177
  %v1002 = vunpack.c.l.b16 %v178
  %v1003 = vunpack.c.h.b16 %v178
  %v1004 = vunpack.c.l.b16 %v179
  %v1005 = vunpack.c.h.b16 %v179
  %v1006 = vunpack.c.l.b16 %v180
  %v1007 = vunpack.c.h.b16 %v180
  %v1008 = vunpack.c.l.b16 %v181
  %v1009 = vunpack.c.h.b16 %v181
  %v1010 = vunpack.c.l.b16 %v182
  %v1011 = vunpack.c.h.b16 %v182
  %v1012 = vunpack.c.l.b16 %v183
  %v1013 = vunpack.c.h.b16 %v183
  %v1014 = vunpack.c.l.b16 %v184
  %v1015 = vunpack.c.h.b16 %v184
  %v1016 = vunpack.c.l.b16 %v185
  %v1017 = vunpack.c.h.b16 %v185
  %v1018 = vunpack.c.l.b16 %v186
  %v1019 = vunpack.c.h.b16 %v186
  %v1020 = vunpack.c.l.b16 %v187
  %v1021 = vunpack.c.h.b16 %v187
  %v1022 = vunpack.c.l.b16 %v188
  %v1023 = vunpack.c.h.b16 %v188
  %v1024 = vunpack.c.l.b16 %v189
  %v1025 = vunpack.c.h.b16 %v189
  %v1026 = vunpack.c.l.b16 %v190
  %v1027 = vunpack.c.h.b16 %v190
  %v1028 = vunpack.c.l.b16 %v191
  %v1029 = vunpack.c.h.b16 %v191
  %v1030 = vunpack.c.l.b16 %v192
  %v1031 = vunpack.c.h.b16 %v192
  %v1032 = vunpack.c.l.b16 %v193
  %v1033 = vunpack.c.h.b16 %v193
  %v1034 = vunpack.c.l.b16 %v194
  %v1035 = vunpack.c.h.b16 %v194
  %v1036 = vunpack.c.l.b16 %v195
  %v1037 = vunpack.c.h.b16 %v195
  %v1038 = vunpack.c.l.b16 %v196
  %v1039 = vunpack.c.h.b16 %v196
  %v1040 = vunpack.c.l.b16 %v197
  %v1041 = vunpack.c.h.b16 %v197
  %v1042 = vunpack.c.l.b16 %v198
  %v1043 = vunpack.c.h.b16 %v198
  %v1044 = vunpack.c.l.b16 %v199
  %v1045 = vunpack.c.h.b16 %v199
  %v1046 = vunpack.c.l.b16 %v200
  %v1047 = vunpack.c.h.b16 %v200
  %v1048 = vunpack.c.l.b16 %v201
  %v1049 = vunpack.c.h.b16 %v201
  %v1050 = vunpack.c.l.b16 %v202
  %v1051 = vunpack.c.h.b16 %v202
  %v1052 = vunpack.c.l.b16 %v203
  %v1053 = vunpack.c.h.b16 %v203
  %v1054 = vunpack.c.l.b16 %v204
  %v1055 = vunpack.c.h.b16 %v204
  %v1056 = vunpack.c.l.b16 %v205
  %v1057 = vunpack.c.h.b16 %v205
  %v1058 = vunpack.c.l.b16 %v206
  %v1059 = vunpack.c.h.b16 %v206
  %v1060 = vunpack.c.l.b16 %v207
  %v1061 = vunpack.c.h.b16 %v207
  %v1062 = vunpack.c.l.b16 %v208
  %v1063 = vunpack.c.h.b16 %v208
  %v1064 = vunpack.c.l.b16 %v209
  %v1065 = vunpack.c.h.b16 %v209
  %v1066 = vunpack.c.l.b16 %v210
  %v1067 = vunpack.c.h.b16 %v210
  %v1068 = vunpack.c.l.b16 %v211
  %v1069 = vunpack.c.h.b16 %v211
  %v1070 = vunpack.c.l.b16 %v212
  %v1071 = vunpack.c.h.b16 %v212
  %v1072 = vunpack.c.l.b16 %v213
  %v1073 = vunpack.c.h.b16 %v213
  %v1074 = vunpack.c.l.b16 %v214
  %v1075 = vunpack.c.h.b16 %v214
  %v1076 = vunpack.c.l.b16 %v215
  %v1077 = vunpack.c.h.b16 %v215
  %v1078 = vunpack.c.l.b16 %v216
  %v1079 = vunpack.c.h.b16 %v216
  %v1080 = vunpack.c.l.b16 %v217
  %v1081 = vunpack.c.h.b16 %v217
  %v1082 = vunpack.c.l.b16 %v218
  %v1083 = vunpack.c.h.b16 %v218
  %v1084 = vunpack.c.l.b16 %v219
  %v1085 = vunpack.c.h.b16 %v219
  %v1086 = vunpack.c.l.b16 %v220
  %v1087 = vunpack.c.h.b16 %v220
  %v1088 = vunpack.c.l.b16 %v221
  %v1089 = vunpack.c.h.b16 %v221
  %v1090 = vunpack.c.l.b16 %v222
  %v1091 = vunpack.c.h.b16 %v222
  %v1092 = vunpack.c.l.b16 %v223
  %v1093 = vunpack.c.h.b16 %v223
  %v1094 = vunpack.c.l.b16 %v224
  %v1095 = vunpack.c.h.b16 %v224
  %v1096 = vunpack.c.l.b16 %v225
  %v1097 = vunpack.c.h.b16 %v225
  %v1098 = vunpack.c.l.b16 %v226
  %v1099 = vunpack.c.h.b16 %v226
  %v1100 = vunpack.c.l.b16 %v227
  %v1101 = vunpack.c.h.b16 %v227
  %v1102 = vunpack.c.l.b16 %v228
  %v1103 = vunpack.c.h.b16 %v228
  %v1104 = vunpack.c.l.b16 %v229
  %v1105 = vunpack.c.h.b16 %v229
  %v1106 = vunpack.c.l.b16 %v230
  %v1107 = vunpack.c.h.b16 %v230
  %v1108 = vunpack.c.l.b16 %v231
  %v1109 = vunpack.c.h.b16 %v231
  %v1110 = vunpack.c.l.b16 %v232
  %v1111 = vunpack.c.h.b16 %v232
  %v1112 = vunpack.c.l.b16 %v233
  %v1113 = vunpack.c.h.b16 %v233
  %v1114 = vunpack.c.l.b16 %v234
  %v1115 = vunpack.c.h.b16 %v234
  %v1116 = vunpack.c.l.b16 %v235
  %v1117 = vunpack.c.h.b16 %v235
  %v1118 = vunpack.c.l.b16 %v236
  %v1119 = vunpack.c.h.b16 %v236
  %v1120 = vunpack.c.l.b16 %v237
  %v1121 = vunpack.c.h.b16 %v237
  %v1122 = vunpack.c.l.b16 %v238
  %v1123 = vunpack.c.h.b16 %v238
  %v1124 = vunpack.c.l.b16 %v239
  %v1125 = vunpack.c.h.b16 %v239
  %v1126 = vunpack.c.l.b16 %v240
  %v1127 = vunpack.c.h.b16 %v240
  %v1128 = vunpack.c.l.b16 %v241
  %v1129 = vunpack.c.h.b16 %v241
  %v1130 = vunpack.c.l.b16 %v242
  %v1131 = vunpack.c.h.b16 %v242
  %v1132 = vunpack.c.l.b16 %v243
  %v1133 = vunpack.c.h.b16 %v243
  %v1134 = vunpack.c.l.b16 %v244
  %v1135 = vunpack.c.h.b16 %v244
  %v1136 = vunpack.c.l.b16 %v245
  %v1137 = vunpack.c.h.b16 %v245
  %v1138 = vunpack.c.l.b16 %v246
  %v1139 = vunpack.c.h.b16 %v246
  %v1140 = vunpack.c.l.b16 %v247
  %v1141 = vunpack.c.h.b16 %v247
  %v1142 = vunpack.c.l.b16 %v248
  %v1143 = vunpack.c.h.b16 %v248
  %v1144 = vunpack.c.l.b16 %v249
  %v1145 = vunpack.c.h.b16 %v249
  %v1146 = vunpack.c.l.b16 %v250
  %v1147 = vunpack.c.h.b16 %v250
  %v1148 = vunpack.c.l.b16 %v251
  %v1149 = vunpack.c.h.b16 %v251
  %v1150 = vunpack.c.l.b16 %v252
  %v1151 = vunpack.c.h.b16 %v252
  %v1152 = vunpack.c.l.b16 %v253
  %v1153 = vunpack.c.h.b16 %v253
  %v1154 = vunpack.c.l.b16 %v254
  %v1155 = vunpack.c.h.b16 %v254
  %v1156 = vunpack.c.l.b16 %v255
  %v1157 = vunpack.c.h.b16 %v255
  %v1158 = vunpack.c.l.b16 %v256
  %v1159 = vunpack.c.h.b16 %v256
  %v1160 = vunpack.c.l.b16 %v257
  %v1161 = vunpack.c.h.b16 %v257
  %v1162 = vunpack.c.l.b16 %v258
  %v1163 = vunpack.c.h.b16 %v258
  %v1164 = vunpack.c.l.b16 %v259
  %v1165 = vunpack.c.h.b16 %v259
  %v1166 = vunpack.c.l.b16 %v260
  %v1167 = vunpack.c.h.b16 %v260
  %v1168 = vunpack.c.l.b16 %v261
  %v1169 = vunpack.c.h.b16 %v261
  %v1170 = vunpack.c.l.b16 %v262
  %v1171 = vunpack.c.h.b16 %v262
  %v1172 = vunpack.c.l.b16 %v263
  %v1173 = vunpack.c.h.b16 %v263
  %v1174 = vunpack.c.l.b16 %v264
  %v1175 = vunpack.c.h.b16 %v264
  %v1176 = vunpack.c.l.b16 %v265
  %v1177 = vunpack.c.h.b16 %v265
  %v1178 = vunpack.c.l.b16 %v266
  %v1179 = vunpack.c.h.b16 %v266
  %v1180 = vunpack.c.l.b16 %v267
  %v1181 = vunpack.c.h.b16 %v267
  %v1182 = vunpack.c.l.b16 %v268
  %v1183 = vunpack.c.h.b16 %v268
  %v1184 = vunpack.c.l.b16 %v269
  %v1185 = vunpack.c.h.b16 %v269
  %v1186 = vunpack.c.l.b16 %v270
  %v1187 = vunpack.c.h.b16 %v270
  %v1188 = vunpack.c.l.b16 %v271
  %v1189 = vunpack.c.h.b16 %v271
  %v1190 = vunpack.c.l.b16 %v272
  %v1191 = vunpack.c.h.b16 %v272
  %v1192 = vunpack.c.l.b16 %v273
  %v1193 = vunpack.c.h.b16 %v273
  %v1194 = vunpack.c.l.b16 %v274
  %v1195 = vunpack.c.h.b16 %v274
  %v1196 = vunpack.c.l.b16 %v275
  %v1197 = vunpack.c.h.b16 %v275
  %v1198 = vunpack.c.l.b16 %v276
  %v1199 = vunpack.c.h.b16 %v276
  %v1200 = vunpack.c.l.b16 %v277
  %v1201 = vunpack.c.h.b16 %v277
  %v1202 = vunpack.c.l.b16 %v278
  %v1203 = vunpack.c.h.b16 %v278
  %v1204 = vunpack.c.l.b16 %v279
  %v1205 = vunpack.c.h.b16 %v279
  %v1206 = vunpack.c.l.b16 %v280
  %v1207 = vunpack.c.h.b16 %v280
  %v1208 = vunpack.c.l.b16 %v281
  %v1209 = vunpack.c.h.b16 %v281
  %v1210 = vunpack.c.l.b16 %v282
  %v1211 = vunpack.c.h.b16 %v282
  %v1212 = vunpack.c.l.b16 %v283
  %v1213 = vunpack.c.h.b16 %v283
  %v1214 = vunpack.c.l.b16 %v284
  %v1215 = vunpack.c.h.b16 %v284
  %v1216 = vunpack.c.l.b16 %v285
  %v1217 = vunpack.c.h.b16 %v285
  %v1218 = vunpack.c.l.b16 %v286
  %v1219 = vunpack.c.h.b16 %v286
  %v1220 = vunpack.c.l.b16 %v287
  %v1221 = vunpack.c.h.b16 %v287
  %v1222 = vunpack.c.l.b16 %v288
  %v1223 = vunpack.c.h.b16 %v288
  %v1224 = vunpack.c.l.b16 %v289
  %v1225 = vunpack.c.h.b16 %v289
  %v1226 = vunpack.c.l.b16 %v290
  %v1227 = vunpack.c.h.b16 %v290
  %v1228 = vunpack.c.l.b16 %v291
  %v1229 = vunpack.c.h.b16 %v291
  %v1230 = vunpack.c.l.b16 %v292
  %v1231 = vunpack.c.h.b16 %v292
  %v1232 = vunpack.c.l.b16 %v293
  %v1233 = vunpack.c.h.b16 %v293
  %v1234 = vunpack.c.l.b16 %v294
  %v1235 = vunpack.c.h.b16 %v294
  %v1236 = vunpack.c.l.b16 %v295
  %v1237 = vunpack.c.h.b16 %v295
  %v1238 = vunpack.c.l.b16 %v296
  %v1239 = vunpack.c.h.b16 %v296
  %v1240 = vunpack.c.l.b16 %v297
  %v1241 = vunpack.c.h.b16 %v297
  %v1242 = vunpack.c.l.b16 %v298
  %v1243 = vunpack.c.h.b16 %v298
  %v1244 = vunpack.c.l.b16 %v299
  %v1245 = vunpack.c.h.b16 %v299
  %v1246 = vunpack.c.l.b16 %v300
  %v1247 = vunpack.c.h.b16 %v300
  %v1248 = vunpack.c.l.b16 %v301
  %v1249 = vunpack.c.h.b16 %v301
  %v1250 = vunpack.c.l.b16 %v302
  %v1251 = vunpack.c.h.b16 %v302
  %v1252 = vunpack.c.l.b16 %v303
  %v1253 = vunpack.c.h.b16 %v303
  %v1254 = vunpack.c.l.b16 %v304
  %v1255 = vunpack.c.h.b16 %v304
  %v1256 = vunpack.c.l.b16 %v305
  %v1257 = vunpack.c.h.b16 %v305
  %v1258 = vunpack.c.l.b16 %v306
  %v1259 = vunpack.c.h.b16 %v306
  %v1260 = vunpack.c.l.b16 %v307
  %v1261 = vunpack.c.h.b16 %v307
  %v1262 = vunpack.c.l.b16 %v308
  %v1263 = vunpack.c.h.b16 %v308
  %v1264 = vunpack.c.l.b16 %v309
  %v1265 = vunpack.c.h.b16 %v309
  %v1266 = vunpack.c.l.b16 %v310
  %v1267 = vunpack.c.h.b16 %v310
  %v1268 = vunpack.c.l.b16 %v311
  %v1269 = vunpack.c.h.b16 %v311
  %v1270 = vunpack.c.l.b16 %v312
  %v1271 = vunpack.c.h.b16 %v312
  %v1272 = vunpack.c.l.b16 %v313
  %v1273 = vunpack.c.h.b16 %v313
  %v1274 = vunpack.c.l.b16 %v314
  %v1275 = vunpack.c.h.b16 %v314
  %v1276 = vunpack.c.l.b16 %v315
  %v1277 = vunpack.c.h.b16 %v315
  %v1278 = vunpack.c.l.b16 %v316
  %v1279 = vunpack.c.h.b16 %v316
  %v1280 = vunpack.c.l.b16 %v317
  %v1281 = vunpack.c.h.b16 %v317
  %v1282 = vunpack.c.l.b16 %v318
  %v1283 = vunpack.c.h.b16 %v318
  %v1284 = vunpack.c.l.b16 %v319
  %v1285 = vunpack.c.h.b16 %v319
  %v1286 = vpack.c.b16 %v712, %v710
  %v1287 = vpack.c.b16 %v713, %v711
  %v1288 = vpack.c.b16 %v716, %v714
  %v1289 = vpack.c.b16 %v717, %v715
  %v1290 = vpack.c.b16 %v720, %v718
  %v1291 = vpack.c.b16 %v721, %v719
  %v1292 = vpack.c.b16 %v724, %v722
  %v1293 = vpack.c.b16 %v725, %v723
  %v1294 = vpack.c.b16 %v728, %v726
  %v1295 = vpack.c.b16 %v729, %v727
  %v1296 = vpack.c.b16 %v732, %v730
  %v1297 = vpack.c.b16 %v733, %v731
  %v1298 = vpack.c.b16 %v736, %v734
  %v1299 = vpack.c.b16 %v737, %v735
  %v1300 = vpack.c.b16 %v740, %v738
  %v1301 = vpack.c.b16 %v741, %v739
  %v1302 = vpack.c.b16 %v744, %v742
  %v1303 = vpack.c.b16 %v745, %v743
  %v1304 = vpack.c.b16 %v748, %v746
  %v1305 = vpack.c.b16 %v749, %v747
  %v1306 = vpack.c.b16 %v752, %v750
  %v1307 = vpack.c.b16 %v753, %v751
  %v1308 = vpack.c.b16 %v756, %v754
  %v1309 = vpack.c.b16 %v757, %v755
  %v1310 = vpack.c.b16 %v760, %v758
  %v1311 = vpack.c.b16 %v761, %v759
  %v1312 = vpack.c.b16 %v764, %v762
  %v1313 = vpack.c.b16 %v765, %v763
  %v1314 = vpack.c.b16 %v768, %v766
  %v1315 = vpack.c.b16 %v769, %v767
  %v1316 = vpack.c.b16 %v772, %v770
  %v1317 = vpack.c.b16 %v773, %v771
  %v1318 = vpack.c.b16 %v776, %v774
  %v1319 = vpack.c.b16 %v777, %v775
  %v1320 = vpack.c.b16 %v780, %v778
  %v1321 = vpack.c.b16 %v781, %v779
  %v1322 = vpack.c.b16 %v784, %v782
  %v1323 = vpack.c.b16 %v785, %v783
  %v1324 = vpack.c.b16 %v788, %v786
  %v1325 = vpack.c.b16 %v789, %v787
  %v1326 = vpack.c.b16 %v792, %v790
  %v1327 = vpack.c.b16 %v793, %v791
  %v1328 = vpack.c.b16 %v796, %v794
  %v1329 = vpack.c.b16 %v797, %v795
  %v1330 = vpack.c.b16 %v800, %v798
  %v1331 = vpack.c.b16 %v801, %v799
  %v1332 = vpack.c.b16 %v804, %v802
  %v1333 = vpack.c.b16 %v805, %v803
  %v1334 = vpack.c.b16 %v808, %v806
  %v1335 = vpack.c.b16 %v809, %v807
  %v1336 = vpack.c.b16 %v812, %v810
  %v1337 = vpack.c.b16 %v813, %v811
  %v1338 = vpack.c.b16 %v816, %v814
  %v1339 = vpack.c.b16 %v817, %v815
  %v1340 = vpack.c.b16 %v820, %v818
  %v1341 = vpack.c.b16 %v821, %v819
  %v1342 = vpack.c.b16 %v824, %v822
  %v1343 = vpack.c.b16 %v825, %v823
  %v1344 = vpack.c.b16 %v828, %v826
  %v1345 = vpack.c.b16 %v829, %v827
  %v1346 = vpack.c.b16 %v832, %v830
  %v1347 = vpack.c.b16 %v833, %v831
  %v1348 = vpack.c.b16 %v836, %v834
  %v1349 = vpack.c.b16 %v837, %v835
  %v1350 = vpack.c.b16 %v840, %v838
  %v1351 = vpack.c.b16 %v841, %v839
  %v1352 = vpack.c.b16 %v844, %v842
  %v1353 = vpack.c.b16 %v845, %v843
  %v1354 = vpack.c.b16 %v848, %v846
  %v1355 = vpack.c.b16 %v849, %v847
  %v1356 = vpack.c.b16 %v852, %v850
  %v1357 = vpack.c.b16 %v853, %v851
  %v1358 = vpack.c.b16 %v856, %v854
  %v1359 = vpack.c.b16 %v857, %v855
  %v1360 = vpack.c.b16 %v860, %v858
  %v1361 = vpack.c.b16 %v861, %v859
  %v1362 = vpack.c.b16 %v864, %v862
  %v1363 = vpack.c.b16 %v865, %v863
  %v1364 = vpack.c.b16 %v868, %v866
  %v1365 = vpack.c.b16 %v869, %v867
  %v1366 = vpack.c.b16 %v872, %v870
  %v1367 = vpack.c.b16 %v873, %v871
  %v1368 = vpack.c.b16 %v876, %v874
  %v1369 = vpack.c.b16 %v877, %v875
  %v1370 = vpack.c.b16 %v880, %v878
  %v1371 = vpack.c.b16 %v881, %v879
  %v1372 = vpack.c.b16 %v884, %v882
  %v1373 = vpack.c.b16 %v885, %v883
  %v1374 = vpack.c.b16 %v888, %v886
  %v1375 = vpack.c.b16 %v889, %v887
  %v1376 = vpack.c.b16 %v892, %v890
  %v1377 = vpack.c.b16 %v893, %v891
  %v1378 = vpack.c.b16 %v896, %v894
  %v1379 = vpack.c.b16 %v897, %v895
  %v1380 = vpack.c.b16 %v900, %v898
  %v1381 = vpack.c.b16 %v901, %v899
  %v1382 = vpack.c.b16 %v904, %v902
  %v1383 = vpack.c.b16 %v905, %v903
  %v1384 = vpack.c.b16 %v908, %v906
  %v1385 = vpack.c.b16 %v909, %v907
  %v1386 = vpack.c.b16 %v912, %v910
  %v1387 = vpack.c.b16 %v913, %v911
  %v1388 = vpack.c.b16 %v916, %v914
  %v1389 = vpack.c.b16 %v917, %v915
  %v1390 = vpack.c.b16 %v920, %v918
  %v1391 = vpack.c.b16 %v921, %v919
  %v1392 = vpack.c.b16 %v924, %v922
  %v1393 = vpack.c.b16 %v925, %v923
  %v1394 = vpack.c.b16 %v928, %v926
  %v1395 = vpack.c.b16 %v929, %v927
  %v1396 = vpack.c.b16 %v932, %v930
  %v1397 = vpack.c.b16 %v933, %v931
  %v1398 = vpack.c.b16 %v936, %v934
  %v1399 = vpack.c.b16 %v937, %v935
  %v1400 = vpack.c.b16 %v940, %v938
  %v1401 = vpack.c.b16 %v941, %v939
  %v1402 = vpack.c.b16 %v944, %v942
  %v1403 = vpack.c.b16 %v945, %v943
  %v1404 = vpack.c.b16 %v948, %v946
  %v1405 = vpack.c.b16 %v949, %v947
  %v1406 = vpack.c.b16 %v952, %v950
  %v1407 = vpack.c.b16 %v953, %v951
  %v1408 = vpack.c.b16 %v956, %v954
  %v1409 = vpack.c.b16 %v957, %v955
  %v1410 = vpack.c.b16 %v960, %v958
  %v1411 = vpack.c.b16 %v961, %v959
  %v1412 = vpack.c.b16 %v964, %v962
  %v1413 = vpack.c.b16 %v965, %v963
  %v1414 = vpack.c.b16 %v968, %v966
  %v1415 = vpack.c.b16 %v969, %v967
  %v1416 = vpack.c.b16 %v972, %v970
  %v1417 = vpack.c.b16 %v973, %v971
  %v1418 = vpack.c.b16 %v976, %v974
  %v1419 = vpack.c.b16 %v977, %v975
  %v1420 = vpack.c.b16 %v980, %v978
  %v1421 = vpack.c.b16 %v981, %v979
  %v1422 = vpack.c.b16 %v984, %v982
  %v1423 = vpack.c.b16 %v985, %v983
  %v1424 = vpack.c.b16 %v988, %v986
  %v1425 = vpack.c.b16 %v989, %v987
  %v1426 = vpack.c.b16 %v992, %v990
  %v1427 = vpack.c.b16 %v993, %v991
  %v1428 = vpack.c.b16 %v996, %v994
  %v1429 = vpack.c.b16 %v997, %v995
  %v1430 = vpack.c.b16 %v1000, %v998
  %v1431 = vpack.c.b16 %v1001, %v999
  %v1432 = vpack.c.b16 %v1004, %v1002
  %v1433 = vpack.c.b16 %v1005, %v1003
  %v1434 = vpack.c.b16 %v1008, %v1006
  %v1435 = vpack.c.b16 %v1009, %v1007
  %v1436 = vpack.c.b16 %v1012, %v1010
  %v1437 = vpack.c.b16 %v1013, %v1011
  %v1438 = vpack.c.b16 %v1016, %v1014
  %v1439 = vpack.c.b16 %v1017, %v1015
  %v1440 = vpack.c.b16 %v1020, %v1018
  %v1441 = vpack.c.b16 %v1021, %v1019
  %v1442 = vpack.c.b16 %v1024, %v1022
  %v1443 = vpack.c.b16 %v1025, %v1023
  %v1444 = vpack.c.b16 %v1028, %v1026
  %v1445 = vpack.c.b16 %v1029, %v1027
  %v1446 = vpack.c.b16 %v1032, %v1030
  %v1447 = vpack.c.b16 %v1033, %v1031
  %v1448 = vpack.c.b16 %v1036, %v1034
  %v1449 = vpack.c.b16 %v1037, %v1035
  %v1450 = vpack.c.b16 %v1040, %v1038
  %v1451 = vpack.c.b16 %v1041, %v1039
  %v1452 = vpack.c.b16 %v1044, %v1042
  %v1453 = vpack.c.b16 %v1045, %v1043
  %v1454 = vpack.c.b16 %v1048, %v1046
  %v1455 = vpack.c.b16 %v1049, %v1047
  %v1456 = vpack.c.b16 %v1052, %v1050
  %v1457 = vpack.c.b16 %v1053, %v1051
  %v1458 = vpack.c.b16 %v1056, %v1054
  %v1459 = vpack.c.b16 %v1057, %v1055
  %v1460 = vpack.c.b16 %v1060, %v1058
  %v1461 = vpack.c.b16 %v1061, %v1059
  %v1462 = vpack.c.b16 %v1064, %v1062
  %v1463 = vpack.c.b16 %v1065, %v1063
  %v1464 = vpack.c.b16 %v1068, %v1066
  %v1465 = vpack.c.b16 %v1069, %v1067
  %v1466 = vpack.c.b16 %v1072, %v1070
  %v1467 = vpack.c.b16 %v1073, %v1071
  %v1468 = vpack.c.b16 %v1076, %v1074
  %v1469 = vpack.c.b16 %v1077, %v1075
  %v1470 = vpack.c.b16 %v1080, %v1078
  %v1471 = vpack.c.b16 %v1081, %v1079
  %v1472 = vpack.c.b16 %v1084, %v1082
  %v1473 = vpack.c.b16 %v1085, %v1083
  %v1474 = vpack.c.b16 %v1088, %v1086
  %v1475 = vpack.c.b16 %v1089, %v1087
  %v1476 = vpack.c.b16 %v1092, %v1090
  %v1477 = vpack.c.b16 %v1093, %v1091
  %v1478 = vpack.c.b16 %v1096, %v1094
  %v1479 = vpack.c.b16 %v1097, %v1095
  %v1480 = vpack.c.b16 %v1100, %v1098
  %v1481 = vpack.c.b16 %v1101, %v1099
  %v1482 = vpack.c.b16 %v1104, %v1102
  %v1483 = vpack.c.b16 %v1105, %v1103
  %v1484 = vpack.c.b16 %v1108, %v1106
  %v1485 = vpack.c.b16 %v1109, %v1107
  %v1486 = vpack.c.b16 %v1112, %v1110
  %v1487 = vpack.c.b16 %v1113, %v1111
  %v1488 = vpack.c.b16 %v1116, %v1114
  %v1489 = vpack.c.b16 %v1117, %v1115
  %v1490 = vpack.c.b16 %v1120, %v1118
  %v1491 = vpack.c.b16 %v1121, %v1119
  %v1492 = vpack.c.b16 %v1124, %v1122
  %v1493 = vpack.c.b16 %v1125, %v1123
  %v1494 = vpack.c.b16 %v1128, %v1126
  %v1495 = vpack.c.b16 %v1129, %v1127
  %v1496 = vpack.c.b16 %v1132, %v1130
  %v1497 = vpack.c.b16 %v1133, %v1131
  %v1498 = vpack.c.b16 %v1136, %v1134
  %v1499 = vpack.c.b16 %v1137, %v1135
  %v1500 = vpack.c.b16 %v1140, %v1138
  %v1501 = vpack.c.b16 %v1141, %v1139
  %v1502 = vpack.c.b16 %v1144, %v1142
  %v1503 = vpack.c.b16 %v1145, %v1143
  %v1504 = vpack.c.b16 %v1148, %v1146
  %v1505 = vpack.c.b16 %v1149, %v1147
  %v1506 = vpack.c.b16 %v1152, %v1150
  %v1507 = vpack.c.b16 %v1153, %v1151
  %v1508 = vpack.c.b16 %v1156, %v1154
  %v1509 = vpack.c.b16 %v1157, %v1155
  %v1510 = vpack.c.b16 %v1160, %v1158
  %v1511 = vpack.c.b16 %v1161, %v1159
  %v1512 = vpack.c.b16 %v1164, %v1162
  %v1513 = vpack.c.b16 %v1165, %v1163
  %v1514 = vpack.c.b16 %v1168, %v1166
  %v1515 = vpack.c.b16 %v1169, %v1167
  %v1516 = vpack.c.b16 %v1172, %v1170
  %v1517 = vpack.c.b16 %v1173, %v1171
  %v1518 = vpack.c.b16 %v1176, %v1174
  %v1519 = vpack.c.b16 %v1177, %v1175
  %v1520 = vpack.c.b16 %v1180, %v1178
  %v1521 = vpack.c.b16 %v1181, %v1179
  %v1522 = vpack.c.b16 %v1184, %v1182
  %v1523 = vpack.c.b16 %v1185, %v1183
  %v1524 = vpack.c.b16 %v1188, %v1186
  %v1525 = vpack.c.b16 %v1189, %v1187
  %v1526 = vpack.c.b16 %v1192, %v1190
  %v1527 = vpack.c.b16 %v1193, %v1191
  %v1528 = vpack.c.b16 %v1196, %v1194
  %v1529 = vpack.c.b16 %v1197, %v1195
  %v1530 = vpack.c.b16 %v1200, %v1198
  %v1531 = vpack.c.b16 %v1201, %v1199
  %v1532 = vpack.c.b16 %v1204, %v1202
  %v1533 = vpack.c.b16 %v1205, %v1203
  %v1534 = vpack.c.b16 %v1208, %v1206
  %v1535 = vpack.c.b16 %v1209, %v1207
  %v1536 = vpack.c.b16 %v1212, %v1210
  %v1537 = vpack.c.b16 %v1213, %v1211
  %v1538 = vpack.c.b16 %v1216, %v1214
  %v1539 = vpack.c.b16 %v1217, %v1215
  %v1540 = vpack.c.b16 %v1220, %v1218
  %v1541 = vpack.c.b16 %v1221, %v1219
  %v1542 = vpack.c.b16 %v1224, %v1222
  %v1543 = vpack.c.b16 %v1225, %v1223
  %v1544 = vpack.c.b16 %v1228, %v1226
  %v1545 = vpack.c.b16 %v1229, %v1227
  %v1546 = vpack.c.b16 %v1232, %v1230
  %v1547 = vpack.c.b16 %v1233, %v1231
  %v1548 = vpack.c.b16 %v1236, %v1234
  %v1549 = vpack.c.b16 %v1237, %v1235
  %v1550 = vpack.c.b16 %v1240, %v1238
  %v1551 = vpack.c.b16 %v1241, %v1239
  %v1552 = vpack.c.b16 %v1244, %v1242
  %v1553 = vpack.c.b16 %v1245, %v1243
  %v1554 = vpack.c.b16 %v1248, %v1246
  %v1555 = vpack.c.b16 %v1249, %v1247
  %v1556 = vpack.c.b16 %v1252, %v1250
  %v1557 = vpack.c.b16 %v1253, %v1251
  %v1558 = vpack.c.b16 %v1256, %v1254
  %v1559 = vpack.c.b16 %v1257, %v1255
  %v1560 = vpack.c.b16 %v1260, %v1258
  %v1561 = vpack.c.b16 %v1261, %v1259
  %v1562 = vpack.c.b16 %v1264, %v1262
  %v1563 = vpack.c.b16 %v1265, %v1263
  %v1564 = vpack.c.b16 %v1268, %v1266
  %v1565 = vpack.c.b16 %v1269, %v1267
  %v1566 = vpack.c.b16 %v1272, %v1270
  %v1567 = vpack.c.b16 %v1273, %v1271
  %v1568 = vpack.c.b16 %v1276, %v1274
  %v1569 = vpack.c.b16 %v1277, %v1275
  %v1570 = vpack.c.b16 %v1280, %v1278
  %v1571 = vpack.c.b16 %v1281, %v1279
  %v1572 = vpack.c.b16 %v1284, %v1282
  %v1573 = vpack.c.b16 %v1285, %v1283
  %1862 = vmatprep.subr.bf16.mxu0 %v1301
  %1863 = vmatpush1.bf16.msra.mxu0 %v1300
  %1864 = vmatprep.subr.bf16.mxu0 %v1299
  %1865 = vmatpush1.bf16.msra.mxu0 %v1298
  %1866 = vmatprep.subr.bf16.mxu0 %v1297
  %1867 = vmatpush1.bf16.msra.mxu0 %v1296
  %1868 = vmatprep.subr.bf16.mxu0 %v1295
  %1869 = vmatpush1.bf16.msra.mxu0 %v1294
  %1870 = vmatprep.subr.bf16.mxu0 %v1293
  %1871 = vmatpush1.bf16.msra.mxu0 %v1292
  %1872 = vmatprep.subr.bf16.mxu0 %v1291
  %1873 = vmatpush1.bf16.msra.mxu0 %v1290
  %1874 = vmatprep.subr.bf16.mxu0 %v1289
  %1875 = vmatpush1.bf16.msra.mxu0 %v1288
  %1876 = vmatprep.subr.bf16.mxu0 %v1287
  %1877 = vmatpush1.bf16.msra.mxu0 %v1286
  %1878 = vmatprep.subr.bf16.mxu0 %v1317
  %1879 = vmatpush2.bf16.msra.mxu0 %v1316
  %1880 = vmatprep.subr.bf16.mxu0 %v1315
  %1881 = vmatpush2.bf16.msra.mxu0 %v1314
  %1882 = vmatprep.subr.bf16.mxu0 %v1313
  %1883 = vmatpush2.bf16.msra.mxu0 %v1312
  %1884 = vmatprep.subr.bf16.mxu0 %v1311
  %1885 = vmatpush2.bf16.msra.mxu0 %v1310
  %1886 = vmatprep.subr.bf16.mxu0 %v1309
  %1887 = vmatpush2.bf16.msra.mxu0 %v1308
  %1888 = vmatprep.subr.bf16.mxu0 %v1307
  %1889 = vmatpush2.bf16.msra.mxu0 %v1306
  %1890 = vmatprep.subr.bf16.mxu0 %v1305
  %1891 = vmatpush2.bf16.msra.mxu0 %v1304
  %1892 = vmatprep.subr.bf16.mxu0 %v1303
  %1893 = vmatpush2.bf16.msra.mxu0 %v1302
  %1894 = vmatprep.mubr.bf16.mxu0 %v387
  %1895 = vmatmul.mubr.bf16.gmra.mxu0 %v386
  %v1896 = vpop.f32.mrf.mxu0
  %v1897 = vadd.f32 %v325, %v1896
  %v1898 = vpop.f32.mrf.mxu0
  %v1899 = vadd.f32 %v329, %v1898
  %v1900 = vpop.f32.mrf.mxu0
  %v1901 = vadd.f32 %v325, %v1900
  %v1902 = vpop.f32.mrf.mxu0
  %v1903 = vadd.f32 %v329, %v1902
  %1904 = vdwg.mxu0
  %1905 = vmatprep.subr.bf16.mxu0 %v1333
  %1906 = vmatpush1.bf16.msra.mxu0 %v1332
  %1907 = vmatprep.subr.bf16.mxu0 %v1331
  %1908 = vmatpush1.bf16.msra.mxu0 %v1330
  %1909 = vmatprep.subr.bf16.mxu0 %v1329
  %1910 = vmatpush1.bf16.msra.mxu0 %v1328
  %1911 = vmatprep.subr.bf16.mxu0 %v1327
  %1912 = vmatpush1.bf16.msra.mxu0 %v1326
  %1913 = vmatprep.subr.bf16.mxu0 %v1325
  %1914 = vmatpush1.bf16.msra.mxu0 %v1324
  %1915 = vmatprep.subr.bf16.mxu0 %v1323
  %1916 = vmatpush1.bf16.msra.mxu0 %v1322
  %1917 = vmatprep.subr.bf16.mxu0 %v1321
  %1918 = vmatpush1.bf16.msra.mxu0 %v1320
  %1919 = vmatprep.subr.bf16.mxu0 %v1319
  %1920 = vmatpush1.bf16.msra.mxu0 %v1318
  %1921 = vmatprep.subr.bf16.mxu0 %v1349
  %1922 = vmatpush2.bf16.msra.mxu0 %v1348
  %1923 = vmatprep.subr.bf16.mxu0 %v1347
  %1924 = vmatpush2.bf16.msra.mxu0 %v1346
  %1925 = vmatprep.subr.bf16.mxu0 %v1345
  %1926 = vmatpush2.bf16.msra.mxu0 %v1344
  %1927 = vmatprep.subr.bf16.mxu0 %v1343
  %1928 = vmatpush2.bf16.msra.mxu0 %v1342
  %1929 = vmatprep.subr.bf16.mxu0 %v1341
  %1930 = vmatpush2.bf16.msra.mxu0 %v1340
  %1931 = vmatprep.subr.bf16.mxu0 %v1339
  %1932 = vmatpush2.bf16.msra.mxu0 %v1338
  %1933 = vmatprep.subr.bf16.mxu0 %v1337
  %1934 = vmatpush2.bf16.msra.mxu0 %v1336
  %1935 = vmatprep.subr.bf16.mxu0 %v1335
  %1936 = vmatpush2.bf16.msra.mxu0 %v1334
  %1937 = vmatprep.mubr.bf16.mxu0 %v389
  %1938 = vmatmul.mubr.bf16.gmra.mxu0 %v388
  %v1939 = vpop.f32.mrf.mxu0
  %v1940 = vadd.f32 %v1897, %v1939
  %v1941 = vpop.f32.mrf.mxu0
  %v1942 = vadd.f32 %v1899, %v1941
  %v1943 = vpop.f32.mrf.mxu0
  %v1944 = vadd.f32 %v1901, %v1943
  %v1945 = vpop.f32.mrf.mxu0
  %v1946 = vadd.f32 %v1903, %v1945
  %1947 = vdwg.mxu0
  %1948 = vmatprep.subr.bf16.mxu0 %v1365
  %1949 = vmatpush1.bf16.msra.mxu0 %v1364
  %1950 = vmatprep.subr.bf16.mxu0 %v1363
  %1951 = vmatpush1.bf16.msra.mxu0 %v1362
  %1952 = vmatprep.subr.bf16.mxu0 %v1361
  %1953 = vmatpush1.bf16.msra.mxu0 %v1360
  %1954 = vmatprep.subr.bf16.mxu0 %v1359
  %1955 = vmatpush1.bf16.msra.mxu0 %v1358
  %1956 = vmatprep.subr.bf16.mxu0 %v1357
  %1957 = vmatpush1.bf16.msra.mxu0 %v1356
  %1958 = vmatprep.subr.bf16.mxu0 %v1355
  %1959 = vmatpush1.bf16.msra.mxu0 %v1354
  %1960 = vmatprep.subr.bf16.mxu0 %v1353
  %1961 = vmatpush1.bf16.msra.mxu0 %v1352
  %1962 = vmatprep.subr.bf16.mxu0 %v1351
  %1963 = vmatpush1.bf16.msra.mxu0 %v1350
  %1964 = vmatprep.subr.bf16.mxu0 %v1381
  %1965 = vmatpush2.bf16.msra.mxu0 %v1380
  %1966 = vmatprep.subr.bf16.mxu0 %v1379
  %1967 = vmatpush2.bf16.msra.mxu0 %v1378
  %1968 = vmatprep.subr.bf16.mxu0 %v1377
  %1969 = vmatpush2.bf16.msra.mxu0 %v1376
  %1970 = vmatprep.subr.bf16.mxu0 %v1375
  %1971 = vmatpush2.bf16.msra.mxu0 %v1374
  %1972 = vmatprep.subr.bf16.mxu0 %v1373
  %1973 = vmatpush2.bf16.msra.mxu0 %v1372
  %1974 = vmatprep.subr.bf16.mxu0 %v1371
  %1975 = vmatpush2.bf16.msra.mxu0 %v1370
  %1976 = vmatprep.subr.bf16.mxu0 %v1369
  %1977 = vmatpush2.bf16.msra.mxu0 %v1368
  %1978 = vmatprep.subr.bf16.mxu0 %v1367
  %1979 = vmatpush2.bf16.msra.mxu0 %v1366
  %1980 = vmatprep.mubr.bf16.mxu0 %v391
  %1981 = vmatmul.mubr.bf16.gmra.mxu0 %v390
  %v1982 = vpop.f32.mrf.mxu0
  %v1983 = vadd.f32 %v1940, %v1982
  %v1984 = vpop.f32.mrf.mxu0
  %v1985 = vadd.f32 %v1942, %v1984
  %v1986 = vpop.f32.mrf.mxu0
  %v1987 = vadd.f32 %v1944, %v1986
  %v1988 = vpop.f32.mrf.mxu0
  %v1989 = vadd.f32 %v1946, %v1988
  %1990 = vdwg.mxu0
  %1991 = vmatprep.subr.bf16.mxu0 %v1397
  %1992 = vmatpush1.bf16.msra.mxu0 %v1396
  %1993 = vmatprep.subr.bf16.mxu0 %v1395
  %1994 = vmatpush1.bf16.msra.mxu0 %v1394
  %1995 = vmatprep.subr.bf16.mxu0 %v1393
  %1996 = vmatpush1.bf16.msra.mxu0 %v1392
  %1997 = vmatprep.subr.bf16.mxu0 %v1391
  %1998 = vmatpush1.bf16.msra.mxu0 %v1390
  %1999 = vmatprep.subr.bf16.mxu0 %v1389
  %2000 = vmatpush1.bf16.msra.mxu0 %v1388
  %2001 = vmatprep.subr.bf16.mxu0 %v1387
  %2002 = vmatpush1.bf16.msra.mxu0 %v1386
  %2003 = vmatprep.subr.bf16.mxu0 %v1385
  %2004 = vmatpush1.bf16.msra.mxu0 %v1384
  %2005 = vmatprep.subr.bf16.mxu0 %v1383
  %2006 = vmatpush1.bf16.msra.mxu0 %v1382
  %2007 = vmatprep.subr.bf16.mxu0 %v1413
  %2008 = vmatpush2.bf16.msra.mxu0 %v1412
  %2009 = vmatprep.subr.bf16.mxu0 %v1411
  %2010 = vmatpush2.bf16.msra.mxu0 %v1410
  %2011 = vmatprep.subr.bf16.mxu0 %v1409
  %2012 = vmatpush2.bf16.msra.mxu0 %v1408
  %2013 = vmatprep.subr.bf16.mxu0 %v1407
  %2014 = vmatpush2.bf16.msra.mxu0 %v1406
  %2015 = vmatprep.subr.bf16.mxu0 %v1405
  %2016 = vmatpush2.bf16.msra.mxu0 %v1404
  %2017 = vmatprep.subr.bf16.mxu0 %v1403
  %2018 = vmatpush2.bf16.msra.mxu0 %v1402
  %2019 = vmatprep.subr.bf16.mxu0 %v1401
  %2020 = vmatpush2.bf16.msra.mxu0 %v1400
  %2021 = vmatprep.subr.bf16.mxu0 %v1399
  %2022 = vmatpush2.bf16.msra.mxu0 %v1398
  %2023 = vmatprep.mubr.bf16.mxu0 %v393
  %2024 = vmatmul.mubr.bf16.gmra.mxu0 %v392
  %v2025 = vpop.f32.mrf.mxu0
  %v2026 = vadd.f32 %v1983, %v2025
  %v2027 = vpop.f32.mrf.mxu0
  %v2028 = vadd.f32 %v1985, %v2027
  %v2029 = vpop.f32.mrf.mxu0
  %v2030 = vadd.f32 %v1987, %v2029
  %v2031 = vpop.f32.mrf.mxu0
  %v2032 = vadd.f32 %v1989, %v2031
  %2033 = vdwg.mxu0
  %2034 = vmatprep.subr.bf16.mxu0 %v1429
  %2035 = vmatpush1.bf16.msra.mxu0 %v1428
  %2036 = vmatprep.subr.bf16.mxu0 %v1427
  %2037 = vmatpush1.bf16.msra.mxu0 %v1426
  %2038 = vmatprep.subr.bf16.mxu0 %v1425
  %2039 = vmatpush1.bf16.msra.mxu0 %v1424
  %2040 = vmatprep.subr.bf16.mxu0 %v1423
  %2041 = vmatpush1.bf16.msra.mxu0 %v1422
  %2042 = vmatprep.subr.bf16.mxu0 %v1421
  %2043 = vmatpush1.bf16.msra.mxu0 %v1420
  %2044 = vmatprep.subr.bf16.mxu0 %v1419
  %2045 = vmatpush1.bf16.msra.mxu0 %v1418
  %2046 = vmatprep.subr.bf16.mxu0 %v1417
  %2047 = vmatpush1.bf16.msra.mxu0 %v1416
  %2048 = vmatprep.subr.bf16.mxu0 %v1415
  %2049 = vmatpush1.bf16.msra.mxu0 %v1414
  %2050 = vmatprep.subr.bf16.mxu0 %v1445
  %2051 = vmatpush2.bf16.msra.mxu0 %v1444
  %2052 = vmatprep.subr.bf16.mxu0 %v1443
  %2053 = vmatpush2.bf16.msra.mxu0 %v1442
  %2054 = vmatprep.subr.bf16.mxu0 %v1441
  %2055 = vmatpush2.bf16.msra.mxu0 %v1440
  %2056 = vmatprep.subr.bf16.mxu0 %v1439
  %2057 = vmatpush2.bf16.msra.mxu0 %v1438
  %2058 = vmatprep.subr.bf16.mxu0 %v1437
  %2059 = vmatpush2.bf16.msra.mxu0 %v1436
  %2060 = vmatprep.subr.bf16.mxu0 %v1435
  %2061 = vmatpush2.bf16.msra.mxu0 %v1434
  %2062 = vmatprep.subr.bf16.mxu0 %v1433
  %2063 = vmatpush2.bf16.msra.mxu0 %v1432
  %2064 = vmatprep.subr.bf16.mxu0 %v1431
  %2065 = vmatpush2.bf16.msra.mxu0 %v1430
  %2066 = vmatprep.mubr.bf16.mxu0 %v395
  %2067 = vmatmul.mubr.bf16.gmra.mxu0 %v394
  %v2068 = vpop.f32.mrf.mxu0
  %v2069 = vadd.f32 %v2026, %v2068
  %v2070 = vpop.f32.mrf.mxu0
  %v2071 = vadd.f32 %v2028, %v2070
  %v2072 = vpop.f32.mrf.mxu0
  %v2073 = vadd.f32 %v2030, %v2072
  %v2074 = vpop.f32.mrf.mxu0
  %v2075 = vadd.f32 %v2032, %v2074
  %2076 = vdwg.mxu0
  %2077 = vmatprep.subr.bf16.mxu0 %v1461
  %2078 = vmatpush1.bf16.msra.mxu0 %v1460
  %2079 = vmatprep.subr.bf16.mxu0 %v1459
  %2080 = vmatpush1.bf16.msra.mxu0 %v1458
  %2081 = vmatprep.subr.bf16.mxu0 %v1457
  %2082 = vmatpush1.bf16.msra.mxu0 %v1456
  %2083 = vmatprep.subr.bf16.mxu0 %v1455
  %2084 = vmatpush1.bf16.msra.mxu0 %v1454
  %2085 = vmatprep.subr.bf16.mxu0 %v1453
  %2086 = vmatpush1.bf16.msra.mxu0 %v1452
  %2087 = vmatprep.subr.bf16.mxu0 %v1451
  %2088 = vmatpush1.bf16.msra.mxu0 %v1450
  %2089 = vmatprep.subr.bf16.mxu0 %v1449
  %2090 = vmatpush1.bf16.msra.mxu0 %v1448
  %2091 = vmatprep.subr.bf16.mxu0 %v1447
  %2092 = vmatpush1.bf16.msra.mxu0 %v1446
  %2093 = vmatprep.subr.bf16.mxu0 %v1477
  %2094 = vmatpush2.bf16.msra.mxu0 %v1476
  %2095 = vmatprep.subr.bf16.mxu0 %v1475
  %2096 = vmatpush2.bf16.msra.mxu0 %v1474
  %2097 = vmatprep.subr.bf16.mxu0 %v1473
  %2098 = vmatpush2.bf16.msra.mxu0 %v1472
  %2099 = vmatprep.subr.bf16.mxu0 %v1471
  %2100 = vmatpush2.bf16.msra.mxu0 %v1470
  %2101 = vmatprep.subr.bf16.mxu0 %v1469
  %2102 = vmatpush2.bf16.msra.mxu0 %v1468
  %2103 = vmatprep.subr.bf16.mxu0 %v1467
  %2104 = vmatpush2.bf16.msra.mxu0 %v1466
  %2105 = vmatprep.subr.bf16.mxu0 %v1465
  %2106 = vmatpush2.bf16.msra.mxu0 %v1464
  %2107 = vmatprep.subr.bf16.mxu0 %v1463
  %2108 = vmatpush2.bf16.msra.mxu0 %v1462
  %2109 = vmatprep.mubr.bf16.mxu0 %v397
  %2110 = vmatmul.mubr.bf16.gmra.mxu0 %v396
  %v2111 = vpop.f32.mrf.mxu0
  %v2112 = vadd.f32 %v2069, %v2111
  %v2113 = vpop.f32.mrf.mxu0
  %v2114 = vadd.f32 %v2071, %v2113
  %v2115 = vpop.f32.mrf.mxu0
  %v2116 = vadd.f32 %v2073, %v2115
  %v2117 = vpop.f32.mrf.mxu0
  %v2118 = vadd.f32 %v2075, %v2117
  %2119 = vdwg.mxu0
  %2120 = vmatprep.subr.bf16.mxu0 %v1493
  %2121 = vmatpush1.bf16.msra.mxu0 %v1492
  %2122 = vmatprep.subr.bf16.mxu0 %v1491
  %2123 = vmatpush1.bf16.msra.mxu0 %v1490
  %2124 = vmatprep.subr.bf16.mxu0 %v1489
  %2125 = vmatpush1.bf16.msra.mxu0 %v1488
  %2126 = vmatprep.subr.bf16.mxu0 %v1487
  %2127 = vmatpush1.bf16.msra.mxu0 %v1486
  %2128 = vmatprep.subr.bf16.mxu0 %v1485
  %2129 = vmatpush1.bf16.msra.mxu0 %v1484
  %2130 = vmatprep.subr.bf16.mxu0 %v1483
  %2131 = vmatpush1.bf16.msra.mxu0 %v1482
  %2132 = vmatprep.subr.bf16.mxu0 %v1481
  %2133 = vmatpush1.bf16.msra.mxu0 %v1480
  %2134 = vmatprep.subr.bf16.mxu0 %v1479
  %2135 = vmatpush1.bf16.msra.mxu0 %v1478
  %2136 = vmatprep.subr.bf16.mxu0 %v1509
  %2137 = vmatpush2.bf16.msra.mxu0 %v1508
  %2138 = vmatprep.subr.bf16.mxu0 %v1507
  %2139 = vmatpush2.bf16.msra.mxu0 %v1506
  %2140 = vmatprep.subr.bf16.mxu0 %v1505
  %2141 = vmatpush2.bf16.msra.mxu0 %v1504
  %2142 = vmatprep.subr.bf16.mxu0 %v1503
  %2143 = vmatpush2.bf16.msra.mxu0 %v1502
  %2144 = vmatprep.subr.bf16.mxu0 %v1501
  %2145 = vmatpush2.bf16.msra.mxu0 %v1500
  %2146 = vmatprep.subr.bf16.mxu0 %v1499
  %2147 = vmatpush2.bf16.msra.mxu0 %v1498
  %2148 = vmatprep.subr.bf16.mxu0 %v1497
  %2149 = vmatpush2.bf16.msra.mxu0 %v1496
  %2150 = vmatprep.subr.bf16.mxu0 %v1495
  %2151 = vmatpush2.bf16.msra.mxu0 %v1494
  %2152 = vmatprep.mubr.bf16.mxu0 %v399
  %2153 = vmatmul.mubr.bf16.gmra.mxu0 %v398
  %v2154 = vpop.f32.mrf.mxu0
  %v2155 = vadd.f32 %v2112, %v2154
  %v2156 = vpop.f32.mrf.mxu0
  %v2157 = vadd.f32 %v2114, %v2156
  %v2158 = vpop.f32.mrf.mxu0
  %v2159 = vadd.f32 %v2116, %v2158
  %v2160 = vpop.f32.mrf.mxu0
  %v2161 = vadd.f32 %v2118, %v2160
  %2162 = vdwg.mxu0
  %2163 = vmatprep.subr.bf16.mxu0 %v1525
  %2164 = vmatpush1.bf16.msra.mxu0 %v1524
  %2165 = vmatprep.subr.bf16.mxu0 %v1523
  %2166 = vmatpush1.bf16.msra.mxu0 %v1522
  %2167 = vmatprep.subr.bf16.mxu0 %v1521
  %2168 = vmatpush1.bf16.msra.mxu0 %v1520
  %2169 = vmatprep.subr.bf16.mxu0 %v1519
  %2170 = vmatpush1.bf16.msra.mxu0 %v1518
  %2171 = vmatprep.subr.bf16.mxu0 %v1517
  %2172 = vmatpush1.bf16.msra.mxu0 %v1516
  %2173 = vmatprep.subr.bf16.mxu0 %v1515
  %2174 = vmatpush1.bf16.msra.mxu0 %v1514
  %2175 = vmatprep.subr.bf16.mxu0 %v1513
  %2176 = vmatpush1.bf16.msra.mxu0 %v1512
  %2177 = vmatprep.subr.bf16.mxu0 %v1511
  %2178 = vmatpush1.bf16.msra.mxu0 %v1510
  %2179 = vmatprep.subr.bf16.mxu0 %v1541
  %2180 = vmatpush2.bf16.msra.mxu0 %v1540
  %2181 = vmatprep.subr.bf16.mxu0 %v1539
  %2182 = vmatpush2.bf16.msra.mxu0 %v1538
  %2183 = vmatprep.subr.bf16.mxu0 %v1537
  %2184 = vmatpush2.bf16.msra.mxu0 %v1536
  %2185 = vmatprep.subr.bf16.mxu0 %v1535
  %2186 = vmatpush2.bf16.msra.mxu0 %v1534
  %2187 = vmatprep.subr.bf16.mxu0 %v1533
  %2188 = vmatpush2.bf16.msra.mxu0 %v1532
  %2189 = vmatprep.subr.bf16.mxu0 %v1531
  %2190 = vmatpush2.bf16.msra.mxu0 %v1530
  %2191 = vmatprep.subr.bf16.mxu0 %v1529
  %2192 = vmatpush2.bf16.msra.mxu0 %v1528
  %2193 = vmatprep.subr.bf16.mxu0 %v1527
  %2194 = vmatpush2.bf16.msra.mxu0 %v1526
  %2195 = vmatprep.mubr.bf16.mxu0 %v401
  %2196 = vmatmul.mubr.bf16.gmra.mxu0 %v400
  %v2197 = vpop.f32.mrf.mxu0
  %v2198 = vadd.f32 %v2155, %v2197
  %v2199 = vpop.f32.mrf.mxu0
  %v2200 = vadd.f32 %v2157, %v2199
  %v2201 = vpop.f32.mrf.mxu0
  %v2202 = vadd.f32 %v2159, %v2201
  %v2203 = vpop.f32.mrf.mxu0
  %v2204 = vadd.f32 %v2161, %v2203
  %2205 = vdwg.mxu0
  %2206 = vmatprep.subr.bf16.mxu0 %v1557
  %2207 = vmatpush1.bf16.msra.mxu0 %v1556
  %2208 = vmatprep.subr.bf16.mxu0 %v1555
  %2209 = vmatpush1.bf16.msra.mxu0 %v1554
  %2210 = vmatprep.subr.bf16.mxu0 %v1553
  %2211 = vmatpush1.bf16.msra.mxu0 %v1552
  %2212 = vmatprep.subr.bf16.mxu0 %v1551
  %2213 = vmatpush1.bf16.msra.mxu0 %v1550
  %2214 = vmatprep.subr.bf16.mxu0 %v1549
  %2215 = vmatpush1.bf16.msra.mxu0 %v1548
  %2216 = vmatprep.subr.bf16.mxu0 %v1547
  %2217 = vmatpush1.bf16.msra.mxu0 %v1546
  %2218 = vmatprep.subr.bf16.mxu0 %v1545
  %2219 = vmatpush1.bf16.msra.mxu0 %v1544
  %2220 = vmatprep.subr.bf16.mxu0 %v1543
  %2221 = vmatpush1.bf16.msra.mxu0 %v1542
  %2222 = vmatprep.subr.bf16.mxu0 %v1573
  %2223 = vmatpush2.bf16.msra.mxu0 %v1572
  %2224 = vmatprep.subr.bf16.mxu0 %v1571
  %2225 = vmatpush2.bf16.msra.mxu0 %v1570
  %2226 = vmatprep.subr.bf16.mxu0 %v1569
  %2227 = vmatpush2.bf16.msra.mxu0 %v1568
  %2228 = vmatprep.subr.bf16.mxu0 %v1567
  %2229 = vmatpush2.bf16.msra.mxu0 %v1566
  %2230 = vmatprep.subr.bf16.mxu0 %v1565
  %2231 = vmatpush2.bf16.msra.mxu0 %v1564
  %2232 = vmatprep.subr.bf16.mxu0 %v1563
  %2233 = vmatpush2.bf16.msra.mxu0 %v1562
  %2234 = vmatprep.subr.bf16.mxu0 %v1561
  %2235 = vmatpush2.bf16.msra.mxu0 %v1560
  %2236 = vmatprep.subr.bf16.mxu0 %v1559
  %2237 = vmatpush2.bf16.msra.mxu0 %v1558
  %2238 = vmatprep.mubr.bf16.mxu0 %v403
  %2239 = vmatmul.mubr.bf16.gmra.mxu0 %v402
  %v2240 = vpop.f32.mrf.mxu0
  %v2241 = vadd.f32 %v2198, %v2240
  %v2242 = vpop.f32.mrf.mxu0
  %v2243 = vadd.f32 %v2200, %v2242
  %v2244 = vpop.f32.mrf.mxu0
  %v2245 = vadd.f32 %v2202, %v2244
  %v2246 = vpop.f32.mrf.mxu0
  %v2247 = vadd.f32 %v2204, %v2246
  %2248 = vdwg.mxu0
  %v2249 = vmax.f32 %v2241, 0.0
  %v2250 = vmax.f32 %v2243, 0.0
  %v2251 = vmax.f32 %v2245, 0.0
  %v2252 = vmax.f32 %v2247, 0.0
  %v2253 = vpack.c.bf16 %v2251, %v2249
  %v2254 = vpack.c.bf16 %v2252, %v2250
  %v2257 = vunpack.c.l.b16 %v2253
  %v2258 = vunpack.c.l.b16 %v2254
  %v2259 = vunpack.c.h.b16 %v2253
  %v2260 = vunpack.c.h.b16 %v2254
  %v2261 = vpack.c.b16 %v2258, %v2257
  %v2262 = vpack.c.b16 %v2260, %v2259
  %2265 = vst [vmem:[%s3] sm:$0xff] %v2261
  %2266 = vst [vmem:[%s3 + $0x8] sm:$0xff] %v2262
  // Predicated region
  $region14: #{lpips_loss.21} parent=0 // pred_check
    _
  $region15: #{lpips_loss.21} parent=0 // pred_check_branch
    %2268 = sbr.rel (0) target = $region17
  $region16: #{lpips_loss.21} parent=0 // pred_region
    _
  $region17: #{lpips_loss.21} parent=0 // pred_fallthru
    _
  // Predicated region
  $region18: #{lpips_loss.21} parent=0 // pred_check
    _
  $region19: #{lpips_loss.21} parent=0 // pred_check_branch
    %2270 = sbr.rel (0) target = $region21
  $region20: #{lpips_loss.21} parent=0 // pred_region
    _
  $region21: #{lpips_loss.21} parent=0 // pred_fallthru
    _

// kernel: lpips_loss.24
$region0: #{lpips_loss.24}
  #allocation0 [shape = 'u32[]', space=smem, size = 0x4, offset = 0x4, fixed_abs, tag = 'smem constant byte address 0x4 - core index']
  #allocation1 [shape = 'u32[144,128]{1,0:T(1,128)}', space=vmem, size = 0x12000, scoped, tag = 'internal scratch']
  #allocation2 [shape = 'f32[1,384]{1,0:T(1,128)}', space=vmem, size = 0x600, scoped, tag = 'scratch operand']
  %s0 = inlined_call_operand.vmem [shape: bf16[2,16,384], index: 0, kind: input, shape index: {}, may-alias: {0,1}]
  %s1 = inlined_call_operand.vmem [shape: bf16[2,16,384], index: 1, kind: input, shape index: {}, may-alias: {0,1}]
  %s2 = inlined_call_operand.vmem [shape: f32[1,384], index: 2, kind: input, shape index: {}]
  %s3 = inlined_call_operand.hbm [shape: f32[1,1], index: 3, kind: output, shape index: {}]
  %s4 = sld [smem:[#allocation0]]
  $region30: #{lpips_loss.24} parent=0
    _
  %s6 = ssub.s32 1, %s4
  %s7 = scalar_select 0, %s6, %s4
  $region1: #{lpips_loss.24} parent=0
    #allocation3 [shape = 'u8[512]{0}', space=vmem, size = 0x400, scoped, tag = 'output window, operand 0, single buffered']
    #allocation4 [shape = 's32[1]{0}', space=sflag, size = 0x4, scoped, tag = 'scoped memory for lpips_loss.24']
    %8 = vsyncpa [#allocation4], 0
    // Predicated region
    $region2: #{lpips_loss.24} parent=1 // pred_check
      _
    $region3: #{lpips_loss.24} parent=1 // pred_check_branch
      %10 = sbr.rel (0) target = $region5
    $region4: #{lpips_loss.24} parent=1 // pred_region
      _
    $region5: #{lpips_loss.24} parent=1 // pred_fallthru
      _
    // Predicated region
    $region6: #{lpips_loss.24} parent=1 // pred_check
      _
    $region7: #{lpips_loss.24} parent=1 // pred_check_branch
      %12 = sbr.rel (0) target = $region9
    $region8: #{lpips_loss.24} parent=1 // pred_region
      %s13 = scalar_lea.vmem %s1, 24
    $region9: #{lpips_loss.24} parent=1 // pred_fallthru
      _
    // Predicated region
    $region10: #{lpips_loss.24} parent=1 // pred_check
      _
    $region11: #{lpips_loss.24} parent=1 // pred_check_branch
      %15 = sbr.rel (0) target = $region13
    $region12: #{lpips_loss.24} parent=1 // pred_region
      _
    $region13: #{lpips_loss.24} parent=1 // pred_fallthru
      _
    %s16 = scalar_lea.vmem %s1, 24
    %s17 = scalar_lea.vmem %s1, 24
    %p18 = scmp.eq.s32.totalorder 0, 0
    // Predicated region
    $region14: #{lpips_loss.24} parent=1 // pred_check
      %p19 = pneg %p18
    $region15: #{lpips_loss.24} parent=1 // pred_check_branch
      %21 = sbr.rel (%p19) target = $region17
    $region16: #{lpips_loss.24} parent=1 // pred_region
      %v22 = vlaneseq
      %vm23 = vcmp.ge.s32.totalorder %v22, 0
      %vm24 = vcmp.lt.s32.totalorder %v22, 384
      %vm25 = vmand %vm23, %vm24
      %26 = vst.msk [vmem:[#allocation2] sm:$0x7] %vm25, 0.0
    $region17: #{lpips_loss.24} parent=1 // pred_fallthru
      _
    %v27 = vld [vmem:[%s0] sm:$0xff]
    %v28 = vld [vmem:[%s0 + $0x8] sm:$0xf]
    %v29 = vld [vmem:[%s0 + $0xc] sm:$0xff]
    %v30 = vld [vmem:[%s0 + $0x14] sm:$0xf]
    %v31 = vunpack.c.l.bf16 %v27
    %v32 = vunpack.c.h.bf16 %v27
    %v33 = vunpack.c.l.bf16 %v28
    %v34 = vunpack.c.l.bf16 %v29
    %v35 = vunpack.c.h.bf16 %v29
    %v36 = vunpack.c.l.bf16 %v30
    %v37 = vld [vmem:[%s17] sm:$0xff]
    %v38 = vld [vmem:[%s17 + $0x8] sm:$0xf]
    %v39 = vld [vmem:[%s17 + $0xc] sm:$0xff]
    %v40 = vld [vmem:[%s17 + $0x14] sm:$0xf]
    %v41 = vunpack.c.l.bf16 %v37
    %v42 = vunpack.c.h.bf16 %v37
    %v43 = vunpack.c.l.bf16 %v38
    %v44 = vunpack.c.l.bf16 %v39
    %v45 = vunpack.c.h.bf16 %v39
    %v46 = vunpack.c.l.bf16 %v40
    %v47 = vmul.f32 %v31, %v31
    %v48 = vmul.f32 %v32, %v32
    %v49 = vmul.f32 %v33, %v33
    %v50 = vmul.f32 %v34, %v34
    %v51 = vmul.f32 %v35, %v35
    %v52 = vmul.f32 %v36, %v36
    %v53 = vadd.f32 %v47, %v48
    %v54 = vadd.f32 %v53, %v49
    %55 = vadd.xlane.f32.xlu0 %v54
    %v56 = vpop.xlane.xlu0 %55
    %v57 = vadd.f32 %v50, %v51
    %v58 = vadd.f32 %v57, %v52
    %59 = vadd.xlane.f32.xlu0 %v58
    %v60 = vpop.xlane.xlu0 %59
    %v61 = vrsqrt.pop %v56
    %v62 = vmul.f32 %v56, %v61
    %vm63 = vcmp.eq.f32.partialorder %v56, inf
    %v64 = vsel %vm63, %v56, %v62
    %vm65 = vcmp.eq.f32.partialorder %v56, 0.0
    %v66 = vand.u32 %v56, 2147483648
    %v67 = vsel %vm65, %v66, %v64
    %v68 = vrsqrt.pop %v60
    %v69 = vmul.f32 %v60, %v68
    %vm70 = vcmp.eq.f32.partialorder %v60, inf
    %v71 = vsel %vm70, %v60, %v69
    %vm72 = vcmp.eq.f32.partialorder %v60, 0.0
    %v73 = vand.u32 %v60, 2147483648
    %v74 = vsel %vm72, %v73, %v71
    %v75 = vmul.f32 %v41, %v41
    %v76 = vmul.f32 %v42, %v42
    %v77 = vmul.f32 %v43, %v43
    %v78 = vmul.f32 %v44, %v44
    %v79 = vmul.f32 %v45, %v45
    %v80 = vmul.f32 %v46, %v46
    %v81 = vadd.f32 %v75, %v76
    %v82 = vadd.f32 %v81, %v77
    %83 = vadd.xlane.f32.xlu0 %v82
    %v84 = vpop.xlane.xlu0 %83
    %v85 = vadd.f32 %v78, %v79
    %v86 = vadd.f32 %v85, %v80
    %87 = vadd.xlane.f32.xlu0 %v86
    %v88 = vpop.xlane.xlu0 %87
    %v89 = vrsqrt.pop %v84
    %v90 = vmul.f32 %v84, %v89
    %vm91 = vcmp.eq.f32.partialorder %v84, inf
    %v92 = vsel %vm91, %v84, %v90
    %vm93 = vcmp.eq.f32.partialorder %v84, 0.0
    %v94 = vand.u32 %v84, 2147483648
    %v95 = vsel %vm93, %v94, %v92
    %v96 = vrsqrt.pop %v88
    %v97 = vmul.f32 %v88, %v96
    %vm98 = vcmp.eq.f32.partialorder %v88, inf
    %v99 = vsel %vm98, %v88, %v97
    %vm100 = vcmp.eq.f32.partialorder %v88, 0.0
    %v101 = vand.u32 %v88, 2147483648
    %v102 = vsel %vm100, %v101, %v99
    %v103 = vadd.f32 %v67, 1e-10
    %v104 = vadd.f32 %v74, 1e-10
    %v105 = vrcp.pop %v103
    %v106 = vrcp.pop %v104
    %v107 = vmul.f32 %v31, %v105
    %v108 = vmul.f32 %v32, %v105
    %v109 = vmul.f32 %v33, %v105
    %v110 = vmul.f32 %v34, %v106
    %v111 = vmul.f32 %v35, %v106
    %v112 = vmul.f32 %v36, %v106
    %v113 = vadd.f32 %v95, 1e-10
    %v114 = vadd.f32 %v102, 1e-10
    %v115 = vrcp.pop %v113
    %v116 = vrcp.pop %v114
    %v117 = vmul.f32 %v41, %v115
    %v118 = vmul.f32 %v42, %v115
    %v119 = vmul.f32 %v43, %v115
    %v120 = vmul.f32 %v44, %v116
    %v121 = vmul.f32 %v45, %v116
    %v122 = vmul.f32 %v46, %v116
    %v123 = vsub.f32 %v107, %v117
    %v124 = vsub.f32 %v108, %v118
    %v125 = vsub.f32 %v109, %v119
    %v126 = vsub.f32 %v110, %v120
    %v127 = vsub.f32 %v111, %v121
    %v128 = vsub.f32 %v112, %v122
    %v129 = vmul.f32 %v123, %v123
    %v130 = vmul.f32 %v124, %v124
    %v131 = vmul.f32 %v125, %v125
    %v132 = vmul.f32 %v126, %v126
    %v133 = vmul.f32 %v127, %v127
    %v134 = vmul.f32 %v128, %v128
    %v135 = vld [vmem:[#allocation2] sm:$0x7]
    %v136 = vadd.f32 %v129, %v132
    %v137 = vrot.slane %v136, 4
    %v138 = vadd.f32 %v136, %v137
    %v139 = vrot.slane %v138, 2
    %v140 = vadd.f32 %v138, %v139
    %v141 = vrot.slane %v140, 1
    %v142 = vadd.f32 %v140, %v141
    %v143 = vadd.f32 %v130, %v133
    %v144 = vrot.slane %v143, 4
    %v145 = vadd.f32 %v143, %v144
    %v146 = vrot.slane %v145, 2
    %v147 = vadd.f32 %v145, %v146
    %v148 = vrot.slane %v147, 1
    %v149 = vadd.f32 %v147, %v148
    %v150 = vadd.f32 %v131, %v134
    %v151 = vrot.slane %v150, 4
    %v152 = vadd.f32 %v150, %v151
    %v153 = vrot.slane %v152, 2
    %v154 = vadd.f32 %v152, %v153
    %v155 = vrot.slane %v154, 1
    %v156 = vadd.f32 %v154, %v155
    %v160 = vcombine.low %v142, %v149
    %v162 = vunpack.c.l.s4 1966171168
    %v163 = vunpack.c.0.s8 %v162
    %v164 = vlaneseq
    %v165 = vshrl.u32 %v164, 7
    %v166 = vsub.s32 %v163, %v165
    %v167 = vrot.slane %v160, %v166
    %v169 = vunpack.c.l.s4 1966171168
    %v170 = vunpack.c.0.s8 %v169
    %v171 = vlaneseq
    %v172 = vshrl.u32 %v171, 7
    %v173 = vsub.s32 %v170, %v172
    %v174 = vrot.slane %v156, %v173
    %v175 = vcombine.low %v167, %v174
    %v177 = vunpack.c.l.s4 1966171168
    %v178 = vunpack.c.0.s8 %v177
    %v179 = vlaneseq
    %v180 = vshrl.u32 %v179, 7
    %v181 = vsub.s32 %v178, %v180
    %v182 = vrot.slane %v175, %v181
    %v184 = vadd.f32 %v135, %v182
    %v185 = vlaneseq
    %vm186 = vcmp.ge.s32.totalorder %v185, 0
    %vm187 = vcmp.lt.s32.totalorder %v185, 384
    %vm188 = vmand %vm186, %vm187
    %189 = vst.msk [vmem:[#allocation2] sm:$0x7] %vm188, %v184
    // Predicated region
    $region18: #{lpips_loss.24} parent=1 // pred_check
      %p190 = pneg %p18
    $region19: #{lpips_loss.24} parent=1 // pred_check_branch
      %192 = sbr.rel (%p190) target = $region21
    $region20: #{lpips_loss.24} parent=1 // pred_region
      %v193 = vld [vmem:[#allocation2] sm:$0x7]
      %v194 = vld [vmem:[%s2] sm:$0x7]
      %v195 = vmul.f32 %v193, %v194
      %v197 = vlaneseq
      %v198 = vshrl.u32 %v197, 7
      %v199 = vsub.s32 0, %v198
      %v200 = vrot.slane %v195, %v199
      %v201 = vlaneseq
      %v202 = vshrl.u32 %v201, 7
      %v203 = vsub.s32 1, %v202
      %v204 = vrot.slane %v195, %v203
      %v205 = vlaneseq
      %v206 = vshrl.u32 %v205, 7
      %v207 = vsub.s32 2, %v206
      %v208 = vrot.slane %v195, %v207
      %vm212 = vcmask 1040384
      %v213 = vsel %vm212, %v200, 0.0
      %v214 = vsel %vm212, %v204, 0.0
      %v215 = vadd.f32 %v213, %v214
      %v216 = vsel %vm212, %v208, 0.0
      %v217 = vadd.f32 %v215, %v216
      %218 = vadd.xlane.f32.xlu0 %v217
      %v219 = vpop.xlane.xlu0 %218
      %vm220 = vcmask 0
      %221 = vst.msk [vmem:[#allocation3] sm:$0x1] %vm220, %v219
    $region21: #{lpips_loss.24} parent=1 // pred_fallthru
      _
    // Predicated region
    $region22: #{lpips_loss.24} parent=1 // pred_check
      _
    $region23: #{lpips_loss.24} parent=1 // pred_check_branch
      %223 = sbr.rel (0) target = $region25
    $region24: #{lpips_loss.24} parent=1 // pred_region
      %s225 = ssub.s32 16, 16
      %226 = vsyncadd [#allocation4], %s225
      %s228 = sshll.u32 [#allocation3], 4
      %s229 = int_to_ptr.vmem [resolvable:$true] %s228
      %231 = dma.vmem_to_hbm [thread:$0]  %s229, 16, %s3, [#allocation4]
    $region25: #{lpips_loss.24} parent=1 // pred_fallthru
      _
    // Predicated region
    $region26: #{lpips_loss.24} parent=1 // pred_check
      _
    $region27: #{lpips_loss.24} parent=1 // pred_check_branch
      %233 = sbr.rel (0) target = $region29
    $region28: #{lpips_loss.24} parent=1 // pred_region
      %234 = dma.done [#allocation4], 16
    $region29: #{lpips_loss.24} parent=1 // pred_fallthru
      _
    %235 = vsyncpa [#allocation4], 1

// kernel: lpips_loss.23
$region0: #{lpips_loss.23}
  #allocation0 [shape = 'u32[]', space=smem, size = 0x4, offset = 0x4, fixed_abs, tag = 'smem constant byte address 0x4 - core index']
  #allocation1 [shape = 'u32[144,128]{1,0:T(1,128)}', space=vmem, size = 0x12000, scoped, tag = 'internal scratch']
  #allocation2 [shape = 'f32[1,192]{1,0:T(1,128)}', space=vmem, size = 0x400, scoped, tag = 'scratch operand']
  %s0 = inlined_call_operand.vmem [shape: bf16[2,32,192], index: 0, kind: input, shape index: {}, may-alias: {0,1}]
  %s1 = inlined_call_operand.vmem [shape: bf16[2,32,192], index: 1, kind: input, shape index: {}, may-alias: {0,1}]
  %s2 = inlined_call_operand.vmem [shape: f32[1,192], index: 2, kind: input, shape index: {}]
  %s3 = inlined_call_operand.hbm [shape: f32[1,1], index: 3, kind: output, shape index: {}]
  %s4 = sld [smem:[#allocation0]]
  $region30: #{lpips_loss.23} parent=0
    _
  %s6 = ssub.s32 1, %s4
  %s7 = scalar_select 0, %s6, %s4
  $region1: #{lpips_loss.23} parent=0
    #allocation3 [shape = 'u8[512]{0}', space=vmem, size = 0x400, scoped, tag = 'output window, operand 0, single buffered']
    #allocation4 [shape = 's32[1]{0}', space=sflag, size = 0x4, scoped, tag = 'scoped memory for lpips_loss.23']
    %8 = vsyncpa [#allocation4], 0
    // Predicated region
    $region2: #{lpips_loss.23} parent=1 // pred_check
      _
    $region3: #{lpips_loss.23} parent=1 // pred_check_branch
      %10 = sbr.rel (0) target = $region5
    $region4: #{lpips_loss.23} parent=1 // pred_region
      _
    $region5: #{lpips_loss.23} parent=1 // pred_fallthru
      _
    // Predicated region
    $region6: #{lpips_loss.23} parent=1 // pred_check
      _
    $region7: #{lpips_loss.23} parent=1 // pred_check_branch
      %12 = sbr.rel (0) target = $region9
    $region8: #{lpips_loss.23} parent=1 // pred_region
      %s13 = scalar_lea.vmem %s1, 32
    $region9: #{lpips_loss.23} parent=1 // pred_fallthru
      _
    // Predicated region
    $region10: #{lpips_loss.23} parent=1 // pred_check
      _
    $region11: #{lpips_loss.23} parent=1 // pred_check_branch
      %15 = sbr.rel (0) target = $region13
    $region12: #{lpips_loss.23} parent=1 // pred_region
      _
    $region13: #{lpips_loss.23} parent=1 // pred_fallthru
      _
    %s16 = scalar_lea.vmem %s1, 32
    %s17 = scalar_lea.vmem %s1, 32
    %p18 = scmp.eq.s32.totalorder 0, 0
    // Predicated region
    $region14: #{lpips_loss.23} parent=1 // pred_check
      %p19 = pneg %p18
    $region15: #{lpips_loss.23} parent=1 // pred_check_branch
      %21 = sbr.rel (%p19) target = $region17
    $region16: #{lpips_loss.23} parent=1 // pred_region
      %v22 = vlaneseq
      %vm23 = vcmp.ge.s32.totalorder %v22, 0
      %vm24 = vcmp.lt.s32.totalorder %v22, 192
      %vm25 = vmand %vm23, %vm24
      %26 = vst.msk [vmem:[#allocation2] sm:$0x3] %vm25, 0.0
    $region17: #{lpips_loss.23} parent=1 // pred_fallthru
      _
    %v27 = vld [vmem:[%s0] sm:$0xff]
    %v28 = vld [vmem:[%s0 + $0x8] sm:$0xff]
    %v29 = vld [vmem:[%s0 + $0x10] sm:$0xff]
    %v30 = vld [vmem:[%s0 + $0x18] sm:$0xff]
    %v31 = vunpack.c.l.bf16 %v27
    %v32 = vunpack.c.h.bf16 %v27
    %v33 = vunpack.c.l.bf16 %v28
    %v34 = vunpack.c.h.bf16 %v28
    %v35 = vunpack.c.l.bf16 %v29
    %v36 = vunpack.c.h.bf16 %v29
    %v37 = vunpack.c.l.bf16 %v30
    %v38 = vunpack.c.h.bf16 %v30
    %v39 = vld [vmem:[%s17] sm:$0xff]
    %v40 = vld [vmem:[%s17 + $0x8] sm:$0xff]
    %v41 = vld [vmem:[%s17 + $0x10] sm:$0xff]
    %v42 = vld [vmem:[%s17 + $0x18] sm:$0xff]
    %v43 = vunpack.c.l.bf16 %v39
    %v44 = vunpack.c.h.bf16 %v39
    %v45 = vunpack.c.l.bf16 %v40
    %v46 = vunpack.c.h.bf16 %v40
    %v47 = vunpack.c.l.bf16 %v41
    %v48 = vunpack.c.h.bf16 %v41
    %v49 = vunpack.c.l.bf16 %v42
    %v50 = vunpack.c.h.bf16 %v42
    %v51 = vmul.f32 %v31, %v31
    %v52 = vmul.f32 %v32, %v32
    %v53 = vmul.f32 %v33, %v33
    %v54 = vmul.f32 %v34, %v34
    %v55 = vmul.f32 %v35, %v35
    %v56 = vmul.f32 %v36, %v36
    %v57 = vmul.f32 %v37, %v37
    %v58 = vmul.f32 %v38, %v38
    %vm59 = vcmask 523264
    %v60 = vsel %vm59, %v52, 0.0
    %v61 = vadd.f32 %v51, %v60
    %62 = vadd.xlane.f32.xlu0 %v61
    %v63 = vpop.xlane.xlu0 %62
    %v64 = vsel %vm59, %v54, 0.0
    %v65 = vadd.f32 %v53, %v64
    %66 = vadd.xlane.f32.xlu0 %v65
    %v67 = vpop.xlane.xlu0 %66
    %v68 = vsel %vm59, %v56, 0.0
    %v69 = vadd.f32 %v55, %v68
    %70 = vadd.xlane.f32.xlu0 %v69
    %v71 = vpop.xlane.xlu0 %70
    %v72 = vsel %vm59, %v58, 0.0
    %v73 = vadd.f32 %v57, %v72
    %74 = vadd.xlane.f32.xlu0 %v73
    %v75 = vpop.xlane.xlu0 %74
    %v76 = vrsqrt.pop %v63
    %v77 = vmul.f32 %v63, %v76
    %vm78 = vcmp.eq.f32.partialorder %v63, inf
    %v79 = vsel %vm78, %v63, %v77
    %vm80 = vcmp.eq.f32.partialorder %v63, 0.0
    %v81 = vand.u32 %v63, 2147483648
    %v82 = vsel %vm80, %v81, %v79
    %v83 = vrsqrt.pop %v67
    %v84 = vmul.f32 %v67, %v83
    %vm85 = vcmp.eq.f32.partialorder %v67, inf
    %v86 = vsel %vm85, %v67, %v84
    %vm87 = vcmp.eq.f32.partialorder %v67, 0.0
    %v88 = vand.u32 %v67, 2147483648
    %v89 = vsel %vm87, %v88, %v86
    %v90 = vrsqrt.pop %v71
    %v91 = vmul.f32 %v71, %v90
    %vm92 = vcmp.eq.f32.partialorder %v71, inf
    %v93 = vsel %vm92, %v71, %v91
    %vm94 = vcmp.eq.f32.partialorder %v71, 0.0
    %v95 = vand.u32 %v71, 2147483648
    %v96 = vsel %vm94, %v95, %v93
    %v97 = vrsqrt.pop %v75
    %v98 = vmul.f32 %v75, %v97
    %vm99 = vcmp.eq.f32.partialorder %v75, inf
    %v100 = vsel %vm99, %v75, %v98
    %vm101 = vcmp.eq.f32.partialorder %v75, 0.0
    %v102 = vand.u32 %v75, 2147483648
    %v103 = vsel %vm101, %v102, %v100
    %v104 = vmul.f32 %v43, %v43
    %v105 = vmul.f32 %v44, %v44
    %v106 = vmul.f32 %v45, %v45
    %v107 = vmul.f32 %v46, %v46
    %v108 = vmul.f32 %v47, %v47
    %v109 = vmul.f32 %v48, %v48
    %v110 = vmul.f32 %v49, %v49
    %v111 = vmul.f32 %v50, %v50
    %v112 = vsel %vm59, %v105, 0.0
    %v113 = vadd.f32 %v104, %v112
    %114 = vadd.xlane.f32.xlu0 %v113
    %v115 = vpop.xlane.xlu0 %114
    %v116 = vsel %vm59, %v107, 0.0
    %v117 = vadd.f32 %v106, %v116
    %118 = vadd.xlane.f32.xlu0 %v117
    %v119 = vpop.xlane.xlu0 %118
    %v120 = vsel %vm59, %v109, 0.0
    %v121 = vadd.f32 %v108, %v120
    %122 = vadd.xlane.f32.xlu0 %v121
    %v123 = vpop.xlane.xlu0 %122
    %v124 = vsel %vm59, %v111, 0.0
    %v125 = vadd.f32 %v110, %v124
    %126 = vadd.xlane.f32.xlu0 %v125
    %v127 = vpop.xlane.xlu0 %126
    %v128 = vrsqrt.pop %v115
    %v129 = vmul.f32 %v115, %v128
    %vm130 = vcmp.eq.f32.partialorder %v115, inf
    %v131 = vsel %vm130, %v115, %v129
    %vm132 = vcmp.eq.f32.partialorder %v115, 0.0
    %v133 = vand.u32 %v115, 2147483648
    %v134 = vsel %vm132, %v133, %v131
    %v135 = vrsqrt.pop %v119
    %v136 = vmul.f32 %v119, %v135
    %vm137 = vcmp.eq.f32.partialorder %v119, inf
    %v138 = vsel %vm137, %v119, %v136
    %vm139 = vcmp.eq.f32.partialorder %v119, 0.0
    %v140 = vand.u32 %v119, 2147483648
    %v141 = vsel %vm139, %v140, %v138
    %v142 = vrsqrt.pop %v123
    %v143 = vmul.f32 %v123, %v142
    %vm144 = vcmp.eq.f32.partialorder %v123, inf
    %v145 = vsel %vm144, %v123, %v143
    %vm146 = vcmp.eq.f32.partialorder %v123, 0.0
    %v147 = vand.u32 %v123, 2147483648
    %v148 = vsel %vm146, %v147, %v145
    %v149 = vrsqrt.pop %v127
    %v150 = vmul.f32 %v127, %v149
    %vm151 = vcmp.eq.f32.partialorder %v127, inf
    %v152 = vsel %vm151, %v127, %v150
    %vm153 = vcmp.eq.f32.partialorder %v127, 0.0
    %v154 = vand.u32 %v127, 2147483648
    %v155 = vsel %vm153, %v154, %v152
    %v156 = vadd.f32 %v82, 1e-10
    %v157 = vadd.f32 %v89, 1e-10
    %v158 = vadd.f32 %v96, 1e-10
    %v159 = vadd.f32 %v103, 1e-10
    %v160 = vrcp.pop %v156
    %v161 = vrcp.pop %v157
    %v162 = vrcp.pop %v158
    %v163 = vrcp.pop %v159
    %v164 = vmul.f32 %v31, %v160
    %v165 = vmul.f32 %v32, %v160
    %v166 = vmul.f32 %v33, %v161
    %v167 = vmul.f32 %v34, %v161
    %v168 = vmul.f32 %v35, %v162
    %v169 = vmul.f32 %v36, %v162
    %v170 = vmul.f32 %v37, %v163
    %v171 = vmul.f32 %v38, %v163
    %v172 = vadd.f32 %v134, 1e-10
    %v173 = vadd.f32 %v141, 1e-10
    %v174 = vadd.f32 %v148, 1e-10
    %v175 = vadd.f32 %v155, 1e-10
    %v176 = vrcp.pop %v172
    %v177 = vrcp.pop %v173
    %v178 = vrcp.pop %v174
    %v179 = vrcp.pop %v175
    %v180 = vmul.f32 %v43, %v176
    %v181 = vmul.f32 %v44, %v176
    %v182 = vmul.f32 %v45, %v177
    %v183 = vmul.f32 %v46, %v177
    %v184 = vmul.f32 %v47, %v178
    %v185 = vmul.f32 %v48, %v178
    %v186 = vmul.f32 %v49, %v179
    %v187 = vmul.f32 %v50, %v179
    %v188 = vsub.f32 %v164, %v180
    %v189 = vsub.f32 %v165, %v181
    %v190 = vsub.f32 %v166, %v182
    %v191 = vsub.f32 %v167, %v183
    %v192 = vsub.f32 %v168, %v184
    %v193 = vsub.f32 %v169, %v185
    %v194 = vsub.f32 %v170, %v186
    %v195 = vsub.f32 %v171, %v187
    %v196 = vmul.f32 %v188, %v188
    %v197 = vmul.f32 %v189, %v189
    %v198 = vmul.f32 %v190, %v190
    %v199 = vmul.f32 %v191, %v191
    %v200 = vmul.f32 %v192, %v192
    %v201 = vmul.f32 %v193, %v193
    %v202 = vmul.f32 %v194, %v194
    %v203 = vmul.f32 %v195, %v195
    %v204 = vld [vmem:[#allocation2] sm:$0x3]
    %v205 = vadd.f32 %v196, %v198
    %v206 = vadd.f32 %v205, %v200
    %v207 = vadd.f32 %v206, %v202
    %v208 = vrot.slane %v207, 4
    %v209 = vadd.f32 %v207, %v208
    %v210 = vrot.slane %v209, 2
    %v211 = vadd.f32 %v209, %v210
    %v212 = vrot.slane %v211, 1
    %v213 = vadd.f32 %v211, %v212
    %v214 = vsel %vm59, %v197, 0.0
    %v215 = vsel %vm59, %v199, 0.0
    %v216 = vadd.f32 %v214, %v215
    %v217 = vsel %vm59, %v201, 0.0
    %v218 = vadd.f32 %v216, %v217
    %v219 = vsel %vm59, %v203, 0.0
    %v220 = vadd.f32 %v218, %v219
    %v221 = vrot.slane %v220, 4
    %v222 = vadd.f32 %v220, %v221
    %v223 = vrot.slane %v222, 2
    %v224 = vadd.f32 %v222, %v223
    %v225 = vrot.slane %v224, 1
    %v226 = vadd.f32 %v224, %v225
    %v229 = vcombine.low %v213, %v226
    %v231 = vunpack.c.l.s4 1966171168
    %v232 = vunpack.c.0.s8 %v231
    %v233 = vlaneseq
    %v234 = vshrl.u32 %v233, 7
    %v235 = vsub.s32 %v232, %v234
    %v236 = vrot.slane %v229, %v235
    %v238 = vunpack.c.l.s4 1966171168
    %v239 = vunpack.c.0.s8 %v238
    %v240 = vlaneseq
    %v241 = vshrl.u32 %v240, 7
    %v242 = vsub.s32 %v239, %v241
    %v243 = vrot.slane %v236, %v242
    %v245 = vadd.f32 %v204, %v243
    %v246 = vlaneseq
    %vm247 = vcmp.ge.s32.totalorder %v246, 0
    %vm248 = vcmp.lt.s32.totalorder %v246, 192
    %vm249 = vmand %vm247, %vm248
    %250 = vst.msk [vmem:[#allocation2] sm:$0x3] %vm249, %v245
    // Predicated region
    $region18: #{lpips_loss.23} parent=1 // pred_check
      %p251 = pneg %p18
    $region19: #{lpips_loss.23} parent=1 // pred_check_branch
      %253 = sbr.rel (%p251) target = $region21
    $region20: #{lpips_loss.23} parent=1 // pred_region
      %v254 = vld [vmem:[#allocation2] sm:$0x3]
      %v255 = vld [vmem:[%s2] sm:$0x3]
      %v256 = vmul.f32 %v254, %v255
      %v258 = vlaneseq
      %v259 = vshrl.u32 %v258, 7
      %v260 = vsub.s32 0, %v259
      %v261 = vrot.slane %v256, %v260
      %v262 = vlaneseq
      %v263 = vshrl.u32 %v262, 7
      %v264 = vsub.s32 1, %v263
      %v265 = vrot.slane %v256, %v264
      %vm268 = vcmask 1040384
      %v269 = vsel %vm268, %v261, 0.0
      %vm270 = vcmask 516096
      %v271 = vsel %vm270, %v265, 0.0
      %v272 = vadd.f32 %v269, %v271
      %273 = vadd.xlane.f32.xlu0 %v272
      %v274 = vpop.xlane.xlu0 %273
      %vm275 = vcmask 0
      %276 = vst.msk [vmem:[#allocation3] sm:$0x1] %vm275, %v274
    $region21: #{lpips_loss.23} parent=1 // pred_fallthru
      _
    // Predicated region
    $region22: #{lpips_loss.23} parent=1 // pred_check
      _
    $region23: #{lpips_loss.23} parent=1 // pred_check_branch
      %278 = sbr.rel (0) target = $region25
    $region24: #{lpips_loss.23} parent=1 // pred_region
      %s280 = ssub.s32 16, 16
      %281 = vsyncadd [#allocation4], %s280
      %s283 = sshll.u32 [#allocation3], 4
      %s284 = int_to_ptr.vmem [resolvable:$true] %s283
      %286 = dma.vmem_to_hbm [thread:$0]  %s284, 16, %s3, [#allocation4]
    $region25: #{lpips_loss.23} parent=1 // pred_fallthru
      _
    // Predicated region
    $region26: #{lpips_loss.23} parent=1 // pred_check
      _
    $region27: #{lpips_loss.23} parent=1 // pred_check_branch
      %288 = sbr.rel (0) target = $region29
    $region28: #{lpips_loss.23} parent=1 // pred_region
      %289 = dma.done [#allocation4], 16
    $region29: #{lpips_loss.23} parent=1 // pred_fallthru
      _
    %290 = vsyncpa [#allocation4], 1

// kernel: lpips_loss.27
$region0: #{lpips_loss.27}
  #allocation0 [shape = 'u32[]', space=smem, size = 0x4, offset = 0x4, fixed_abs, tag = 'smem constant byte address 0x4 - core index']
  #allocation1 [shape = 'u32[144,128]{1,0:T(1,128)}', space=vmem, size = 0x12000, scoped, tag = 'internal scratch']
  #allocation2 [shape = 'f32[1,1]{1,0:T(1,128)}', space=vmem, size = 0x200, scoped, tag = 'scratch operand']
  %s0 = inlined_call_operand.vmem [shape: f32[8,1024], index: 0, kind: input, shape index: {}]
  %s1 = inlined_call_operand.vmem [shape: f32[8,1024], index: 1, kind: input, shape index: {}]
  %s2 = inlined_call_operand.hbm [shape: f32[1,1], index: 2, kind: output, shape index: {}]
  %s3 = sld [smem:[#allocation0]]
  $region26: #{lpips_loss.27} parent=0
    _
  %s5 = ssub.s32 1, %s3
  %s6 = scalar_select 0, %s5, %s3
  $region1: #{lpips_loss.27} parent=0
    #allocation3 [shape = 'u8[512]{0}', space=vmem, size = 0x400, scoped, tag = 'output window, operand 0, single buffered']
    #allocation4 [shape = 's32[1]{0}', space=sflag, size = 0x4, scoped, tag = 'scoped memory for lpips_loss.27']
    %7 = vsyncpa [#allocation4], 0
    // Predicated region
    $region2: #{lpips_loss.27} parent=1 // pred_check
      _
    $region3: #{lpips_loss.27} parent=1 // pred_check_branch
      %9 = sbr.rel (0) target = $region5
    $region4: #{lpips_loss.27} parent=1 // pred_region
      _
    $region5: #{lpips_loss.27} parent=1 // pred_fallthru
      _
    // Predicated region
    $region6: #{lpips_loss.27} parent=1 // pred_check
      _
    $region7: #{lpips_loss.27} parent=1 // pred_check_branch
      %11 = sbr.rel (0) target = $region9
    $region8: #{lpips_loss.27} parent=1 // pred_region
      _
    $region9: #{lpips_loss.27} parent=1 // pred_fallthru
      _
    %p12 = scmp.eq.s32.totalorder 0, 0
    // Predicated region
    $region10: #{lpips_loss.27} parent=1 // pred_check
      %p13 = pneg %p12
    $region11: #{lpips_loss.27} parent=1 // pred_check_branch
      %15 = sbr.rel (%p13) target = $region13
    $region12: #{lpips_loss.27} parent=1 // pred_region
      %vm16 = vcmask 0
      %17 = vst.msk [vmem:[#allocation2] sm:$0x1] %vm16, 0.0
    $region13: #{lpips_loss.27} parent=1 // pred_fallthru
      _
    %v18 = vld [vmem:[%s0] sm:$0xff]
    %v19 = vld [vmem:[%s0 + $0x8] sm:$0xff]
    %v20 = vld [vmem:[%s0 + $0x10] sm:$0xff]
    %v21 = vld [vmem:[%s0 + $0x18] sm:$0xff]
    %v22 = vld [vmem:[%s0 + $0x20] sm:$0xff]
    %v23 = vld [vmem:[%s0 + $0x28] sm:$0xff]
    %v24 = vld [vmem:[%s0 + $0x30] sm:$0xff]
    %v25 = vld [vmem:[%s0 + $0x38] sm:$0xff]
    %v26 = vld [vmem:[%s1] sm:$0xff]
    %v27 = vld [vmem:[%s1 + $0x8] sm:$0xff]
    %v28 = vld [vmem:[%s1 + $0x10] sm:$0xff]
    %v29 = vld [vmem:[%s1 + $0x18] sm:$0xff]
    %v30 = vld [vmem:[%s1 + $0x20] sm:$0xff]
    %v31 = vld [vmem:[%s1 + $0x28] sm:$0xff]
    %v32 = vld [vmem:[%s1 + $0x30] sm:$0xff]
    %v33 = vld [vmem:[%s1 + $0x38] sm:$0xff]
    %v34 = vsub.f32 %v18, %v26
    %v35 = vsub.f32 %v19, %v27
    %v36 = vsub.f32 %v20, %v28
    %v37 = vsub.f32 %v21, %v29
    %v38 = vsub.f32 %v22, %v30
    %v39 = vsub.f32 %v23, %v31
    %v40 = vsub.f32 %v24, %v32
    %v41 = vsub.f32 %v25, %v33
    %v42 = vld [vmem:[#allocation2] sm:$0x1]
    %v43 = vmul.f32 %v34, %v34
    %v44 = vmul.f32 %v35, %v35
    %v45 = vmul.f32 %v36, %v36
    %v46 = vmul.f32 %v37, %v37
    %v47 = vmul.f32 %v38, %v38
    %v48 = vmul.f32 %v39, %v39
    %v49 = vmul.f32 %v40, %v40
    %v50 = vmul.f32 %v41, %v41
    %v51 = vadd.f32 %v43, %v44
    %v52 = vadd.f32 %v51, %v45
    %v53 = vadd.f32 %v52, %v46
    %v54 = vadd.f32 %v53, %v47
    %v55 = vadd.f32 %v54, %v48
    %v56 = vadd.f32 %v55, %v49
    %v57 = vadd.f32 %v56, %v50
    %58 = vadd.xlane.f32.xlu0 %v57
    %v59 = vpop.xlane.xlu0 %58
    %v60 = vrot.slane %v59, 4
    %v61 = vadd.f32 %v59, %v60
    %v62 = vrot.slane %v61, 2
    %v63 = vadd.f32 %v61, %v62
    %v64 = vrot.slane %v63, 1
    %v65 = vadd.f32 %v63, %v64
    %s66 = vtos %v65
    %v67 = vstv %s66
    %v68 = vadd.f32 %v42, %v67
    %vm69 = vcmask 0
    %70 = vst.msk [vmem:[#allocation2] sm:$0x1] %vm69, %v68
    // Predicated region
    $region14: #{lpips_loss.27} parent=1 // pred_check
      %p71 = pneg %p12
    $region15: #{lpips_loss.27} parent=1 // pred_check_branch
      %73 = sbr.rel (%p71) target = $region17
    $region16: #{lpips_loss.27} parent=1 // pred_region
      %v74 = vld [vmem:[#allocation2] sm:$0x1]
      %75 = vst.msk [vmem:[#allocation3] sm:$0x1] %vm69, %v74
    $region17: #{lpips_loss.27} parent=1 // pred_fallthru
      _
    // Predicated region
    $region18: #{lpips_loss.27} parent=1 // pred_check
      _
    $region19: #{lpips_loss.27} parent=1 // pred_check_branch
      %77 = sbr.rel (0) target = $region21
    $region20: #{lpips_loss.27} parent=1 // pred_region
      %s79 = ssub.s32 16, 16
      %80 = vsyncadd [#allocation4], %s79
      %s82 = sshll.u32 [#allocation3], 4
      %s83 = int_to_ptr.vmem [resolvable:$true] %s82
      %85 = dma.vmem_to_hbm [thread:$0]  %s83, 16, %s2, [#allocation4]
    $region21: #{lpips_loss.27} parent=1 // pred_fallthru
      _
    // Predicated region
    $region22: #{lpips_loss.27} parent=1 // pred_check
      _
    $region23: #{lpips_loss.27} parent=1 // pred_check_branch
      %87 = sbr.rel (0) target = $region25
    $region24: #{lpips_loss.27} parent=1 // pred_region
      %88 = dma.done [#allocation4], 16
    $region25: #{lpips_loss.27} parent=1 // pred_fallthru
      _
    %89 = vsyncpa [#allocation4], 1

// kernel: lpips_loss.22
$region0: #{lpips_loss.22}
  #allocation0 [shape = 'u32[]', space=smem, size = 0x4, offset = 0x4, fixed_abs, tag = 'smem constant byte address 0x4 - core index']
  #allocation1 [shape = 'u32[144,128]{1,0:T(1,128)}', space=vmem, size = 0x12000, scoped, tag = 'internal scratch']
  #allocation2 [shape = 'f32[1,64]{1,0:T(1,128)}', space=vmem, size = 0x200, scoped, tag = 'scratch operand']
  %s0 = inlined_call_operand.vmem [shape: bf16[2,112,64], index: 0, kind: input, shape index: {}, may-alias: {0,1}]
  %s1 = inlined_call_operand.vmem [shape: bf16[2,112,64], index: 1, kind: input, shape index: {}, may-alias: {0,1}]
  %s2 = inlined_call_operand.vmem [shape: f32[1,64], index: 2, kind: input, shape index: {}]
  %s3 = inlined_call_operand.hbm [shape: f32[1,1], index: 3, kind: output, shape index: {}]
  %s4 = sld [smem:[#allocation0]]
  $region30: #{lpips_loss.22} parent=0
    _
  %s6 = ssub.s32 1, %s4
  %s7 = scalar_select 0, %s6, %s4
  $region1: #{lpips_loss.22} parent=0
    #allocation3 [shape = 'u8[512]{0}', space=vmem, size = 0x400, scoped, tag = 'output window, operand 0, single buffered']
    #allocation4 [shape = 's32[1]{0}', space=sflag, size = 0x4, scoped, tag = 'scoped memory for lpips_loss.22']
    %8 = vsyncpa [#allocation4], 0
    // Predicated region
    $region2: #{lpips_loss.22} parent=1 // pred_check
      _
    $region3: #{lpips_loss.22} parent=1 // pred_check_branch
      %10 = sbr.rel (0) target = $region5
    $region4: #{lpips_loss.22} parent=1 // pred_region
      _
    $region5: #{lpips_loss.22} parent=1 // pred_fallthru
      _
    // Predicated region
    $region6: #{lpips_loss.22} parent=1 // pred_check
      _
    $region7: #{lpips_loss.22} parent=1 // pred_check_branch
      %12 = sbr.rel (0) target = $region9
    $region8: #{lpips_loss.22} parent=1 // pred_region
      %s13 = scalar_lea.vmem %s1, 56
    $region9: #{lpips_loss.22} parent=1 // pred_fallthru
      _
    // Predicated region
    $region10: #{lpips_loss.22} parent=1 // pred_check
      _
    $region11: #{lpips_loss.22} parent=1 // pred_check_branch
      %15 = sbr.rel (0) target = $region13
    $region12: #{lpips_loss.22} parent=1 // pred_region
      _
    $region13: #{lpips_loss.22} parent=1 // pred_fallthru
      _
    %s16 = scalar_lea.vmem %s1, 56
    %s17 = scalar_lea.vmem %s1, 56
    %p18 = scmp.eq.s32.totalorder 0, 0
    // Predicated region
    $region14: #{lpips_loss.22} parent=1 // pred_check
      %p19 = pneg %p18
    $region15: #{lpips_loss.22} parent=1 // pred_check_branch
      %21 = sbr.rel (%p19) target = $region17
    $region16: #{lpips_loss.22} parent=1 // pred_region
      %vm22 = vcmask 516096
      %23 = vst.msk [vmem:[#allocation2] sm:$0x1] %vm22, 0.0
    $region17: #{lpips_loss.22} parent=1 // pred_fallthru
      _
    %v24 = vld [vmem:[%s0] sm:$0xf]
    %v25 = vld [vmem:[%s0 + $0x4] sm:$0xf]
    %v26 = vld [vmem:[%s0 + $0x8] sm:$0xf]
    %v27 = vld [vmem:[%s0 + $0xc] sm:$0xf]
    %v28 = vld [vmem:[%s0 + $0x10] sm:$0xf]
    %v29 = vld [vmem:[%s0 + $0x14] sm:$0xf]
    %v30 = vld [vmem:[%s0 + $0x18] sm:$0xf]
    %v31 = vld [vmem:[%s0 + $0x1c] sm:$0xf]
    %v32 = vld [vmem:[%s0 + $0x20] sm:$0xf]
    %v33 = vld [vmem:[%s0 + $0x24] sm:$0xf]
    %v34 = vld [vmem:[%s0 + $0x28] sm:$0xf]
    %v35 = vld [vmem:[%s0 + $0x2c] sm:$0xf]
    %v36 = vld [vmem:[%s0 + $0x30] sm:$0xf]
    %v37 = vld [vmem:[%s0 + $0x34] sm:$0xf]
    %v38 = vunpack.c.l.bf16 %v24
    %v39 = vunpack.c.l.bf16 %v25
    %v40 = vunpack.c.l.bf16 %v26
    %v41 = vunpack.c.l.bf16 %v27
    %v42 = vunpack.c.l.bf16 %v28
    %v43 = vunpack.c.l.bf16 %v29
    %v44 = vunpack.c.l.bf16 %v30
    %v45 = vunpack.c.l.bf16 %v31
    %v46 = vunpack.c.l.bf16 %v32
    %v47 = vunpack.c.l.bf16 %v33
    %v48 = vunpack.c.l.bf16 %v34
    %v49 = vunpack.c.l.bf16 %v35
    %v50 = vunpack.c.l.bf16 %v36
    %v51 = vunpack.c.l.bf16 %v37
    %v52 = vld [vmem:[%s17] sm:$0xf]
    %v53 = vld [vmem:[%s17 + $0x4] sm:$0xf]
    %v54 = vld [vmem:[%s17 + $0x8] sm:$0xf]
    %v55 = vld [vmem:[%s17 + $0xc] sm:$0xf]
    %v56 = vld [vmem:[%s17 + $0x10] sm:$0xf]
    %v57 = vld [vmem:[%s17 + $0x14] sm:$0xf]
    %v58 = vld [vmem:[%s17 + $0x18] sm:$0xf]
    %v59 = vld [vmem:[%s17 + $0x1c] sm:$0xf]
    %v60 = vld [vmem:[%s17 + $0x20] sm:$0xf]
    %v61 = vld [vmem:[%s17 + $0x24] sm:$0xf]
    %v62 = vld [vmem:[%s17 + $0x28] sm:$0xf]
    %v63 = vld [vmem:[%s17 + $0x2c] sm:$0xf]
    %v64 = vld [vmem:[%s17 + $0x30] sm:$0xf]
    %v65 = vld [vmem:[%s17 + $0x34] sm:$0xf]
    %v66 = vunpack.c.l.bf16 %v52
    %v67 = vunpack.c.l.bf16 %v53
    %v68 = vunpack.c.l.bf16 %v54
    %v69 = vunpack.c.l.bf16 %v55
    %v70 = vunpack.c.l.bf16 %v56
    %v71 = vunpack.c.l.bf16 %v57
    %v72 = vunpack.c.l.bf16 %v58
    %v73 = vunpack.c.l.bf16 %v59
    %v74 = vunpack.c.l.bf16 %v60
    %v75 = vunpack.c.l.bf16 %v61
    %v76 = vunpack.c.l.bf16 %v62
    %v77 = vunpack.c.l.bf16 %v63
    %v78 = vunpack.c.l.bf16 %v64
    %v79 = vunpack.c.l.bf16 %v65
    %v80 = vmul.f32 %v38, %v38
    %v81 = vmul.f32 %v39, %v39
    %v82 = vmul.f32 %v40, %v40
    %v83 = vmul.f32 %v41, %v41
    %v84 = vmul.f32 %v42, %v42
    %v85 = vmul.f32 %v43, %v43
    %v86 = vmul.f32 %v44, %v44
    %v87 = vmul.f32 %v45, %v45
    %v88 = vmul.f32 %v46, %v46
    %v89 = vmul.f32 %v47, %v47
    %v90 = vmul.f32 %v48, %v48
    %v91 = vmul.f32 %v49, %v49
    %v92 = vmul.f32 %v50, %v50
    %v93 = vmul.f32 %v51, %v51
    %vm94 = vcmask 523264
    %v95 = vsel %vm94, %v80, 0.0
    %96 = vadd.xlane.f32.xlu0 %v95
    %v97 = vpop.xlane.xlu0 %96
    %v98 = vsel %vm94, %v81, 0.0
    %99 = vadd.xlane.f32.xlu0 %v98
    %v100 = vpop.xlane.xlu0 %99
    %v101 = vsel %vm94, %v82, 0.0
    %102 = vadd.xlane.f32.xlu0 %v101
    %v103 = vpop.xlane.xlu0 %102
    %v104 = vsel %vm94, %v83, 0.0
    %105 = vadd.xlane.f32.xlu0 %v104
    %v106 = vpop.xlane.xlu0 %105
    %v107 = vsel %vm94, %v84, 0.0
    %108 = vadd.xlane.f32.xlu0 %v107
    %v109 = vpop.xlane.xlu0 %108
    %v110 = vsel %vm94, %v85, 0.0
    %111 = vadd.xlane.f32.xlu0 %v110
    %v112 = vpop.xlane.xlu0 %111
    %v113 = vsel %vm94, %v86, 0.0
    %114 = vadd.xlane.f32.xlu0 %v113
    %v115 = vpop.xlane.xlu0 %114
    %v116 = vsel %vm94, %v87, 0.0
    %117 = vadd.xlane.f32.xlu0 %v116
    %v118 = vpop.xlane.xlu0 %117
    %v119 = vsel %vm94, %v88, 0.0
    %120 = vadd.xlane.f32.xlu0 %v119
    %v121 = vpop.xlane.xlu0 %120
    %v122 = vsel %vm94, %v89, 0.0
    %123 = vadd.xlane.f32.xlu0 %v122
    %v124 = vpop.xlane.xlu0 %123
    %v125 = vsel %vm94, %v90, 0.0
    %126 = vadd.xlane.f32.xlu0 %v125
    %v127 = vpop.xlane.xlu0 %126
    %v128 = vsel %vm94, %v91, 0.0
    %129 = vadd.xlane.f32.xlu0 %v128
    %v130 = vpop.xlane.xlu0 %129
    %v131 = vsel %vm94, %v92, 0.0
    %132 = vadd.xlane.f32.xlu0 %v131
    %v133 = vpop.xlane.xlu0 %132
    %v134 = vsel %vm94, %v93, 0.0
    %135 = vadd.xlane.f32.xlu0 %v134
    %v136 = vpop.xlane.xlu0 %135
    %v137 = vrsqrt.pop %v97
    %v138 = vmul.f32 %v97, %v137
    %vm139 = vcmp.eq.f32.partialorder %v97, inf
    %v140 = vsel %vm139, %v97, %v138
    %vm141 = vcmp.eq.f32.partialorder %v97, 0.0
    %v142 = vand.u32 %v97, 2147483648
    %v143 = vsel %vm141, %v142, %v140
    %v144 = vrsqrt.pop %v100
    %v145 = vmul.f32 %v100, %v144
    %vm146 = vcmp.eq.f32.partialorder %v100, inf
    %v147 = vsel %vm146, %v100, %v145
    %vm148 = vcmp.eq.f32.partialorder %v100, 0.0
    %v149 = vand.u32 %v100, 2147483648
    %v150 = vsel %vm148, %v149, %v147
    %v151 = vrsqrt.pop %v103
    %v152 = vmul.f32 %v103, %v151
    %vm153 = vcmp.eq.f32.partialorder %v103, inf
    %v154 = vsel %vm153, %v103, %v152
    %vm155 = vcmp.eq.f32.partialorder %v103, 0.0
    %v156 = vand.u32 %v103, 2147483648
    %v157 = vsel %vm155, %v156, %v154
    %v158 = vrsqrt.pop %v106
    %v159 = vmul.f32 %v106, %v158
    %vm160 = vcmp.eq.f32.partialorder %v106, inf
    %v161 = vsel %vm160, %v106, %v159
    %vm162 = vcmp.eq.f32.partialorder %v106, 0.0
    %v163 = vand.u32 %v106, 2147483648
    %v164 = vsel %vm162, %v163, %v161
    %v165 = vrsqrt.pop %v109
    %v166 = vmul.f32 %v109, %v165
    %vm167 = vcmp.eq.f32.partialorder %v109, inf
    %v168 = vsel %vm167, %v109, %v166
    %vm169 = vcmp.eq.f32.partialorder %v109, 0.0
    %v170 = vand.u32 %v109, 2147483648
    %v171 = vsel %vm169, %v170, %v168
    %v172 = vrsqrt.pop %v112
    %v173 = vmul.f32 %v112, %v172
    %vm174 = vcmp.eq.f32.partialorder %v112, inf
    %v175 = vsel %vm174, %v112, %v173
    %vm176 = vcmp.eq.f32.partialorder %v112, 0.0
    %v177 = vand.u32 %v112, 2147483648
    %v178 = vsel %vm176, %v177, %v175
    %v179 = vrsqrt.pop %v115
    %v180 = vmul.f32 %v115, %v179
    %vm181 = vcmp.eq.f32.partialorder %v115, inf
    %v182 = vsel %vm181, %v115, %v180
    %vm183 = vcmp.eq.f32.partialorder %v115, 0.0
    %v184 = vand.u32 %v115, 2147483648
    %v185 = vsel %vm183, %v184, %v182
    %v186 = vrsqrt.pop %v118
    %v187 = vmul.f32 %v118, %v186
    %vm188 = vcmp.eq.f32.partialorder %v118, inf
    %v189 = vsel %vm188, %v118, %v187
    %vm190 = vcmp.eq.f32.partialorder %v118, 0.0
    %v191 = vand.u32 %v118, 2147483648
    %v192 = vsel %vm190, %v191, %v189
    %v193 = vrsqrt.pop %v121
    %v194 = vmul.f32 %v121, %v193
    %vm195 = vcmp.eq.f32.partialorder %v121, inf
    %v196 = vsel %vm195, %v121, %v194
    %vm197 = vcmp.eq.f32.partialorder %v121, 0.0
    %v198 = vand.u32 %v121, 2147483648
    %v199 = vsel %vm197, %v198, %v196
    %v200 = vrsqrt.pop %v124
    %v201 = vmul.f32 %v124, %v200
    %vm202 = vcmp.eq.f32.partialorder %v124, inf
    %v203 = vsel %vm202, %v124, %v201
    %vm204 = vcmp.eq.f32.partialorder %v124, 0.0
    %v205 = vand.u32 %v124, 2147483648
    %v206 = vsel %vm204, %v205, %v203
    %v207 = vrsqrt.pop %v127
    %v208 = vmul.f32 %v127, %v207
    %vm209 = vcmp.eq.f32.partialorder %v127, inf
    %v210 = vsel %vm209, %v127, %v208
    %vm211 = vcmp.eq.f32.partialorder %v127, 0.0
    %v212 = vand.u32 %v127, 2147483648
    %v213 = vsel %vm211, %v212, %v210
    %v214 = vrsqrt.pop %v130
    %v215 = vmul.f32 %v130, %v214
    %vm216 = vcmp.eq.f32.partialorder %v130, inf
    %v217 = vsel %vm216, %v130, %v215
    %vm218 = vcmp.eq.f32.partialorder %v130, 0.0
    %v219 = vand.u32 %v130, 2147483648
    %v220 = vsel %vm218, %v219, %v217
    %v221 = vrsqrt.pop %v133
    %v222 = vmul.f32 %v133, %v221
    %vm223 = vcmp.eq.f32.partialorder %v133, inf
    %v224 = vsel %vm223, %v133, %v222
    %vm225 = vcmp.eq.f32.partialorder %v133, 0.0
    %v226 = vand.u32 %v133, 2147483648
    %v227 = vsel %vm225, %v226, %v224
    %v228 = vrsqrt.pop %v136
    %v229 = vmul.f32 %v136, %v228
    %vm230 = vcmp.eq.f32.partialorder %v136, inf
    %v231 = vsel %vm230, %v136, %v229
    %vm232 = vcmp.eq.f32.partialorder %v136, 0.0
    %v233 = vand.u32 %v136, 2147483648
    %v234 = vsel %vm232, %v233, %v231
    %v235 = vmul.f32 %v66, %v66
    %v236 = vmul.f32 %v67, %v67
    %v237 = vmul.f32 %v68, %v68
    %v238 = vmul.f32 %v69, %v69
    %v239 = vmul.f32 %v70, %v70
    %v240 = vmul.f32 %v71, %v71
    %v241 = vmul.f32 %v72, %v72
    %v242 = vmul.f32 %v73, %v73
    %v243 = vmul.f32 %v74, %v74
    %v244 = vmul.f32 %v75, %v75
    %v245 = vmul.f32 %v76, %v76
    %v246 = vmul.f32 %v77, %v77
    %v247 = vmul.f32 %v78, %v78
    %v248 = vmul.f32 %v79, %v79
    %v249 = vsel %vm94, %v235, 0.0
    %250 = vadd.xlane.f32.xlu0 %v249
    %v251 = vpop.xlane.xlu0 %250
    %v252 = vsel %vm94, %v236, 0.0
    %253 = vadd.xlane.f32.xlu0 %v252
    %v254 = vpop.xlane.xlu0 %253
    %v255 = vsel %vm94, %v237, 0.0
    %256 = vadd.xlane.f32.xlu0 %v255
    %v257 = vpop.xlane.xlu0 %256
    %v258 = vsel %vm94, %v238, 0.0
    %259 = vadd.xlane.f32.xlu0 %v258
    %v260 = vpop.xlane.xlu0 %259
    %v261 = vsel %vm94, %v239, 0.0
    %262 = vadd.xlane.f32.xlu0 %v261
    %v263 = vpop.xlane.xlu0 %262
    %v264 = vsel %vm94, %v240, 0.0
    %265 = vadd.xlane.f32.xlu0 %v264
    %v266 = vpop.xlane.xlu0 %265
    %v267 = vsel %vm94, %v241, 0.0
    %268 = vadd.xlane.f32.xlu0 %v267
    %v269 = vpop.xlane.xlu0 %268
    %v270 = vsel %vm94, %v242, 0.0
    %271 = vadd.xlane.f32.xlu0 %v270
    %v272 = vpop.xlane.xlu0 %271
    %v273 = vsel %vm94, %v243, 0.0
    %274 = vadd.xlane.f32.xlu0 %v273
    %v275 = vpop.xlane.xlu0 %274
    %v276 = vsel %vm94, %v244, 0.0
    %277 = vadd.xlane.f32.xlu0 %v276
    %v278 = vpop.xlane.xlu0 %277
    %v279 = vsel %vm94, %v245, 0.0
    %280 = vadd.xlane.f32.xlu0 %v279
    %v281 = vpop.xlane.xlu0 %280
    %v282 = vsel %vm94, %v246, 0.0
    %283 = vadd.xlane.f32.xlu0 %v282
    %v284 = vpop.xlane.xlu0 %283
    %v285 = vsel %vm94, %v247, 0.0
    %286 = vadd.xlane.f32.xlu0 %v285
    %v287 = vpop.xlane.xlu0 %286
    %v288 = vsel %vm94, %v248, 0.0
    %289 = vadd.xlane.f32.xlu0 %v288
    %v290 = vpop.xlane.xlu0 %289
    %v291 = vrsqrt.pop %v251
    %v292 = vmul.f32 %v251, %v291
    %vm293 = vcmp.eq.f32.partialorder %v251, inf
    %v294 = vsel %vm293, %v251, %v292
    %vm295 = vcmp.eq.f32.partialorder %v251, 0.0
    %v296 = vand.u32 %v251, 2147483648
    %v297 = vsel %vm295, %v296, %v294
    %v298 = vrsqrt.pop %v254
    %v299 = vmul.f32 %v254, %v298
    %vm300 = vcmp.eq.f32.partialorder %v254, inf
    %v301 = vsel %vm300, %v254, %v299
    %vm302 = vcmp.eq.f32.partialorder %v254, 0.0
    %v303 = vand.u32 %v254, 2147483648
    %v304 = vsel %vm302, %v303, %v301
    %v305 = vrsqrt.pop %v257
    %v306 = vmul.f32 %v257, %v305
    %vm307 = vcmp.eq.f32.partialorder %v257, inf
    %v308 = vsel %vm307, %v257, %v306
    %vm309 = vcmp.eq.f32.partialorder %v257, 0.0
    %v310 = vand.u32 %v257, 2147483648
    %v311 = vsel %vm309, %v310, %v308
    %v312 = vrsqrt.pop %v260
    %v313 = vmul.f32 %v260, %v312
    %vm314 = vcmp.eq.f32.partialorder %v260, inf
    %v315 = vsel %vm314, %v260, %v313
    %vm316 = vcmp.eq.f32.partialorder %v260, 0.0
    %v317 = vand.u32 %v260, 2147483648
    %v318 = vsel %vm316, %v317, %v315
    %v319 = vrsqrt.pop %v263
    %v320 = vmul.f32 %v263, %v319
    %vm321 = vcmp.eq.f32.partialorder %v263, inf
    %v322 = vsel %vm321, %v263, %v320
    %vm323 = vcmp.eq.f32.partialorder %v263, 0.0
    %v324 = vand.u32 %v263, 2147483648
    %v325 = vsel %vm323, %v324, %v322
    %v326 = vrsqrt.pop %v266
    %v327 = vmul.f32 %v266, %v326
    %vm328 = vcmp.eq.f32.partialorder %v266, inf
    %v329 = vsel %vm328, %v266, %v327
    %vm330 = vcmp.eq.f32.partialorder %v266, 0.0
    %v331 = vand.u32 %v266, 2147483648
    %v332 = vsel %vm330, %v331, %v329
    %v333 = vrsqrt.pop %v269
    %v334 = vmul.f32 %v269, %v333
    %vm335 = vcmp.eq.f32.partialorder %v269, inf
    %v336 = vsel %vm335, %v269, %v334
    %vm337 = vcmp.eq.f32.partialorder %v269, 0.0
    %v338 = vand.u32 %v269, 2147483648
    %v339 = vsel %vm337, %v338, %v336
    %v340 = vrsqrt.pop %v272
    %v341 = vmul.f32 %v272, %v340
    %vm342 = vcmp.eq.f32.partialorder %v272, inf
    %v343 = vsel %vm342, %v272, %v341
    %vm344 = vcmp.eq.f32.partialorder %v272, 0.0
    %v345 = vand.u32 %v272, 2147483648
    %v346 = vsel %vm344, %v345, %v343
    %v347 = vrsqrt.pop %v275
    %v348 = vmul.f32 %v275, %v347
    %vm349 = vcmp.eq.f32.partialorder %v275, inf
    %v350 = vsel %vm349, %v275, %v348
    %vm351 = vcmp.eq.f32.partialorder %v275, 0.0
    %v352 = vand.u32 %v275, 2147483648
    %v353 = vsel %vm351, %v352, %v350
    %v354 = vrsqrt.pop %v278
    %v355 = vmul.f32 %v278, %v354
    %vm356 = vcmp.eq.f32.partialorder %v278, inf
    %v357 = vsel %vm356, %v278, %v355
    %vm358 = vcmp.eq.f32.partialorder %v278, 0.0
    %v359 = vand.u32 %v278, 2147483648
    %v360 = vsel %vm358, %v359, %v357
    %v361 = vrsqrt.pop %v281
    %v362 = vmul.f32 %v281, %v361
    %vm363 = vcmp.eq.f32.partialorder %v281, inf
    %v364 = vsel %vm363, %v281, %v362
    %vm365 = vcmp.eq.f32.partialorder %v281, 0.0
    %v366 = vand.u32 %v281, 2147483648
    %v367 = vsel %vm365, %v366, %v364
    %v368 = vrsqrt.pop %v284
    %v369 = vmul.f32 %v284, %v368
    %vm370 = vcmp.eq.f32.partialorder %v284, inf
    %v371 = vsel %vm370, %v284, %v369
    %vm372 = vcmp.eq.f32.partialorder %v284, 0.0
    %v373 = vand.u32 %v284, 2147483648
    %v374 = vsel %vm372, %v373, %v371
    %v375 = vrsqrt.pop %v287
    %v376 = vmul.f32 %v287, %v375
    %vm377 = vcmp.eq.f32.partialorder %v287, inf
    %v378 = vsel %vm377, %v287, %v376
    %vm379 = vcmp.eq.f32.partialorder %v287, 0.0
    %v380 = vand.u32 %v287, 2147483648
    %v381 = vsel %vm379, %v380, %v378
    %v382 = vrsqrt.pop %v290
    %v383 = vmul.f32 %v290, %v382
    %vm384 = vcmp.eq.f32.partialorder %v290, inf
    %v385 = vsel %vm384, %v290, %v383
    %vm386 = vcmp.eq.f32.partialorder %v290, 0.0
    %v387 = vand.u32 %v290, 2147483648
    %v388 = vsel %vm386, %v387, %v385
    %v389 = vadd.f32 %v143, 1e-10
    %v390 = vadd.f32 %v150, 1e-10
    %v391 = vadd.f32 %v157, 1e-10
    %v392 = vadd.f32 %v164, 1e-10
    %v393 = vadd.f32 %v171, 1e-10
    %v394 = vadd.f32 %v178, 1e-10
    %v395 = vadd.f32 %v185, 1e-10
    %v396 = vadd.f32 %v192, 1e-10
    %v397 = vadd.f32 %v199, 1e-10
    %v398 = vadd.f32 %v206, 1e-10
    %v399 = vadd.f32 %v213, 1e-10
    %v400 = vadd.f32 %v220, 1e-10
    %v401 = vadd.f32 %v227, 1e-10
    %v402 = vadd.f32 %v234, 1e-10
    %v403 = vrcp.pop %v389
    %v404 = vrcp.pop %v390
    %v405 = vrcp.pop %v391
    %v406 = vrcp.pop %v392
    %v407 = vrcp.pop %v393
    %v408 = vrcp.pop %v394
    %v409 = vrcp.pop %v395
    %v410 = vrcp.pop %v396
    %v411 = vrcp.pop %v397
    %v412 = vrcp.pop %v398
    %v413 = vrcp.pop %v399
    %v414 = vrcp.pop %v400
    %v415 = vrcp.pop %v401
    %v416 = vrcp.pop %v402
    %v417 = vmul.f32 %v38, %v403
    %v418 = vmul.f32 %v39, %v404
    %v419 = vmul.f32 %v40, %v405
    %v420 = vmul.f32 %v41, %v406
    %v421 = vmul.f32 %v42, %v407
    %v422 = vmul.f32 %v43, %v408
    %v423 = vmul.f32 %v44, %v409
    %v424 = vmul.f32 %v45, %v410
    %v425 = vmul.f32 %v46, %v411
    %v426 = vmul.f32 %v47, %v412
    %v427 = vmul.f32 %v48, %v413
    %v428 = vmul.f32 %v49, %v414
    %v429 = vmul.f32 %v50, %v415
    %v430 = vmul.f32 %v51, %v416
    %v431 = vadd.f32 %v297, 1e-10
    %v432 = vadd.f32 %v304, 1e-10
    %v433 = vadd.f32 %v311, 1e-10
    %v434 = vadd.f32 %v318, 1e-10
    %v435 = vadd.f32 %v325, 1e-10
    %v436 = vadd.f32 %v332, 1e-10
    %v437 = vadd.f32 %v339, 1e-10
    %v438 = vadd.f32 %v346, 1e-10
    %v439 = vadd.f32 %v353, 1e-10
    %v440 = vadd.f32 %v360, 1e-10
    %v441 = vadd.f32 %v367, 1e-10
    %v442 = vadd.f32 %v374, 1e-10
    %v443 = vadd.f32 %v381, 1e-10
    %v444 = vadd.f32 %v388, 1e-10
    %v445 = vrcp.pop %v431
    %v446 = vrcp.pop %v432
    %v447 = vrcp.pop %v433
    %v448 = vrcp.pop %v434
    %v449 = vrcp.pop %v435
    %v450 = vrcp.pop %v436
    %v451 = vrcp.pop %v437
    %v452 = vrcp.pop %v438
    %v453 = vrcp.pop %v439
    %v454 = vrcp.pop %v440
    %v455 = vrcp.pop %v441
    %v456 = vrcp.pop %v442
    %v457 = vrcp.pop %v443
    %v458 = vrcp.pop %v444
    %v459 = vmul.f32 %v66, %v445
    %v460 = vmul.f32 %v67, %v446
    %v461 = vmul.f32 %v68, %v447
    %v462 = vmul.f32 %v69, %v448
    %v463 = vmul.f32 %v70, %v449
    %v464 = vmul.f32 %v71, %v450
    %v465 = vmul.f32 %v72, %v451
    %v466 = vmul.f32 %v73, %v452
    %v467 = vmul.f32 %v74, %v453
    %v468 = vmul.f32 %v75, %v454
    %v469 = vmul.f32 %v76, %v455
    %v470 = vmul.f32 %v77, %v456
    %v471 = vmul.f32 %v78, %v457
    %v472 = vmul.f32 %v79, %v458
    %v473 = vsub.f32 %v417, %v459
    %v474 = vsub.f32 %v418, %v460
    %v475 = vsub.f32 %v419, %v461
    %v476 = vsub.f32 %v420, %v462
    %v477 = vsub.f32 %v421, %v463
    %v478 = vsub.f32 %v422, %v464
    %v479 = vsub.f32 %v423, %v465
    %v480 = vsub.f32 %v424, %v466
    %v481 = vsub.f32 %v425, %v467
    %v482 = vsub.f32 %v426, %v468
    %v483 = vsub.f32 %v427, %v469
    %v484 = vsub.f32 %v428, %v470
    %v485 = vsub.f32 %v429, %v471
    %v486 = vsub.f32 %v430, %v472
    %v487 = vmul.f32 %v473, %v473
    %v488 = vmul.f32 %v474, %v474
    %v489 = vmul.f32 %v475, %v475
    %v490 = vmul.f32 %v476, %v476
    %v491 = vmul.f32 %v477, %v477
    %v492 = vmul.f32 %v478, %v478
    %v493 = vmul.f32 %v479, %v479
    %v494 = vmul.f32 %v480, %v480
    %v495 = vmul.f32 %v481, %v481
    %v496 = vmul.f32 %v482, %v482
    %v497 = vmul.f32 %v483, %v483
    %v498 = vmul.f32 %v484, %v484
    %v499 = vmul.f32 %v485, %v485
    %v500 = vmul.f32 %v486, %v486
    %v501 = vld [vmem:[#allocation2] sm:$0x1]
    %v502 = vsel %vm94, %v487, 0.0
    %v503 = vsel %vm94, %v488, 0.0
    %v504 = vadd.f32 %v502, %v503
    %v505 = vsel %vm94, %v489, 0.0
    %v506 = vadd.f32 %v504, %v505
    %v507 = vsel %vm94, %v490, 0.0
    %v508 = vadd.f32 %v506, %v507
    %v509 = vsel %vm94, %v491, 0.0
    %v510 = vadd.f32 %v508, %v509
    %v511 = vsel %vm94, %v492, 0.0
    %v512 = vadd.f32 %v510, %v511
    %v513 = vsel %vm94, %v493, 0.0
    %v514 = vadd.f32 %v512, %v513
    %v515 = vsel %vm94, %v494, 0.0
    %v516 = vadd.f32 %v514, %v515
    %v517 = vsel %vm94, %v495, 0.0
    %v518 = vadd.f32 %v516, %v517
    %v519 = vsel %vm94, %v496, 0.0
    %v520 = vadd.f32 %v518, %v519
    %v521 = vsel %vm94, %v497, 0.0
    %v522 = vadd.f32 %v520, %v521
    %v523 = vsel %vm94, %v498, 0.0
    %v524 = vadd.f32 %v522, %v523
    %v525 = vsel %vm94, %v499, 0.0
    %v526 = vadd.f32 %v524, %v525
    %v527 = vsel %vm94, %v500, 0.0
    %v528 = vadd.f32 %v526, %v527
    %v529 = vrot.slane %v528, 4
    %v530 = vadd.f32 %v528, %v529
    %v531 = vrot.slane %v530, 2
    %v532 = vadd.f32 %v530, %v531
    %v533 = vrot.slane %v532, 1
    %v534 = vadd.f32 %v532, %v533
    %v535 = vadd.f32 %v501, %v534
    %vm536 = vcmask 516096
    %537 = vst.msk [vmem:[#allocation2] sm:$0x1] %vm536, %v535
    // Predicated region
    $region18: #{lpips_loss.22} parent=1 // pred_check
      %p538 = pneg %p18
    $region19: #{lpips_loss.22} parent=1 // pred_check_branch
      %540 = sbr.rel (%p538) target = $region21
    $region20: #{lpips_loss.22} parent=1 // pred_region
      %v541 = vld [vmem:[#allocation2] sm:$0x1]
      %v542 = vld [vmem:[%s2] sm:$0x1]
      %v543 = vmul.f32 %v541, %v542
      %v544 = vsel %vm536, %v543, 0.0
      %545 = vadd.xlane.f32.xlu0 %v544
      %v546 = vpop.xlane.xlu0 %545
      %vm547 = vcmask 0
      %548 = vst.msk [vmem:[#allocation3] sm:$0x1] %vm547, %v546
    $region21: #{lpips_loss.22} parent=1 // pred_fallthru
      _
    // Predicated region
    $region22: #{lpips_loss.22} parent=1 // pred_check
      _
    $region23: #{lpips_loss.22} parent=1 // pred_check_branch
      %550 = sbr.rel (0) target = $region25
    $region24: #{lpips_loss.22} parent=1 // pred_region
      %s552 = ssub.s32 16, 16
      %553 = vsyncadd [#allocation4], %s552
      %s555 = sshll.u32 [#allocation3], 4
      %s556 = int_to_ptr.vmem [resolvable:$true] %s555
      %558 = dma.vmem_to_hbm [thread:$0]  %s556, 16, %s3, [#allocation4]
    $region25: #{lpips_loss.22} parent=1 // pred_fallthru
      _
    // Predicated region
    $region26: #{lpips_loss.22} parent=1 // pred_check
      _
    $region27: #{lpips_loss.22} parent=1 // pred_check_branch
      %560 = sbr.rel (0) target = $region29
    $region28: #{lpips_loss.22} parent=1 // pred_region
      %561 = dma.done [#allocation4], 16
    $region29: #{lpips_loss.22} parent=1 // pred_fallthru
      _
    %562 = vsyncpa [#allocation4], 1

</llo_original>
